<compile_context>
chip_gen: v7x
topology: tpu7x:2x2x1
jax: 0.10.0
libtpu: 0.0.40
codegen_flags: <defaults>
</compile_context>

<pallas_src>
from functools import partial

import jax
import jax.numpy as jnp
from jax.experimental import pallas as pl
from jax.experimental.pallas import tpu as pltpu


def _leaky_relu(x, slope=0.01):
    return jnp.where(x >= 0, x, slope * x)


def _metanext_kernel(H, W, hid, pad,
                     x_ref,
                     ns_ref, nb_ref,
                     dw1_ref,
                     w12_ref, b12_ref,
                     wg_ref, bg_ref,
                     dw2_ref, db2_ref,
                     fc1w_ref, fc1b_ref, fc2w_ref, fc2b_ref,
                     ses_ref, seb_ref,
                     gam_ref,
                     cmask_ref,
                     o_ref,
                     scr_ref):
    C, HW = x_ref.shape
    Cr = fc1w_ref.shape[0]

    # ---- zero ONLY the two halo strips of the flat conv scratch (every step) ----
    scr_ref[:, pl.ds(0, pad)] = jnp.zeros((C, pad), jnp.float32)
    scr_ref[:, pl.ds(pad + HW, pad)] = jnp.zeros((C, pad), jnp.float32)

    x = x_ref[...]                                   # (C, HW) original input (shortcut)

    # ---- self.norm : BatchNorm2d (eval) folded to per-channel scale/shift ----
    y = x * ns_ref[...] + nb_ref[...]                # (C,1) broadcasts along lanes

    cmask = cmask_ref[...]                           # (7, HW) float 0/1 W-boundary masks

    # ---- depthwise 7x7 conv (zero padding 3, groups=C) on the flat (C, H*W) layout.
    # Row (H) boundary handling comes from the zero halos; column (W) boundary
    # handling from the precomputed column masks.  Accumulator stays in vregs.
    def dwconv7(inp, w_ref, bias_col):
        scr_ref[:, pl.ds(pad, HW)] = inp             # 128-aligned interior store
        w = w_ref[...]                               # (C, 49)
        if bias_col is None:
            acc = jnp.zeros((C, HW), jnp.float32)
        else:
            acc = jnp.broadcast_to(bias_col, (C, HW))
        for kh in range(7):
            dh = kh - 3
            for kw in range(7):
                dw = kw - 3
                k = kh * 7 + kw
                shifted = scr_ref[:, pl.ds(pad + dh * W + dw, HW)]   # (C, HW)
                term = shifted * w[:, k:k + 1]                       # per-channel tap
                if dw != 0:
                    term = term * cmask[kw:kw + 1, :]                # kill W wrap-around
                acc = acc + term
        return acc

    # ---- StarMlp (mlp_ratio=2): dwconv(+BN) -> f1/f2 -> relu6(x1)*x2 -> g(+BN) -> dwconv2
    # dwconv bias + its BN are folded into the fused f1/f2 weights/bias (host side).
    d1 = dwconv7(y, dw1_ref, None)                                        # raw conv(y)
    x12 = jnp.dot(w12_ref[...], d1,
                  preferred_element_type=jnp.float32) + b12_ref[...]      # (2*hid, HW)
    s = jnp.clip(x12[:hid], 0.0, 6.0) * x12[hid:]                         # ReLU6(x1) * x2
    gact = jnp.dot(wg_ref[...], s,
                   preferred_element_type=jnp.float32) + bg_ref[...]      # g (+BN folded)
    d2 = dwconv7(gact, dw2_ref, db2_ref[...])                             # dwconv2 (+ bias)
    mlp_out = y + d2                                                      # inner residual

    # ---- ChannelSELayer: gate = sigmoid(fc2(leaky(fc1(avgpool)))) ----
    # fc1 commutes with the spatial mean -> matmul first, reduce over lanes after.
    t = jnp.dot(fc1w_ref[...], mlp_out, preferred_element_type=jnp.float32)   # (Cr, HW)
    h = jnp.mean(t, axis=1, keepdims=True) + fc1b_ref[...]                    # (Cr, 1)
    h = _leaky_relu(h)
    z = fc2b_ref[...]                                                         # (C, 1)
    for r in range(Cr):                                                       # Cr tiny; unrolled
        z = z + fc2w_ref[:, r:r + 1] * h[r:r + 1, 0:1]
    gate = 1.0 / (1.0 + jnp.exp(-z))                                          # sigmoid, (C, 1)

    # se.bn scale folded into the gate; shift applied as a broadcast add.
    se = mlp_out * (gate * ses_ref[...]) + seb_ref[...]
    se = _leaky_relu(se)

    # ---- layer scale (gamma) + outer residual ----
    o_ref[...] = se * gam_ref[...] + x


def _bn_fold(weight, bias, mean, var, eps=1e-5):
    scale = weight / jnp.sqrt(var + eps)
    shift = bias - mean * scale
    return scale.astype(jnp.float32), shift.astype(jnp.float32)


def metanext_block_se(x_nchw, params):
    """Fused MetaNeXtBlock_SE forward.  x_nchw: (B, C, H, W) float32 (torch NCHW layout)."""
    B, C, H, W = x_nchw.shape
    HW = H * W
    hid = params["f1_w"].shape[0]              # int(mlp_ratio * dim), mlp_ratio = 2
    Cr = params["fc1_w"].shape[0]              # C // 8
    pad = ((3 * W + 3 + 127) // 128) * 128     # lane halo: multiple of 128, >= 3*W + 3

    f32 = jnp.float32
    x = x_nchw.reshape(B, C, HW).astype(f32)   # free reshape for contiguous NCHW

    # ---- eval-mode BatchNorm folding + weight fusion (host side) ----
    ns, nb = _bn_fold(*params["norm_bn"])
    ds, db = _bn_fold(*params["dw_bn"])
    gs, gb = _bn_fold(*params["g_bn"])
    ss, sb = _bn_fold(*params["se_bn"])

    dw1 = params["dw_w"].reshape(C, 49).astype(f32)          # torch (C,1,7,7) -> (C,49)
    dw2 = params["dw2_w"].reshape(C, 49).astype(f32)
    db2 = params["dw2_b"].reshape(C, 1).astype(f32)

    # fold dwconv bias + dwconv BN into the fused f1/f2 (1x1 conv) weights & biases
    W1 = params["f1_w"].reshape(hid, C).astype(f32)
    W2 = params["f2_w"].reshape(hid, C).astype(f32)
    bvec = ds * params["dw_b"] + db                          # (C,)
    W12 = jnp.concatenate([W1 * ds[None, :], W2 * ds[None, :]], axis=0)       # (2*hid, C)
    b12 = jnp.concatenate([params["f1_b"] + W1 @ bvec,
                           params["f2_b"] + W2 @ bvec], axis=0).reshape(2 * hid, 1)

    # fold g BN into g weights/bias
    Wg = params["g_w"].reshape(C, hid).astype(f32)
    Wgf = Wg * gs[:, None]
    bgf = (gs * params["g_b"] + gb).reshape(C, 1)

    fc1w = params["fc1_w"].astype(f32)                       # (Cr, C)
    fc1b = params["fc1_b"].reshape(Cr, 1).astype(f32)
    fc2w = params["fc2_w"].astype(f32)                       # (C, Cr)
    fc2b = params["fc2_b"].reshape(C, 1).astype(f32)

    # W-direction validity masks for the 7 kernel columns (float 0/1), shape (7, H*W)
    col = jnp.arange(HW, dtype=jnp.int32) % W
    cmask = jnp.stack(
        [((col + (kw - 3) >= 0) & (col + (kw - 3) <= W - 1)).astype(f32) for kw in range(7)],
        axis=0)

    plist = [
        ns.reshape(C, 1), nb.reshape(C, 1),
        dw1,
        W12, b12,
        Wgf, bgf,
        dw2, db2,
        fc1w, fc1b, fc2w, fc2b,
        ss.reshape(C, 1), sb.reshape(C, 1),
        params["gamma"].reshape(C, 1).astype(f32),
        cmask,
    ]

    def full_spec(a):
        nd = a.ndim
        return pl.BlockSpec(a.shape, lambda b, _nd=nd: (0,) * _nd)

    kernel = partial(_metanext_kernel, H, W, hid, pad)

    # TODO(synk): for large H*W add a spatial grid axis (halo tiles + two-pass SE pooling)
    # so v7x (64 MiB VMEM, 2 TCs) gets both a VMEM-budgeted block and pipelining depth.
    out = pl.pallas_call(
        kernel,
        out_shape=jax.ShapeDtypeStruct((B, C, HW), f32),
        grid=(B,),
        in_specs=[pl.BlockSpec((None, C, HW), lambda b: (b, 0, 0))]
                 + [full_spec(p) for p in plist],
        out_specs=pl.BlockSpec((None, C, HW), lambda b: (b, 0, 0)),
        scratch_shapes=[pltpu.VMEM((C, HW + 2 * pad), jnp.float32)],
        compiler_params=pltpu.CompilerParams(dimension_semantics=("parallel",)),
    )(x, *plist)

    return out.reshape(B, C, H, W)


def metanext_upstage_blockwithse(x, blocks_params):
    """MetaNeXtUpStage_blockwithse forward with ds_stride=1 (Identity upsample)."""
    # TODO(synk): ds_stride>1 upsample path (BN + DySample bilinear grid_sample + 1x1 conv)
    # has no clean Pallas equivalent here (data-dependent bilinear gather); Identity is used.
    for p in blocks_params:
        x = metanext_block_se(x, p)
    return x


def make_params(key, C):
    """Deterministic synthetic parameters matching MetaNeXtBlock_SE(dim=C) torch layouts."""
    Cr = C // 8                    # ChannelSELayer reduction ratio 8
    hid = 2 * C                    # StarMlp(dim, mlp_ratio=2)
    ks = jax.random.split(key, 20)
    r = lambda k, shape, s=0.1: (s * jax.random.normal(k, shape)).astype(jnp.float32)

    def bn(k):
        k1, k2, k3, k4 = jax.random.split(k, 4)
        return (1.0 + r(k1, (C,)), r(k2, (C,)), r(k3, (C,)), 1.0 + jnp.abs(r(k4, (C,))))

    return dict(
        norm_bn=bn(ks[0]),
        dw_w=r(ks[1], (C, 1, 7, 7)), dw_b=r(ks[2], (C,)), dw_bn=bn(ks[3]),
        f1_w=r(ks[4], (hid, C, 1, 1)), f1_b=r(ks[5], (hid,)),
        f2_w=r(ks[6], (hid, C, 1, 1)), f2_b=r(ks[7], (hid,)),
        g_w=r(ks[8], (C, hid, 1, 1)), g_b=r(ks[9], (C,)), g_bn=bn(ks[10]),
        dw2_w=r(ks[11], (C, 1, 7, 7)), dw2_b=r(ks[12], (C,)),
        fc1_w=r(ks[13], (Cr, C)), fc1_b=r(ks[14], (Cr,)),
        fc2_w=r(ks[15], (C, Cr)), fc2_b=r(ks[16], (C,)),
        se_bn=bn(ks[17]),
        gamma=jnp.full((C,), 1.0, jnp.float32),       # stage default ls_init_value = 1.0
    )


def _block_ref(x, p):
    """Pure-JAX reference for MetaNeXtBlock_SE.forward (eval mode, drop=0)."""
    eps = 1e-5

    def bn(z, t):
        w, b, m, v = t
        return (z - m[None, :, None, None]) / jnp.sqrt(v[None, :, None, None] + eps) \
            * w[None, :, None, None] + b[None, :, None, None]

    def dwconv(z, w, b):
        out = jax.lax.conv_general_dilated(
            z, w, window_strides=(1, 1), padding=((3, 3), (3, 3)),
            dimension_numbers=("NCHW", "OIHW", "NCHW"), feature_group_count=z.shape[1])
        return out + b[None, :, None, None]

    def conv1x1(z, w, b):
        return jnp.einsum("bchw,oc->bohw", z, w.reshape(w.shape[0], w.shape[1])) \
            + b[None, :, None, None]

    shortcut = x
    y = bn(x, p["norm_bn"])
    d1 = bn(dwconv(y, p["dw_w"], p["dw_b"]), p["dw_bn"])
    s = jnp.clip(conv1x1(d1, p["f1_w"], p["f1_b"]), 0.0, 6.0) * conv1x1(d1, p["f2_w"], p["f2_b"])
    g = bn(conv1x1(s, p["g_w"], p["g_b"]), p["g_bn"])
    mlp = y + dwconv(g, p["dw2_w"], p["dw2_b"])
    pooled = jnp.mean(mlp, axis=(2, 3))
    h = pooled @ p["fc1_w"].T + p["fc1_b"]
    h = jnp.where(h >= 0, h, 0.01 * h)
    z = h @ p["fc2_w"].T + p["fc2_b"]
    gate = 1.0 / (1.0 + jnp.exp(-z))
    se = bn(mlp * gate[:, :, None, None], p["se_bn"])
    se = jnp.where(se >= 0, se, 0.01 * se)
    return se * p["gamma"][None, :, None, None] + shortcut


if __name__ == "__main__":
    key = jax.random.PRNGKey(0)
    kx, k1, k2 = jax.random.split(key, 3)
    B, C, H, W = 2, 16, 16, 16     # dim >= 8 so C//8 >= 1; H*W = 256 -> lane-dense blocks
    x = jax.random.normal(kx, (B, C, H, W), dtype=jnp.float32)
    blocks = [make_params(k1, C), make_params(k2, C)]   # stage depth = 2, ds_stride = 1

    out = jax.jit(metanext_upstage_blockwithse)(x, blocks)
    jax.block_until_ready(out)
    assert out.shape == (B, C, H, W)

    ref = x
    for p in blocks:
        ref = _block_ref(ref, p)
    err = float(jnp.max(jnp.abs(out - ref)))
    assert err < 2e-3, f"mismatch vs pure-JAX reference: {err}"
    print("KERNEL_OK")
</pallas_src>

<mosaic_0001>
module attributes {stable_mosaic.version = 11 : i64} {
  func.func @_metanext_kernel(%arg0: i32, %arg1: memref<1x16x256xf32, #tpu.memory_space<vmem>>, %arg2: memref<16x1xf32, #tpu.memory_space<vmem>>, %arg3: memref<16x1xf32, #tpu.memory_space<vmem>>, %arg4: memref<16x49xf32, #tpu.memory_space<vmem>>, %arg5: memref<64x16xf32, #tpu.memory_space<vmem>>, %arg6: memref<64x1xf32, #tpu.memory_space<vmem>>, %arg7: memref<16x32xf32, #tpu.memory_space<vmem>>, %arg8: memref<16x1xf32, #tpu.memory_space<vmem>>, %arg9: memref<16x49xf32, #tpu.memory_space<vmem>>, %arg10: memref<16x1xf32, #tpu.memory_space<vmem>>, %arg11: memref<2x16xf32, #tpu.memory_space<vmem>>, %arg12: memref<2x1xf32, #tpu.memory_space<vmem>>, %arg13: memref<16x2xf32, #tpu.memory_space<vmem>>, %arg14: memref<16x1xf32, #tpu.memory_space<vmem>>, %arg15: memref<16x1xf32, #tpu.memory_space<vmem>>, %arg16: memref<16x1xf32, #tpu.memory_space<vmem>>, %arg17: memref<16x1xf32, #tpu.memory_space<vmem>>, %arg18: memref<7x256xf32, #tpu.memory_space<vmem>>, %arg19: memref<1x16x256xf32, #tpu.memory_space<vmem>>, %arg20: memref<16x512xf32, #tpu.memory_space<vmem>>) attributes {dimension_semantics = [#tpu.dimension_semantics<parallel>], iteration_bounds = array<i64: 2>, scalar_prefetch = 0 : i64, scratch_operands = 1 : i64, tpu.core_type = #tpu.core_type<tc>, window_params = [{transform_indices = @transform_0, window_bounds = array<i64: 1, 16, 256>}, {pipeline_mode = #tpu.pipeline_mode<synchronous>, transform_indices = @transform_1, window_bounds = array<i64: 16, 1>}, {pipeline_mode = #tpu.pipeline_mode<synchronous>, transform_indices = @transform_2, window_bounds = array<i64: 16, 1>}, {pipeline_mode = #tpu.pipeline_mode<synchronous>, transform_indices = @transform_3, window_bounds = array<i64: 16, 49>}, {pipeline_mode = #tpu.pipeline_mode<synchronous>, transform_indices = @transform_4, window_bounds = array<i64: 64, 16>}, {pipeline_mode = #tpu.pipeline_mode<synchronous>, transform_indices = @transform_5, window_bounds = array<i64: 64, 1>}, {pipeline_mode = #tpu.pipeline_mode<synchronous>, transform_indices = @transform_6, window_bounds = array<i64: 16, 32>}, {pipeline_mode = #tpu.pipeline_mode<synchronous>, transform_indices = @transform_7, window_bounds = array<i64: 16, 1>}, {pipeline_mode = #tpu.pipeline_mode<synchronous>, transform_indices = @transform_8, window_bounds = array<i64: 16, 49>}, {pipeline_mode = #tpu.pipeline_mode<synchronous>, transform_indices = @transform_9, window_bounds = array<i64: 16, 1>}, {pipeline_mode = #tpu.pipeline_mode<synchronous>, transform_indices = @transform_10, window_bounds = array<i64: 2, 16>}, {pipeline_mode = #tpu.pipeline_mode<synchronous>, transform_indices = @transform_11, window_bounds = array<i64: 2, 1>}, {pipeline_mode = #tpu.pipeline_mode<synchronous>, transform_indices = @transform_12, window_bounds = array<i64: 16, 2>}, {pipeline_mode = #tpu.pipeline_mode<synchronous>, transform_indices = @transform_13, window_bounds = array<i64: 16, 1>}, {pipeline_mode = #tpu.pipeline_mode<synchronous>, transform_indices = @transform_14, window_bounds = array<i64: 16, 1>}, {pipeline_mode = #tpu.pipeline_mode<synchronous>, transform_indices = @transform_15, window_bounds = array<i64: 16, 1>}, {pipeline_mode = #tpu.pipeline_mode<synchronous>, transform_indices = @transform_16, window_bounds = array<i64: 16, 1>}, {pipeline_mode = #tpu.pipeline_mode<synchronous>, transform_indices = @transform_17, window_bounds = array<i64: 7, 256>}, {transform_indices = @transform_18, window_bounds = array<i64: 1, 16, 256>}]} {
    %cst = arith.constant 0.000000e+00 : f32
    %0 = vector.broadcast %cst : f32 to vector<16x128xf32>
    %c0 = arith.constant 0 : index
    %c0_0 = arith.constant 0 : index
    %1 = vector.load %arg20[%c0, %c0_0] : memref<16x512xf32, #tpu.memory_space<vmem>>, vector<16x128xf32>
    tpu.vector_store %arg20[%c0, %c0_0], %0 {strides = array<i32>} : memref<16x512xf32, #tpu.memory_space<vmem>>, vector<16x128xf32>,
    %cst_1 = arith.constant 0.000000e+00 : f32
    %2 = vector.broadcast %cst_1 : f32 to vector<16x128xf32>
    %c0_2 = arith.constant 0 : index
    %c384 = arith.constant 384 : index
    %3 = vector.load %arg20[%c0_2, %c384] : memref<16x512xf32, #tpu.memory_space<vmem>>, vector<16x128xf32>
    tpu.vector_store %arg20[%c0_2, %c384], %2 {strides = array<i32>} : memref<16x512xf32, #tpu.memory_space<vmem>>, vector<16x128xf32>,
    %c0_3 = arith.constant 0 : index
    %c0_4 = arith.constant 0 : index
    %c0_5 = arith.constant 0 : index
    %4 = vector.load %arg1[%c0_3, %c0_4, %c0_5] : memref<1x16x256xf32, #tpu.memory_space<vmem>>, vector<1x16x256xf32>
    %5 = vector.shape_cast %4 : vector<1x16x256xf32> to vector<16x256xf32>
    %c0_6 = arith.constant 0 : index
    %c0_7 = arith.constant 0 : index
    %6 = vector.load %arg2[%c0_6, %c0_7] : memref<16x1xf32, #tpu.memory_space<vmem>>, vector<16x1xf32>
    %7 = vector.broadcast %6 : vector<16x1xf32> to vector<16x256xf32>
    %8 = arith.mulf %5, %7 : vector<16x256xf32>
    %c0_8 = arith.constant 0 : index
    %c0_9 = arith.constant 0 : index
    %9 = vector.load %arg3[%c0_8, %c0_9] : memref<16x1xf32, #tpu.memory_space<vmem>>, vector<16x1xf32>
    %10 = vector.broadcast %9 : vector<16x1xf32> to vector<16x256xf32>
    %11 = arith.addf %8, %10 : vector<16x256xf32>
    %c0_10 = arith.constant 0 : index
    %c0_11 = arith.constant 0 : index
    %12 = vector.load %arg18[%c0_10, %c0_11] : memref<7x256xf32, #tpu.memory_space<vmem>>, vector<7x256xf32>
    %c0_12 = arith.constant 0 : index
    %c128 = arith.constant 128 : index
    %13 = vector.load %arg20[%c0_12, %c128] : memref<16x512xf32, #tpu.memory_space<vmem>>, vector<16x256xf32>
    tpu.vector_store %arg20[%c0_12, %c128], %11 {strides = array<i32>} : memref<16x512xf32, #tpu.memory_space<vmem>>, vector<16x256xf32>,
    %c0_13 = arith.constant 0 : index
    %c0_14 = arith.constant 0 : index
    %14 = vector.load %arg4[%c0_13, %c0_14] : memref<16x49xf32, #tpu.memory_space<vmem>>, vector<16x49xf32>
    %cst_15 = arith.constant 0.000000e+00 : f32
    %15 = vector.broadcast %cst_15 : f32 to vector<16x256xf32>
    %c0_16 = arith.constant 0 : index
    %c77 = arith.constant 77 : index
    %16 = vector.load %arg20[%c0_16, %c77] : memref<16x512xf32, #tpu.memory_space<vmem>>, vector<16x256xf32>
    %17 = vector.extract_strided_slice %14 {offsets = [0, 0], sizes = [16, 1], strides = [1, 1]} : vector<16x49xf32> to vector<16x1xf32>
    %18 = vector.broadcast %17 : vector<16x1xf32> to vector<16x256xf32>
    %19 = arith.mulf %16, %18 : vector<16x256xf32>
    %20 = vector.extract_strided_slice %12 {offsets = [0, 0], sizes = [1, 256], strides = [1, 1]} : vector<7x256xf32> to vector<1x256xf32>
    %21 = vector.broadcast %20 : vector<1x256xf32> to vector<16x256xf32>
    %22 = arith.mulf %19, %21 : vector<16x256xf32>
    %23 = arith.addf %15, %22 : vector<16x256xf32>
    %c0_17 = arith.constant 0 : index
    %c78 = arith.constant 78 : index
    %24 = vector.load %arg20[%c0_17, %c78] : memref<16x512xf32, #tpu.memory_space<vmem>>, vector<16x256xf32>
    %25 = vector.extract_strided_slice %14 {offsets = [0, 1], sizes = [16, 1], strides = [1, 1]} : vector<16x49xf32> to vector<16x1xf32>
    %26 = vector.broadcast %25 : vector<16x1xf32> to vector<16x256xf32>
    %27 = arith.mulf %24, %26 : vector<16x256xf32>
    %28 = vector.extract_strided_slice %12 {offsets = [1, 0], sizes = [1, 256], strides = [1, 1]} : vector<7x256xf32> to vector<1x256xf32>
    %29 = vector.broadcast %28 : vector<1x256xf32> to vector<16x256xf32>
    %30 = arith.mulf %27, %29 : vector<16x256xf32>
    %31 = arith.addf %23, %30 : vector<16x256xf32>
    %c0_18 = arith.constant 0 : index
    %c79 = arith.constant 79 : index
    %32 = vector.load %arg20[%c0_18, %c79] : memref<16x512xf32, #tpu.memory_space<vmem>>, vector<16x256xf32>
    %33 = vector.extract_strided_slice %14 {offsets = [0, 2], sizes = [16, 1], strides = [1, 1]} : vector<16x49xf32> to vector<16x1xf32>
    %34 = vector.broadcast %33 : vector<16x1xf32> to vector<16x256xf32>
    %35 = arith.mulf %32, %34 : vector<16x256xf32>
    %36 = vector.extract_strided_slice %12 {offsets = [2, 0], sizes = [1, 256], strides = [1, 1]} : vector<7x256xf32> to vector<1x256xf32>
    %37 = vector.broadcast %36 : vector<1x256xf32> to vector<16x256xf32>
    %38 = arith.mulf %35, %37 : vector<16x256xf32>
    %39 = arith.addf %31, %38 : vector<16x256xf32>
    %c0_19 = arith.constant 0 : index
    %c80 = arith.constant 80 : index
    %40 = vector.load %arg20[%c0_19, %c80] : memref<16x512xf32, #tpu.memory_space<vmem>>, vector<16x256xf32>
    %41 = vector.extract_strided_slice %14 {offsets = [0, 3], sizes = [16, 1], strides = [1, 1]} : vector<16x49xf32> to vector<16x1xf32>
    %42 = vector.broadcast %41 : vector<16x1xf32> to vector<16x256xf32>
    %43 = arith.mulf %40, %42 : vector<16x256xf32>
    %44 = arith.addf %39, %43 : vector<16x256xf32>
    %c0_20 = arith.constant 0 : index
    %c81 = arith.constant 81 : index
    %45 = vector.load %arg20[%c0_20, %c81] : memref<16x512xf32, #tpu.memory_space<vmem>>, vector<16x256xf32>
    %46 = vector.extract_strided_slice %14 {offsets = [0, 4], sizes = [16, 1], strides = [1, 1]} : vector<16x49xf32> to vector<16x1xf32>
    %47 = vector.broadcast %46 : vector<16x1xf32> to vector<16x256xf32>
    %48 = arith.mulf %45, %47 : vector<16x256xf32>
    %49 = vector.extract_strided_slice %12 {offsets = [4, 0], sizes = [1, 256], strides = [1, 1]} : vector<7x256xf32> to vector<1x256xf32>
    %50 = vector.broadcast %49 : vector<1x256xf32> to vector<16x256xf32>
    %51 = arith.mulf %48, %50 : vector<16x256xf32>
    %52 = arith.addf %44, %51 : vector<16x256xf32>
    %c0_21 = arith.constant 0 : index
    %c82 = arith.constant 82 : index
    %53 = vector.load %arg20[%c0_21, %c82] : memref<16x512xf32, #tpu.memory_space<vmem>>, vector<16x256xf32>
    %54 = vector.extract_strided_slice %14 {offsets = [0, 5], sizes = [16, 1], strides = [1, 1]} : vector<16x49xf32> to vector<16x1xf32>
    %55 = vector.broadcast %54 : vector<16x1xf32> to vector<16x256xf32>
    %56 = arith.mulf %53, %55 : vector<16x256xf32>
    %57 = vector.extract_strided_slice %12 {offsets = [5, 0], sizes = [1, 256], strides = [1, 1]} : vector<7x256xf32> to vector<1x256xf32>
    %58 = vector.broadcast %57 : vector<1x256xf32> to vector<16x256xf32>
    %59 = arith.mulf %56, %58 : vector<16x256xf32>
    %60 = arith.addf %52, %59 : vector<16x256xf32>
    %c0_22 = arith.constant 0 : index
    %c83 = arith.constant 83 : index
    %61 = vector.load %arg20[%c0_22, %c83] : memref<16x512xf32, #tpu.memory_space<vmem>>, vector<16x256xf32>
    %62 = vector.extract_strided_slice %14 {offsets = [0, 6], sizes = [16, 1], strides = [1, 1]} : vector<16x49xf32> to vector<16x1xf32>
    %63 = vector.broadcast %62 : vector<16x1xf32> to vector<16x256xf32>
    %64 = arith.mulf %61, %63 : vector<16x256xf32>
    %65 = vector.extract_strided_slice %12 {offsets = [6, 0], sizes = [1, 256], strides = [1, 1]} : vector<7x256xf32> to vector<1x256xf32>
    %66 = vector.broadcast %65 : vector<1x256xf32> to vector<16x256xf32>
    %67 = arith.mulf %64, %66 : vector<16x256xf32>
    %68 = arith.addf %60, %67 : vector<16x256xf32>
    %c0_23 = arith.constant 0 : index
    %c93 = arith.constant 93 : index
    %69 = vector.load %arg20[%c0_23, %c93] : memref<16x512xf32, #tpu.memory_space<vmem>>, vector<16x256xf32>
    %70 = vector.extract_strided_slice %14 {offsets = [0, 7], sizes = [16, 1], strides = [1, 1]} : vector<16x49xf32> to vector<16x1xf32>
    %71 = vector.broadcast %70 : vector<16x1xf32> to vector<16x256xf32>
    %72 = arith.mulf %69, %71 : vector<16x256xf32>
    %73 = vector.extract_strided_slice %12 {offsets = [0, 0], sizes = [1, 256], strides = [1, 1]} : vector<7x256xf32> to vector<1x256xf32>
    %74 = vector.broadcast %73 : vector<1x256xf32> to vector<16x256xf32>
    %75 = arith.mulf %72, %74 : vector<16x256xf32>
    %76 = arith.addf %68, %75 : vector<16x256xf32>
    %c0_24 = arith.constant 0 : index
    %c94 = arith.constant 94 : index
    %77 = vector.load %arg20[%c0_24, %c94] : memref<16x512xf32, #tpu.memory_space<vmem>>, vector<16x256xf32>
    %78 = vector.extract_strided_slice %14 {offsets = [0, 8], sizes = [16, 1], strides = [1, 1]} : vector<16x49xf32> to vector<16x1xf32>
    %79 = vector.broadcast %78 : vector<16x1xf32> to vector<16x256xf32>
    %80 = arith.mulf %77, %79 : vector<16x256xf32>
    %81 = vector.extract_strided_slice %12 {offsets = [1, 0], sizes = [1, 256], strides = [1, 1]} : vector<7x256xf32> to vector<1x256xf32>
    %82 = vector.broadcast %81 : vector<1x256xf32> to vector<16x256xf32>
    %83 = arith.mulf %80, %82 : vector<16x256xf32>
    %84 = arith.addf %76, %83 : vector<16x256xf32>
    %c0_25 = arith.constant 0 : index
    %c95 = arith.constant 95 : index
    %85 = vector.load %arg20[%c0_25, %c95] : memref<16x512xf32, #tpu.memory_space<vmem>>, vector<16x256xf32>
    %86 = vector.extract_strided_slice %14 {offsets = [0, 9], sizes = [16, 1], strides = [1, 1]} : vector<16x49xf32> to vector<16x1xf32>
    %87 = vector.broadcast %86 : vector<16x1xf32> to vector<16x256xf32>
    %88 = arith.mulf %85, %87 : vector<16x256xf32>
    %89 = vector.extract_strided_slice %12 {offsets = [2, 0], sizes = [1, 256], strides = [1, 1]} : vector<7x256xf32> to vector<1x256xf32>
    %90 = vector.broadcast %89 : vector<1x256xf32> to vector<16x256xf32>
    %91 = arith.mulf %88, %90 : vector<16x256xf32>
    %92 = arith.addf %84, %91 : vector<16x256xf32>
    %c0_26 = arith.constant 0 : index
    %c96 = arith.constant 96 : index
    %93 = vector.load %arg20[%c0_26, %c96] : memref<16x512xf32, #tpu.memory_space<vmem>>, vector<16x256xf32>
    %94 = vector.extract_strided_slice %14 {offsets = [0, 10], sizes = [16, 1], strides = [1, 1]} : vector<16x49xf32> to vector<16x1xf32>
    %95 = vector.broadcast %94 : vector<16x1xf32> to vector<16x256xf32>
    %96 = arith.mulf %93, %95 : vector<16x256xf32>
    %97 = arith.addf %92, %96 : vector<16x256xf32>
    %c0_27 = arith.constant 0 : index
    %c97 = arith.constant 97 : index
    %98 = vector.load %arg20[%c0_27, %c97] : memref<16x512xf32, #tpu.memory_space<vmem>>, vector<16x256xf32>
    %99 = vector.extract_strided_slice %14 {offsets = [0, 11], sizes = [16, 1], strides = [1, 1]} : vector<16x49xf32> to vector<16x1xf32>
    %100 = vector.broadcast %99 : vector<16x1xf32> to vector<16x256xf32>
    %101 = arith.mulf %98, %100 : vector<16x256xf32>
    %102 = vector.extract_strided_slice %12 {offsets = [4, 0], sizes = [1, 256], strides = [1, 1]} : vector<7x256xf32> to vector<1x256xf32>
    %103 = vector.broadcast %102 : vector<1x256xf32> to vector<16x256xf32>
    %104 = arith.mulf %101, %103 : vector<16x256xf32>
    %105 = arith.addf %97, %104 : vector<16x256xf32>
    %c0_28 = arith.constant 0 : index
    %c98 = arith.constant 98 : index
    %106 = vector.load %arg20[%c0_28, %c98] : memref<16x512xf32, #tpu.memory_space<vmem>>, vector<16x256xf32>
    %107 = vector.extract_strided_slice %14 {offsets = [0, 12], sizes = [16, 1], strides = [1, 1]} : vector<16x49xf32> to vector<16x1xf32>
    %108 = vector.broadcast %107 : vector<16x1xf32> to vector<16x256xf32>
    %109 = arith.mulf %106, %108 : vector<16x256xf32>
    %110 = vector.extract_strided_slice %12 {offsets = [5, 0], sizes = [1, 256], strides = [1, 1]} : vector<7x256xf32> to vector<1x256xf32>
    %111 = vector.broadcast %110 : vector<1x256xf32> to vector<16x256xf32>
    %112 = arith.mulf %109, %111 : vector<16x256xf32>
    %113 = arith.addf %105, %112 : vector<16x256xf32>
    %c0_29 = arith.constant 0 : index
    %c99 = arith.constant 99 : index
    %114 = vector.load %arg20[%c0_29, %c99] : memref<16x512xf32, #tpu.memory_space<vmem>>, vector<16x256xf32>
    %115 = vector.extract_strided_slice %14 {offsets = [0, 13], sizes = [16, 1], strides = [1, 1]} : vector<16x49xf32> to vector<16x1xf32>
    %116 = vector.broadcast %115 : vector<16x1xf32> to vector<16x256xf32>
    %117 = arith.mulf %114, %116 : vector<16x256xf32>
    %118 = vector.extract_strided_slice %12 {offsets = [6, 0], sizes = [1, 256], strides = [1, 1]} : vector<7x256xf32> to vector<1x256xf32>
    %119 = vector.broadcast %118 : vector<1x256xf32> to vector<16x256xf32>
    %120 = arith.mulf %117, %119 : vector<16x256xf32>
    %121 = arith.addf %113, %120 : vector<16x256xf32>
    %c0_30 = arith.constant 0 : index
    %c109 = arith.constant 109 : index
    %122 = vector.load %arg20[%c0_30, %c109] : memref<16x512xf32, #tpu.memory_space<vmem>>, vector<16x256xf32>
    %123 = vector.extract_strided_slice %14 {offsets = [0, 14], sizes = [16, 1], strides = [1, 1]} : vector<16x49xf32> to vector<16x1xf32>
    %124 = vector.broadcast %123 : vector<16x1xf32> to vector<16x256xf32>
    %125 = arith.mulf %122, %124 : vector<16x256xf32>
    %126 = vector.extract_strided_slice %12 {offsets = [0, 0], sizes = [1, 256], strides = [1, 1]} : vector<7x256xf32> to vector<1x256xf32>
    %127 = vector.broadcast %126 : vector<1x256xf32> to vector<16x256xf32>
    %128 = arith.mulf %125, %127 : vector<16x256xf32>
    %129 = arith.addf %121, %128 : vector<16x256xf32>
    %c0_31 = arith.constant 0 : index
    %c110 = arith.constant 110 : index
    %130 = vector.load %arg20[%c0_31, %c110] : memref<16x512xf32, #tpu.memory_space<vmem>>, vector<16x256xf32>
    %131 = vector.extract_strided_slice %14 {offsets = [0, 15], sizes = [16, 1], strides = [1, 1]} : vector<16x49xf32> to vector<16x1xf32>
    %132 = vector.broadcast %131 : vector<16x1xf32> to vector<16x256xf32>
    %133 = arith.mulf %130, %132 : vector<16x256xf32>
    %134 = vector.extract_strided_slice %12 {offsets = [1, 0], sizes = [1, 256], strides = [1, 1]} : vector<7x256xf32> to vector<1x256xf32>
    %135 = vector.broadcast %134 : vector<1x256xf32> to vector<16x256xf32>
    %136 = arith.mulf %133, %135 : vector<16x256xf32>
    %137 = arith.addf %129, %136 : vector<16x256xf32>
    %c0_32 = arith.constant 0 : index
    %c111 = arith.constant 111 : index
    %138 = vector.load %arg20[%c0_32, %c111] : memref<16x512xf32, #tpu.memory_space<vmem>>, vector<16x256xf32>
    %139 = vector.extract_strided_slice %14 {offsets = [0, 16], sizes = [16, 1], strides = [1, 1]} : vector<16x49xf32> to vector<16x1xf32>
    %140 = vector.broadcast %139 : vector<16x1xf32> to vector<16x256xf32>
    %141 = arith.mulf %138, %140 : vector<16x256xf32>
    %142 = vector.extract_strided_slice %12 {offsets = [2, 0], sizes = [1, 256], strides = [1, 1]} : vector<7x256xf32> to vector<1x256xf32>
    %143 = vector.broadcast %142 : vector<1x256xf32> to vector<16x256xf32>
    %144 = arith.mulf %141, %143 : vector<16x256xf32>
    %145 = arith.addf %137, %144 : vector<16x256xf32>
    %c0_33 = arith.constant 0 : index
    %c112 = arith.constant 112 : index
    %146 = vector.load %arg20[%c0_33, %c112] : memref<16x512xf32, #tpu.memory_space<vmem>>, vector<16x256xf32>
    %147 = vector.extract_strided_slice %14 {offsets = [0, 17], sizes = [16, 1], strides = [1, 1]} : vector<16x49xf32> to vector<16x1xf32>
    %148 = vector.broadcast %147 : vector<16x1xf32> to vector<16x256xf32>
    %149 = arith.mulf %146, %148 : vector<16x256xf32>
    %150 = arith.addf %145, %149 : vector<16x256xf32>
    %c0_34 = arith.constant 0 : index
    %c113 = arith.constant 113 : index
    %151 = vector.load %arg20[%c0_34, %c113] : memref<16x512xf32, #tpu.memory_space<vmem>>, vector<16x256xf32>
    %152 = vector.extract_strided_slice %14 {offsets = [0, 18], sizes = [16, 1], strides = [1, 1]} : vector<16x49xf32> to vector<16x1xf32>
    %153 = vector.broadcast %152 : vector<16x1xf32> to vector<16x256xf32>
    %154 = arith.mulf %151, %153 : vector<16x256xf32>
    %155 = vector.extract_strided_slice %12 {offsets = [4, 0], sizes = [1, 256], strides = [1, 1]} : vector<7x256xf32> to vector<1x256xf32>
    %156 = vector.broadcast %155 : vector<1x256xf32> to vector<16x256xf32>
    %157 = arith.mulf %154, %156 : vector<16x256xf32>
    %158 = arith.addf %150, %157 : vector<16x256xf32>
    %c0_35 = arith.constant 0 : index
    %c114 = arith.constant 114 : index
    %159 = vector.load %arg20[%c0_35, %c114] : memref<16x512xf32, #tpu.memory_space<vmem>>, vector<16x256xf32>
    %160 = vector.extract_strided_slice %14 {offsets = [0, 19], sizes = [16, 1], strides = [1, 1]} : vector<16x49xf32> to vector<16x1xf32>
    %161 = vector.broadcast %160 : vector<16x1xf32> to vector<16x256xf32>
    %162 = arith.mulf %159, %161 : vector<16x256xf32>
    %163 = vector.extract_strided_slice %12 {offsets = [5, 0], sizes = [1, 256], strides = [1, 1]} : vector<7x256xf32> to vector<1x256xf32>
    %164 = vector.broadcast %163 : vector<1x256xf32> to vector<16x256xf32>
    %165 = arith.mulf %162, %164 : vector<16x256xf32>
    %166 = arith.addf %158, %165 : vector<16x256xf32>
    %c0_36 = arith.constant 0 : index
    %c115 = arith.constant 115 : index
    %167 = vector.load %arg20[%c0_36, %c115] : memref<16x512xf32, #tpu.memory_space<vmem>>, vector<16x256xf32>
    %168 = vector.extract_strided_slice %14 {offsets = [0, 20], sizes = [16, 1], strides = [1, 1]} : vector<16x49xf32> to vector<16x1xf32>
    %169 = vector.broadcast %168 : vector<16x1xf32> to vector<16x256xf32>
    %170 = arith.mulf %167, %169 : vector<16x256xf32>
    %171 = vector.extract_strided_slice %12 {offsets = [6, 0], sizes = [1, 256], strides = [1, 1]} : vector<7x256xf32> to vector<1x256xf32>
    %172 = vector.broadcast %171 : vector<1x256xf32> to vector<16x256xf32>
    %173 = arith.mulf %170, %172 : vector<16x256xf32>
    %174 = arith.addf %166, %173 : vector<16x256xf32>
    %c0_37 = arith.constant 0 : index
    %c125 = arith.constant 125 : index
    %175 = vector.load %arg20[%c0_37, %c125] : memref<16x512xf32, #tpu.memory_space<vmem>>, vector<16x256xf32>
    %176 = vector.extract_strided_slice %14 {offsets = [0, 21], sizes = [16, 1], strides = [1, 1]} : vector<16x49xf32> to vector<16x1xf32>
    %177 = vector.broadcast %176 : vector<16x1xf32> to vector<16x256xf32>
    %178 = arith.mulf %175, %177 : vector<16x256xf32>
    %179 = vector.extract_strided_slice %12 {offsets = [0, 0], sizes = [1, 256], strides = [1, 1]} : vector<7x256xf32> to vector<1x256xf32>
    %180 = vector.broadcast %179 : vector<1x256xf32> to vector<16x256xf32>
    %181 = arith.mulf %178, %180 : vector<16x256xf32>
    %182 = arith.addf %174, %181 : vector<16x256xf32>
    %c0_38 = arith.constant 0 : index
    %c126 = arith.constant 126 : index
    %183 = vector.load %arg20[%c0_38, %c126] : memref<16x512xf32, #tpu.memory_space<vmem>>, vector<16x256xf32>
    %184 = vector.extract_strided_slice %14 {offsets = [0, 22], sizes = [16, 1], strides = [1, 1]} : vector<16x49xf32> to vector<16x1xf32>
    %185 = vector.broadcast %184 : vector<16x1xf32> to vector<16x256xf32>
    %186 = arith.mulf %183, %185 : vector<16x256xf32>
    %187 = vector.extract_strided_slice %12 {offsets = [1, 0], sizes = [1, 256], strides = [1, 1]} : vector<7x256xf32> to vector<1x256xf32>
    %188 = vector.broadcast %187 : vector<1x256xf32> to vector<16x256xf32>
    %189 = arith.mulf %186, %188 : vector<16x256xf32>
    %190 = arith.addf %182, %189 : vector<16x256xf32>
    %c0_39 = arith.constant 0 : index
    %c127 = arith.constant 127 : index
    %191 = vector.load %arg20[%c0_39, %c127] : memref<16x512xf32, #tpu.memory_space<vmem>>, vector<16x256xf32>
    %192 = vector.extract_strided_slice %14 {offsets = [0, 23], sizes = [16, 1], strides = [1, 1]} : vector<16x49xf32> to vector<16x1xf32>
    %193 = vector.broadcast %192 : vector<16x1xf32> to vector<16x256xf32>
    %194 = arith.mulf %191, %193 : vector<16x256xf32>
    %195 = vector.extract_strided_slice %12 {offsets = [2, 0], sizes = [1, 256], strides = [1, 1]} : vector<7x256xf32> to vector<1x256xf32>
    %196 = vector.broadcast %195 : vector<1x256xf32> to vector<16x256xf32>
    %197 = arith.mulf %194, %196 : vector<16x256xf32>
    %198 = arith.addf %190, %197 : vector<16x256xf32>
    %c0_40 = arith.constant 0 : index
    %c128_41 = arith.constant 128 : index
    %199 = vector.load %arg20[%c0_40, %c128_41] : memref<16x512xf32, #tpu.memory_space<vmem>>, vector<16x256xf32>
    %200 = vector.extract_strided_slice %14 {offsets = [0, 24], sizes = [16, 1], strides = [1, 1]} : vector<16x49xf32> to vector<16x1xf32>
    %201 = vector.broadcast %200 : vector<16x1xf32> to vector<16x256xf32>
    %202 = arith.mulf %199, %201 : vector<16x256xf32>
    %203 = arith.addf %198, %202 : vector<16x256xf32>
    %c0_42 = arith.constant 0 : index
    %c129 = arith.constant 129 : index
    %204 = vector.load %arg20[%c0_42, %c129] : memref<16x512xf32, #tpu.memory_space<vmem>>, vector<16x256xf32>
    %205 = vector.extract_strided_slice %14 {offsets = [0, 25], sizes = [16, 1], strides = [1, 1]} : vector<16x49xf32> to vector<16x1xf32>
    %206 = vector.broadcast %205 : vector<16x1xf32> to vector<16x256xf32>
    %207 = arith.mulf %204, %206 : vector<16x256xf32>
    %208 = vector.extract_strided_slice %12 {offsets = [4, 0], sizes = [1, 256], strides = [1, 1]} : vector<7x256xf32> to vector<1x256xf32>
    %209 = vector.broadcast %208 : vector<1x256xf32> to vector<16x256xf32>
    %210 = arith.mulf %207, %209 : vector<16x256xf32>
    %211 = arith.addf %203, %210 : vector<16x256xf32>
    %c0_43 = arith.constant 0 : index
    %c130 = arith.constant 130 : index
    %212 = vector.load %arg20[%c0_43, %c130] : memref<16x512xf32, #tpu.memory_space<vmem>>, vector<16x256xf32>
    %213 = vector.extract_strided_slice %14 {offsets = [0, 26], sizes = [16, 1], strides = [1, 1]} : vector<16x49xf32> to vector<16x1xf32>
    %214 = vector.broadcast %213 : vector<16x1xf32> to vector<16x256xf32>
    %215 = arith.mulf %212, %214 : vector<16x256xf32>
    %216 = vector.extract_strided_slice %12 {offsets = [5, 0], sizes = [1, 256], strides = [1, 1]} : vector<7x256xf32> to vector<1x256xf32>
    %217 = vector.broadcast %216 : vector<1x256xf32> to vector<16x256xf32>
    %218 = arith.mulf %215, %217 : vector<16x256xf32>
    %219 = arith.addf %211, %218 : vector<16x256xf32>
    %c0_44 = arith.constant 0 : index
    %c131 = arith.constant 131 : index
    %220 = vector.load %arg20[%c0_44, %c131] : memref<16x512xf32, #tpu.memory_space<vmem>>, vector<16x256xf32>
    %221 = vector.extract_strided_slice %14 {offsets = [0, 27], sizes = [16, 1], strides = [1, 1]} : vector<16x49xf32> to vector<16x1xf32>
    %222 = vector.broadcast %221 : vector<16x1xf32> to vector<16x256xf32>
    %223 = arith.mulf %220, %222 : vector<16x256xf32>
    %224 = vector.extract_strided_slice %12 {offsets = [6, 0], sizes = [1, 256], strides = [1, 1]} : vector<7x256xf32> to vector<1x256xf32>
    %225 = vector.broadcast %224 : vector<1x256xf32> to vector<16x256xf32>
    %226 = arith.mulf %223, %225 : vector<16x256xf32>
    %227 = arith.addf %219, %226 : vector<16x256xf32>
    %c0_45 = arith.constant 0 : index
    %c141 = arith.constant 141 : index
    %228 = vector.load %arg20[%c0_45, %c141] : memref<16x512xf32, #tpu.memory_space<vmem>>, vector<16x256xf32>
    %229 = vector.extract_strided_slice %14 {offsets = [0, 28], sizes = [16, 1], strides = [1, 1]} : vector<16x49xf32> to vector<16x1xf32>
    %230 = vector.broadcast %229 : vector<16x1xf32> to vector<16x256xf32>
    %231 = arith.mulf %228, %230 : vector<16x256xf32>
    %232 = vector.extract_strided_slice %12 {offsets = [0, 0], sizes = [1, 256], strides = [1, 1]} : vector<7x256xf32> to vector<1x256xf32>
    %233 = vector.broadcast %232 : vector<1x256xf32> to vector<16x256xf32>
    %234 = arith.mulf %231, %233 : vector<16x256xf32>
    %235 = arith.addf %227, %234 : vector<16x256xf32>
    %c0_46 = arith.constant 0 : index
    %c142 = arith.constant 142 : index
    %236 = vector.load %arg20[%c0_46, %c142] : memref<16x512xf32, #tpu.memory_space<vmem>>, vector<16x256xf32>
    %237 = vector.extract_strided_slice %14 {offsets = [0, 29], sizes = [16, 1], strides = [1, 1]} : vector<16x49xf32> to vector<16x1xf32>
    %238 = vector.broadcast %237 : vector<16x1xf32> to vector<16x256xf32>
    %239 = arith.mulf %236, %238 : vector<16x256xf32>
    %240 = vector.extract_strided_slice %12 {offsets = [1, 0], sizes = [1, 256], strides = [1, 1]} : vector<7x256xf32> to vector<1x256xf32>
    %241 = vector.broadcast %240 : vector<1x256xf32> to vector<16x256xf32>
    %242 = arith.mulf %239, %241 : vector<16x256xf32>
    %243 = arith.addf %235, %242 : vector<16x256xf32>
    %c0_47 = arith.constant 0 : index
    %c143 = arith.constant 143 : index
    %244 = vector.load %arg20[%c0_47, %c143] : memref<16x512xf32, #tpu.memory_space<vmem>>, vector<16x256xf32>
    %245 = vector.extract_strided_slice %14 {offsets = [0, 30], sizes = [16, 1], strides = [1, 1]} : vector<16x49xf32> to vector<16x1xf32>
    %246 = vector.broadcast %245 : vector<16x1xf32> to vector<16x256xf32>
    %247 = arith.mulf %244, %246 : vector<16x256xf32>
    %248 = vector.extract_strided_slice %12 {offsets = [2, 0], sizes = [1, 256], strides = [1, 1]} : vector<7x256xf32> to vector<1x256xf32>
    %249 = vector.broadcast %248 : vector<1x256xf32> to vector<16x256xf32>
    %250 = arith.mulf %247, %249 : vector<16x256xf32>
    %251 = arith.addf %243, %250 : vector<16x256xf32>
    %c0_48 = arith.constant 0 : index
    %c144 = arith.constant 144 : index
    %252 = vector.load %arg20[%c0_48, %c144] : memref<16x512xf32, #tpu.memory_space<vmem>>, vector<16x256xf32>
    %253 = vector.extract_strided_slice %14 {offsets = [0, 31], sizes = [16, 1], strides = [1, 1]} : vector<16x49xf32> to vector<16x1xf32>
    %254 = vector.broadcast %253 : vector<16x1xf32> to vector<16x256xf32>
    %255 = arith.mulf %252, %254 : vector<16x256xf32>
    %256 = arith.addf %251, %255 : vector<16x256xf32>
    %c0_49 = arith.constant 0 : index
    %c145 = arith.constant 145 : index
    %257 = vector.load %arg20[%c0_49, %c145] : memref<16x512xf32, #tpu.memory_space<vmem>>, vector<16x256xf32>
    %258 = vector.extract_strided_slice %14 {offsets = [0, 32], sizes = [16, 1], strides = [1, 1]} : vector<16x49xf32> to vector<16x1xf32>
    %259 = vector.broadcast %258 : vector<16x1xf32> to vector<16x256xf32>
    %260 = arith.mulf %257, %259 : vector<16x256xf32>
    %261 = vector.extract_strided_slice %12 {offsets = [4, 0], sizes = [1, 256], strides = [1, 1]} : vector<7x256xf32> to vector<1x256xf32>
    %262 = vector.broadcast %261 : vector<1x256xf32> to vector<16x256xf32>
    %263 = arith.mulf %260, %262 : vector<16x256xf32>
    %264 = arith.addf %256, %263 : vector<16x256xf32>
    %c0_50 = arith.constant 0 : index
    %c146 = arith.constant 146 : index
    %265 = vector.load %arg20[%c0_50, %c146] : memref<16x512xf32, #tpu.memory_space<vmem>>, vector<16x256xf32>
    %266 = vector.extract_strided_slice %14 {offsets = [0, 33], sizes = [16, 1], strides = [1, 1]} : vector<16x49xf32> to vector<16x1xf32>
    %267 = vector.broadcast %266 : vector<16x1xf32> to vector<16x256xf32>
    %268 = arith.mulf %265, %267 : vector<16x256xf32>
    %269 = vector.extract_strided_slice %12 {offsets = [5, 0], sizes = [1, 256], strides = [1, 1]} : vector<7x256xf32> to vector<1x256xf32>
    %270 = vector.broadcast %269 : vector<1x256xf32> to vector<16x256xf32>
    %271 = arith.mulf %268, %270 : vector<16x256xf32>
    %272 = arith.addf %264, %271 : vector<16x256xf32>
    %c0_51 = arith.constant 0 : index
    %c147 = arith.constant 147 : index
    %273 = vector.load %arg20[%c0_51, %c147] : memref<16x512xf32, #tpu.memory_space<vmem>>, vector<16x256xf32>
    %274 = vector.extract_strided_slice %14 {offsets = [0, 34], sizes = [16, 1], strides = [1, 1]} : vector<16x49xf32> to vector<16x1xf32>
    %275 = vector.broadcast %274 : vector<16x1xf32> to vector<16x256xf32>
    %276 = arith.mulf %273, %275 : vector<16x256xf32>
    %277 = vector.extract_strided_slice %12 {offsets = [6, 0], sizes = [1, 256], strides = [1, 1]} : vector<7x256xf32> to vector<1x256xf32>
    %278 = vector.broadcast %277 : vector<1x256xf32> to vector<16x256xf32>
    %279 = arith.mulf %276, %278 : vector<16x256xf32>
    %280 = arith.addf %272, %279 : vector<16x256xf32>
    %c0_52 = arith.constant 0 : index
    %c157 = arith.constant 157 : index
    %281 = vector.load %arg20[%c0_52, %c157] : memref<16x512xf32, #tpu.memory_space<vmem>>, vector<16x256xf32>
    %282 = vector.extract_strided_slice %14 {offsets = [0, 35], sizes = [16, 1], strides = [1, 1]} : vector<16x49xf32> to vector<16x1xf32>
    %283 = vector.broadcast %282 : vector<16x1xf32> to vector<16x256xf32>
    %284 = arith.mulf %281, %283 : vector<16x256xf32>
    %285 = vector.extract_strided_slice %12 {offsets = [0, 0], sizes = [1, 256], strides = [1, 1]} : vector<7x256xf32> to vector<1x256xf32>
    %286 = vector.broadcast %285 : vector<1x256xf32> to vector<16x256xf32>
    %287 = arith.mulf %284, %286 : vector<16x256xf32>
    %288 = arith.addf %280, %287 : vector<16x256xf32>
    %c0_53 = arith.constant 0 : index
    %c158 = arith.constant 158 : index
    %289 = vector.load %arg20[%c0_53, %c158] : memref<16x512xf32, #tpu.memory_space<vmem>>, vector<16x256xf32>
    %290 = vector.extract_strided_slice %14 {offsets = [0, 36], sizes = [16, 1], strides = [1, 1]} : vector<16x49xf32> to vector<16x1xf32>
    %291 = vector.broadcast %290 : vector<16x1xf32> to vector<16x256xf32>
    %292 = arith.mulf %289, %291 : vector<16x256xf32>
    %293 = vector.extract_strided_slice %12 {offsets = [1, 0], sizes = [1, 256], strides = [1, 1]} : vector<7x256xf32> to vector<1x256xf32>
    %294 = vector.broadcast %293 : vector<1x256xf32> to vector<16x256xf32>
    %295 = arith.mulf %292, %294 : vector<16x256xf32>
    %296 = arith.addf %288, %295 : vector<16x256xf32>
    %c0_54 = arith.constant 0 : index
    %c159 = arith.constant 159 : index
    %297 = vector.load %arg20[%c0_54, %c159] : memref<16x512xf32, #tpu.memory_space<vmem>>, vector<16x256xf32>
    %298 = vector.extract_strided_slice %14 {offsets = [0, 37], sizes = [16, 1], strides = [1, 1]} : vector<16x49xf32> to vector<16x1xf32>
    %299 = vector.broadcast %298 : vector<16x1xf32> to vector<16x256xf32>
    %300 = arith.mulf %297, %299 : vector<16x256xf32>
    %301 = vector.extract_strided_slice %12 {offsets = [2, 0], sizes = [1, 256], strides = [1, 1]} : vector<7x256xf32> to vector<1x256xf32>
    %302 = vector.broadcast %301 : vector<1x256xf32> to vector<16x256xf32>
    %303 = arith.mulf %300, %302 : vector<16x256xf32>
    %304 = arith.addf %296, %303 : vector<16x256xf32>
    %c0_55 = arith.constant 0 : index
    %c160 = arith.constant 160 : index
    %305 = vector.load %arg20[%c0_55, %c160] : memref<16x512xf32, #tpu.memory_space<vmem>>, vector<16x256xf32>
    %306 = vector.extract_strided_slice %14 {offsets = [0, 38], sizes = [16, 1], strides = [1, 1]} : vector<16x49xf32> to vector<16x1xf32>
    %307 = vector.broadcast %306 : vector<16x1xf32> to vector<16x256xf32>
    %308 = arith.mulf %305, %307 : vector<16x256xf32>
    %309 = arith.addf %304, %308 : vector<16x256xf32>
    %c0_56 = arith.constant 0 : index
    %c161 = arith.constant 161 : index
    %310 = vector.load %arg20[%c0_56, %c161] : memref<16x512xf32, #tpu.memory_space<vmem>>, vector<16x256xf32>
    %311 = vector.extract_strided_slice %14 {offsets = [0, 39], sizes = [16, 1], strides = [1, 1]} : vector<16x49xf32> to vector<16x1xf32>
    %312 = vector.broadcast %311 : vector<16x1xf32> to vector<16x256xf32>
    %313 = arith.mulf %310, %312 : vector<16x256xf32>
    %314 = vector.extract_strided_slice %12 {offsets = [4, 0], sizes = [1, 256], strides = [1, 1]} : vector<7x256xf32> to vector<1x256xf32>
    %315 = vector.broadcast %314 : vector<1x256xf32> to vector<16x256xf32>
    %316 = arith.mulf %313, %315 : vector<16x256xf32>
    %317 = arith.addf %309, %316 : vector<16x256xf32>
    %c0_57 = arith.constant 0 : index
    %c162 = arith.constant 162 : index
    %318 = vector.load %arg20[%c0_57, %c162] : memref<16x512xf32, #tpu.memory_space<vmem>>, vector<16x256xf32>
    %319 = vector.extract_strided_slice %14 {offsets = [0, 40], sizes = [16, 1], strides = [1, 1]} : vector<16x49xf32> to vector<16x1xf32>
    %320 = vector.broadcast %319 : vector<16x1xf32> to vector<16x256xf32>
    %321 = arith.mulf %318, %320 : vector<16x256xf32>
    %322 = vector.extract_strided_slice %12 {offsets = [5, 0], sizes = [1, 256], strides = [1, 1]} : vector<7x256xf32> to vector<1x256xf32>
    %323 = vector.broadcast %322 : vector<1x256xf32> to vector<16x256xf32>
    %324 = arith.mulf %321, %323 : vector<16x256xf32>
    %325 = arith.addf %317, %324 : vector<16x256xf32>
    %c0_58 = arith.constant 0 : index
    %c163 = arith.constant 163 : index
    %326 = vector.load %arg20[%c0_58, %c163] : memref<16x512xf32, #tpu.memory_space<vmem>>, vector<16x256xf32>
    %327 = vector.extract_strided_slice %14 {offsets = [0, 41], sizes = [16, 1], strides = [1, 1]} : vector<16x49xf32> to vector<16x1xf32>
    %328 = vector.broadcast %327 : vector<16x1xf32> to vector<16x256xf32>
    %329 = arith.mulf %326, %328 : vector<16x256xf32>
    %330 = vector.extract_strided_slice %12 {offsets = [6, 0], sizes = [1, 256], strides = [1, 1]} : vector<7x256xf32> to vector<1x256xf32>
    %331 = vector.broadcast %330 : vector<1x256xf32> to vector<16x256xf32>
    %332 = arith.mulf %329, %331 : vector<16x256xf32>
    %333 = arith.addf %325, %332 : vector<16x256xf32>
    %c0_59 = arith.constant 0 : index
    %c173 = arith.constant 173 : index
    %334 = vector.load %arg20[%c0_59, %c173] : memref<16x512xf32, #tpu.memory_space<vmem>>, vector<16x256xf32>
    %335 = vector.extract_strided_slice %14 {offsets = [0, 42], sizes = [16, 1], strides = [1, 1]} : vector<16x49xf32> to vector<16x1xf32>
    %336 = vector.broadcast %335 : vector<16x1xf32> to vector<16x256xf32>
    %337 = arith.mulf %334, %336 : vector<16x256xf32>
    %338 = vector.extract_strided_slice %12 {offsets = [0, 0], sizes = [1, 256], strides = [1, 1]} : vector<7x256xf32> to vector<1x256xf32>
    %339 = vector.broadcast %338 : vector<1x256xf32> to vector<16x256xf32>
    %340 = arith.mulf %337, %339 : vector<16x256xf32>
    %341 = arith.addf %333, %340 : vector<16x256xf32>
    %c0_60 = arith.constant 0 : index
    %c174 = arith.constant 174 : index
    %342 = vector.load %arg20[%c0_60, %c174] : memref<16x512xf32, #tpu.memory_space<vmem>>, vector<16x256xf32>
    %343 = vector.extract_strided_slice %14 {offsets = [0, 43], sizes = [16, 1], strides = [1, 1]} : vector<16x49xf32> to vector<16x1xf32>
    %344 = vector.broadcast %343 : vector<16x1xf32> to vector<16x256xf32>
    %345 = arith.mulf %342, %344 : vector<16x256xf32>
    %346 = vector.extract_strided_slice %12 {offsets = [1, 0], sizes = [1, 256], strides = [1, 1]} : vector<7x256xf32> to vector<1x256xf32>
    %347 = vector.broadcast %346 : vector<1x256xf32> to vector<16x256xf32>
    %348 = arith.mulf %345, %347 : vector<16x256xf32>
    %349 = arith.addf %341, %348 : vector<16x256xf32>
    %c0_61 = arith.constant 0 : index
    %c175 = arith.constant 175 : index
    %350 = vector.load %arg20[%c0_61, %c175] : memref<16x512xf32, #tpu.memory_space<vmem>>, vector<16x256xf32>
    %351 = vector.extract_strided_slice %14 {offsets = [0, 44], sizes = [16, 1], strides = [1, 1]} : vector<16x49xf32> to vector<16x1xf32>
    %352 = vector.broadcast %351 : vector<16x1xf32> to vector<16x256xf32>
    %353 = arith.mulf %350, %352 : vector<16x256xf32>
    %354 = vector.extract_strided_slice %12 {offsets = [2, 0], sizes = [1, 256], strides = [1, 1]} : vector<7x256xf32> to vector<1x256xf32>
    %355 = vector.broadcast %354 : vector<1x256xf32> to vector<16x256xf32>
    %356 = arith.mulf %353, %355 : vector<16x256xf32>
    %357 = arith.addf %349, %356 : vector<16x256xf32>
    %c0_62 = arith.constant 0 : index
    %c176 = arith.constant 176 : index
    %358 = vector.load %arg20[%c0_62, %c176] : memref<16x512xf32, #tpu.memory_space<vmem>>, vector<16x256xf32>
    %359 = vector.extract_strided_slice %14 {offsets = [0, 45], sizes = [16, 1], strides = [1, 1]} : vector<16x49xf32> to vector<16x1xf32>
    %360 = vector.broadcast %359 : vector<16x1xf32> to vector<16x256xf32>
    %361 = arith.mulf %358, %360 : vector<16x256xf32>
    %362 = arith.addf %357, %361 : vector<16x256xf32>
    %c0_63 = arith.constant 0 : index
    %c177 = arith.constant 177 : index
    %363 = vector.load %arg20[%c0_63, %c177] : memref<16x512xf32, #tpu.memory_space<vmem>>, vector<16x256xf32>
    %364 = vector.extract_strided_slice %14 {offsets = [0, 46], sizes = [16, 1], strides = [1, 1]} : vector<16x49xf32> to vector<16x1xf32>
    %365 = vector.broadcast %364 : vector<16x1xf32> to vector<16x256xf32>
    %366 = arith.mulf %363, %365 : vector<16x256xf32>
    %367 = vector.extract_strided_slice %12 {offsets = [4, 0], sizes = [1, 256], strides = [1, 1]} : vector<7x256xf32> to vector<1x256xf32>
    %368 = vector.broadcast %367 : vector<1x256xf32> to vector<16x256xf32>
    %369 = arith.mulf %366, %368 : vector<16x256xf32>
    %370 = arith.addf %362, %369 : vector<16x256xf32>
    %c0_64 = arith.constant 0 : index
    %c178 = arith.constant 178 : index
    %371 = vector.load %arg20[%c0_64, %c178] : memref<16x512xf32, #tpu.memory_space<vmem>>, vector<16x256xf32>
    %372 = vector.extract_strided_slice %14 {offsets = [0, 47], sizes = [16, 1], strides = [1, 1]} : vector<16x49xf32> to vector<16x1xf32>
    %373 = vector.broadcast %372 : vector<16x1xf32> to vector<16x256xf32>
    %374 = arith.mulf %371, %373 : vector<16x256xf32>
    %375 = vector.extract_strided_slice %12 {offsets = [5, 0], sizes = [1, 256], strides = [1, 1]} : vector<7x256xf32> to vector<1x256xf32>
    %376 = vector.broadcast %375 : vector<1x256xf32> to vector<16x256xf32>
    %377 = arith.mulf %374, %376 : vector<16x256xf32>
    %378 = arith.addf %370, %377 : vector<16x256xf32>
    %c0_65 = arith.constant 0 : index
    %c179 = arith.constant 179 : index
    %379 = vector.load %arg20[%c0_65, %c179] : memref<16x512xf32, #tpu.memory_space<vmem>>, vector<16x256xf32>
    %380 = vector.extract_strided_slice %14 {offsets = [0, 48], sizes = [16, 1], strides = [1, 1]} : vector<16x49xf32> to vector<16x1xf32>
    %381 = vector.broadcast %380 : vector<16x1xf32> to vector<16x256xf32>
    %382 = arith.mulf %379, %381 : vector<16x256xf32>
    %383 = vector.extract_strided_slice %12 {offsets = [6, 0], sizes = [1, 256], strides = [1, 1]} : vector<7x256xf32> to vector<1x256xf32>
    %384 = vector.broadcast %383 : vector<1x256xf32> to vector<16x256xf32>
    %385 = arith.mulf %382, %384 : vector<16x256xf32>
    %386 = arith.addf %378, %385 : vector<16x256xf32>
    %c0_66 = arith.constant 0 : index
    %c0_67 = arith.constant 0 : index
    %387 = vector.load %arg5[%c0_66, %c0_67] : memref<64x16xf32, #tpu.memory_space<vmem>>, vector<64x16xf32>
    %cst_68 = arith.constant dense<0.000000e+00> : vector<64x256xf32>
    %388 = tpu.matmul %387, %386, %cst_68 {dimension_numbers = #tpu.dot_dimension_numbers<[1], [0], [0], [1], [0, 0, 1, 1], [], []>} : vector<64x16xf32>, vector<16x256xf32>, vector<64x256xf32> -> vector<64x256xf32>
    %c0_69 = arith.constant 0 : index
    %c0_70 = arith.constant 0 : index
    %389 = vector.load %arg6[%c0_69, %c0_70] : memref<64x1xf32, #tpu.memory_space<vmem>>, vector<64x1xf32>
    %390 = vector.broadcast %389 : vector<64x1xf32> to vector<64x256xf32>
    %391 = arith.addf %388, %390 : vector<64x256xf32>
    %392 = vector.extract_strided_slice %391 {offsets = [0, 0], sizes = [32, 256], strides = [1, 1]} : vector<64x256xf32> to vector<32x256xf32>
    %cst_71 = arith.constant 0.000000e+00 : f32
    %cst_72 = arith.constant 6.000000e+00 : f32
    %393 = vector.broadcast %cst_71 : f32 to vector<32x256xf32>
    %394 = arith.maximumf %393, %392 : vector<32x256xf32>
    %395 = vector.broadcast %cst_72 : f32 to vector<32x256xf32>
    %396 = arith.minimumf %395, %394 : vector<32x256xf32>
    %397 = vector.extract_strided_slice %391 {offsets = [32, 0], sizes = [32, 256], strides = [1, 1]} : vector<64x256xf32> to vector<32x256xf32>
    %398 = arith.mulf %396, %397 : vector<32x256xf32>
    %c0_73 = arith.constant 0 : index
    %c0_74 = arith.constant 0 : index
    %399 = vector.load %arg7[%c0_73, %c0_74] : memref<16x32xf32, #tpu.memory_space<vmem>>, vector<16x32xf32>
    %cst_75 = arith.constant dense<0.000000e+00> : vector<16x256xf32>
    %400 = tpu.matmul %399, %398, %cst_75 {dimension_numbers = #tpu.dot_dimension_numbers<[1], [0], [0], [1], [0, 0, 1, 1], [], []>} : vector<16x32xf32>, vector<32x256xf32>, vector<16x256xf32> -> vector<16x256xf32>
    %c0_76 = arith.constant 0 : index
    %c0_77 = arith.constant 0 : index
    %401 = vector.load %arg8[%c0_76, %c0_77] : memref<16x1xf32, #tpu.memory_space<vmem>>, vector<16x1xf32>
    %402 = vector.broadcast %401 : vector<16x1xf32> to vector<16x256xf32>
    %403 = arith.addf %400, %402 : vector<16x256xf32>
    %c0_78 = arith.constant 0 : index
    %c0_79 = arith.constant 0 : index
    %404 = vector.load %arg10[%c0_78, %c0_79] : memref<16x1xf32, #tpu.memory_space<vmem>>, vector<16x1xf32>
    %c0_80 = arith.constant 0 : index
    %c128_81 = arith.constant 128 : index
    %405 = vector.load %arg20[%c0_80, %c128_81] : memref<16x512xf32, #tpu.memory_space<vmem>>, vector<16x256xf32>
    tpu.vector_store %arg20[%c0_80, %c128_81], %403 {strides = array<i32>} : memref<16x512xf32, #tpu.memory_space<vmem>>, vector<16x256xf32>,
    %c0_82 = arith.constant 0 : index
    %c0_83 = arith.constant 0 : index
    %406 = vector.load %arg9[%c0_82, %c0_83] : memref<16x49xf32, #tpu.memory_space<vmem>>, vector<16x49xf32>
    %407 = vector.shape_cast %404 : vector<16x1xf32> to vector<16x1xf32>
    %408 = vector.broadcast %407 : vector<16x1xf32> to vector<16x256xf32>
    %c0_84 = arith.constant 0 : index
    %c77_85 = arith.constant 77 : index
    %409 = vector.load %arg20[%c0_84, %c77_85] : memref<16x512xf32, #tpu.memory_space<vmem>>, vector<16x256xf32>
    %410 = vector.extract_strided_slice %406 {offsets = [0, 0], sizes = [16, 1], strides = [1, 1]} : vector<16x49xf32> to vector<16x1xf32>
    %411 = vector.broadcast %410 : vector<16x1xf32> to vector<16x256xf32>
    %412 = arith.mulf %409, %411 : vector<16x256xf32>
    %413 = vector.extract_strided_slice %12 {offsets = [0, 0], sizes = [1, 256], strides = [1, 1]} : vector<7x256xf32> to vector<1x256xf32>
    %414 = vector.broadcast %413 : vector<1x256xf32> to vector<16x256xf32>
    %415 = arith.mulf %412, %414 : vector<16x256xf32>
    %416 = arith.addf %408, %415 : vector<16x256xf32>
    %c0_86 = arith.constant 0 : index
    %c78_87 = arith.constant 78 : index
    %417 = vector.load %arg20[%c0_86, %c78_87] : memref<16x512xf32, #tpu.memory_space<vmem>>, vector<16x256xf32>
    %418 = vector.extract_strided_slice %406 {offsets = [0, 1], sizes = [16, 1], strides = [1, 1]} : vector<16x49xf32> to vector<16x1xf32>
    %419 = vector.broadcast %418 : vector<16x1xf32> to vector<16x256xf32>
    %420 = arith.mulf %417, %419 : vector<16x256xf32>
    %421 = vector.extract_strided_slice %12 {offsets = [1, 0], sizes = [1, 256], strides = [1, 1]} : vector<7x256xf32> to vector<1x256xf32>
    %422 = vector.broadcast %421 : vector<1x256xf32> to vector<16x256xf32>
    %423 = arith.mulf %420, %422 : vector<16x256xf32>
    %424 = arith.addf %416, %423 : vector<16x256xf32>
    %c0_88 = arith.constant 0 : index
    %c79_89 = arith.constant 79 : index
    %425 = vector.load %arg20[%c0_88, %c79_89] : memref<16x512xf32, #tpu.memory_space<vmem>>, vector<16x256xf32>
    %426 = vector.extract_strided_slice %406 {offsets = [0, 2], sizes = [16, 1], strides = [1, 1]} : vector<16x49xf32> to vector<16x1xf32>
    %427 = vector.broadcast %426 : vector<16x1xf32> to vector<16x256xf32>
    %428 = arith.mulf %425, %427 : vector<16x256xf32>
    %429 = vector.extract_strided_slice %12 {offsets = [2, 0], sizes = [1, 256], strides = [1, 1]} : vector<7x256xf32> to vector<1x256xf32>
    %430 = vector.broadcast %429 : vector<1x256xf32> to vector<16x256xf32>
    %431 = arith.mulf %428, %430 : vector<16x256xf32>
    %432 = arith.addf %424, %431 : vector<16x256xf32>
    %c0_90 = arith.constant 0 : index
    %c80_91 = arith.constant 80 : index
    %433 = vector.load %arg20[%c0_90, %c80_91] : memref<16x512xf32, #tpu.memory_space<vmem>>, vector<16x256xf32>
    %434 = vector.extract_strided_slice %406 {offsets = [0, 3], sizes = [16, 1], strides = [1, 1]} : vector<16x49xf32> to vector<16x1xf32>
    %435 = vector.broadcast %434 : vector<16x1xf32> to vector<16x256xf32>
    %436 = arith.mulf %433, %435 : vector<16x256xf32>
    %437 = arith.addf %432, %436 : vector<16x256xf32>
    %c0_92 = arith.constant 0 : index
    %c81_93 = arith.constant 81 : index
    %438 = vector.load %arg20[%c0_92, %c81_93] : memref<16x512xf32, #tpu.memory_space<vmem>>, vector<16x256xf32>
    %439 = vector.extract_strided_slice %406 {offsets = [0, 4], sizes = [16, 1], strides = [1, 1]} : vector<16x49xf32> to vector<16x1xf32>
    %440 = vector.broadcast %439 : vector<16x1xf32> to vector<16x256xf32>
    %441 = arith.mulf %438, %440 : vector<16x256xf32>
    %442 = vector.extract_strided_slice %12 {offsets = [4, 0], sizes = [1, 256], strides = [1, 1]} : vector<7x256xf32> to vector<1x256xf32>
    %443 = vector.broadcast %442 : vector<1x256xf32> to vector<16x256xf32>
    %444 = arith.mulf %441, %443 : vector<16x256xf32>
    %445 = arith.addf %437, %444 : vector<16x256xf32>
    %c0_94 = arith.constant 0 : index
    %c82_95 = arith.constant 82 : index
    %446 = vector.load %arg20[%c0_94, %c82_95] : memref<16x512xf32, #tpu.memory_space<vmem>>, vector<16x256xf32>
    %447 = vector.extract_strided_slice %406 {offsets = [0, 5], sizes = [16, 1], strides = [1, 1]} : vector<16x49xf32> to vector<16x1xf32>
    %448 = vector.broadcast %447 : vector<16x1xf32> to vector<16x256xf32>
    %449 = arith.mulf %446, %448 : vector<16x256xf32>
    %450 = vector.extract_strided_slice %12 {offsets = [5, 0], sizes = [1, 256], strides = [1, 1]} : vector<7x256xf32> to vector<1x256xf32>
    %451 = vector.broadcast %450 : vector<1x256xf32> to vector<16x256xf32>
    %452 = arith.mulf %449, %451 : vector<16x256xf32>
    %453 = arith.addf %445, %452 : vector<16x256xf32>
    %c0_96 = arith.constant 0 : index
    %c83_97 = arith.constant 83 : index
    %454 = vector.load %arg20[%c0_96, %c83_97] : memref<16x512xf32, #tpu.memory_space<vmem>>, vector<16x256xf32>
    %455 = vector.extract_strided_slice %406 {offsets = [0, 6], sizes = [16, 1], strides = [1, 1]} : vector<16x49xf32> to vector<16x1xf32>
    %456 = vector.broadcast %455 : vector<16x1xf32> to vector<16x256xf32>
    %457 = arith.mulf %454, %456 : vector<16x256xf32>
    %458 = vector.extract_strided_slice %12 {offsets = [6, 0], sizes = [1, 256], strides = [1, 1]} : vector<7x256xf32> to vector<1x256xf32>
    %459 = vector.broadcast %458 : vector<1x256xf32> to vector<16x256xf32>
    %460 = arith.mulf %457, %459 : vector<16x256xf32>
    %461 = arith.addf %453, %460 : vector<16x256xf32>
    %c0_98 = arith.constant 0 : index
    %c93_99 = arith.constant 93 : index
    %462 = vector.load %arg20[%c0_98, %c93_99] : memref<16x512xf32, #tpu.memory_space<vmem>>, vector<16x256xf32>
    %463 = vector.extract_strided_slice %406 {offsets = [0, 7], sizes = [16, 1], strides = [1, 1]} : vector<16x49xf32> to vector<16x1xf32>
    %464 = vector.broadcast %463 : vector<16x1xf32> to vector<16x256xf32>
    %465 = arith.mulf %462, %464 : vector<16x256xf32>
    %466 = vector.extract_strided_slice %12 {offsets = [0, 0], sizes = [1, 256], strides = [1, 1]} : vector<7x256xf32> to vector<1x256xf32>
    %467 = vector.broadcast %466 : vector<1x256xf32> to vector<16x256xf32>
    %468 = arith.mulf %465, %467 : vector<16x256xf32>
    %469 = arith.addf %461, %468 : vector<16x256xf32>
    %c0_100 = arith.constant 0 : index
    %c94_101 = arith.constant 94 : index
    %470 = vector.load %arg20[%c0_100, %c94_101] : memref<16x512xf32, #tpu.memory_space<vmem>>, vector<16x256xf32>
    %471 = vector.extract_strided_slice %406 {offsets = [0, 8], sizes = [16, 1], strides = [1, 1]} : vector<16x49xf32> to vector<16x1xf32>
    %472 = vector.broadcast %471 : vector<16x1xf32> to vector<16x256xf32>
    %473 = arith.mulf %470, %472 : vector<16x256xf32>
    %474 = vector.extract_strided_slice %12 {offsets = [1, 0], sizes = [1, 256], strides = [1, 1]} : vector<7x256xf32> to vector<1x256xf32>
    %475 = vector.broadcast %474 : vector<1x256xf32> to vector<16x256xf32>
    %476 = arith.mulf %473, %475 : vector<16x256xf32>
    %477 = arith.addf %469, %476 : vector<16x256xf32>
    %c0_102 = arith.constant 0 : index
    %c95_103 = arith.constant 95 : index
    %478 = vector.load %arg20[%c0_102, %c95_103] : memref<16x512xf32, #tpu.memory_space<vmem>>, vector<16x256xf32>
    %479 = vector.extract_strided_slice %406 {offsets = [0, 9], sizes = [16, 1], strides = [1, 1]} : vector<16x49xf32> to vector<16x1xf32>
    %480 = vector.broadcast %479 : vector<16x1xf32> to vector<16x256xf32>
    %481 = arith.mulf %478, %480 : vector<16x256xf32>
    %482 = vector.extract_strided_slice %12 {offsets = [2, 0], sizes = [1, 256], strides = [1, 1]} : vector<7x256xf32> to vector<1x256xf32>
    %483 = vector.broadcast %482 : vector<1x256xf32> to vector<16x256xf32>
    %484 = arith.mulf %481, %483 : vector<16x256xf32>
    %485 = arith.addf %477, %484 : vector<16x256xf32>
    %c0_104 = arith.constant 0 : index
    %c96_105 = arith.constant 96 : index
    %486 = vector.load %arg20[%c0_104, %c96_105] : memref<16x512xf32, #tpu.memory_space<vmem>>, vector<16x256xf32>
    %487 = vector.extract_strided_slice %406 {offsets = [0, 10], sizes = [16, 1], strides = [1, 1]} : vector<16x49xf32> to vector<16x1xf32>
    %488 = vector.broadcast %487 : vector<16x1xf32> to vector<16x256xf32>
    %489 = arith.mulf %486, %488 : vector<16x256xf32>
    %490 = arith.addf %485, %489 : vector<16x256xf32>
    %c0_106 = arith.constant 0 : index
    %c97_107 = arith.constant 97 : index
    %491 = vector.load %arg20[%c0_106, %c97_107] : memref<16x512xf32, #tpu.memory_space<vmem>>, vector<16x256xf32>
    %492 = vector.extract_strided_slice %406 {offsets = [0, 11], sizes = [16, 1], strides = [1, 1]} : vector<16x49xf32> to vector<16x1xf32>
    %493 = vector.broadcast %492 : vector<16x1xf32> to vector<16x256xf32>
    %494 = arith.mulf %491, %493 : vector<16x256xf32>
    %495 = vector.extract_strided_slice %12 {offsets = [4, 0], sizes = [1, 256], strides = [1, 1]} : vector<7x256xf32> to vector<1x256xf32>
    %496 = vector.broadcast %495 : vector<1x256xf32> to vector<16x256xf32>
    %497 = arith.mulf %494, %496 : vector<16x256xf32>
    %498 = arith.addf %490, %497 : vector<16x256xf32>
    %c0_108 = arith.constant 0 : index
    %c98_109 = arith.constant 98 : index
    %499 = vector.load %arg20[%c0_108, %c98_109] : memref<16x512xf32, #tpu.memory_space<vmem>>, vector<16x256xf32>
    %500 = vector.extract_strided_slice %406 {offsets = [0, 12], sizes = [16, 1], strides = [1, 1]} : vector<16x49xf32> to vector<16x1xf32>
    %501 = vector.broadcast %500 : vector<16x1xf32> to vector<16x256xf32>
    %502 = arith.mulf %499, %501 : vector<16x256xf32>
    %503 = vector.extract_strided_slice %12 {offsets = [5, 0], sizes = [1, 256], strides = [1, 1]} : vector<7x256xf32> to vector<1x256xf32>
    %504 = vector.broadcast %503 : vector<1x256xf32> to vector<16x256xf32>
    %505 = arith.mulf %502, %504 : vector<16x256xf32>
    %506 = arith.addf %498, %505 : vector<16x256xf32>
    %c0_110 = arith.constant 0 : index
    %c99_111 = arith.constant 99 : index
    %507 = vector.load %arg20[%c0_110, %c99_111] : memref<16x512xf32, #tpu.memory_space<vmem>>, vector<16x256xf32>
    %508 = vector.extract_strided_slice %406 {offsets = [0, 13], sizes = [16, 1], strides = [1, 1]} : vector<16x49xf32> to vector<16x1xf32>
    %509 = vector.broadcast %508 : vector<16x1xf32> to vector<16x256xf32>
    %510 = arith.mulf %507, %509 : vector<16x256xf32>
    %511 = vector.extract_strided_slice %12 {offsets = [6, 0], sizes = [1, 256], strides = [1, 1]} : vector<7x256xf32> to vector<1x256xf32>
    %512 = vector.broadcast %511 : vector<1x256xf32> to vector<16x256xf32>
    %513 = arith.mulf %510, %512 : vector<16x256xf32>
    %514 = arith.addf %506, %513 : vector<16x256xf32>
    %c0_112 = arith.constant 0 : index
    %c109_113 = arith.constant 109 : index
    %515 = vector.load %arg20[%c0_112, %c109_113] : memref<16x512xf32, #tpu.memory_space<vmem>>, vector<16x256xf32>
    %516 = vector.extract_strided_slice %406 {offsets = [0, 14], sizes = [16, 1], strides = [1, 1]} : vector<16x49xf32> to vector<16x1xf32>
    %517 = vector.broadcast %516 : vector<16x1xf32> to vector<16x256xf32>
    %518 = arith.mulf %515, %517 : vector<16x256xf32>
    %519 = vector.extract_strided_slice %12 {offsets = [0, 0], sizes = [1, 256], strides = [1, 1]} : vector<7x256xf32> to vector<1x256xf32>
    %520 = vector.broadcast %519 : vector<1x256xf32> to vector<16x256xf32>
    %521 = arith.mulf %518, %520 : vector<16x256xf32>
    %522 = arith.addf %514, %521 : vector<16x256xf32>
    %c0_114 = arith.constant 0 : index
    %c110_115 = arith.constant 110 : index
    %523 = vector.load %arg20[%c0_114, %c110_115] : memref<16x512xf32, #tpu.memory_space<vmem>>, vector<16x256xf32>
    %524 = vector.extract_strided_slice %406 {offsets = [0, 15], sizes = [16, 1], strides = [1, 1]} : vector<16x49xf32> to vector<16x1xf32>
    %525 = vector.broadcast %524 : vector<16x1xf32> to vector<16x256xf32>
    %526 = arith.mulf %523, %525 : vector<16x256xf32>
    %527 = vector.extract_strided_slice %12 {offsets = [1, 0], sizes = [1, 256], strides = [1, 1]} : vector<7x256xf32> to vector<1x256xf32>
    %528 = vector.broadcast %527 : vector<1x256xf32> to vector<16x256xf32>
    %529 = arith.mulf %526, %528 : vector<16x256xf32>
    %530 = arith.addf %522, %529 : vector<16x256xf32>
    %c0_116 = arith.constant 0 : index
    %c111_117 = arith.constant 111 : index
    %531 = vector.load %arg20[%c0_116, %c111_117] : memref<16x512xf32, #tpu.memory_space<vmem>>, vector<16x256xf32>
    %532 = vector.extract_strided_slice %406 {offsets = [0, 16], sizes = [16, 1], strides = [1, 1]} : vector<16x49xf32> to vector<16x1xf32>
    %533 = vector.broadcast %532 : vector<16x1xf32> to vector<16x256xf32>
    %534 = arith.mulf %531, %533 : vector<16x256xf32>
    %535 = vector.extract_strided_slice %12 {offsets = [2, 0], sizes = [1, 256], strides = [1, 1]} : vector<7x256xf32> to vector<1x256xf32>
    %536 = vector.broadcast %535 : vector<1x256xf32> to vector<16x256xf32>
    %537 = arith.mulf %534, %536 : vector<16x256xf32>
    %538 = arith.addf %530, %537 : vector<16x256xf32>
    %c0_118 = arith.constant 0 : index
    %c112_119 = arith.constant 112 : index
    %539 = vector.load %arg20[%c0_118, %c112_119] : memref<16x512xf32, #tpu.memory_space<vmem>>, vector<16x256xf32>
    %540 = vector.extract_strided_slice %406 {offsets = [0, 17], sizes = [16, 1], strides = [1, 1]} : vector<16x49xf32> to vector<16x1xf32>
    %541 = vector.broadcast %540 : vector<16x1xf32> to vector<16x256xf32>
    %542 = arith.mulf %539, %541 : vector<16x256xf32>
    %543 = arith.addf %538, %542 : vector<16x256xf32>
    %c0_120 = arith.constant 0 : index
    %c113_121 = arith.constant 113 : index
    %544 = vector.load %arg20[%c0_120, %c113_121] : memref<16x512xf32, #tpu.memory_space<vmem>>, vector<16x256xf32>
    %545 = vector.extract_strided_slice %406 {offsets = [0, 18], sizes = [16, 1], strides = [1, 1]} : vector<16x49xf32> to vector<16x1xf32>
    %546 = vector.broadcast %545 : vector<16x1xf32> to vector<16x256xf32>
    %547 = arith.mulf %544, %546 : vector<16x256xf32>
    %548 = vector.extract_strided_slice %12 {offsets = [4, 0], sizes = [1, 256], strides = [1, 1]} : vector<7x256xf32> to vector<1x256xf32>
    %549 = vector.broadcast %548 : vector<1x256xf32> to vector<16x256xf32>
    %550 = arith.mulf %547, %549 : vector<16x256xf32>
    %551 = arith.addf %543, %550 : vector<16x256xf32>
    %c0_122 = arith.constant 0 : index
    %c114_123 = arith.constant 114 : index
    %552 = vector.load %arg20[%c0_122, %c114_123] : memref<16x512xf32, #tpu.memory_space<vmem>>, vector<16x256xf32>
    %553 = vector.extract_strided_slice %406 {offsets = [0, 19], sizes = [16, 1], strides = [1, 1]} : vector<16x49xf32> to vector<16x1xf32>
    %554 = vector.broadcast %553 : vector<16x1xf32> to vector<16x256xf32>
    %555 = arith.mulf %552, %554 : vector<16x256xf32>
    %556 = vector.extract_strided_slice %12 {offsets = [5, 0], sizes = [1, 256], strides = [1, 1]} : vector<7x256xf32> to vector<1x256xf32>
    %557 = vector.broadcast %556 : vector<1x256xf32> to vector<16x256xf32>
    %558 = arith.mulf %555, %557 : vector<16x256xf32>
    %559 = arith.addf %551, %558 : vector<16x256xf32>
    %c0_124 = arith.constant 0 : index
    %c115_125 = arith.constant 115 : index
    %560 = vector.load %arg20[%c0_124, %c115_125] : memref<16x512xf32, #tpu.memory_space<vmem>>, vector<16x256xf32>
    %561 = vector.extract_strided_slice %406 {offsets = [0, 20], sizes = [16, 1], strides = [1, 1]} : vector<16x49xf32> to vector<16x1xf32>
    %562 = vector.broadcast %561 : vector<16x1xf32> to vector<16x256xf32>
    %563 = arith.mulf %560, %562 : vector<16x256xf32>
    %564 = vector.extract_strided_slice %12 {offsets = [6, 0], sizes = [1, 256], strides = [1, 1]} : vector<7x256xf32> to vector<1x256xf32>
    %565 = vector.broadcast %564 : vector<1x256xf32> to vector<16x256xf32>
    %566 = arith.mulf %563, %565 : vector<16x256xf32>
    %567 = arith.addf %559, %566 : vector<16x256xf32>
    %c0_126 = arith.constant 0 : index
    %c125_127 = arith.constant 125 : index
    %568 = vector.load %arg20[%c0_126, %c125_127] : memref<16x512xf32, #tpu.memory_space<vmem>>, vector<16x256xf32>
    %569 = vector.extract_strided_slice %406 {offsets = [0, 21], sizes = [16, 1], strides = [1, 1]} : vector<16x49xf32> to vector<16x1xf32>
    %570 = vector.broadcast %569 : vector<16x1xf32> to vector<16x256xf32>
    %571 = arith.mulf %568, %570 : vector<16x256xf32>
    %572 = vector.extract_strided_slice %12 {offsets = [0, 0], sizes = [1, 256], strides = [1, 1]} : vector<7x256xf32> to vector<1x256xf32>
    %573 = vector.broadcast %572 : vector<1x256xf32> to vector<16x256xf32>
    %574 = arith.mulf %571, %573 : vector<16x256xf32>
    %575 = arith.addf %567, %574 : vector<16x256xf32>
    %c0_128 = arith.constant 0 : index
    %c126_129 = arith.constant 126 : index
    %576 = vector.load %arg20[%c0_128, %c126_129] : memref<16x512xf32, #tpu.memory_space<vmem>>, vector<16x256xf32>
    %577 = vector.extract_strided_slice %406 {offsets = [0, 22], sizes = [16, 1], strides = [1, 1]} : vector<16x49xf32> to vector<16x1xf32>
    %578 = vector.broadcast %577 : vector<16x1xf32> to vector<16x256xf32>
    %579 = arith.mulf %576, %578 : vector<16x256xf32>
    %580 = vector.extract_strided_slice %12 {offsets = [1, 0], sizes = [1, 256], strides = [1, 1]} : vector<7x256xf32> to vector<1x256xf32>
    %581 = vector.broadcast %580 : vector<1x256xf32> to vector<16x256xf32>
    %582 = arith.mulf %579, %581 : vector<16x256xf32>
    %583 = arith.addf %575, %582 : vector<16x256xf32>
    %c0_130 = arith.constant 0 : index
    %c127_131 = arith.constant 127 : index
    %584 = vector.load %arg20[%c0_130, %c127_131] : memref<16x512xf32, #tpu.memory_space<vmem>>, vector<16x256xf32>
    %585 = vector.extract_strided_slice %406 {offsets = [0, 23], sizes = [16, 1], strides = [1, 1]} : vector<16x49xf32> to vector<16x1xf32>
    %586 = vector.broadcast %585 : vector<16x1xf32> to vector<16x256xf32>
    %587 = arith.mulf %584, %586 : vector<16x256xf32>
    %588 = vector.extract_strided_slice %12 {offsets = [2, 0], sizes = [1, 256], strides = [1, 1]} : vector<7x256xf32> to vector<1x256xf32>
    %589 = vector.broadcast %588 : vector<1x256xf32> to vector<16x256xf32>
    %590 = arith.mulf %587, %589 : vector<16x256xf32>
    %591 = arith.addf %583, %590 : vector<16x256xf32>
    %c0_132 = arith.constant 0 : index
    %c128_133 = arith.constant 128 : index
    %592 = vector.load %arg20[%c0_132, %c128_133] : memref<16x512xf32, #tpu.memory_space<vmem>>, vector<16x256xf32>
    %593 = vector.extract_strided_slice %406 {offsets = [0, 24], sizes = [16, 1], strides = [1, 1]} : vector<16x49xf32> to vector<16x1xf32>
    %594 = vector.broadcast %593 : vector<16x1xf32> to vector<16x256xf32>
    %595 = arith.mulf %592, %594 : vector<16x256xf32>
    %596 = arith.addf %591, %595 : vector<16x256xf32>
    %c0_134 = arith.constant 0 : index
    %c129_135 = arith.constant 129 : index
    %597 = vector.load %arg20[%c0_134, %c129_135] : memref<16x512xf32, #tpu.memory_space<vmem>>, vector<16x256xf32>
    %598 = vector.extract_strided_slice %406 {offsets = [0, 25], sizes = [16, 1], strides = [1, 1]} : vector<16x49xf32> to vector<16x1xf32>
    %599 = vector.broadcast %598 : vector<16x1xf32> to vector<16x256xf32>
    %600 = arith.mulf %597, %599 : vector<16x256xf32>
    %601 = vector.extract_strided_slice %12 {offsets = [4, 0], sizes = [1, 256], strides = [1, 1]} : vector<7x256xf32> to vector<1x256xf32>
    %602 = vector.broadcast %601 : vector<1x256xf32> to vector<16x256xf32>
    %603 = arith.mulf %600, %602 : vector<16x256xf32>
    %604 = arith.addf %596, %603 : vector<16x256xf32>
    %c0_136 = arith.constant 0 : index
    %c130_137 = arith.constant 130 : index
    %605 = vector.load %arg20[%c0_136, %c130_137] : memref<16x512xf32, #tpu.memory_space<vmem>>, vector<16x256xf32>
    %606 = vector.extract_strided_slice %406 {offsets = [0, 26], sizes = [16, 1], strides = [1, 1]} : vector<16x49xf32> to vector<16x1xf32>
    %607 = vector.broadcast %606 : vector<16x1xf32> to vector<16x256xf32>
    %608 = arith.mulf %605, %607 : vector<16x256xf32>
    %609 = vector.extract_strided_slice %12 {offsets = [5, 0], sizes = [1, 256], strides = [1, 1]} : vector<7x256xf32> to vector<1x256xf32>
    %610 = vector.broadcast %609 : vector<1x256xf32> to vector<16x256xf32>
    %611 = arith.mulf %608, %610 : vector<16x256xf32>
    %612 = arith.addf %604, %611 : vector<16x256xf32>
    %c0_138 = arith.constant 0 : index
    %c131_139 = arith.constant 131 : index
    %613 = vector.load %arg20[%c0_138, %c131_139] : memref<16x512xf32, #tpu.memory_space<vmem>>, vector<16x256xf32>
    %614 = vector.extract_strided_slice %406 {offsets = [0, 27], sizes = [16, 1], strides = [1, 1]} : vector<16x49xf32> to vector<16x1xf32>
    %615 = vector.broadcast %614 : vector<16x1xf32> to vector<16x256xf32>
    %616 = arith.mulf %613, %615 : vector<16x256xf32>
    %617 = vector.extract_strided_slice %12 {offsets = [6, 0], sizes = [1, 256], strides = [1, 1]} : vector<7x256xf32> to vector<1x256xf32>
    %618 = vector.broadcast %617 : vector<1x256xf32> to vector<16x256xf32>
    %619 = arith.mulf %616, %618 : vector<16x256xf32>
    %620 = arith.addf %612, %619 : vector<16x256xf32>
    %c0_140 = arith.constant 0 : index
    %c141_141 = arith.constant 141 : index
    %621 = vector.load %arg20[%c0_140, %c141_141] : memref<16x512xf32, #tpu.memory_space<vmem>>, vector<16x256xf32>
    %622 = vector.extract_strided_slice %406 {offsets = [0, 28], sizes = [16, 1], strides = [1, 1]} : vector<16x49xf32> to vector<16x1xf32>
    %623 = vector.broadcast %622 : vector<16x1xf32> to vector<16x256xf32>
    %624 = arith.mulf %621, %623 : vector<16x256xf32>
    %625 = vector.extract_strided_slice %12 {offsets = [0, 0], sizes = [1, 256], strides = [1, 1]} : vector<7x256xf32> to vector<1x256xf32>
    %626 = vector.broadcast %625 : vector<1x256xf32> to vector<16x256xf32>
    %627 = arith.mulf %624, %626 : vector<16x256xf32>
    %628 = arith.addf %620, %627 : vector<16x256xf32>
    %c0_142 = arith.constant 0 : index
    %c142_143 = arith.constant 142 : index
    %629 = vector.load %arg20[%c0_142, %c142_143] : memref<16x512xf32, #tpu.memory_space<vmem>>, vector<16x256xf32>
    %630 = vector.extract_strided_slice %406 {offsets = [0, 29], sizes = [16, 1], strides = [1, 1]} : vector<16x49xf32> to vector<16x1xf32>
    %631 = vector.broadcast %630 : vector<16x1xf32> to vector<16x256xf32>
    %632 = arith.mulf %629, %631 : vector<16x256xf32>
    %633 = vector.extract_strided_slice %12 {offsets = [1, 0], sizes = [1, 256], strides = [1, 1]} : vector<7x256xf32> to vector<1x256xf32>
    %634 = vector.broadcast %633 : vector<1x256xf32> to vector<16x256xf32>
    %635 = arith.mulf %632, %634 : vector<16x256xf32>
    %636 = arith.addf %628, %635 : vector<16x256xf32>
    %c0_144 = arith.constant 0 : index
    %c143_145 = arith.constant 143 : index
    %637 = vector.load %arg20[%c0_144, %c143_145] : memref<16x512xf32, #tpu.memory_space<vmem>>, vector<16x256xf32>
    %638 = vector.extract_strided_slice %406 {offsets = [0, 30], sizes = [16, 1], strides = [1, 1]} : vector<16x49xf32> to vector<16x1xf32>
    %639 = vector.broadcast %638 : vector<16x1xf32> to vector<16x256xf32>
    %640 = arith.mulf %637, %639 : vector<16x256xf32>
    %641 = vector.extract_strided_slice %12 {offsets = [2, 0], sizes = [1, 256], strides = [1, 1]} : vector<7x256xf32> to vector<1x256xf32>
    %642 = vector.broadcast %641 : vector<1x256xf32> to vector<16x256xf32>
    %643 = arith.mulf %640, %642 : vector<16x256xf32>
    %644 = arith.addf %636, %643 : vector<16x256xf32>
    %c0_146 = arith.constant 0 : index
    %c144_147 = arith.constant 144 : index
    %645 = vector.load %arg20[%c0_146, %c144_147] : memref<16x512xf32, #tpu.memory_space<vmem>>, vector<16x256xf32>
    %646 = vector.extract_strided_slice %406 {offsets = [0, 31], sizes = [16, 1], strides = [1, 1]} : vector<16x49xf32> to vector<16x1xf32>
    %647 = vector.broadcast %646 : vector<16x1xf32> to vector<16x256xf32>
    %648 = arith.mulf %645, %647 : vector<16x256xf32>
    %649 = arith.addf %644, %648 : vector<16x256xf32>
    %c0_148 = arith.constant 0 : index
    %c145_149 = arith.constant 145 : index
    %650 = vector.load %arg20[%c0_148, %c145_149] : memref<16x512xf32, #tpu.memory_space<vmem>>, vector<16x256xf32>
    %651 = vector.extract_strided_slice %406 {offsets = [0, 32], sizes = [16, 1], strides = [1, 1]} : vector<16x49xf32> to vector<16x1xf32>
    %652 = vector.broadcast %651 : vector<16x1xf32> to vector<16x256xf32>
    %653 = arith.mulf %650, %652 : vector<16x256xf32>
    %654 = vector.extract_strided_slice %12 {offsets = [4, 0], sizes = [1, 256], strides = [1, 1]} : vector<7x256xf32> to vector<1x256xf32>
    %655 = vector.broadcast %654 : vector<1x256xf32> to vector<16x256xf32>
    %656 = arith.mulf %653, %655 : vector<16x256xf32>
    %657 = arith.addf %649, %656 : vector<16x256xf32>
    %c0_150 = arith.constant 0 : index
    %c146_151 = arith.constant 146 : index
    %658 = vector.load %arg20[%c0_150, %c146_151] : memref<16x512xf32, #tpu.memory_space<vmem>>, vector<16x256xf32>
    %659 = vector.extract_strided_slice %406 {offsets = [0, 33], sizes = [16, 1], strides = [1, 1]} : vector<16x49xf32> to vector<16x1xf32>
    %660 = vector.broadcast %659 : vector<16x1xf32> to vector<16x256xf32>
    %661 = arith.mulf %658, %660 : vector<16x256xf32>
    %662 = vector.extract_strided_slice %12 {offsets = [5, 0], sizes = [1, 256], strides = [1, 1]} : vector<7x256xf32> to vector<1x256xf32>
    %663 = vector.broadcast %662 : vector<1x256xf32> to vector<16x256xf32>
    %664 = arith.mulf %661, %663 : vector<16x256xf32>
    %665 = arith.addf %657, %664 : vector<16x256xf32>
    %c0_152 = arith.constant 0 : index
    %c147_153 = arith.constant 147 : index
    %666 = vector.load %arg20[%c0_152, %c147_153] : memref<16x512xf32, #tpu.memory_space<vmem>>, vector<16x256xf32>
    %667 = vector.extract_strided_slice %406 {offsets = [0, 34], sizes = [16, 1], strides = [1, 1]} : vector<16x49xf32> to vector<16x1xf32>
    %668 = vector.broadcast %667 : vector<16x1xf32> to vector<16x256xf32>
    %669 = arith.mulf %666, %668 : vector<16x256xf32>
    %670 = vector.extract_strided_slice %12 {offsets = [6, 0], sizes = [1, 256], strides = [1, 1]} : vector<7x256xf32> to vector<1x256xf32>
    %671 = vector.broadcast %670 : vector<1x256xf32> to vector<16x256xf32>
    %672 = arith.mulf %669, %671 : vector<16x256xf32>
    %673 = arith.addf %665, %672 : vector<16x256xf32>
    %c0_154 = arith.constant 0 : index
    %c157_155 = arith.constant 157 : index
    %674 = vector.load %arg20[%c0_154, %c157_155] : memref<16x512xf32, #tpu.memory_space<vmem>>, vector<16x256xf32>
    %675 = vector.extract_strided_slice %406 {offsets = [0, 35], sizes = [16, 1], strides = [1, 1]} : vector<16x49xf32> to vector<16x1xf32>
    %676 = vector.broadcast %675 : vector<16x1xf32> to vector<16x256xf32>
    %677 = arith.mulf %674, %676 : vector<16x256xf32>
    %678 = vector.extract_strided_slice %12 {offsets = [0, 0], sizes = [1, 256], strides = [1, 1]} : vector<7x256xf32> to vector<1x256xf32>
    %679 = vector.broadcast %678 : vector<1x256xf32> to vector<16x256xf32>
    %680 = arith.mulf %677, %679 : vector<16x256xf32>
    %681 = arith.addf %673, %680 : vector<16x256xf32>
    %c0_156 = arith.constant 0 : index
    %c158_157 = arith.constant 158 : index
    %682 = vector.load %arg20[%c0_156, %c158_157] : memref<16x512xf32, #tpu.memory_space<vmem>>, vector<16x256xf32>
    %683 = vector.extract_strided_slice %406 {offsets = [0, 36], sizes = [16, 1], strides = [1, 1]} : vector<16x49xf32> to vector<16x1xf32>
    %684 = vector.broadcast %683 : vector<16x1xf32> to vector<16x256xf32>
    %685 = arith.mulf %682, %684 : vector<16x256xf32>
    %686 = vector.extract_strided_slice %12 {offsets = [1, 0], sizes = [1, 256], strides = [1, 1]} : vector<7x256xf32> to vector<1x256xf32>
    %687 = vector.broadcast %686 : vector<1x256xf32> to vector<16x256xf32>
    %688 = arith.mulf %685, %687 : vector<16x256xf32>
    %689 = arith.addf %681, %688 : vector<16x256xf32>
    %c0_158 = arith.constant 0 : index
    %c159_159 = arith.constant 159 : index
    %690 = vector.load %arg20[%c0_158, %c159_159] : memref<16x512xf32, #tpu.memory_space<vmem>>, vector<16x256xf32>
    %691 = vector.extract_strided_slice %406 {offsets = [0, 37], sizes = [16, 1], strides = [1, 1]} : vector<16x49xf32> to vector<16x1xf32>
    %692 = vector.broadcast %691 : vector<16x1xf32> to vector<16x256xf32>
    %693 = arith.mulf %690, %692 : vector<16x256xf32>
    %694 = vector.extract_strided_slice %12 {offsets = [2, 0], sizes = [1, 256], strides = [1, 1]} : vector<7x256xf32> to vector<1x256xf32>
    %695 = vector.broadcast %694 : vector<1x256xf32> to vector<16x256xf32>
    %696 = arith.mulf %693, %695 : vector<16x256xf32>
    %697 = arith.addf %689, %696 : vector<16x256xf32>
    %c0_160 = arith.constant 0 : index
    %c160_161 = arith.constant 160 : index
    %698 = vector.load %arg20[%c0_160, %c160_161] : memref<16x512xf32, #tpu.memory_space<vmem>>, vector<16x256xf32>
    %699 = vector.extract_strided_slice %406 {offsets = [0, 38], sizes = [16, 1], strides = [1, 1]} : vector<16x49xf32> to vector<16x1xf32>
    %700 = vector.broadcast %699 : vector<16x1xf32> to vector<16x256xf32>
    %701 = arith.mulf %698, %700 : vector<16x256xf32>
    %702 = arith.addf %697, %701 : vector<16x256xf32>
    %c0_162 = arith.constant 0 : index
    %c161_163 = arith.constant 161 : index
    %703 = vector.load %arg20[%c0_162, %c161_163] : memref<16x512xf32, #tpu.memory_space<vmem>>, vector<16x256xf32>
    %704 = vector.extract_strided_slice %406 {offsets = [0, 39], sizes = [16, 1], strides = [1, 1]} : vector<16x49xf32> to vector<16x1xf32>
    %705 = vector.broadcast %704 : vector<16x1xf32> to vector<16x256xf32>
    %706 = arith.mulf %703, %705 : vector<16x256xf32>
    %707 = vector.extract_strided_slice %12 {offsets = [4, 0], sizes = [1, 256], strides = [1, 1]} : vector<7x256xf32> to vector<1x256xf32>
    %708 = vector.broadcast %707 : vector<1x256xf32> to vector<16x256xf32>
    %709 = arith.mulf %706, %708 : vector<16x256xf32>
    %710 = arith.addf %702, %709 : vector<16x256xf32>
    %c0_164 = arith.constant 0 : index
    %c162_165 = arith.constant 162 : index
    %711 = vector.load %arg20[%c0_164, %c162_165] : memref<16x512xf32, #tpu.memory_space<vmem>>, vector<16x256xf32>
    %712 = vector.extract_strided_slice %406 {offsets = [0, 40], sizes = [16, 1], strides = [1, 1]} : vector<16x49xf32> to vector<16x1xf32>
    %713 = vector.broadcast %712 : vector<16x1xf32> to vector<16x256xf32>
    %714 = arith.mulf %711, %713 : vector<16x256xf32>
    %715 = vector.extract_strided_slice %12 {offsets = [5, 0], sizes = [1, 256], strides = [1, 1]} : vector<7x256xf32> to vector<1x256xf32>
    %716 = vector.broadcast %715 : vector<1x256xf32> to vector<16x256xf32>
    %717 = arith.mulf %714, %716 : vector<16x256xf32>
    %718 = arith.addf %710, %717 : vector<16x256xf32>
    %c0_166 = arith.constant 0 : index
    %c163_167 = arith.constant 163 : index
    %719 = vector.load %arg20[%c0_166, %c163_167] : memref<16x512xf32, #tpu.memory_space<vmem>>, vector<16x256xf32>
    %720 = vector.extract_strided_slice %406 {offsets = [0, 41], sizes = [16, 1], strides = [1, 1]} : vector<16x49xf32> to vector<16x1xf32>
    %721 = vector.broadcast %720 : vector<16x1xf32> to vector<16x256xf32>
    %722 = arith.mulf %719, %721 : vector<16x256xf32>
    %723 = vector.extract_strided_slice %12 {offsets = [6, 0], sizes = [1, 256], strides = [1, 1]} : vector<7x256xf32> to vector<1x256xf32>
    %724 = vector.broadcast %723 : vector<1x256xf32> to vector<16x256xf32>
    %725 = arith.mulf %722, %724 : vector<16x256xf32>
    %726 = arith.addf %718, %725 : vector<16x256xf32>
    %c0_168 = arith.constant 0 : index
    %c173_169 = arith.constant 173 : index
    %727 = vector.load %arg20[%c0_168, %c173_169] : memref<16x512xf32, #tpu.memory_space<vmem>>, vector<16x256xf32>
    %728 = vector.extract_strided_slice %406 {offsets = [0, 42], sizes = [16, 1], strides = [1, 1]} : vector<16x49xf32> to vector<16x1xf32>
    %729 = vector.broadcast %728 : vector<16x1xf32> to vector<16x256xf32>
    %730 = arith.mulf %727, %729 : vector<16x256xf32>
    %731 = vector.extract_strided_slice %12 {offsets = [0, 0], sizes = [1, 256], strides = [1, 1]} : vector<7x256xf32> to vector<1x256xf32>
    %732 = vector.broadcast %731 : vector<1x256xf32> to vector<16x256xf32>
    %733 = arith.mulf %730, %732 : vector<16x256xf32>
    %734 = arith.addf %726, %733 : vector<16x256xf32>
    %c0_170 = arith.constant 0 : index
    %c174_171 = arith.constant 174 : index
    %735 = vector.load %arg20[%c0_170, %c174_171] : memref<16x512xf32, #tpu.memory_space<vmem>>, vector<16x256xf32>
    %736 = vector.extract_strided_slice %406 {offsets = [0, 43], sizes = [16, 1], strides = [1, 1]} : vector<16x49xf32> to vector<16x1xf32>
    %737 = vector.broadcast %736 : vector<16x1xf32> to vector<16x256xf32>
    %738 = arith.mulf %735, %737 : vector<16x256xf32>
    %739 = vector.extract_strided_slice %12 {offsets = [1, 0], sizes = [1, 256], strides = [1, 1]} : vector<7x256xf32> to vector<1x256xf32>
    %740 = vector.broadcast %739 : vector<1x256xf32> to vector<16x256xf32>
    %741 = arith.mulf %738, %740 : vector<16x256xf32>
    %742 = arith.addf %734, %741 : vector<16x256xf32>
    %c0_172 = arith.constant 0 : index
    %c175_173 = arith.constant 175 : index
    %743 = vector.load %arg20[%c0_172, %c175_173] : memref<16x512xf32, #tpu.memory_space<vmem>>, vector<16x256xf32>
    %744 = vector.extract_strided_slice %406 {offsets = [0, 44], sizes = [16, 1], strides = [1, 1]} : vector<16x49xf32> to vector<16x1xf32>
    %745 = vector.broadcast %744 : vector<16x1xf32> to vector<16x256xf32>
    %746 = arith.mulf %743, %745 : vector<16x256xf32>
    %747 = vector.extract_strided_slice %12 {offsets = [2, 0], sizes = [1, 256], strides = [1, 1]} : vector<7x256xf32> to vector<1x256xf32>
    %748 = vector.broadcast %747 : vector<1x256xf32> to vector<16x256xf32>
    %749 = arith.mulf %746, %748 : vector<16x256xf32>
    %750 = arith.addf %742, %749 : vector<16x256xf32>
    %c0_174 = arith.constant 0 : index
    %c176_175 = arith.constant 176 : index
    %751 = vector.load %arg20[%c0_174, %c176_175] : memref<16x512xf32, #tpu.memory_space<vmem>>, vector<16x256xf32>
    %752 = vector.extract_strided_slice %406 {offsets = [0, 45], sizes = [16, 1], strides = [1, 1]} : vector<16x49xf32> to vector<16x1xf32>
    %753 = vector.broadcast %752 : vector<16x1xf32> to vector<16x256xf32>
    %754 = arith.mulf %751, %753 : vector<16x256xf32>
    %755 = arith.addf %750, %754 : vector<16x256xf32>
    %c0_176 = arith.constant 0 : index
    %c177_177 = arith.constant 177 : index
    %756 = vector.load %arg20[%c0_176, %c177_177] : memref<16x512xf32, #tpu.memory_space<vmem>>, vector<16x256xf32>
    %757 = vector.extract_strided_slice %406 {offsets = [0, 46], sizes = [16, 1], strides = [1, 1]} : vector<16x49xf32> to vector<16x1xf32>
    %758 = vector.broadcast %757 : vector<16x1xf32> to vector<16x256xf32>
    %759 = arith.mulf %756, %758 : vector<16x256xf32>
    %760 = vector.extract_strided_slice %12 {offsets = [4, 0], sizes = [1, 256], strides = [1, 1]} : vector<7x256xf32> to vector<1x256xf32>
    %761 = vector.broadcast %760 : vector<1x256xf32> to vector<16x256xf32>
    %762 = arith.mulf %759, %761 : vector<16x256xf32>
    %763 = arith.addf %755, %762 : vector<16x256xf32>
    %c0_178 = arith.constant 0 : index
    %c178_179 = arith.constant 178 : index
    %764 = vector.load %arg20[%c0_178, %c178_179] : memref<16x512xf32, #tpu.memory_space<vmem>>, vector<16x256xf32>
    %765 = vector.extract_strided_slice %406 {offsets = [0, 47], sizes = [16, 1], strides = [1, 1]} : vector<16x49xf32> to vector<16x1xf32>
    %766 = vector.broadcast %765 : vector<16x1xf32> to vector<16x256xf32>
    %767 = arith.mulf %764, %766 : vector<16x256xf32>
    %768 = vector.extract_strided_slice %12 {offsets = [5, 0], sizes = [1, 256], strides = [1, 1]} : vector<7x256xf32> to vector<1x256xf32>
    %769 = vector.broadcast %768 : vector<1x256xf32> to vector<16x256xf32>
    %770 = arith.mulf %767, %769 : vector<16x256xf32>
    %771 = arith.addf %763, %770 : vector<16x256xf32>
    %c0_180 = arith.constant 0 : index
    %c179_181 = arith.constant 179 : index
    %772 = vector.load %arg20[%c0_180, %c179_181] : memref<16x512xf32, #tpu.memory_space<vmem>>, vector<16x256xf32>
    %773 = vector.extract_strided_slice %406 {offsets = [0, 48], sizes = [16, 1], strides = [1, 1]} : vector<16x49xf32> to vector<16x1xf32>
    %774 = vector.broadcast %773 : vector<16x1xf32> to vector<16x256xf32>
    %775 = arith.mulf %772, %774 : vector<16x256xf32>
    %776 = vector.extract_strided_slice %12 {offsets = [6, 0], sizes = [1, 256], strides = [1, 1]} : vector<7x256xf32> to vector<1x256xf32>
    %777 = vector.broadcast %776 : vector<1x256xf32> to vector<16x256xf32>
    %778 = arith.mulf %775, %777 : vector<16x256xf32>
    %779 = arith.addf %771, %778 : vector<16x256xf32>
    %780 = arith.addf %11, %779 : vector<16x256xf32>
    %c0_182 = arith.constant 0 : index
    %c0_183 = arith.constant 0 : index
    %781 = vector.load %arg11[%c0_182, %c0_183] : memref<2x16xf32, #tpu.memory_space<vmem>>, vector<2x16xf32>
    %cst_184 = arith.constant dense<0.000000e+00> : vector<2x256xf32>
    %782 = tpu.matmul %781, %780, %cst_184 {dimension_numbers = #tpu.dot_dimension_numbers<[1], [0], [0], [1], [0, 0, 1, 1], [], []>} : vector<2x16xf32>, vector<16x256xf32>, vector<2x256xf32> -> vector<2x256xf32>
    %cst_185 = arith.constant dense<0.000000e+00> : vector<2xf32>
    %783 = vector.multi_reduction <add>, %782, %cst_185 [1] : vector<2x256xf32> to vector<2xf32>
    %784 = vector.shape_cast %783 : vector<2xf32> to vector<2x1xf32>
    %cst_186 = arith.constant 2.560000e+02 : f32
    %785 = vector.broadcast %cst_186 : f32 to vector<2x1xf32>
    %786 = arith.divf %784, %785 : vector<2x1xf32>
    %c0_187 = arith.constant 0 : index
    %c0_188 = arith.constant 0 : index
    %787 = vector.load %arg12[%c0_187, %c0_188] : memref<2x1xf32, #tpu.memory_space<vmem>>, vector<2x1xf32>
    %788 = arith.addf %786, %787 : vector<2x1xf32>
    %cst_189 = arith.constant 0.000000e+00 : f32
    %789 = vector.broadcast %cst_189 : f32 to vector<2x1xf32>
    %790 = arith.cmpf oge, %788, %789 : vector<2x1xf32>
    %cst_190 = arith.constant 0.00999999977 : f32
    %791 = vector.broadcast %cst_190 : f32 to vector<2x1xf32>
    %792 = arith.mulf %791, %788 : vector<2x1xf32>
    %793 = arith.select %790, %788, %792 : vector<2x1xi1>, vector<2x1xf32>
    %c0_191 = arith.constant 0 : index
    %c0_192 = arith.constant 0 : index
    %794 = vector.load %arg14[%c0_191, %c0_192] : memref<16x1xf32, #tpu.memory_space<vmem>>, vector<16x1xf32>
    %c0_193 = arith.constant 0 : index
    %c0_194 = arith.constant 0 : index
    %795 = vector.load %arg13[%c0_193, %c0_194] : memref<16x2xf32, #tpu.memory_space<vmem>>, vector<16x1xf32>
    %796 = vector.extract_strided_slice %793 {offsets = [0, 0], sizes = [1, 1], strides = [1, 1]} : vector<2x1xf32> to vector<1x1xf32>
    %797 = vector.broadcast %796 : vector<1x1xf32> to vector<16x1xf32>
    %798 = arith.mulf %795, %797 : vector<16x1xf32>
    %799 = arith.addf %794, %798 : vector<16x1xf32>
    %c0_195 = arith.constant 0 : index
    %c1 = arith.constant 1 : index
    %800 = vector.load %arg13[%c0_195, %c1] : memref<16x2xf32, #tpu.memory_space<vmem>>, vector<16x1xf32>
    %801 = vector.extract_strided_slice %793 {offsets = [1, 0], sizes = [1, 1], strides = [1, 1]} : vector<2x1xf32> to vector<1x1xf32>
    %802 = vector.broadcast %801 : vector<1x1xf32> to vector<16x1xf32>
    %803 = arith.mulf %800, %802 : vector<16x1xf32>
    %804 = arith.addf %799, %803 : vector<16x1xf32>
    %cst_196 = arith.constant 0.000000e+00 : f32
    %805 = vector.broadcast %cst_196 : f32 to vector<16x1xf32>
    %806 = arith.subf %805, %804 : vector<16x1xf32>
    %807 = math.exp %806 : vector<16x1xf32>
    %cst_197 = arith.constant 1.000000e+00 : f32
    %808 = vector.broadcast %cst_197 : f32 to vector<16x1xf32>
    %809 = arith.addf %808, %807 : vector<16x1xf32>
    %cst_198 = arith.constant 1.000000e+00 : f32
    %810 = vector.broadcast %cst_198 : f32 to vector<16x1xf32>
    %811 = arith.divf %810, %809 : vector<16x1xf32>
    %c0_199 = arith.constant 0 : index
    %c0_200 = arith.constant 0 : index
    %812 = vector.load %arg15[%c0_199, %c0_200] : memref<16x1xf32, #tpu.memory_space<vmem>>, vector<16x1xf32>
    %813 = arith.mulf %811, %812 : vector<16x1xf32>
    %814 = vector.broadcast %813 : vector<16x1xf32> to vector<16x256xf32>
    %815 = arith.mulf %780, %814 : vector<16x256xf32>
    %c0_201 = arith.constant 0 : index
    %c0_202 = arith.constant 0 : index
    %816 = vector.load %arg16[%c0_201, %c0_202] : memref<16x1xf32, #tpu.memory_space<vmem>>, vector<16x1xf32>
    %817 = vector.broadcast %816 : vector<16x1xf32> to vector<16x256xf32>
    %818 = arith.addf %815, %817 : vector<16x256xf32>
    %cst_203 = arith.constant 0.000000e+00 : f32
    %819 = vector.broadcast %cst_203 : f32 to vector<16x256xf32>
    %820 = arith.cmpf oge, %818, %819 : vector<16x256xf32>
    %cst_204 = arith.constant 0.00999999977 : f32
    %821 = vector.broadcast %cst_204 : f32 to vector<16x256xf32>
    %822 = arith.mulf %821, %818 : vector<16x256xf32>
    %823 = arith.select %820, %818, %822 : vector<16x256xi1>, vector<16x256xf32>
    %c0_205 = arith.constant 0 : index
    %c0_206 = arith.constant 0 : index
    %824 = vector.load %arg17[%c0_205, %c0_206] : memref<16x1xf32, #tpu.memory_space<vmem>>, vector<16x1xf32>
    %825 = vector.broadcast %824 : vector<16x1xf32> to vector<16x256xf32>
    %826 = arith.mulf %823, %825 : vector<16x256xf32>
    %827 = arith.addf %826, %5 : vector<16x256xf32>
    %c0_207 = arith.constant 0 : index
    %c0_208 = arith.constant 0 : index
    %c0_209 = arith.constant 0 : index
    %828 = vector.load %arg19[%c0_207, %c0_208, %c0_209] : memref<1x16x256xf32, #tpu.memory_space<vmem>>, vector<1x16x256xf32>
    %829 = vector.shape_cast %828 : vector<1x16x256xf32> to vector<16x256xf32>
    %830 = vector.shape_cast %827 : vector<16x256xf32> to vector<1x16x256xf32>
    tpu.vector_store %arg19[%c0_207, %c0_208, %c0_209], %830 {strides = array<i32>} : memref<1x16x256xf32, #tpu.memory_space<vmem>>, vector<1x16x256xf32>,
    return
  }
  func.func @transform_0(%arg0: i32) -> (i32, i32, i32) {
    %c0_i32 = arith.constant 0 : i32
    %c0_i32_0 = arith.constant 0 : i32
    %c0_i32_1 = arith.constant 0 : i32
    return %arg0, %c0_i32, %c0_i32_0 : i32, i32, i32
  }
  func.func @transform_1(%arg0: i32) -> (i32, i32) {
    %c0_i32 = arith.constant 0 : i32
    %c0_i32_0 = arith.constant 0 : i32
    %c0_i32_1 = arith.constant 0 : i32
    return %c0_i32, %c0_i32_0 : i32, i32
  }
  func.func @transform_2(%arg0: i32) -> (i32, i32) {
    %c0_i32 = arith.constant 0 : i32
    %c0_i32_0 = arith.constant 0 : i32
    %c0_i32_1 = arith.constant 0 : i32
    return %c0_i32, %c0_i32_0 : i32, i32
  }
  func.func @transform_3(%arg0: i32) -> (i32, i32) {
    %c0_i32 = arith.constant 0 : i32
    %c0_i32_0 = arith.constant 0 : i32
    %c0_i32_1 = arith.constant 0 : i32
    return %c0_i32, %c0_i32_0 : i32, i32
  }
  func.func @transform_4(%arg0: i32) -> (i32, i32) {
    %c0_i32 = arith.constant 0 : i32
    %c0_i32_0 = arith.constant 0 : i32
    %c0_i32_1 = arith.constant 0 : i32
    return %c0_i32, %c0_i32_0 : i32, i32
  }
  func.func @transform_5(%arg0: i32) -> (i32, i32) {
    %c0_i32 = arith.constant 0 : i32
    %c0_i32_0 = arith.constant 0 : i32
    %c0_i32_1 = arith.constant 0 : i32
    return %c0_i32, %c0_i32_0 : i32, i32
  }
  func.func @transform_6(%arg0: i32) -> (i32, i32) {
    %c0_i32 = arith.constant 0 : i32
    %c0_i32_0 = arith.constant 0 : i32
    %c0_i32_1 = arith.constant 0 : i32
    return %c0_i32, %c0_i32_0 : i32, i32
  }
  func.func @transform_7(%arg0: i32) -> (i32, i32) {
    %c0_i32 = arith.constant 0 : i32
    %c0_i32_0 = arith.constant 0 : i32
    %c0_i32_1 = arith.constant 0 : i32
    return %c0_i32, %c0_i32_0 : i32, i32
  }
  func.func @transform_8(%arg0: i32) -> (i32, i32) {
    %c0_i32 = arith.constant 0 : i32
    %c0_i32_0 = arith.constant 0 : i32
    %c0_i32_1 = arith.constant 0 : i32
    return %c0_i32, %c0_i32_0 : i32, i32
  }
  func.func @transform_9(%arg0: i32) -> (i32, i32) {
    %c0_i32 = arith.constant 0 : i32
    %c0_i32_0 = arith.constant 0 : i32
    %c0_i32_1 = arith.constant 0 : i32
    return %c0_i32, %c0_i32_0 : i32, i32
  }
  func.func @transform_10(%arg0: i32) -> (i32, i32) {
    %c0_i32 = arith.constant 0 : i32
    %c0_i32_0 = arith.constant 0 : i32
    %c0_i32_1 = arith.constant 0 : i32
    return %c0_i32, %c0_i32_0 : i32, i32
  }
  func.func @transform_11(%arg0: i32) -> (i32, i32) {
    %c0_i32 = arith.constant 0 : i32
    %c0_i32_0 = arith.constant 0 : i32
    %c0_i32_1 = arith.constant 0 : i32
    return %c0_i32, %c0_i32_0 : i32, i32
  }
  func.func @transform_12(%arg0: i32) -> (i32, i32) {
    %c0_i32 = arith.constant 0 : i32
    %c0_i32_0 = arith.constant 0 : i32
    %c0_i32_1 = arith.constant 0 : i32
    return %c0_i32, %c0_i32_0 : i32, i32
  }
  func.func @transform_13(%arg0: i32) -> (i32, i32) {
    %c0_i32 = arith.constant 0 : i32
    %c0_i32_0 = arith.constant 0 : i32
    %c0_i32_1 = arith.constant 0 : i32
    return %c0_i32, %c0_i32_0 : i32, i32
  }
  func.func @transform_14(%arg0: i32) -> (i32, i32) {
    %c0_i32 = arith.constant 0 : i32
    %c0_i32_0 = arith.constant 0 : i32
    %c0_i32_1 = arith.constant 0 : i32
    return %c0_i32, %c0_i32_0 : i32, i32
  }
  func.func @transform_15(%arg0: i32) -> (i32, i32) {
    %c0_i32 = arith.constant 0 : i32
    %c0_i32_0 = arith.constant 0 : i32
    %c0_i32_1 = arith.constant 0 : i32
    return %c0_i32, %c0_i32_0 : i32, i32
  }
  func.func @transform_16(%arg0: i32) -> (i32, i32) {
    %c0_i32 = arith.constant 0 : i32
    %c0_i32_0 = arith.constant 0 : i32
    %c0_i32_1 = arith.constant 0 : i32
    return %c0_i32, %c0_i32_0 : i32, i32
  }
  func.func @transform_17(%arg0: i32) -> (i32, i32) {
    %c0_i32 = arith.constant 0 : i32
    %c0_i32_0 = arith.constant 0 : i32
    %c0_i32_1 = arith.constant 0 : i32
    return %c0_i32, %c0_i32_0 : i32, i32
  }
  func.func @transform_18(%arg0: i32) -> (i32, i32, i32) {
    %c0_i32 = arith.constant 0 : i32
    %c0_i32_0 = arith.constant 0 : i32
    %c0_i32_1 = arith.constant 0 : i32
    return %arg0, %c0_i32, %c0_i32_0 : i32, i32, i32
  }
}

</mosaic_0001>

<llo_original>
// kernel: metanext_upstage_blockwithse.2
$region0: #{metanext_upstage_blockwithse.2}
  #allocation0 [shape = 'u32[]', space=smem, size = 0x4, offset = 0x4, fixed_abs, tag = 'smem constant byte address 0x4 - core index']
  #allocation1 [shape = 'u32[144,128]{1,0:T(1,128)}', space=vmem, size = 0x12000, scoped, tag = 'internal scratch']
  #allocation2 [shape = 'f32[16,512]{1,0:T(8,128)}', space=vmem, size = 0x8000, scoped, tag = 'scratch operand']
  %s0 = inlined_call_operand.vmem [shape: f32[2,16,256], index: 0, kind: input, shape index: {}]
  %s1 = inlined_call_operand.vmem [shape: f32[16,1], index: 1, kind: input, shape index: {}]
  %s2 = inlined_call_operand.vmem [shape: f32[16,1], index: 2, kind: input, shape index: {}]
  %s3 = inlined_call_operand.vmem [shape: f32[16,49], index: 3, kind: input, shape index: {}]
  %s4 = inlined_call_operand.vmem [shape: f32[64,16], index: 4, kind: input, shape index: {}]
  %s5 = inlined_call_operand.vmem [shape: f32[64,1], index: 5, kind: input, shape index: {}]
  %s6 = inlined_call_operand.vmem [shape: f32[16,32], index: 6, kind: input, shape index: {}]
  %s7 = inlined_call_operand.vmem [shape: f32[16,1], index: 7, kind: input, shape index: {}]
  %s8 = inlined_call_operand.vmem [shape: f32[16,49], index: 8, kind: input, shape index: {}]
  %s9 = inlined_call_operand.vmem [shape: f32[16,1], index: 9, kind: input, shape index: {}]
  %s10 = inlined_call_operand.vmem [shape: f32[2,16], index: 10, kind: input, shape index: {}]
  %s11 = inlined_call_operand.vmem [shape: f32[2,1], index: 11, kind: input, shape index: {}]
  %s12 = inlined_call_operand.vmem [shape: f32[16,2], index: 12, kind: input, shape index: {}]
  %s13 = inlined_call_operand.vmem [shape: f32[16,1], index: 13, kind: input, shape index: {}]
  %s14 = inlined_call_operand.vmem [shape: f32[16,1], index: 14, kind: input, shape index: {}]
  %s15 = inlined_call_operand.vmem [shape: f32[16,1], index: 15, kind: input, shape index: {}]
  %s16 = inlined_call_operand.vmem [shape: f32[16,1], index: 16, kind: input, shape index: {}]
  %s17 = inlined_call_operand.vmem [shape: f32[7,256], index: 17, kind: input, shape index: {}]
  %s18 = inlined_call_operand.vmem [shape: f32[2,16,256], index: 18, kind: output, shape index: {}]
  %s19 = sld [smem:[#allocation0]]
  $region105: #{metanext_upstage_blockwithse.2} parent=0
    _
  %s21 = ssub.s32 1, %s19
  %s22 = scalar_select 0, %s21, %s19
  loop: start=0, step=1, limit=4
  $region2: #{metanext_upstage_blockwithse.2} parent=0 // loop_pre_header
    _
  $region3: #{metanext_upstage_blockwithse.2} parent=0 // loop_header
    %s24 = sphi 0, %s28
    %p25 = scmp.ge.s32.totalorder %s24, 4
    %s34 = sphi 0, %s36
    %s37 = sphi 0, %s34
    %s38 = sphi 0, %s37
    %s54 = sphi 0, %s38
    %s58 = sphi 0, %s58
    %s60 = sphi 0, %s58
    %s61 = sphi 0, %s60
    %s75 = sphi 0, %s61
    %s79 = sphi 0, %s79
    %s81 = sphi 0, %s79
    %s82 = sphi 0, %s81
    %s96 = sphi 0, %s82
    %s100 = sphi 0, %s100
    %s102 = sphi 0, %s100
    %s103 = sphi 0, %s102
    %s117 = sphi 0, %s103
    %s121 = sphi 0, %s121
    %s123 = sphi 0, %s121
    %s124 = sphi 0, %s123
    %s138 = sphi 0, %s124
    %s142 = sphi 0, %s142
    %s144 = sphi 0, %s142
    %s145 = sphi 0, %s144
    %s159 = sphi 0, %s145
    %s163 = sphi 0, %s163
    %s165 = sphi 0, %s163
    %s166 = sphi 0, %s165
    %s180 = sphi 0, %s166
    %s184 = sphi 0, %s184
    %s186 = sphi 0, %s184
    %s187 = sphi 0, %s186
    %s201 = sphi 0, %s187
    %s205 = sphi 0, %s205
    %s207 = sphi 0, %s205
    %s208 = sphi 0, %s207
    %s222 = sphi 0, %s208
    %s226 = sphi 0, %s226
    %s228 = sphi 0, %s226
    %s229 = sphi 0, %s228
    %s243 = sphi 0, %s229
    %s247 = sphi 0, %s247
    %s249 = sphi 0, %s247
    %s250 = sphi 0, %s249
    %s264 = sphi 0, %s250
    %s268 = sphi 0, %s268
    %s270 = sphi 0, %s268
    %s271 = sphi 0, %s270
    %s285 = sphi 0, %s271
    %s289 = sphi 0, %s289
    %s291 = sphi 0, %s289
    %s292 = sphi 0, %s291
    %s306 = sphi 0, %s292
    %s310 = sphi 0, %s310
    %s312 = sphi 0, %s310
    %s313 = sphi 0, %s312
    %s327 = sphi 0, %s313
    %s331 = sphi 0, %s331
    %s333 = sphi 0, %s331
    %s334 = sphi 0, %s333
    %s348 = sphi 0, %s334
    %s352 = sphi 0, %s352
    %s354 = sphi 0, %s352
    %s355 = sphi 0, %s354
    %s369 = sphi 0, %s355
    %s373 = sphi 0, %s373
    %s375 = sphi 0, %s373
    %s376 = sphi 0, %s375
    %s390 = sphi 0, %s376
    %s394 = sphi 0, %s394
    %s396 = sphi 0, %s394
    %s397 = sphi 0, %s396
    %s411 = sphi 0, %s397
    %s417 = sphi 0, %s419
    %s420 = sphi 0, %s417
    %s421 = sphi 0, %s420
    %s437 = sphi 0, %s421
  $region4: #{metanext_upstage_blockwithse.2} parent=0 // loop_header_branch
    %27 = sbr.rel (%p25) target = $region8
  $region5: #{metanext_upstage_blockwithse.2} parent=0 // loop_body
    %s29 = ssub.s32 %s24, 1
    %s30 = ssub.s32 %s24, 2
    %s31 = sadd.s32 %s24, 1
    %s32 = ssub.s32 %s24, %s31
    %p33 = scmp.eq.s32.totalorder %s32, 0
    %s35 = sadd.s32 %s34, 1
    %s36 = scalar_select %p33, %s34, %s35
    %p39 = pneg %p33
    %p40 = scmp.eq.s32.totalorder %s24, 1
    %p41 = por %p39, %p40
    %p42 = scmp.ne.s32.totalorder %s34, %s37
    %p43 = scmp.eq.s32.totalorder %s24, 0
    %p44 = por %p42, %p43
    %p45 = scmp.ne.s32.totalorder %s34, %s37
    %p46 = scmp.eq.s32.totalorder %s29, 1
    %p47 = por %p45, %p46
    %p48 = scmp.ne.s32.totalorder %s37, %s38
    %p49 = scmp.eq.s32.totalorder %s29, 0
    %p50 = por %p48, %p49
    %p51 = scmp.ne.s32.totalorder %s37, %s38
    %p52 = scmp.eq.s32.totalorder %s30, 1
    %p53 = por %p51, %p52
    %p55 = scmp.ne.s32.totalorder %s38, %s54
    %p56 = scmp.eq.s32.totalorder %s30, 0
    %p57 = por %p55, %p56
    %s59 = sadd.s32 %s58, 1
    %p62 = scmp.eq.s32.totalorder %s24, 1
    %p63 = scmp.ne.s32.totalorder %s58, %s60
    %p64 = scmp.eq.s32.totalorder %s24, 0
    %p65 = por %p63, %p64
    %p66 = scmp.ne.s32.totalorder %s58, %s60
    %p67 = scmp.eq.s32.totalorder %s29, 1
    %p68 = por %p66, %p67
    %p69 = scmp.ne.s32.totalorder %s60, %s61
    %p70 = scmp.eq.s32.totalorder %s29, 0
    %p71 = por %p69, %p70
    %p72 = scmp.ne.s32.totalorder %s60, %s61
    %p73 = scmp.eq.s32.totalorder %s30, 1
    %p74 = por %p72, %p73
    %p76 = scmp.ne.s32.totalorder %s61, %s75
    %p77 = scmp.eq.s32.totalorder %s30, 0
    %p78 = por %p76, %p77
    %s80 = sadd.s32 %s79, 1
    %p83 = scmp.eq.s32.totalorder %s24, 1
    %p84 = scmp.ne.s32.totalorder %s79, %s81
    %p85 = scmp.eq.s32.totalorder %s24, 0
    %p86 = por %p84, %p85
    %p87 = scmp.ne.s32.totalorder %s79, %s81
    %p88 = scmp.eq.s32.totalorder %s29, 1
    %p89 = por %p87, %p88
    %p90 = scmp.ne.s32.totalorder %s81, %s82
    %p91 = scmp.eq.s32.totalorder %s29, 0
    %p92 = por %p90, %p91
    %p93 = scmp.ne.s32.totalorder %s81, %s82
    %p94 = scmp.eq.s32.totalorder %s30, 1
    %p95 = por %p93, %p94
    %p97 = scmp.ne.s32.totalorder %s82, %s96
    %p98 = scmp.eq.s32.totalorder %s30, 0
    %p99 = por %p97, %p98
    %s101 = sadd.s32 %s100, 1
    %p104 = scmp.eq.s32.totalorder %s24, 1
    %p105 = scmp.ne.s32.totalorder %s100, %s102
    %p106 = scmp.eq.s32.totalorder %s24, 0
    %p107 = por %p105, %p106
    %p108 = scmp.ne.s32.totalorder %s100, %s102
    %p109 = scmp.eq.s32.totalorder %s29, 1
    %p110 = por %p108, %p109
    %p111 = scmp.ne.s32.totalorder %s102, %s103
    %p112 = scmp.eq.s32.totalorder %s29, 0
    %p113 = por %p111, %p112
    %p114 = scmp.ne.s32.totalorder %s102, %s103
    %p115 = scmp.eq.s32.totalorder %s30, 1
    %p116 = por %p114, %p115
    %p118 = scmp.ne.s32.totalorder %s103, %s117
    %p119 = scmp.eq.s32.totalorder %s30, 0
    %p120 = por %p118, %p119
    %s122 = sadd.s32 %s121, 1
    %p125 = scmp.eq.s32.totalorder %s24, 1
    %p126 = scmp.ne.s32.totalorder %s121, %s123
    %p127 = scmp.eq.s32.totalorder %s24, 0
    %p128 = por %p126, %p127
    %p129 = scmp.ne.s32.totalorder %s121, %s123
    %p130 = scmp.eq.s32.totalorder %s29, 1
    %p131 = por %p129, %p130
    %p132 = scmp.ne.s32.totalorder %s123, %s124
    %p133 = scmp.eq.s32.totalorder %s29, 0
    %p134 = por %p132, %p133
    %p135 = scmp.ne.s32.totalorder %s123, %s124
    %p136 = scmp.eq.s32.totalorder %s30, 1
    %p137 = por %p135, %p136
    %p139 = scmp.ne.s32.totalorder %s124, %s138
    %p140 = scmp.eq.s32.totalorder %s30, 0
    %p141 = por %p139, %p140
    %s143 = sadd.s32 %s142, 1
    %p146 = scmp.eq.s32.totalorder %s24, 1
    %p147 = scmp.ne.s32.totalorder %s142, %s144
    %p148 = scmp.eq.s32.totalorder %s24, 0
    %p149 = por %p147, %p148
    %p150 = scmp.ne.s32.totalorder %s142, %s144
    %p151 = scmp.eq.s32.totalorder %s29, 1
    %p152 = por %p150, %p151
    %p153 = scmp.ne.s32.totalorder %s144, %s145
    %p154 = scmp.eq.s32.totalorder %s29, 0
    %p155 = por %p153, %p154
    %p156 = scmp.ne.s32.totalorder %s144, %s145
    %p157 = scmp.eq.s32.totalorder %s30, 1
    %p158 = por %p156, %p157
    %p160 = scmp.ne.s32.totalorder %s145, %s159
    %p161 = scmp.eq.s32.totalorder %s30, 0
    %p162 = por %p160, %p161
    %s164 = sadd.s32 %s163, 1
    %p167 = scmp.eq.s32.totalorder %s24, 1
    %p168 = scmp.ne.s32.totalorder %s163, %s165
    %p169 = scmp.eq.s32.totalorder %s24, 0
    %p170 = por %p168, %p169
    %p171 = scmp.ne.s32.totalorder %s163, %s165
    %p172 = scmp.eq.s32.totalorder %s29, 1
    %p173 = por %p171, %p172
    %p174 = scmp.ne.s32.totalorder %s165, %s166
    %p175 = scmp.eq.s32.totalorder %s29, 0
    %p176 = por %p174, %p175
    %p177 = scmp.ne.s32.totalorder %s165, %s166
    %p178 = scmp.eq.s32.totalorder %s30, 1
    %p179 = por %p177, %p178
    %p181 = scmp.ne.s32.totalorder %s166, %s180
    %p182 = scmp.eq.s32.totalorder %s30, 0
    %p183 = por %p181, %p182
    %s185 = sadd.s32 %s184, 1
    %p188 = scmp.eq.s32.totalorder %s24, 1
    %p189 = scmp.ne.s32.totalorder %s184, %s186
    %p190 = scmp.eq.s32.totalorder %s24, 0
    %p191 = por %p189, %p190
    %p192 = scmp.ne.s32.totalorder %s184, %s186
    %p193 = scmp.eq.s32.totalorder %s29, 1
    %p194 = por %p192, %p193
    %p195 = scmp.ne.s32.totalorder %s186, %s187
    %p196 = scmp.eq.s32.totalorder %s29, 0
    %p197 = por %p195, %p196
    %p198 = scmp.ne.s32.totalorder %s186, %s187
    %p199 = scmp.eq.s32.totalorder %s30, 1
    %p200 = por %p198, %p199
    %p202 = scmp.ne.s32.totalorder %s187, %s201
    %p203 = scmp.eq.s32.totalorder %s30, 0
    %p204 = por %p202, %p203
    %s206 = sadd.s32 %s205, 1
    %p209 = scmp.eq.s32.totalorder %s24, 1
    %p210 = scmp.ne.s32.totalorder %s205, %s207
    %p211 = scmp.eq.s32.totalorder %s24, 0
    %p212 = por %p210, %p211
    %p213 = scmp.ne.s32.totalorder %s205, %s207
    %p214 = scmp.eq.s32.totalorder %s29, 1
    %p215 = por %p213, %p214
    %p216 = scmp.ne.s32.totalorder %s207, %s208
    %p217 = scmp.eq.s32.totalorder %s29, 0
    %p218 = por %p216, %p217
    %p219 = scmp.ne.s32.totalorder %s207, %s208
    %p220 = scmp.eq.s32.totalorder %s30, 1
    %p221 = por %p219, %p220
    %p223 = scmp.ne.s32.totalorder %s208, %s222
    %p224 = scmp.eq.s32.totalorder %s30, 0
    %p225 = por %p223, %p224
    %s227 = sadd.s32 %s226, 1
    %p230 = scmp.eq.s32.totalorder %s24, 1
    %p231 = scmp.ne.s32.totalorder %s226, %s228
    %p232 = scmp.eq.s32.totalorder %s24, 0
    %p233 = por %p231, %p232
    %p234 = scmp.ne.s32.totalorder %s226, %s228
    %p235 = scmp.eq.s32.totalorder %s29, 1
    %p236 = por %p234, %p235
    %p237 = scmp.ne.s32.totalorder %s228, %s229
    %p238 = scmp.eq.s32.totalorder %s29, 0
    %p239 = por %p237, %p238
    %p240 = scmp.ne.s32.totalorder %s228, %s229
    %p241 = scmp.eq.s32.totalorder %s30, 1
    %p242 = por %p240, %p241
    %p244 = scmp.ne.s32.totalorder %s229, %s243
    %p245 = scmp.eq.s32.totalorder %s30, 0
    %p246 = por %p244, %p245
    %s248 = sadd.s32 %s247, 1
    %p251 = scmp.eq.s32.totalorder %s24, 1
    %p252 = scmp.ne.s32.totalorder %s247, %s249
    %p253 = scmp.eq.s32.totalorder %s24, 0
    %p254 = por %p252, %p253
    %p255 = scmp.ne.s32.totalorder %s247, %s249
    %p256 = scmp.eq.s32.totalorder %s29, 1
    %p257 = por %p255, %p256
    %p258 = scmp.ne.s32.totalorder %s249, %s250
    %p259 = scmp.eq.s32.totalorder %s29, 0
    %p260 = por %p258, %p259
    %p261 = scmp.ne.s32.totalorder %s249, %s250
    %p262 = scmp.eq.s32.totalorder %s30, 1
    %p263 = por %p261, %p262
    %p265 = scmp.ne.s32.totalorder %s250, %s264
    %p266 = scmp.eq.s32.totalorder %s30, 0
    %p267 = por %p265, %p266
    %s269 = sadd.s32 %s268, 1
    %p272 = scmp.eq.s32.totalorder %s24, 1
    %p273 = scmp.ne.s32.totalorder %s268, %s270
    %p274 = scmp.eq.s32.totalorder %s24, 0
    %p275 = por %p273, %p274
    %p276 = scmp.ne.s32.totalorder %s268, %s270
    %p277 = scmp.eq.s32.totalorder %s29, 1
    %p278 = por %p276, %p277
    %p279 = scmp.ne.s32.totalorder %s270, %s271
    %p280 = scmp.eq.s32.totalorder %s29, 0
    %p281 = por %p279, %p280
    %p282 = scmp.ne.s32.totalorder %s270, %s271
    %p283 = scmp.eq.s32.totalorder %s30, 1
    %p284 = por %p282, %p283
    %p286 = scmp.ne.s32.totalorder %s271, %s285
    %p287 = scmp.eq.s32.totalorder %s30, 0
    %p288 = por %p286, %p287
    %s290 = sadd.s32 %s289, 1
    %p293 = scmp.eq.s32.totalorder %s24, 1
    %p294 = scmp.ne.s32.totalorder %s289, %s291
    %p295 = scmp.eq.s32.totalorder %s24, 0
    %p296 = por %p294, %p295
    %p297 = scmp.ne.s32.totalorder %s289, %s291
    %p298 = scmp.eq.s32.totalorder %s29, 1
    %p299 = por %p297, %p298
    %p300 = scmp.ne.s32.totalorder %s291, %s292
    %p301 = scmp.eq.s32.totalorder %s29, 0
    %p302 = por %p300, %p301
    %p303 = scmp.ne.s32.totalorder %s291, %s292
    %p304 = scmp.eq.s32.totalorder %s30, 1
    %p305 = por %p303, %p304
    %p307 = scmp.ne.s32.totalorder %s292, %s306
    %p308 = scmp.eq.s32.totalorder %s30, 0
    %p309 = por %p307, %p308
    %s311 = sadd.s32 %s310, 1
    %p314 = scmp.eq.s32.totalorder %s24, 1
    %p315 = scmp.ne.s32.totalorder %s310, %s312
    %p316 = scmp.eq.s32.totalorder %s24, 0
    %p317 = por %p315, %p316
    %p318 = scmp.ne.s32.totalorder %s310, %s312
    %p319 = scmp.eq.s32.totalorder %s29, 1
    %p320 = por %p318, %p319
    %p321 = scmp.ne.s32.totalorder %s312, %s313
    %p322 = scmp.eq.s32.totalorder %s29, 0
    %p323 = por %p321, %p322
    %p324 = scmp.ne.s32.totalorder %s312, %s313
    %p325 = scmp.eq.s32.totalorder %s30, 1
    %p326 = por %p324, %p325
    %p328 = scmp.ne.s32.totalorder %s313, %s327
    %p329 = scmp.eq.s32.totalorder %s30, 0
    %p330 = por %p328, %p329
    %s332 = sadd.s32 %s331, 1
    %p335 = scmp.eq.s32.totalorder %s24, 1
    %p336 = scmp.ne.s32.totalorder %s331, %s333
    %p337 = scmp.eq.s32.totalorder %s24, 0
    %p338 = por %p336, %p337
    %p339 = scmp.ne.s32.totalorder %s331, %s333
    %p340 = scmp.eq.s32.totalorder %s29, 1
    %p341 = por %p339, %p340
    %p342 = scmp.ne.s32.totalorder %s333, %s334
    %p343 = scmp.eq.s32.totalorder %s29, 0
    %p344 = por %p342, %p343
    %p345 = scmp.ne.s32.totalorder %s333, %s334
    %p346 = scmp.eq.s32.totalorder %s30, 1
    %p347 = por %p345, %p346
    %p349 = scmp.ne.s32.totalorder %s334, %s348
    %p350 = scmp.eq.s32.totalorder %s30, 0
    %p351 = por %p349, %p350
    %s353 = sadd.s32 %s352, 1
    %p356 = scmp.eq.s32.totalorder %s24, 1
    %p357 = scmp.ne.s32.totalorder %s352, %s354
    %p358 = scmp.eq.s32.totalorder %s24, 0
    %p359 = por %p357, %p358
    %p360 = scmp.ne.s32.totalorder %s352, %s354
    %p361 = scmp.eq.s32.totalorder %s29, 1
    %p362 = por %p360, %p361
    %p363 = scmp.ne.s32.totalorder %s354, %s355
    %p364 = scmp.eq.s32.totalorder %s29, 0
    %p365 = por %p363, %p364
    %p366 = scmp.ne.s32.totalorder %s354, %s355
    %p367 = scmp.eq.s32.totalorder %s30, 1
    %p368 = por %p366, %p367
    %p370 = scmp.ne.s32.totalorder %s355, %s369
    %p371 = scmp.eq.s32.totalorder %s30, 0
    %p372 = por %p370, %p371
    %s374 = sadd.s32 %s373, 1
    %p377 = scmp.eq.s32.totalorder %s24, 1
    %p378 = scmp.ne.s32.totalorder %s373, %s375
    %p379 = scmp.eq.s32.totalorder %s24, 0
    %p380 = por %p378, %p379
    %p381 = scmp.ne.s32.totalorder %s373, %s375
    %p382 = scmp.eq.s32.totalorder %s29, 1
    %p383 = por %p381, %p382
    %p384 = scmp.ne.s32.totalorder %s375, %s376
    %p385 = scmp.eq.s32.totalorder %s29, 0
    %p386 = por %p384, %p385
    %p387 = scmp.ne.s32.totalorder %s375, %s376
    %p388 = scmp.eq.s32.totalorder %s30, 1
    %p389 = por %p387, %p388
    %p391 = scmp.ne.s32.totalorder %s376, %s390
    %p392 = scmp.eq.s32.totalorder %s30, 0
    %p393 = por %p391, %p392
    %s395 = sadd.s32 %s394, 1
    %p398 = scmp.eq.s32.totalorder %s24, 1
    %p399 = scmp.ne.s32.totalorder %s394, %s396
    %p400 = scmp.eq.s32.totalorder %s24, 0
    %p401 = por %p399, %p400
    %p402 = scmp.ne.s32.totalorder %s394, %s396
    %p403 = scmp.eq.s32.totalorder %s29, 1
    %p404 = por %p402, %p403
    %p405 = scmp.ne.s32.totalorder %s396, %s397
    %p406 = scmp.eq.s32.totalorder %s29, 0
    %p407 = por %p405, %p406
    %p408 = scmp.ne.s32.totalorder %s396, %s397
    %p409 = scmp.eq.s32.totalorder %s30, 1
    %p410 = por %p408, %p409
    %p412 = scmp.ne.s32.totalorder %s397, %s411
    %p413 = scmp.eq.s32.totalorder %s30, 0
    %p414 = por %p412, %p413
    %s415 = ssub.s32 %s24, %s31
    %p416 = scmp.eq.s32.totalorder %s415, 0
    %s418 = sadd.s32 %s417, 1
    %s419 = scalar_select %p416, %s417, %s418
    %p422 = pneg %p416
    %p423 = scmp.eq.s32.totalorder %s24, 1
    %p424 = por %p422, %p423
    %p425 = scmp.ne.s32.totalorder %s417, %s420
    %p426 = scmp.eq.s32.totalorder %s24, 0
    %p427 = por %p425, %p426
    %p428 = scmp.ne.s32.totalorder %s417, %s420
    %p429 = scmp.eq.s32.totalorder %s29, 1
    %p430 = por %p428, %p429
    %p431 = scmp.ne.s32.totalorder %s420, %s421
    %p432 = scmp.eq.s32.totalorder %s29, 0
    %p433 = por %p431, %p432
    %p434 = scmp.ne.s32.totalorder %s420, %s421
    %p435 = scmp.eq.s32.totalorder %s30, 1
    %p436 = por %p434, %p435
    %p438 = scmp.ne.s32.totalorder %s421, %s437
    %p439 = scmp.eq.s32.totalorder %s30, 0
    %p440 = por %p438, %p439
    %p441 = scmp.le.s32.totalorder 1, %s24
    %p442 = scmp.lt.s32.totalorder %s24, 3
    %p443 = pnand %p441, %p442
    %p444 = pneg %p443
    // Predicated region
    $region9: #{metanext_upstage_blockwithse.2} parent=5 // pred_check
      _
    $region10: #{metanext_upstage_blockwithse.2} parent=5 // pred_check_branch
      %446 = sbr.rel (%p443) target = $region12
    $region11: #{metanext_upstage_blockwithse.2} parent=5 // pred_region
      %s447 = ssub.s32 %s24, 1
      // Predicated region
      $region13: #{metanext_upstage_blockwithse.2} parent=11 // pred_check
        %p448 = pneg %p71
      $region14: #{metanext_upstage_blockwithse.2} parent=11 // pred_check_branch
        %450 = sbr.rel (%p448) target = $region16
      $region15: #{metanext_upstage_blockwithse.2} parent=11 // pred_region
        _
      $region16: #{metanext_upstage_blockwithse.2} parent=11 // pred_fallthru
        _
      // Predicated region
      $region17: #{metanext_upstage_blockwithse.2} parent=11 // pred_check
        %p451 = pneg %p92
      $region18: #{metanext_upstage_blockwithse.2} parent=11 // pred_check_branch
        %453 = sbr.rel (%p451) target = $region20
      $region19: #{metanext_upstage_blockwithse.2} parent=11 // pred_region
        _
      $region20: #{metanext_upstage_blockwithse.2} parent=11 // pred_fallthru
        _
      // Predicated region
      $region21: #{metanext_upstage_blockwithse.2} parent=11 // pred_check
        %p454 = pneg %p113
      $region22: #{metanext_upstage_blockwithse.2} parent=11 // pred_check_branch
        %456 = sbr.rel (%p454) target = $region24
      $region23: #{metanext_upstage_blockwithse.2} parent=11 // pred_region
        _
      $region24: #{metanext_upstage_blockwithse.2} parent=11 // pred_fallthru
        _
      // Predicated region
      $region25: #{metanext_upstage_blockwithse.2} parent=11 // pred_check
        %p457 = pneg %p134
      $region26: #{metanext_upstage_blockwithse.2} parent=11 // pred_check_branch
        %459 = sbr.rel (%p457) target = $region28
      $region27: #{metanext_upstage_blockwithse.2} parent=11 // pred_region
        _
      $region28: #{metanext_upstage_blockwithse.2} parent=11 // pred_fallthru
        _
      // Predicated region
      $region29: #{metanext_upstage_blockwithse.2} parent=11 // pred_check
        %p460 = pneg %p155
      $region30: #{metanext_upstage_blockwithse.2} parent=11 // pred_check_branch
        %462 = sbr.rel (%p460) target = $region32
      $region31: #{metanext_upstage_blockwithse.2} parent=11 // pred_region
        _
      $region32: #{metanext_upstage_blockwithse.2} parent=11 // pred_fallthru
        _
      // Predicated region
      $region33: #{metanext_upstage_blockwithse.2} parent=11 // pred_check
        %p463 = pneg %p176
      $region34: #{metanext_upstage_blockwithse.2} parent=11 // pred_check_branch
        %465 = sbr.rel (%p463) target = $region36
      $region35: #{metanext_upstage_blockwithse.2} parent=11 // pred_region
        _
      $region36: #{metanext_upstage_blockwithse.2} parent=11 // pred_fallthru
        _
      // Predicated region
      $region37: #{metanext_upstage_blockwithse.2} parent=11 // pred_check
        %p466 = pneg %p197
      $region38: #{metanext_upstage_blockwithse.2} parent=11 // pred_check_branch
        %468 = sbr.rel (%p466) target = $region40
      $region39: #{metanext_upstage_blockwithse.2} parent=11 // pred_region
        _
      $region40: #{metanext_upstage_blockwithse.2} parent=11 // pred_fallthru
        _
      // Predicated region
      $region41: #{metanext_upstage_blockwithse.2} parent=11 // pred_check
        %p469 = pneg %p218
      $region42: #{metanext_upstage_blockwithse.2} parent=11 // pred_check_branch
        %471 = sbr.rel (%p469) target = $region44
      $region43: #{metanext_upstage_blockwithse.2} parent=11 // pred_region
        _
      $region44: #{metanext_upstage_blockwithse.2} parent=11 // pred_fallthru
        _
      // Predicated region
      $region45: #{metanext_upstage_blockwithse.2} parent=11 // pred_check
        %p472 = pneg %p239
      $region46: #{metanext_upstage_blockwithse.2} parent=11 // pred_check_branch
        %474 = sbr.rel (%p472) target = $region48
      $region47: #{metanext_upstage_blockwithse.2} parent=11 // pred_region
        _
      $region48: #{metanext_upstage_blockwithse.2} parent=11 // pred_fallthru
        _
      // Predicated region
      $region49: #{metanext_upstage_blockwithse.2} parent=11 // pred_check
        %p475 = pneg %p260
      $region50: #{metanext_upstage_blockwithse.2} parent=11 // pred_check_branch
        %477 = sbr.rel (%p475) target = $region52
      $region51: #{metanext_upstage_blockwithse.2} parent=11 // pred_region
        _
      $region52: #{metanext_upstage_blockwithse.2} parent=11 // pred_fallthru
        _
      // Predicated region
      $region53: #{metanext_upstage_blockwithse.2} parent=11 // pred_check
        %p478 = pneg %p281
      $region54: #{metanext_upstage_blockwithse.2} parent=11 // pred_check_branch
        %480 = sbr.rel (%p478) target = $region56
      $region55: #{metanext_upstage_blockwithse.2} parent=11 // pred_region
        _
      $region56: #{metanext_upstage_blockwithse.2} parent=11 // pred_fallthru
        _
      // Predicated region
      $region57: #{metanext_upstage_blockwithse.2} parent=11 // pred_check
        %p481 = pneg %p302
      $region58: #{metanext_upstage_blockwithse.2} parent=11 // pred_check_branch
        %483 = sbr.rel (%p481) target = $region60
      $region59: #{metanext_upstage_blockwithse.2} parent=11 // pred_region
        _
      $region60: #{metanext_upstage_blockwithse.2} parent=11 // pred_fallthru
        _
      // Predicated region
      $region61: #{metanext_upstage_blockwithse.2} parent=11 // pred_check
        %p484 = pneg %p323
      $region62: #{metanext_upstage_blockwithse.2} parent=11 // pred_check_branch
        %486 = sbr.rel (%p484) target = $region64
      $region63: #{metanext_upstage_blockwithse.2} parent=11 // pred_region
        _
      $region64: #{metanext_upstage_blockwithse.2} parent=11 // pred_fallthru
        _
      // Predicated region
      $region65: #{metanext_upstage_blockwithse.2} parent=11 // pred_check
        %p487 = pneg %p344
      $region66: #{metanext_upstage_blockwithse.2} parent=11 // pred_check_branch
        %489 = sbr.rel (%p487) target = $region68
      $region67: #{metanext_upstage_blockwithse.2} parent=11 // pred_region
        _
      $region68: #{metanext_upstage_blockwithse.2} parent=11 // pred_fallthru
        _
      // Predicated region
      $region69: #{metanext_upstage_blockwithse.2} parent=11 // pred_check
        %p490 = pneg %p365
      $region70: #{metanext_upstage_blockwithse.2} parent=11 // pred_check_branch
        %492 = sbr.rel (%p490) target = $region72
      $region71: #{metanext_upstage_blockwithse.2} parent=11 // pred_region
        _
      $region72: #{metanext_upstage_blockwithse.2} parent=11 // pred_fallthru
        _
      // Predicated region
      $region73: #{metanext_upstage_blockwithse.2} parent=11 // pred_check
        %p493 = pneg %p386
      $region74: #{metanext_upstage_blockwithse.2} parent=11 // pred_check_branch
        %495 = sbr.rel (%p493) target = $region76
      $region75: #{metanext_upstage_blockwithse.2} parent=11 // pred_region
        _
      $region76: #{metanext_upstage_blockwithse.2} parent=11 // pred_fallthru
        _
      // Predicated region
      $region77: #{metanext_upstage_blockwithse.2} parent=11 // pred_check
        %p496 = pneg %p407
      $region78: #{metanext_upstage_blockwithse.2} parent=11 // pred_check_branch
        %498 = sbr.rel (%p496) target = $region80
      $region79: #{metanext_upstage_blockwithse.2} parent=11 // pred_region
        _
      $region80: #{metanext_upstage_blockwithse.2} parent=11 // pred_fallthru
        _
    $region12: #{metanext_upstage_blockwithse.2} parent=5 // pred_fallthru
      _
    %p499 = scmp.lt.s32.totalorder %s24, 2
    // Predicated region
    $region81: #{metanext_upstage_blockwithse.2} parent=5 // pred_check
      %p500 = pneg %p499
    $region82: #{metanext_upstage_blockwithse.2} parent=5 // pred_check_branch
      %502 = sbr.rel (%p500) target = $region84
    $region83: #{metanext_upstage_blockwithse.2} parent=5 // pred_region
      // Predicated region
      $region85: #{metanext_upstage_blockwithse.2} parent=83 // pred_check
        %p503 = pneg %p44
      $region86: #{metanext_upstage_blockwithse.2} parent=83 // pred_check_branch
        %505 = sbr.rel (%p503) target = $region88
      $region87: #{metanext_upstage_blockwithse.2} parent=83 // pred_region
        %p506 = scmp.lt.s32.totalorder %s24, 1
        %s507 = scalar_select %p506, %s24, 1
        %s508 = smul.addr %s507, 4
        %s509 = smul.addr %s508, 8
        %s510 = scalar_lea.vmem %s0, %s509
      $region88: #{metanext_upstage_blockwithse.2} parent=83 // pred_fallthru
        _
    $region84: #{metanext_upstage_blockwithse.2} parent=5 // pred_fallthru
      _
    %p511 = scmp.le.s32.totalorder 1, %s24
    %p512 = scmp.lt.s32.totalorder %s24, 3
    %p513 = pnand %p511, %p512
    %p514 = pneg %p513
    // Predicated region
    $region89: #{metanext_upstage_blockwithse.2} parent=5 // pred_check
      _
    $region90: #{metanext_upstage_blockwithse.2} parent=5 // pred_check_branch
      %516 = sbr.rel (%p513) target = $region92
    $region91: #{metanext_upstage_blockwithse.2} parent=5 // pred_region
      %s517 = ssub.s32 %s24, 1
      %p518 = scmp.lt.s32.totalorder %s29, 1
      %s519 = scalar_select %p518, %s29, 1
      %s520 = smul.addr %s519, 4
      %s521 = smul.addr %s520, 8
      %s522 = scalar_lea.vmem %s0, %s521
      %p523 = pneg %p50
      %p524 = pneg %p47
      %p525 = pneg %p71
      %p526 = pneg %p68
      %p527 = pneg %p92
      %p528 = pneg %p89
      %p529 = pneg %p113
      %p530 = pneg %p110
      %p531 = pneg %p134
      %p532 = pneg %p131
      %p533 = pneg %p155
      %p534 = pneg %p152
      %p535 = pneg %p176
      %p536 = pneg %p173
      %p537 = pneg %p197
      %p538 = pneg %p194
      %p539 = pneg %p218
      %p540 = pneg %p215
      %p541 = pneg %p239
      %p542 = pneg %p236
      %p543 = pneg %p260
      %p544 = pneg %p257
      %p545 = pneg %p281
      %p546 = pneg %p278
      %p547 = pneg %p302
      %p548 = pneg %p299
      %p549 = pneg %p323
      %p550 = pneg %p320
      %p551 = pneg %p344
      %p552 = pneg %p341
      %p553 = pneg %p365
      %p554 = pneg %p362
      %p555 = pneg %p386
      %p556 = pneg %p383
      %p557 = pneg %p407
      %p558 = pneg %p404
      %p559 = pneg %p433
      %p560 = pneg %p430
      %p561 = scmp.lt.s32.totalorder %s29, 1
      %s562 = scalar_select %p561, %s29, 1
      %s563 = smul.addr %s562, 4
      %s564 = smul.addr %s563, 8
      %s565 = scalar_lea.vmem %s18, %s564
      %p566 = scmp.lt.s32.totalorder %s29, 1
      %s567 = scalar_select %p566, %s29, 1
      %s568 = smul.addr %s567, 4
      %s569 = smul.addr %s568, 8
      %s570 = scalar_lea.vmem %s0, %s569
      %p571 = scmp.lt.s32.totalorder %s29, 1
      %s572 = scalar_select %p571, %s29, 1
      %s573 = smul.addr %s572, 4
      %s574 = smul.addr %s573, 8
      %s575 = scalar_lea.vmem %s18, %s574
      %576 = vst [vmem:[#allocation2] sm:$0xff] 0.0
      %577 = vst [vmem:[#allocation2 + $0x20] sm:$0xff] 0.0
      %578 = vst [vmem:[#allocation2 + $0x18] sm:$0xff] 0.0
      %579 = vst [vmem:[#allocation2 + $0x38] sm:$0xff] 0.0
      %v580 = vld [vmem:[%s570] sm:$0xff]
      %v581 = vld [vmem:[%s570 + $0x8] sm:$0xff]
      %v582 = vld [vmem:[%s570 + $0x10] sm:$0xff]
      %v583 = vld [vmem:[%s570 + $0x18] sm:$0xff]
      %v584 = vld [vmem:[%s1] sm:$0xff]
      %v585 = vld [vmem:[%s1 + $0x8] sm:$0xff]
      %587 = vset.pattern.permute.xlu0 0
      %588 = vperm.xlu0 %587, %v584
      %v589 = vpop.permute.xlu0 %588
      %592 = vset.pattern.permute.xlu0 0
      %593 = vperm.xlu0 %592, %v585
      %v594 = vpop.permute.xlu0 %593
      %v596 = vmul.f32 %v580, %v589
      %v597 = vmul.f32 %v581, %v589
      %v598 = vmul.f32 %v582, %v594
      %v599 = vmul.f32 %v583, %v594
      %v600 = vld [vmem:[%s2] sm:$0xff]
      %v601 = vld [vmem:[%s2 + $0x8] sm:$0xff]
      %603 = vset.pattern.permute.xlu0 0
      %604 = vperm.xlu0 %603, %v600
      %v605 = vpop.permute.xlu0 %604
      %608 = vset.pattern.permute.xlu0 0
      %609 = vperm.xlu0 %608, %v601
      %v610 = vpop.permute.xlu0 %609
      %v612 = vadd.f32 %v596, %v605
      %v613 = vadd.f32 %v597, %v605
      %v614 = vadd.f32 %v598, %v610
      %v615 = vadd.f32 %v599, %v610
      %v616 = vld [vmem:[%s17] sm:$0x7f]
      %v617 = vld [vmem:[%s17 + $0x8] sm:$0x7f]
      %618 = vst [vmem:[#allocation2 + $0x8] sm:$0xff] %v612
      %619 = vst [vmem:[#allocation2 + $0x10] sm:$0xff] %v613
      %620 = vst [vmem:[#allocation2 + $0x28] sm:$0xff] %v614
      %621 = vst [vmem:[#allocation2 + $0x30] sm:$0xff] %v615
      %v622 = vld [vmem:[%s3] sm:$0xff]
      %v623 = vld [vmem:[%s3 + $0x8] sm:$0xff]
      %v624 = vld [vmem:[#allocation2] sm:$0xff]
      %v625 = vld [vmem:[#allocation2 + $0x8] sm:$0xff]
      %v626 = vld [vmem:[#allocation2 + $0x10] sm:$0xff]
      %v627 = vld [vmem:[#allocation2 + $0x20] sm:$0xff]
      %v628 = vld [vmem:[#allocation2 + $0x28] sm:$0xff]
      %v629 = vld [vmem:[#allocation2 + $0x30] sm:$0xff]
      %631 = vset.pattern.permute.xlu0 0
      %632 = vperm.xlu0 %631, %v622
      %v633 = vpop.permute.xlu0 %632
      %636 = vset.pattern.permute.xlu0 0
      %637 = vperm.xlu0 %636, %v623
      %v638 = vpop.permute.xlu0 %637
      %v640 = vmul.f32 %v624, %v633
      %v641 = vmul.f32 %v625, %v633
      %v642 = vmul.f32 %v626, %v633
      %v643 = vmul.f32 %v627, %v638
      %v644 = vmul.f32 %v628, %v638
      %v645 = vmul.f32 %v629, %v638
      %v646 = vlaneseq
      %v647 = vshrl.u32 %v646, 7
      %v648 = vsub.s32 0, %v647
      %v649 = vrot.slane %v616, %v648
      %v650 = vlaneseq
      %v651 = vshrl.u32 %v650, 7
      %v652 = vsub.s32 0, %v651
      %v653 = vrot.slane %v617, %v652
      %656 = vrot.lane.b32.xlu0 %v649, 77
      %v657 = vpop.permute.xlu0 %656
      %658 = vrot.lane.b32.xlu0 %v653, 77
      %v659 = vpop.permute.xlu0 %658
      %vm660 = vcmask 629760
      %v661 = vsel %vm660, %v657, %v659
      %v665 = vmul.f32 %v640, %v657
      %v666 = vmul.f32 %v641, %v661
      %v667 = vmul.f32 %v642, %v659
      %v668 = vmul.f32 %v643, %v657
      %v669 = vmul.f32 %v644, %v661
      %v670 = vmul.f32 %v645, %v659
      %v671 = vadd.f32 %v665, 0.0
      %v672 = vadd.f32 %v666, 0.0
      %v673 = vadd.f32 %v667, 0.0
      %v674 = vadd.f32 %v668, 0.0
      %v675 = vadd.f32 %v669, 0.0
      %v676 = vadd.f32 %v670, 0.0
      %677 = vset.pattern.permute.xlu0 1
      %678 = vperm.xlu0 %677, %v622
      %v679 = vpop.permute.xlu0 %678
      %681 = vset.pattern.permute.xlu0 1
      %682 = vperm.xlu0 %681, %v623
      %v683 = vpop.permute.xlu0 %682
      %v685 = vmul.f32 %v624, %v679
      %v686 = vmul.f32 %v625, %v679
      %v687 = vmul.f32 %v626, %v679
      %v688 = vmul.f32 %v627, %v683
      %v689 = vmul.f32 %v628, %v683
      %v690 = vmul.f32 %v629, %v683
      %v691 = vlaneseq
      %v692 = vshrl.u32 %v691, 7
      %v693 = vsub.s32 1, %v692
      %v694 = vrot.slane %v616, %v693
      %v695 = vlaneseq
      %v696 = vshrl.u32 %v695, 7
      %v697 = vsub.s32 1, %v696
      %v698 = vrot.slane %v617, %v697
      %701 = vrot.lane.b32.xlu0 %v694, 78
      %v702 = vpop.permute.xlu0 %701
      %703 = vrot.lane.b32.xlu0 %v698, 78
      %v704 = vpop.permute.xlu0 %703
      %vm705 = vcmask 637952
      %v706 = vsel %vm705, %v702, %v704
      %v710 = vmul.f32 %v685, %v702
      %v711 = vmul.f32 %v686, %v706
      %v712 = vmul.f32 %v687, %v704
      %v713 = vmul.f32 %v688, %v702
      %v714 = vmul.f32 %v689, %v706
      %v715 = vmul.f32 %v690, %v704
      %722 = vrot.lane.b32.xlu0 %v710, 127
      %v723 = vpop.permute.xlu0 %722
      %724 = vrot.lane.b32.xlu0 %v711, 127
      %v725 = vpop.permute.xlu0 %724
      %726 = vrot.lane.b32.xlu0 %v712, 127
      %v727 = vpop.permute.xlu0 %726
      %728 = vrot.lane.b32.xlu0 %v713, 127
      %v729 = vpop.permute.xlu0 %728
      %730 = vrot.lane.b32.xlu0 %v714, 127
      %v731 = vpop.permute.xlu0 %730
      %732 = vrot.lane.b32.xlu0 %v715, 127
      %v733 = vpop.permute.xlu0 %732
      %vm734 = vcmask 1039360
      %v735 = vsel %vm734, %v723, %v725
      %v736 = vsel %vm734, %v725, %v727
      %v737 = vsel %vm734, %v729, %v731
      %v738 = vsel %vm734, %v731, %v733
      %v745 = vadd.f32 %v671, %v735
      %v746 = vadd.f32 %v672, %v736
      %v747 = vadd.f32 %v673, %v727
      %v748 = vadd.f32 %v674, %v737
      %v749 = vadd.f32 %v675, %v738
      %v750 = vadd.f32 %v676, %v733
      %751 = vset.pattern.permute.xlu0 2
      %752 = vperm.xlu0 %751, %v622
      %v753 = vpop.permute.xlu0 %752
      %755 = vset.pattern.permute.xlu0 2
      %756 = vperm.xlu0 %755, %v623
      %v757 = vpop.permute.xlu0 %756
      %v759 = vmul.f32 %v624, %v753
      %v760 = vmul.f32 %v625, %v753
      %v761 = vmul.f32 %v626, %v753
      %v762 = vmul.f32 %v627, %v757
      %v763 = vmul.f32 %v628, %v757
      %v764 = vmul.f32 %v629, %v757
      %v765 = vlaneseq
      %v766 = vshrl.u32 %v765, 7
      %v767 = vsub.s32 2, %v766
      %v768 = vrot.slane %v616, %v767
      %v769 = vlaneseq
      %v770 = vshrl.u32 %v769, 7
      %v771 = vsub.s32 2, %v770
      %v772 = vrot.slane %v617, %v771
      %775 = vrot.lane.b32.xlu0 %v768, 79
      %v776 = vpop.permute.xlu0 %775
      %777 = vrot.lane.b32.xlu0 %v772, 79
      %v778 = vpop.permute.xlu0 %777
      %vm779 = vcmask 646144
      %v780 = vsel %vm779, %v776, %v778
      %v784 = vmul.f32 %v759, %v776
      %v785 = vmul.f32 %v760, %v780
      %v786 = vmul.f32 %v761, %v778
      %v787 = vmul.f32 %v762, %v776
      %v788 = vmul.f32 %v763, %v780
      %v789 = vmul.f32 %v764, %v778
      %796 = vrot.lane.b32.xlu0 %v784, 126
      %v797 = vpop.permute.xlu0 %796
      %798 = vrot.lane.b32.xlu0 %v785, 126
      %v799 = vpop.permute.xlu0 %798
      %800 = vrot.lane.b32.xlu0 %v786, 126
      %v801 = vpop.permute.xlu0 %800
      %802 = vrot.lane.b32.xlu0 %v787, 126
      %v803 = vpop.permute.xlu0 %802
      %804 = vrot.lane.b32.xlu0 %v788, 126
      %v805 = vpop.permute.xlu0 %804
      %806 = vrot.lane.b32.xlu0 %v789, 126
      %v807 = vpop.permute.xlu0 %806
      %vm808 = vcmask 1031168
      %v809 = vsel %vm808, %v797, %v799
      %v810 = vsel %vm808, %v799, %v801
      %v811 = vsel %vm808, %v803, %v805
      %v812 = vsel %vm808, %v805, %v807
      %v819 = vadd.f32 %v745, %v809
      %v820 = vadd.f32 %v746, %v810
      %v821 = vadd.f32 %v747, %v801
      %v822 = vadd.f32 %v748, %v811
      %v823 = vadd.f32 %v749, %v812
      %v824 = vadd.f32 %v750, %v807
      %825 = vset.pattern.permute.xlu0 3
      %826 = vperm.xlu0 %825, %v622
      %v827 = vpop.permute.xlu0 %826
      %829 = vset.pattern.permute.xlu0 3
      %830 = vperm.xlu0 %829, %v623
      %v831 = vpop.permute.xlu0 %830
      %v833 = vmul.f32 %v624, %v827
      %v834 = vmul.f32 %v625, %v827
      %v835 = vmul.f32 %v626, %v827
      %v836 = vmul.f32 %v627, %v831
      %v837 = vmul.f32 %v628, %v831
      %v838 = vmul.f32 %v629, %v831
      %845 = vrot.lane.b32.xlu0 %v833, 125
      %v846 = vpop.permute.xlu0 %845
      %847 = vrot.lane.b32.xlu0 %v834, 125
      %v848 = vpop.permute.xlu0 %847
      %849 = vrot.lane.b32.xlu0 %v835, 125
      %v850 = vpop.permute.xlu0 %849
      %851 = vrot.lane.b32.xlu0 %v836, 125
      %v852 = vpop.permute.xlu0 %851
      %853 = vrot.lane.b32.xlu0 %v837, 125
      %v854 = vpop.permute.xlu0 %853
      %855 = vrot.lane.b32.xlu0 %v838, 125
      %v856 = vpop.permute.xlu0 %855
      %vm857 = vcmask 1022976
      %v858 = vsel %vm857, %v846, %v848
      %v859 = vsel %vm857, %v848, %v850
      %v860 = vsel %vm857, %v852, %v854
      %v861 = vsel %vm857, %v854, %v856
      %v868 = vadd.f32 %v819, %v858
      %v869 = vadd.f32 %v820, %v859
      %v870 = vadd.f32 %v821, %v850
      %v871 = vadd.f32 %v822, %v860
      %v872 = vadd.f32 %v823, %v861
      %v873 = vadd.f32 %v824, %v856
      %874 = vset.pattern.permute.xlu0 4
      %875 = vperm.xlu0 %874, %v622
      %v876 = vpop.permute.xlu0 %875
      %878 = vset.pattern.permute.xlu0 4
      %879 = vperm.xlu0 %878, %v623
      %v880 = vpop.permute.xlu0 %879
      %v882 = vmul.f32 %v624, %v876
      %v883 = vmul.f32 %v625, %v876
      %v884 = vmul.f32 %v626, %v876
      %v885 = vmul.f32 %v627, %v880
      %v886 = vmul.f32 %v628, %v880
      %v887 = vmul.f32 %v629, %v880
      %v888 = vlaneseq
      %v889 = vshrl.u32 %v888, 7
      %v890 = vsub.s32 4, %v889
      %v891 = vrot.slane %v616, %v890
      %v892 = vlaneseq
      %v893 = vshrl.u32 %v892, 7
      %v894 = vsub.s32 4, %v893
      %v895 = vrot.slane %v617, %v894
      %898 = vrot.lane.b32.xlu0 %v891, 81
      %v899 = vpop.permute.xlu0 %898
      %900 = vrot.lane.b32.xlu0 %v895, 81
      %v901 = vpop.permute.xlu0 %900
      %vm902 = vcmask 662528
      %v903 = vsel %vm902, %v899, %v901
      %v907 = vmul.f32 %v882, %v899
      %v908 = vmul.f32 %v883, %v903
      %v909 = vmul.f32 %v884, %v901
      %v910 = vmul.f32 %v885, %v899
      %v911 = vmul.f32 %v886, %v903
      %v912 = vmul.f32 %v887, %v901
      %919 = vrot.lane.b32.xlu0 %v907, 124
      %v920 = vpop.permute.xlu0 %919
      %921 = vrot.lane.b32.xlu0 %v908, 124
      %v922 = vpop.permute.xlu0 %921
      %923 = vrot.lane.b32.xlu0 %v909, 124
      %v924 = vpop.permute.xlu0 %923
      %925 = vrot.lane.b32.xlu0 %v910, 124
      %v926 = vpop.permute.xlu0 %925
      %927 = vrot.lane.b32.xlu0 %v911, 124
      %v928 = vpop.permute.xlu0 %927
      %929 = vrot.lane.b32.xlu0 %v912, 124
      %v930 = vpop.permute.xlu0 %929
      %vm931 = vcmask 1014784
      %v932 = vsel %vm931, %v920, %v922
      %v933 = vsel %vm931, %v922, %v924
      %v934 = vsel %vm931, %v926, %v928
      %v935 = vsel %vm931, %v928, %v930
      %v942 = vadd.f32 %v868, %v932
      %v943 = vadd.f32 %v869, %v933
      %v944 = vadd.f32 %v870, %v924
      %v945 = vadd.f32 %v871, %v934
      %v946 = vadd.f32 %v872, %v935
      %v947 = vadd.f32 %v873, %v930
      %948 = vset.pattern.permute.xlu0 5
      %949 = vperm.xlu0 %948, %v622
      %v950 = vpop.permute.xlu0 %949
      %952 = vset.pattern.permute.xlu0 5
      %953 = vperm.xlu0 %952, %v623
      %v954 = vpop.permute.xlu0 %953
      %v956 = vmul.f32 %v624, %v950
      %v957 = vmul.f32 %v625, %v950
      %v958 = vmul.f32 %v626, %v950
      %v959 = vmul.f32 %v627, %v954
      %v960 = vmul.f32 %v628, %v954
      %v961 = vmul.f32 %v629, %v954
      %v962 = vlaneseq
      %v963 = vshrl.u32 %v962, 7
      %v964 = vsub.s32 5, %v963
      %v965 = vrot.slane %v616, %v964
      %v966 = vlaneseq
      %v967 = vshrl.u32 %v966, 7
      %v968 = vsub.s32 5, %v967
      %v969 = vrot.slane %v617, %v968
      %972 = vrot.lane.b32.xlu0 %v965, 82
      %v973 = vpop.permute.xlu0 %972
      %974 = vrot.lane.b32.xlu0 %v969, 82
      %v975 = vpop.permute.xlu0 %974
      %vm976 = vcmask 670720
      %v977 = vsel %vm976, %v973, %v975
      %v981 = vmul.f32 %v956, %v973
      %v982 = vmul.f32 %v957, %v977
      %v983 = vmul.f32 %v958, %v975
      %v984 = vmul.f32 %v959, %v973
      %v985 = vmul.f32 %v960, %v977
      %v986 = vmul.f32 %v961, %v975
      %993 = vrot.lane.b32.xlu0 %v981, 123
      %v994 = vpop.permute.xlu0 %993
      %995 = vrot.lane.b32.xlu0 %v982, 123
      %v996 = vpop.permute.xlu0 %995
      %997 = vrot.lane.b32.xlu0 %v983, 123
      %v998 = vpop.permute.xlu0 %997
      %999 = vrot.lane.b32.xlu0 %v984, 123
      %v1000 = vpop.permute.xlu0 %999
      %1001 = vrot.lane.b32.xlu0 %v985, 123
      %v1002 = vpop.permute.xlu0 %1001
      %1003 = vrot.lane.b32.xlu0 %v986, 123
      %v1004 = vpop.permute.xlu0 %1003
      %vm1005 = vcmask 1006592
      %v1006 = vsel %vm1005, %v994, %v996
      %v1007 = vsel %vm1005, %v996, %v998
      %v1008 = vsel %vm1005, %v1000, %v1002
      %v1009 = vsel %vm1005, %v1002, %v1004
      %v1016 = vadd.f32 %v942, %v1006
      %v1017 = vadd.f32 %v943, %v1007
      %v1018 = vadd.f32 %v944, %v998
      %v1019 = vadd.f32 %v945, %v1008
      %v1020 = vadd.f32 %v946, %v1009
      %v1021 = vadd.f32 %v947, %v1004
      %1022 = vset.pattern.permute.xlu0 6
      %1023 = vperm.xlu0 %1022, %v622
      %v1024 = vpop.permute.xlu0 %1023
      %1026 = vset.pattern.permute.xlu0 6
      %1027 = vperm.xlu0 %1026, %v623
      %v1028 = vpop.permute.xlu0 %1027
      %v1030 = vmul.f32 %v624, %v1024
      %v1031 = vmul.f32 %v625, %v1024
      %v1032 = vmul.f32 %v626, %v1024
      %v1033 = vmul.f32 %v627, %v1028
      %v1034 = vmul.f32 %v628, %v1028
      %v1035 = vmul.f32 %v629, %v1028
      %v1036 = vlaneseq
      %v1037 = vshrl.u32 %v1036, 7
      %v1038 = vsub.s32 6, %v1037
      %v1039 = vrot.slane %v616, %v1038
      %v1040 = vlaneseq
      %v1041 = vshrl.u32 %v1040, 7
      %v1042 = vsub.s32 6, %v1041
      %v1043 = vrot.slane %v617, %v1042
      %1046 = vrot.lane.b32.xlu0 %v1039, 83
      %v1047 = vpop.permute.xlu0 %1046
      %1048 = vrot.lane.b32.xlu0 %v1043, 83
      %v1049 = vpop.permute.xlu0 %1048
      %vm1050 = vcmask 678912
      %v1051 = vsel %vm1050, %v1047, %v1049
      %v1055 = vmul.f32 %v1030, %v1047
      %v1056 = vmul.f32 %v1031, %v1051
      %v1057 = vmul.f32 %v1032, %v1049
      %v1058 = vmul.f32 %v1033, %v1047
      %v1059 = vmul.f32 %v1034, %v1051
      %v1060 = vmul.f32 %v1035, %v1049
      %1067 = vrot.lane.b32.xlu0 %v1055, 122
      %v1068 = vpop.permute.xlu0 %1067
      %1069 = vrot.lane.b32.xlu0 %v1056, 122
      %v1070 = vpop.permute.xlu0 %1069
      %1071 = vrot.lane.b32.xlu0 %v1057, 122
      %v1072 = vpop.permute.xlu0 %1071
      %1073 = vrot.lane.b32.xlu0 %v1058, 122
      %v1074 = vpop.permute.xlu0 %1073
      %1075 = vrot.lane.b32.xlu0 %v1059, 122
      %v1076 = vpop.permute.xlu0 %1075
      %1077 = vrot.lane.b32.xlu0 %v1060, 122
      %v1078 = vpop.permute.xlu0 %1077
      %vm1079 = vcmask 998400
      %v1080 = vsel %vm1079, %v1068, %v1070
      %v1081 = vsel %vm1079, %v1070, %v1072
      %v1082 = vsel %vm1079, %v1074, %v1076
      %v1083 = vsel %vm1079, %v1076, %v1078
      %v1090 = vadd.f32 %v1016, %v1080
      %v1091 = vadd.f32 %v1017, %v1081
      %v1092 = vadd.f32 %v1018, %v1072
      %v1093 = vadd.f32 %v1019, %v1082
      %v1094 = vadd.f32 %v1020, %v1083
      %v1095 = vadd.f32 %v1021, %v1078
      %1096 = vset.pattern.permute.xlu0 7
      %1097 = vperm.xlu0 %1096, %v622
      %v1098 = vpop.permute.xlu0 %1097
      %1100 = vset.pattern.permute.xlu0 7
      %1101 = vperm.xlu0 %1100, %v623
      %v1102 = vpop.permute.xlu0 %1101
      %v1104 = vmul.f32 %v624, %v1098
      %v1105 = vmul.f32 %v625, %v1098
      %v1106 = vmul.f32 %v626, %v1098
      %v1107 = vmul.f32 %v627, %v1102
      %v1108 = vmul.f32 %v628, %v1102
      %v1109 = vmul.f32 %v629, %v1102
      %1110 = vrot.lane.b32.xlu0 %v649, 93
      %v1111 = vpop.permute.xlu0 %1110
      %1112 = vrot.lane.b32.xlu0 %v653, 93
      %v1113 = vpop.permute.xlu0 %1112
      %vm1114 = vcmask 760832
      %v1115 = vsel %vm1114, %v1111, %v1113
      %v1119 = vmul.f32 %v1104, %v1111
      %v1120 = vmul.f32 %v1105, %v1115
      %v1121 = vmul.f32 %v1106, %v1113
      %v1122 = vmul.f32 %v1107, %v1111
      %v1123 = vmul.f32 %v1108, %v1115
      %v1124 = vmul.f32 %v1109, %v1113
      %1131 = vrot.lane.b32.xlu0 %v1119, 112
      %v1132 = vpop.permute.xlu0 %1131
      %1133 = vrot.lane.b32.xlu0 %v1120, 112
      %v1134 = vpop.permute.xlu0 %1133
      %1135 = vrot.lane.b32.xlu0 %v1121, 112
      %v1136 = vpop.permute.xlu0 %1135
      %1137 = vrot.lane.b32.xlu0 %v1122, 112
      %v1138 = vpop.permute.xlu0 %1137
      %1139 = vrot.lane.b32.xlu0 %v1123, 112
      %v1140 = vpop.permute.xlu0 %1139
      %1141 = vrot.lane.b32.xlu0 %v1124, 112
      %v1142 = vpop.permute.xlu0 %1141
      %vm1143 = vcmask 916480
      %v1144 = vsel %vm1143, %v1132, %v1134
      %v1145 = vsel %vm1143, %v1134, %v1136
      %v1146 = vsel %vm1143, %v1138, %v1140
      %v1147 = vsel %vm1143, %v1140, %v1142
      %v1154 = vadd.f32 %v1090, %v1144
      %v1155 = vadd.f32 %v1091, %v1145
      %v1156 = vadd.f32 %v1092, %v1136
      %v1157 = vadd.f32 %v1093, %v1146
      %v1158 = vadd.f32 %v1094, %v1147
      %v1159 = vadd.f32 %v1095, %v1142
      %1160 = vset.pattern.permute.xlu0 8
      %1161 = vperm.xlu0 %1160, %v622
      %v1162 = vpop.permute.xlu0 %1161
      %1164 = vset.pattern.permute.xlu0 8
      %1165 = vperm.xlu0 %1164, %v623
      %v1166 = vpop.permute.xlu0 %1165
      %v1168 = vmul.f32 %v624, %v1162
      %v1169 = vmul.f32 %v625, %v1162
      %v1170 = vmul.f32 %v626, %v1162
      %v1171 = vmul.f32 %v627, %v1166
      %v1172 = vmul.f32 %v628, %v1166
      %v1173 = vmul.f32 %v629, %v1166
      %1174 = vrot.lane.b32.xlu0 %v694, 94
      %v1175 = vpop.permute.xlu0 %1174
      %1176 = vrot.lane.b32.xlu0 %v698, 94
      %v1177 = vpop.permute.xlu0 %1176
      %vm1178 = vcmask 769024
      %v1179 = vsel %vm1178, %v1175, %v1177
      %v1183 = vmul.f32 %v1168, %v1175
      %v1184 = vmul.f32 %v1169, %v1179
      %v1185 = vmul.f32 %v1170, %v1177
      %v1186 = vmul.f32 %v1171, %v1175
      %v1187 = vmul.f32 %v1172, %v1179
      %v1188 = vmul.f32 %v1173, %v1177
      %1195 = vrot.lane.b32.xlu0 %v1183, 111
      %v1196 = vpop.permute.xlu0 %1195
      %1197 = vrot.lane.b32.xlu0 %v1184, 111
      %v1198 = vpop.permute.xlu0 %1197
      %1199 = vrot.lane.b32.xlu0 %v1185, 111
      %v1200 = vpop.permute.xlu0 %1199
      %1201 = vrot.lane.b32.xlu0 %v1186, 111
      %v1202 = vpop.permute.xlu0 %1201
      %1203 = vrot.lane.b32.xlu0 %v1187, 111
      %v1204 = vpop.permute.xlu0 %1203
      %1205 = vrot.lane.b32.xlu0 %v1188, 111
      %v1206 = vpop.permute.xlu0 %1205
      %vm1207 = vcmask 908288
      %v1208 = vsel %vm1207, %v1196, %v1198
      %v1209 = vsel %vm1207, %v1198, %v1200
      %v1210 = vsel %vm1207, %v1202, %v1204
      %v1211 = vsel %vm1207, %v1204, %v1206
      %v1218 = vadd.f32 %v1154, %v1208
      %v1219 = vadd.f32 %v1155, %v1209
      %v1220 = vadd.f32 %v1156, %v1200
      %v1221 = vadd.f32 %v1157, %v1210
      %v1222 = vadd.f32 %v1158, %v1211
      %v1223 = vadd.f32 %v1159, %v1206
      %1224 = vset.pattern.permute.xlu0 9
      %1225 = vperm.xlu0 %1224, %v622
      %v1226 = vpop.permute.xlu0 %1225
      %1228 = vset.pattern.permute.xlu0 9
      %1229 = vperm.xlu0 %1228, %v623
      %v1230 = vpop.permute.xlu0 %1229
      %v1232 = vmul.f32 %v624, %v1226
      %v1233 = vmul.f32 %v625, %v1226
      %v1234 = vmul.f32 %v626, %v1226
      %v1235 = vmul.f32 %v627, %v1230
      %v1236 = vmul.f32 %v628, %v1230
      %v1237 = vmul.f32 %v629, %v1230
      %1238 = vrot.lane.b32.xlu0 %v768, 95
      %v1239 = vpop.permute.xlu0 %1238
      %1240 = vrot.lane.b32.xlu0 %v772, 95
      %v1241 = vpop.permute.xlu0 %1240
      %vm1242 = vcmask 777216
      %v1243 = vsel %vm1242, %v1239, %v1241
      %v1247 = vmul.f32 %v1232, %v1239
      %v1248 = vmul.f32 %v1233, %v1243
      %v1249 = vmul.f32 %v1234, %v1241
      %v1250 = vmul.f32 %v1235, %v1239
      %v1251 = vmul.f32 %v1236, %v1243
      %v1252 = vmul.f32 %v1237, %v1241
      %1259 = vrot.lane.b32.xlu0 %v1247, 110
      %v1260 = vpop.permute.xlu0 %1259
      %1261 = vrot.lane.b32.xlu0 %v1248, 110
      %v1262 = vpop.permute.xlu0 %1261
      %1263 = vrot.lane.b32.xlu0 %v1249, 110
      %v1264 = vpop.permute.xlu0 %1263
      %1265 = vrot.lane.b32.xlu0 %v1250, 110
      %v1266 = vpop.permute.xlu0 %1265
      %1267 = vrot.lane.b32.xlu0 %v1251, 110
      %v1268 = vpop.permute.xlu0 %1267
      %1269 = vrot.lane.b32.xlu0 %v1252, 110
      %v1270 = vpop.permute.xlu0 %1269
      %vm1271 = vcmask 900096
      %v1272 = vsel %vm1271, %v1260, %v1262
      %v1273 = vsel %vm1271, %v1262, %v1264
      %v1274 = vsel %vm1271, %v1266, %v1268
      %v1275 = vsel %vm1271, %v1268, %v1270
      %v1282 = vadd.f32 %v1218, %v1272
      %v1283 = vadd.f32 %v1219, %v1273
      %v1284 = vadd.f32 %v1220, %v1264
      %v1285 = vadd.f32 %v1221, %v1274
      %v1286 = vadd.f32 %v1222, %v1275
      %v1287 = vadd.f32 %v1223, %v1270
      %1288 = vset.pattern.permute.xlu0 10
      %1289 = vperm.xlu0 %1288, %v622
      %v1290 = vpop.permute.xlu0 %1289
      %1292 = vset.pattern.permute.xlu0 10
      %1293 = vperm.xlu0 %1292, %v623
      %v1294 = vpop.permute.xlu0 %1293
      %v1296 = vmul.f32 %v624, %v1290
      %v1297 = vmul.f32 %v625, %v1290
      %v1298 = vmul.f32 %v626, %v1290
      %v1299 = vmul.f32 %v627, %v1294
      %v1300 = vmul.f32 %v628, %v1294
      %v1301 = vmul.f32 %v629, %v1294
      %1308 = vrot.lane.b32.xlu0 %v1296, 109
      %v1309 = vpop.permute.xlu0 %1308
      %1310 = vrot.lane.b32.xlu0 %v1297, 109
      %v1311 = vpop.permute.xlu0 %1310
      %1312 = vrot.lane.b32.xlu0 %v1298, 109
      %v1313 = vpop.permute.xlu0 %1312
      %1314 = vrot.lane.b32.xlu0 %v1299, 109
      %v1315 = vpop.permute.xlu0 %1314
      %1316 = vrot.lane.b32.xlu0 %v1300, 109
      %v1317 = vpop.permute.xlu0 %1316
      %1318 = vrot.lane.b32.xlu0 %v1301, 109
      %v1319 = vpop.permute.xlu0 %1318
      %vm1320 = vcmask 891904
      %v1321 = vsel %vm1320, %v1309, %v1311
      %v1322 = vsel %vm1320, %v1311, %v1313
      %v1323 = vsel %vm1320, %v1315, %v1317
      %v1324 = vsel %vm1320, %v1317, %v1319
      %v1331 = vadd.f32 %v1282, %v1321
      %v1332 = vadd.f32 %v1283, %v1322
      %v1333 = vadd.f32 %v1284, %v1313
      %v1334 = vadd.f32 %v1285, %v1323
      %v1335 = vadd.f32 %v1286, %v1324
      %v1336 = vadd.f32 %v1287, %v1319
      %1337 = vset.pattern.permute.xlu0 11
      %1338 = vperm.xlu0 %1337, %v622
      %v1339 = vpop.permute.xlu0 %1338
      %1341 = vset.pattern.permute.xlu0 11
      %1342 = vperm.xlu0 %1341, %v623
      %v1343 = vpop.permute.xlu0 %1342
      %v1345 = vmul.f32 %v624, %v1339
      %v1346 = vmul.f32 %v625, %v1339
      %v1347 = vmul.f32 %v626, %v1339
      %v1348 = vmul.f32 %v627, %v1343
      %v1349 = vmul.f32 %v628, %v1343
      %v1350 = vmul.f32 %v629, %v1343
      %1351 = vrot.lane.b32.xlu0 %v891, 97
      %v1352 = vpop.permute.xlu0 %1351
      %1353 = vrot.lane.b32.xlu0 %v895, 97
      %v1354 = vpop.permute.xlu0 %1353
      %vm1355 = vcmask 793600
      %v1356 = vsel %vm1355, %v1352, %v1354
      %v1360 = vmul.f32 %v1345, %v1352
      %v1361 = vmul.f32 %v1346, %v1356
      %v1362 = vmul.f32 %v1347, %v1354
      %v1363 = vmul.f32 %v1348, %v1352
      %v1364 = vmul.f32 %v1349, %v1356
      %v1365 = vmul.f32 %v1350, %v1354
      %1372 = vrot.lane.b32.xlu0 %v1360, 108
      %v1373 = vpop.permute.xlu0 %1372
      %1374 = vrot.lane.b32.xlu0 %v1361, 108
      %v1375 = vpop.permute.xlu0 %1374
      %1376 = vrot.lane.b32.xlu0 %v1362, 108
      %v1377 = vpop.permute.xlu0 %1376
      %1378 = vrot.lane.b32.xlu0 %v1363, 108
      %v1379 = vpop.permute.xlu0 %1378
      %1380 = vrot.lane.b32.xlu0 %v1364, 108
      %v1381 = vpop.permute.xlu0 %1380
      %1382 = vrot.lane.b32.xlu0 %v1365, 108
      %v1383 = vpop.permute.xlu0 %1382
      %vm1384 = vcmask 883712
      %v1385 = vsel %vm1384, %v1373, %v1375
      %v1386 = vsel %vm1384, %v1375, %v1377
      %v1387 = vsel %vm1384, %v1379, %v1381
      %v1388 = vsel %vm1384, %v1381, %v1383
      %v1395 = vadd.f32 %v1331, %v1385
      %v1396 = vadd.f32 %v1332, %v1386
      %v1397 = vadd.f32 %v1333, %v1377
      %v1398 = vadd.f32 %v1334, %v1387
      %v1399 = vadd.f32 %v1335, %v1388
      %v1400 = vadd.f32 %v1336, %v1383
      %1401 = vset.pattern.permute.xlu0 12
      %1402 = vperm.xlu0 %1401, %v622
      %v1403 = vpop.permute.xlu0 %1402
      %1405 = vset.pattern.permute.xlu0 12
      %1406 = vperm.xlu0 %1405, %v623
      %v1407 = vpop.permute.xlu0 %1406
      %v1409 = vmul.f32 %v624, %v1403
      %v1410 = vmul.f32 %v625, %v1403
      %v1411 = vmul.f32 %v626, %v1403
      %v1412 = vmul.f32 %v627, %v1407
      %v1413 = vmul.f32 %v628, %v1407
      %v1414 = vmul.f32 %v629, %v1407
      %1415 = vrot.lane.b32.xlu0 %v965, 98
      %v1416 = vpop.permute.xlu0 %1415
      %1417 = vrot.lane.b32.xlu0 %v969, 98
      %v1418 = vpop.permute.xlu0 %1417
      %vm1419 = vcmask 801792
      %v1420 = vsel %vm1419, %v1416, %v1418
      %v1424 = vmul.f32 %v1409, %v1416
      %v1425 = vmul.f32 %v1410, %v1420
      %v1426 = vmul.f32 %v1411, %v1418
      %v1427 = vmul.f32 %v1412, %v1416
      %v1428 = vmul.f32 %v1413, %v1420
      %v1429 = vmul.f32 %v1414, %v1418
      %1436 = vrot.lane.b32.xlu0 %v1424, 107
      %v1437 = vpop.permute.xlu0 %1436
      %1438 = vrot.lane.b32.xlu0 %v1425, 107
      %v1439 = vpop.permute.xlu0 %1438
      %1440 = vrot.lane.b32.xlu0 %v1426, 107
      %v1441 = vpop.permute.xlu0 %1440
      %1442 = vrot.lane.b32.xlu0 %v1427, 107
      %v1443 = vpop.permute.xlu0 %1442
      %1444 = vrot.lane.b32.xlu0 %v1428, 107
      %v1445 = vpop.permute.xlu0 %1444
      %1446 = vrot.lane.b32.xlu0 %v1429, 107
      %v1447 = vpop.permute.xlu0 %1446
      %vm1448 = vcmask 875520
      %v1449 = vsel %vm1448, %v1437, %v1439
      %v1450 = vsel %vm1448, %v1439, %v1441
      %v1451 = vsel %vm1448, %v1443, %v1445
      %v1452 = vsel %vm1448, %v1445, %v1447
      %v1459 = vadd.f32 %v1395, %v1449
      %v1460 = vadd.f32 %v1396, %v1450
      %v1461 = vadd.f32 %v1397, %v1441
      %v1462 = vadd.f32 %v1398, %v1451
      %v1463 = vadd.f32 %v1399, %v1452
      %v1464 = vadd.f32 %v1400, %v1447
      %1465 = vset.pattern.permute.xlu0 13
      %1466 = vperm.xlu0 %1465, %v622
      %v1467 = vpop.permute.xlu0 %1466
      %1469 = vset.pattern.permute.xlu0 13
      %1470 = vperm.xlu0 %1469, %v623
      %v1471 = vpop.permute.xlu0 %1470
      %v1473 = vmul.f32 %v624, %v1467
      %v1474 = vmul.f32 %v625, %v1467
      %v1475 = vmul.f32 %v626, %v1467
      %v1476 = vmul.f32 %v627, %v1471
      %v1477 = vmul.f32 %v628, %v1471
      %v1478 = vmul.f32 %v629, %v1471
      %1479 = vrot.lane.b32.xlu0 %v1039, 99
      %v1480 = vpop.permute.xlu0 %1479
      %1481 = vrot.lane.b32.xlu0 %v1043, 99
      %v1482 = vpop.permute.xlu0 %1481
      %vm1483 = vcmask 809984
      %v1484 = vsel %vm1483, %v1480, %v1482
      %v1488 = vmul.f32 %v1473, %v1480
      %v1489 = vmul.f32 %v1474, %v1484
      %v1490 = vmul.f32 %v1475, %v1482
      %v1491 = vmul.f32 %v1476, %v1480
      %v1492 = vmul.f32 %v1477, %v1484
      %v1493 = vmul.f32 %v1478, %v1482
      %1500 = vrot.lane.b32.xlu0 %v1488, 106
      %v1501 = vpop.permute.xlu0 %1500
      %1502 = vrot.lane.b32.xlu0 %v1489, 106
      %v1503 = vpop.permute.xlu0 %1502
      %1504 = vrot.lane.b32.xlu0 %v1490, 106
      %v1505 = vpop.permute.xlu0 %1504
      %1506 = vrot.lane.b32.xlu0 %v1491, 106
      %v1507 = vpop.permute.xlu0 %1506
      %1508 = vrot.lane.b32.xlu0 %v1492, 106
      %v1509 = vpop.permute.xlu0 %1508
      %1510 = vrot.lane.b32.xlu0 %v1493, 106
      %v1511 = vpop.permute.xlu0 %1510
      %vm1512 = vcmask 867328
      %v1513 = vsel %vm1512, %v1501, %v1503
      %v1514 = vsel %vm1512, %v1503, %v1505
      %v1515 = vsel %vm1512, %v1507, %v1509
      %v1516 = vsel %vm1512, %v1509, %v1511
      %v1523 = vadd.f32 %v1459, %v1513
      %v1524 = vadd.f32 %v1460, %v1514
      %v1525 = vadd.f32 %v1461, %v1505
      %v1526 = vadd.f32 %v1462, %v1515
      %v1527 = vadd.f32 %v1463, %v1516
      %v1528 = vadd.f32 %v1464, %v1511
      %1529 = vset.pattern.permute.xlu0 14
      %1530 = vperm.xlu0 %1529, %v622
      %v1531 = vpop.permute.xlu0 %1530
      %1533 = vset.pattern.permute.xlu0 14
      %1534 = vperm.xlu0 %1533, %v623
      %v1535 = vpop.permute.xlu0 %1534
      %v1537 = vmul.f32 %v624, %v1531
      %v1538 = vmul.f32 %v625, %v1531
      %v1539 = vmul.f32 %v626, %v1531
      %v1540 = vmul.f32 %v627, %v1535
      %v1541 = vmul.f32 %v628, %v1535
      %v1542 = vmul.f32 %v629, %v1535
      %1543 = vrot.lane.b32.xlu0 %v649, 109
      %v1544 = vpop.permute.xlu0 %1543
      %1545 = vrot.lane.b32.xlu0 %v653, 109
      %v1546 = vpop.permute.xlu0 %1545
      %v1547 = vsel %vm1320, %v1544, %v1546
      %v1551 = vmul.f32 %v1537, %v1544
      %v1552 = vmul.f32 %v1538, %v1547
      %v1553 = vmul.f32 %v1539, %v1546
      %v1554 = vmul.f32 %v1540, %v1544
      %v1555 = vmul.f32 %v1541, %v1547
      %v1556 = vmul.f32 %v1542, %v1546
      %1563 = vrot.lane.b32.xlu0 %v1551, 96
      %v1564 = vpop.permute.xlu0 %1563
      %1565 = vrot.lane.b32.xlu0 %v1552, 96
      %v1566 = vpop.permute.xlu0 %1565
      %1567 = vrot.lane.b32.xlu0 %v1553, 96
      %v1568 = vpop.permute.xlu0 %1567
      %1569 = vrot.lane.b32.xlu0 %v1554, 96
      %v1570 = vpop.permute.xlu0 %1569
      %1571 = vrot.lane.b32.xlu0 %v1555, 96
      %v1572 = vpop.permute.xlu0 %1571
      %1573 = vrot.lane.b32.xlu0 %v1556, 96
      %v1574 = vpop.permute.xlu0 %1573
      %vm1575 = vcmask 785408
      %v1576 = vsel %vm1575, %v1564, %v1566
      %v1577 = vsel %vm1575, %v1566, %v1568
      %v1578 = vsel %vm1575, %v1570, %v1572
      %v1579 = vsel %vm1575, %v1572, %v1574
      %v1586 = vadd.f32 %v1523, %v1576
      %v1587 = vadd.f32 %v1524, %v1577
      %v1588 = vadd.f32 %v1525, %v1568
      %v1589 = vadd.f32 %v1526, %v1578
      %v1590 = vadd.f32 %v1527, %v1579
      %v1591 = vadd.f32 %v1528, %v1574
      %1592 = vset.pattern.permute.xlu0 15
      %1593 = vperm.xlu0 %1592, %v622
      %v1594 = vpop.permute.xlu0 %1593
      %1596 = vset.pattern.permute.xlu0 15
      %1597 = vperm.xlu0 %1596, %v623
      %v1598 = vpop.permute.xlu0 %1597
      %v1600 = vmul.f32 %v624, %v1594
      %v1601 = vmul.f32 %v625, %v1594
      %v1602 = vmul.f32 %v626, %v1594
      %v1603 = vmul.f32 %v627, %v1598
      %v1604 = vmul.f32 %v628, %v1598
      %v1605 = vmul.f32 %v629, %v1598
      %1606 = vrot.lane.b32.xlu0 %v694, 110
      %v1607 = vpop.permute.xlu0 %1606
      %1608 = vrot.lane.b32.xlu0 %v698, 110
      %v1609 = vpop.permute.xlu0 %1608
      %v1610 = vsel %vm1271, %v1607, %v1609
      %v1614 = vmul.f32 %v1600, %v1607
      %v1615 = vmul.f32 %v1601, %v1610
      %v1616 = vmul.f32 %v1602, %v1609
      %v1617 = vmul.f32 %v1603, %v1607
      %v1618 = vmul.f32 %v1604, %v1610
      %v1619 = vmul.f32 %v1605, %v1609
      %1626 = vrot.lane.b32.xlu0 %v1614, 95
      %v1627 = vpop.permute.xlu0 %1626
      %1628 = vrot.lane.b32.xlu0 %v1615, 95
      %v1629 = vpop.permute.xlu0 %1628
      %1630 = vrot.lane.b32.xlu0 %v1616, 95
      %v1631 = vpop.permute.xlu0 %1630
      %1632 = vrot.lane.b32.xlu0 %v1617, 95
      %v1633 = vpop.permute.xlu0 %1632
      %1634 = vrot.lane.b32.xlu0 %v1618, 95
      %v1635 = vpop.permute.xlu0 %1634
      %1636 = vrot.lane.b32.xlu0 %v1619, 95
      %v1637 = vpop.permute.xlu0 %1636
      %v1638 = vsel %vm1242, %v1627, %v1629
      %v1639 = vsel %vm1242, %v1629, %v1631
      %v1640 = vsel %vm1242, %v1633, %v1635
      %v1641 = vsel %vm1242, %v1635, %v1637
      %v1648 = vadd.f32 %v1586, %v1638
      %v1649 = vadd.f32 %v1587, %v1639
      %v1650 = vadd.f32 %v1588, %v1631
      %v1651 = vadd.f32 %v1589, %v1640
      %v1652 = vadd.f32 %v1590, %v1641
      %v1653 = vadd.f32 %v1591, %v1637
      %1654 = vset.pattern.permute.xlu0 16
      %1655 = vperm.xlu0 %1654, %v622
      %v1656 = vpop.permute.xlu0 %1655
      %1658 = vset.pattern.permute.xlu0 16
      %1659 = vperm.xlu0 %1658, %v623
      %v1660 = vpop.permute.xlu0 %1659
      %v1662 = vmul.f32 %v624, %v1656
      %v1663 = vmul.f32 %v625, %v1656
      %v1664 = vmul.f32 %v626, %v1656
      %v1665 = vmul.f32 %v627, %v1660
      %v1666 = vmul.f32 %v628, %v1660
      %v1667 = vmul.f32 %v629, %v1660
      %1668 = vrot.lane.b32.xlu0 %v768, 111
      %v1669 = vpop.permute.xlu0 %1668
      %1670 = vrot.lane.b32.xlu0 %v772, 111
      %v1671 = vpop.permute.xlu0 %1670
      %v1672 = vsel %vm1207, %v1669, %v1671
      %v1676 = vmul.f32 %v1662, %v1669
      %v1677 = vmul.f32 %v1663, %v1672
      %v1678 = vmul.f32 %v1664, %v1671
      %v1679 = vmul.f32 %v1665, %v1669
      %v1680 = vmul.f32 %v1666, %v1672
      %v1681 = vmul.f32 %v1667, %v1671
      %1688 = vrot.lane.b32.xlu0 %v1676, 94
      %v1689 = vpop.permute.xlu0 %1688
      %1690 = vrot.lane.b32.xlu0 %v1677, 94
      %v1691 = vpop.permute.xlu0 %1690
      %1692 = vrot.lane.b32.xlu0 %v1678, 94
      %v1693 = vpop.permute.xlu0 %1692
      %1694 = vrot.lane.b32.xlu0 %v1679, 94
      %v1695 = vpop.permute.xlu0 %1694
      %1696 = vrot.lane.b32.xlu0 %v1680, 94
      %v1697 = vpop.permute.xlu0 %1696
      %1698 = vrot.lane.b32.xlu0 %v1681, 94
      %v1699 = vpop.permute.xlu0 %1698
      %v1700 = vsel %vm1178, %v1689, %v1691
      %v1701 = vsel %vm1178, %v1691, %v1693
      %v1702 = vsel %vm1178, %v1695, %v1697
      %v1703 = vsel %vm1178, %v1697, %v1699
      %v1710 = vadd.f32 %v1648, %v1700
      %v1711 = vadd.f32 %v1649, %v1701
      %v1712 = vadd.f32 %v1650, %v1693
      %v1713 = vadd.f32 %v1651, %v1702
      %v1714 = vadd.f32 %v1652, %v1703
      %v1715 = vadd.f32 %v1653, %v1699
      %1716 = vset.pattern.permute.xlu0 17
      %1717 = vperm.xlu0 %1716, %v622
      %v1718 = vpop.permute.xlu0 %1717
      %1720 = vset.pattern.permute.xlu0 17
      %1721 = vperm.xlu0 %1720, %v623
      %v1722 = vpop.permute.xlu0 %1721
      %v1724 = vmul.f32 %v624, %v1718
      %v1725 = vmul.f32 %v625, %v1718
      %v1726 = vmul.f32 %v626, %v1718
      %v1727 = vmul.f32 %v627, %v1722
      %v1728 = vmul.f32 %v628, %v1722
      %v1729 = vmul.f32 %v629, %v1722
      %1736 = vrot.lane.b32.xlu0 %v1724, 93
      %v1737 = vpop.permute.xlu0 %1736
      %1738 = vrot.lane.b32.xlu0 %v1725, 93
      %v1739 = vpop.permute.xlu0 %1738
      %1740 = vrot.lane.b32.xlu0 %v1726, 93
      %v1741 = vpop.permute.xlu0 %1740
      %1742 = vrot.lane.b32.xlu0 %v1727, 93
      %v1743 = vpop.permute.xlu0 %1742
      %1744 = vrot.lane.b32.xlu0 %v1728, 93
      %v1745 = vpop.permute.xlu0 %1744
      %1746 = vrot.lane.b32.xlu0 %v1729, 93
      %v1747 = vpop.permute.xlu0 %1746
      %v1748 = vsel %vm1114, %v1737, %v1739
      %v1749 = vsel %vm1114, %v1739, %v1741
      %v1750 = vsel %vm1114, %v1743, %v1745
      %v1751 = vsel %vm1114, %v1745, %v1747
      %v1758 = vadd.f32 %v1710, %v1748
      %v1759 = vadd.f32 %v1711, %v1749
      %v1760 = vadd.f32 %v1712, %v1741
      %v1761 = vadd.f32 %v1713, %v1750
      %v1762 = vadd.f32 %v1714, %v1751
      %v1763 = vadd.f32 %v1715, %v1747
      %1764 = vset.pattern.permute.xlu0 18
      %1765 = vperm.xlu0 %1764, %v622
      %v1766 = vpop.permute.xlu0 %1765
      %1768 = vset.pattern.permute.xlu0 18
      %1769 = vperm.xlu0 %1768, %v623
      %v1770 = vpop.permute.xlu0 %1769
      %v1772 = vmul.f32 %v624, %v1766
      %v1773 = vmul.f32 %v625, %v1766
      %v1774 = vmul.f32 %v626, %v1766
      %v1775 = vmul.f32 %v627, %v1770
      %v1776 = vmul.f32 %v628, %v1770
      %v1777 = vmul.f32 %v629, %v1770
      %1778 = vrot.lane.b32.xlu0 %v891, 113
      %v1779 = vpop.permute.xlu0 %1778
      %1780 = vrot.lane.b32.xlu0 %v895, 113
      %v1781 = vpop.permute.xlu0 %1780
      %vm1782 = vcmask 924672
      %v1783 = vsel %vm1782, %v1779, %v1781
      %v1787 = vmul.f32 %v1772, %v1779
      %v1788 = vmul.f32 %v1773, %v1783
      %v1789 = vmul.f32 %v1774, %v1781
      %v1790 = vmul.f32 %v1775, %v1779
      %v1791 = vmul.f32 %v1776, %v1783
      %v1792 = vmul.f32 %v1777, %v1781
      %1799 = vrot.lane.b32.xlu0 %v1787, 92
      %v1800 = vpop.permute.xlu0 %1799
      %1801 = vrot.lane.b32.xlu0 %v1788, 92
      %v1802 = vpop.permute.xlu0 %1801
      %1803 = vrot.lane.b32.xlu0 %v1789, 92
      %v1804 = vpop.permute.xlu0 %1803
      %1805 = vrot.lane.b32.xlu0 %v1790, 92
      %v1806 = vpop.permute.xlu0 %1805
      %1807 = vrot.lane.b32.xlu0 %v1791, 92
      %v1808 = vpop.permute.xlu0 %1807
      %1809 = vrot.lane.b32.xlu0 %v1792, 92
      %v1810 = vpop.permute.xlu0 %1809
      %vm1811 = vcmask 752640
      %v1812 = vsel %vm1811, %v1800, %v1802
      %v1813 = vsel %vm1811, %v1802, %v1804
      %v1814 = vsel %vm1811, %v1806, %v1808
      %v1815 = vsel %vm1811, %v1808, %v1810
      %v1822 = vadd.f32 %v1758, %v1812
      %v1823 = vadd.f32 %v1759, %v1813
      %v1824 = vadd.f32 %v1760, %v1804
      %v1825 = vadd.f32 %v1761, %v1814
      %v1826 = vadd.f32 %v1762, %v1815
      %v1827 = vadd.f32 %v1763, %v1810
      %1828 = vset.pattern.permute.xlu0 19
      %1829 = vperm.xlu0 %1828, %v622
      %v1830 = vpop.permute.xlu0 %1829
      %1832 = vset.pattern.permute.xlu0 19
      %1833 = vperm.xlu0 %1832, %v623
      %v1834 = vpop.permute.xlu0 %1833
      %v1836 = vmul.f32 %v624, %v1830
      %v1837 = vmul.f32 %v625, %v1830
      %v1838 = vmul.f32 %v626, %v1830
      %v1839 = vmul.f32 %v627, %v1834
      %v1840 = vmul.f32 %v628, %v1834
      %v1841 = vmul.f32 %v629, %v1834
      %1842 = vrot.lane.b32.xlu0 %v965, 114
      %v1843 = vpop.permute.xlu0 %1842
      %1844 = vrot.lane.b32.xlu0 %v969, 114
      %v1845 = vpop.permute.xlu0 %1844
      %vm1846 = vcmask 932864
      %v1847 = vsel %vm1846, %v1843, %v1845
      %v1851 = vmul.f32 %v1836, %v1843
      %v1852 = vmul.f32 %v1837, %v1847
      %v1853 = vmul.f32 %v1838, %v1845
      %v1854 = vmul.f32 %v1839, %v1843
      %v1855 = vmul.f32 %v1840, %v1847
      %v1856 = vmul.f32 %v1841, %v1845
      %1863 = vrot.lane.b32.xlu0 %v1851, 91
      %v1864 = vpop.permute.xlu0 %1863
      %1865 = vrot.lane.b32.xlu0 %v1852, 91
      %v1866 = vpop.permute.xlu0 %1865
      %1867 = vrot.lane.b32.xlu0 %v1853, 91
      %v1868 = vpop.permute.xlu0 %1867
      %1869 = vrot.lane.b32.xlu0 %v1854, 91
      %v1870 = vpop.permute.xlu0 %1869
      %1871 = vrot.lane.b32.xlu0 %v1855, 91
      %v1872 = vpop.permute.xlu0 %1871
      %1873 = vrot.lane.b32.xlu0 %v1856, 91
      %v1874 = vpop.permute.xlu0 %1873
      %vm1875 = vcmask 744448
      %v1876 = vsel %vm1875, %v1864, %v1866
      %v1877 = vsel %vm1875, %v1866, %v1868
      %v1878 = vsel %vm1875, %v1870, %v1872
      %v1879 = vsel %vm1875, %v1872, %v1874
      %v1886 = vadd.f32 %v1822, %v1876
      %v1887 = vadd.f32 %v1823, %v1877
      %v1888 = vadd.f32 %v1824, %v1868
      %v1889 = vadd.f32 %v1825, %v1878
      %v1890 = vadd.f32 %v1826, %v1879
      %v1891 = vadd.f32 %v1827, %v1874
      %1892 = vset.pattern.permute.xlu0 20
      %1893 = vperm.xlu0 %1892, %v622
      %v1894 = vpop.permute.xlu0 %1893
      %1896 = vset.pattern.permute.xlu0 20
      %1897 = vperm.xlu0 %1896, %v623
      %v1898 = vpop.permute.xlu0 %1897
      %v1900 = vmul.f32 %v624, %v1894
      %v1901 = vmul.f32 %v625, %v1894
      %v1902 = vmul.f32 %v626, %v1894
      %v1903 = vmul.f32 %v627, %v1898
      %v1904 = vmul.f32 %v628, %v1898
      %v1905 = vmul.f32 %v629, %v1898
      %1906 = vrot.lane.b32.xlu0 %v1039, 115
      %v1907 = vpop.permute.xlu0 %1906
      %1908 = vrot.lane.b32.xlu0 %v1043, 115
      %v1909 = vpop.permute.xlu0 %1908
      %vm1910 = vcmask 941056
      %v1911 = vsel %vm1910, %v1907, %v1909
      %v1915 = vmul.f32 %v1900, %v1907
      %v1916 = vmul.f32 %v1901, %v1911
      %v1917 = vmul.f32 %v1902, %v1909
      %v1918 = vmul.f32 %v1903, %v1907
      %v1919 = vmul.f32 %v1904, %v1911
      %v1920 = vmul.f32 %v1905, %v1909
      %1927 = vrot.lane.b32.xlu0 %v1915, 90
      %v1928 = vpop.permute.xlu0 %1927
      %1929 = vrot.lane.b32.xlu0 %v1916, 90
      %v1930 = vpop.permute.xlu0 %1929
      %1931 = vrot.lane.b32.xlu0 %v1917, 90
      %v1932 = vpop.permute.xlu0 %1931
      %1933 = vrot.lane.b32.xlu0 %v1918, 90
      %v1934 = vpop.permute.xlu0 %1933
      %1935 = vrot.lane.b32.xlu0 %v1919, 90
      %v1936 = vpop.permute.xlu0 %1935
      %1937 = vrot.lane.b32.xlu0 %v1920, 90
      %v1938 = vpop.permute.xlu0 %1937
      %vm1939 = vcmask 736256
      %v1940 = vsel %vm1939, %v1928, %v1930
      %v1941 = vsel %vm1939, %v1930, %v1932
      %v1942 = vsel %vm1939, %v1934, %v1936
      %v1943 = vsel %vm1939, %v1936, %v1938
      %v1950 = vadd.f32 %v1886, %v1940
      %v1951 = vadd.f32 %v1887, %v1941
      %v1952 = vadd.f32 %v1888, %v1932
      %v1953 = vadd.f32 %v1889, %v1942
      %v1954 = vadd.f32 %v1890, %v1943
      %v1955 = vadd.f32 %v1891, %v1938
      %1956 = vset.pattern.permute.xlu0 21
      %1957 = vperm.xlu0 %1956, %v622
      %v1958 = vpop.permute.xlu0 %1957
      %1960 = vset.pattern.permute.xlu0 21
      %1961 = vperm.xlu0 %1960, %v623
      %v1962 = vpop.permute.xlu0 %1961
      %v1964 = vmul.f32 %v624, %v1958
      %v1965 = vmul.f32 %v625, %v1958
      %v1966 = vmul.f32 %v626, %v1958
      %v1967 = vmul.f32 %v627, %v1962
      %v1968 = vmul.f32 %v628, %v1962
      %v1969 = vmul.f32 %v629, %v1962
      %1970 = vrot.lane.b32.xlu0 %v649, 125
      %v1971 = vpop.permute.xlu0 %1970
      %1972 = vrot.lane.b32.xlu0 %v653, 125
      %v1973 = vpop.permute.xlu0 %1972
      %v1974 = vsel %vm857, %v1971, %v1973
      %v1978 = vmul.f32 %v1964, %v1971
      %v1979 = vmul.f32 %v1965, %v1974
      %v1980 = vmul.f32 %v1966, %v1973
      %v1981 = vmul.f32 %v1967, %v1971
      %v1982 = vmul.f32 %v1968, %v1974
      %v1983 = vmul.f32 %v1969, %v1973
      %1990 = vrot.lane.b32.xlu0 %v1978, 80
      %v1991 = vpop.permute.xlu0 %1990
      %1992 = vrot.lane.b32.xlu0 %v1979, 80
      %v1993 = vpop.permute.xlu0 %1992
      %1994 = vrot.lane.b32.xlu0 %v1980, 80
      %v1995 = vpop.permute.xlu0 %1994
      %1996 = vrot.lane.b32.xlu0 %v1981, 80
      %v1997 = vpop.permute.xlu0 %1996
      %1998 = vrot.lane.b32.xlu0 %v1982, 80
      %v1999 = vpop.permute.xlu0 %1998
      %2000 = vrot.lane.b32.xlu0 %v1983, 80
      %v2001 = vpop.permute.xlu0 %2000
      %vm2002 = vcmask 654336
      %v2003 = vsel %vm2002, %v1991, %v1993
      %v2004 = vsel %vm2002, %v1993, %v1995
      %v2005 = vsel %vm2002, %v1997, %v1999
      %v2006 = vsel %vm2002, %v1999, %v2001
      %v2013 = vadd.f32 %v1950, %v2003
      %v2014 = vadd.f32 %v1951, %v2004
      %v2015 = vadd.f32 %v1952, %v1995
      %v2016 = vadd.f32 %v1953, %v2005
      %v2017 = vadd.f32 %v1954, %v2006
      %v2018 = vadd.f32 %v1955, %v2001
      %2019 = vset.pattern.permute.xlu0 22
      %2020 = vperm.xlu0 %2019, %v622
      %v2021 = vpop.permute.xlu0 %2020
      %2023 = vset.pattern.permute.xlu0 22
      %2024 = vperm.xlu0 %2023, %v623
      %v2025 = vpop.permute.xlu0 %2024
      %v2027 = vmul.f32 %v624, %v2021
      %v2028 = vmul.f32 %v625, %v2021
      %v2029 = vmul.f32 %v626, %v2021
      %v2030 = vmul.f32 %v627, %v2025
      %v2031 = vmul.f32 %v628, %v2025
      %v2032 = vmul.f32 %v629, %v2025
      %2033 = vrot.lane.b32.xlu0 %v694, 126
      %v2034 = vpop.permute.xlu0 %2033
      %2035 = vrot.lane.b32.xlu0 %v698, 126
      %v2036 = vpop.permute.xlu0 %2035
      %v2037 = vsel %vm808, %v2034, %v2036
      %v2041 = vmul.f32 %v2027, %v2034
      %v2042 = vmul.f32 %v2028, %v2037
      %v2043 = vmul.f32 %v2029, %v2036
      %v2044 = vmul.f32 %v2030, %v2034
      %v2045 = vmul.f32 %v2031, %v2037
      %v2046 = vmul.f32 %v2032, %v2036
      %2053 = vrot.lane.b32.xlu0 %v2041, 79
      %v2054 = vpop.permute.xlu0 %2053
      %2055 = vrot.lane.b32.xlu0 %v2042, 79
      %v2056 = vpop.permute.xlu0 %2055
      %2057 = vrot.lane.b32.xlu0 %v2043, 79
      %v2058 = vpop.permute.xlu0 %2057
      %2059 = vrot.lane.b32.xlu0 %v2044, 79
      %v2060 = vpop.permute.xlu0 %2059
      %2061 = vrot.lane.b32.xlu0 %v2045, 79
      %v2062 = vpop.permute.xlu0 %2061
      %2063 = vrot.lane.b32.xlu0 %v2046, 79
      %v2064 = vpop.permute.xlu0 %2063
      %v2065 = vsel %vm779, %v2054, %v2056
      %v2066 = vsel %vm779, %v2056, %v2058
      %v2067 = vsel %vm779, %v2060, %v2062
      %v2068 = vsel %vm779, %v2062, %v2064
      %v2075 = vadd.f32 %v2013, %v2065
      %v2076 = vadd.f32 %v2014, %v2066
      %v2077 = vadd.f32 %v2015, %v2058
      %v2078 = vadd.f32 %v2016, %v2067
      %v2079 = vadd.f32 %v2017, %v2068
      %v2080 = vadd.f32 %v2018, %v2064
      %2081 = vset.pattern.permute.xlu0 23
      %2082 = vperm.xlu0 %2081, %v622
      %v2083 = vpop.permute.xlu0 %2082
      %2085 = vset.pattern.permute.xlu0 23
      %2086 = vperm.xlu0 %2085, %v623
      %v2087 = vpop.permute.xlu0 %2086
      %v2089 = vmul.f32 %v624, %v2083
      %v2090 = vmul.f32 %v625, %v2083
      %v2091 = vmul.f32 %v626, %v2083
      %v2092 = vmul.f32 %v627, %v2087
      %v2093 = vmul.f32 %v628, %v2087
      %v2094 = vmul.f32 %v629, %v2087
      %2095 = vrot.lane.b32.xlu0 %v768, 127
      %v2096 = vpop.permute.xlu0 %2095
      %2097 = vrot.lane.b32.xlu0 %v772, 127
      %v2098 = vpop.permute.xlu0 %2097
      %v2099 = vsel %vm734, %v2096, %v2098
      %v2103 = vmul.f32 %v2089, %v2096
      %v2104 = vmul.f32 %v2090, %v2099
      %v2105 = vmul.f32 %v2091, %v2098
      %v2106 = vmul.f32 %v2092, %v2096
      %v2107 = vmul.f32 %v2093, %v2099
      %v2108 = vmul.f32 %v2094, %v2098
      %2115 = vrot.lane.b32.xlu0 %v2103, 78
      %v2116 = vpop.permute.xlu0 %2115
      %2117 = vrot.lane.b32.xlu0 %v2104, 78
      %v2118 = vpop.permute.xlu0 %2117
      %2119 = vrot.lane.b32.xlu0 %v2105, 78
      %v2120 = vpop.permute.xlu0 %2119
      %2121 = vrot.lane.b32.xlu0 %v2106, 78
      %v2122 = vpop.permute.xlu0 %2121
      %2123 = vrot.lane.b32.xlu0 %v2107, 78
      %v2124 = vpop.permute.xlu0 %2123
      %2125 = vrot.lane.b32.xlu0 %v2108, 78
      %v2126 = vpop.permute.xlu0 %2125
      %v2127 = vsel %vm705, %v2116, %v2118
      %v2128 = vsel %vm705, %v2118, %v2120
      %v2129 = vsel %vm705, %v2122, %v2124
      %v2130 = vsel %vm705, %v2124, %v2126
      %v2137 = vadd.f32 %v2075, %v2127
      %v2138 = vadd.f32 %v2076, %v2128
      %v2139 = vadd.f32 %v2077, %v2120
      %v2140 = vadd.f32 %v2078, %v2129
      %v2141 = vadd.f32 %v2079, %v2130
      %v2142 = vadd.f32 %v2080, %v2126
      %2143 = vset.pattern.permute.xlu0 24
      %2144 = vperm.xlu0 %2143, %v622
      %v2145 = vpop.permute.xlu0 %2144
      %2147 = vset.pattern.permute.xlu0 24
      %2148 = vperm.xlu0 %2147, %v623
      %v2149 = vpop.permute.xlu0 %2148
      %v2151 = vmul.f32 %v625, %v2145
      %v2152 = vmul.f32 %v626, %v2145
      %v2153 = vmul.f32 %v628, %v2149
      %v2154 = vmul.f32 %v629, %v2149
      %2159 = vrot.lane.b32.xlu0 %v2151, 77
      %v2160 = vpop.permute.xlu0 %2159
      %2161 = vrot.lane.b32.xlu0 %v2152, 77
      %v2162 = vpop.permute.xlu0 %2161
      %2163 = vrot.lane.b32.xlu0 %v2153, 77
      %v2164 = vpop.permute.xlu0 %2163
      %2165 = vrot.lane.b32.xlu0 %v2154, 77
      %v2166 = vpop.permute.xlu0 %2165
      %v2167 = vsel %vm660, %v2160, %v2162
      %v2168 = vsel %vm660, %v2164, %v2166
      %v2175 = vadd.f32 %v2137, %v2160
      %v2176 = vadd.f32 %v2138, %v2167
      %v2177 = vadd.f32 %v2139, %v2162
      %v2178 = vadd.f32 %v2140, %v2164
      %v2179 = vadd.f32 %v2141, %v2168
      %v2180 = vadd.f32 %v2142, %v2166
      %v2181 = vld [vmem:[#allocation2 + $0x8] sm:$0xff]
      %v2182 = vld [vmem:[#allocation2 + $0x10] sm:$0xff]
      %v2183 = vld [vmem:[#allocation2 + $0x18] sm:$0xff]
      %v2184 = vld [vmem:[#allocation2 + $0x28] sm:$0xff]
      %v2185 = vld [vmem:[#allocation2 + $0x30] sm:$0xff]
      %v2186 = vld [vmem:[#allocation2 + $0x38] sm:$0xff]
      %2187 = vset.pattern.permute.xlu0 25
      %2188 = vperm.xlu0 %2187, %v622
      %v2189 = vpop.permute.xlu0 %2188
      %2191 = vset.pattern.permute.xlu0 25
      %2192 = vperm.xlu0 %2191, %v623
      %v2193 = vpop.permute.xlu0 %2192
      %v2195 = vmul.f32 %v2181, %v2189
      %v2196 = vmul.f32 %v2182, %v2189
      %v2197 = vmul.f32 %v2183, %v2189
      %v2198 = vmul.f32 %v2184, %v2193
      %v2199 = vmul.f32 %v2185, %v2193
      %v2200 = vmul.f32 %v2186, %v2193
      %2201 = vrot.lane.b32.xlu0 %v891, 1
      %v2202 = vpop.permute.xlu0 %2201
      %2203 = vrot.lane.b32.xlu0 %v895, 1
      %v2204 = vpop.permute.xlu0 %2203
      %vm2205 = vcmask 7168
      %v2206 = vsel %vm2205, %v2202, %v2204
      %v2210 = vmul.f32 %v2195, %v2202
      %v2211 = vmul.f32 %v2196, %v2206
      %v2212 = vmul.f32 %v2197, %v2204
      %v2213 = vmul.f32 %v2198, %v2202
      %v2214 = vmul.f32 %v2199, %v2206
      %v2215 = vmul.f32 %v2200, %v2204
      %2222 = vrot.lane.b32.xlu0 %v2210, 76
      %v2223 = vpop.permute.xlu0 %2222
      %2224 = vrot.lane.b32.xlu0 %v2211, 76
      %v2225 = vpop.permute.xlu0 %2224
      %2226 = vrot.lane.b32.xlu0 %v2212, 76
      %v2227 = vpop.permute.xlu0 %2226
      %2228 = vrot.lane.b32.xlu0 %v2213, 76
      %v2229 = vpop.permute.xlu0 %2228
      %2230 = vrot.lane.b32.xlu0 %v2214, 76
      %v2231 = vpop.permute.xlu0 %2230
      %2232 = vrot.lane.b32.xlu0 %v2215, 76
      %v2233 = vpop.permute.xlu0 %2232
      %vm2234 = vcmask 621568
      %v2235 = vsel %vm2234, %v2223, %v2225
      %v2236 = vsel %vm2234, %v2225, %v2227
      %v2237 = vsel %vm2234, %v2229, %v2231
      %v2238 = vsel %vm2234, %v2231, %v2233
      %v2245 = vadd.f32 %v2175, %v2223
      %v2246 = vadd.f32 %v2176, %v2235
      %v2247 = vadd.f32 %v2177, %v2236
      %v2248 = vadd.f32 %v2178, %v2229
      %v2249 = vadd.f32 %v2179, %v2237
      %v2250 = vadd.f32 %v2180, %v2238
      %2251 = vset.pattern.permute.xlu0 26
      %2252 = vperm.xlu0 %2251, %v622
      %v2253 = vpop.permute.xlu0 %2252
      %2255 = vset.pattern.permute.xlu0 26
      %2256 = vperm.xlu0 %2255, %v623
      %v2257 = vpop.permute.xlu0 %2256
      %v2259 = vmul.f32 %v2181, %v2253
      %v2260 = vmul.f32 %v2182, %v2253
      %v2261 = vmul.f32 %v2183, %v2253
      %v2262 = vmul.f32 %v2184, %v2257
      %v2263 = vmul.f32 %v2185, %v2257
      %v2264 = vmul.f32 %v2186, %v2257
      %2265 = vrot.lane.b32.xlu0 %v965, 2
      %v2266 = vpop.permute.xlu0 %2265
      %2267 = vrot.lane.b32.xlu0 %v969, 2
      %v2268 = vpop.permute.xlu0 %2267
      %vm2269 = vcmask 15360
      %v2270 = vsel %vm2269, %v2266, %v2268
      %v2274 = vmul.f32 %v2259, %v2266
      %v2275 = vmul.f32 %v2260, %v2270
      %v2276 = vmul.f32 %v2261, %v2268
      %v2277 = vmul.f32 %v2262, %v2266
      %v2278 = vmul.f32 %v2263, %v2270
      %v2279 = vmul.f32 %v2264, %v2268
      %2286 = vrot.lane.b32.xlu0 %v2274, 75
      %v2287 = vpop.permute.xlu0 %2286
      %2288 = vrot.lane.b32.xlu0 %v2275, 75
      %v2289 = vpop.permute.xlu0 %2288
      %2290 = vrot.lane.b32.xlu0 %v2276, 75
      %v2291 = vpop.permute.xlu0 %2290
      %2292 = vrot.lane.b32.xlu0 %v2277, 75
      %v2293 = vpop.permute.xlu0 %2292
      %2294 = vrot.lane.b32.xlu0 %v2278, 75
      %v2295 = vpop.permute.xlu0 %2294
      %2296 = vrot.lane.b32.xlu0 %v2279, 75
      %v2297 = vpop.permute.xlu0 %2296
      %vm2298 = vcmask 613376
      %v2299 = vsel %vm2298, %v2287, %v2289
      %v2300 = vsel %vm2298, %v2289, %v2291
      %v2301 = vsel %vm2298, %v2293, %v2295
      %v2302 = vsel %vm2298, %v2295, %v2297
      %v2309 = vadd.f32 %v2245, %v2287
      %v2310 = vadd.f32 %v2246, %v2299
      %v2311 = vadd.f32 %v2247, %v2300
      %v2312 = vadd.f32 %v2248, %v2293
      %v2313 = vadd.f32 %v2249, %v2301
      %v2314 = vadd.f32 %v2250, %v2302
      %2315 = vset.pattern.permute.xlu0 27
      %2316 = vperm.xlu0 %2315, %v622
      %v2317 = vpop.permute.xlu0 %2316
      %2319 = vset.pattern.permute.xlu0 27
      %2320 = vperm.xlu0 %2319, %v623
      %v2321 = vpop.permute.xlu0 %2320
      %v2323 = vmul.f32 %v2181, %v2317
      %v2324 = vmul.f32 %v2182, %v2317
      %v2325 = vmul.f32 %v2183, %v2317
      %v2326 = vmul.f32 %v2184, %v2321
      %v2327 = vmul.f32 %v2185, %v2321
      %v2328 = vmul.f32 %v2186, %v2321
      %2329 = vrot.lane.b32.xlu0 %v1039, 3
      %v2330 = vpop.permute.xlu0 %2329
      %2331 = vrot.lane.b32.xlu0 %v1043, 3
      %v2332 = vpop.permute.xlu0 %2331
      %vm2333 = vcmask 23552
      %v2334 = vsel %vm2333, %v2330, %v2332
      %v2338 = vmul.f32 %v2323, %v2330
      %v2339 = vmul.f32 %v2324, %v2334
      %v2340 = vmul.f32 %v2325, %v2332
      %v2341 = vmul.f32 %v2326, %v2330
      %v2342 = vmul.f32 %v2327, %v2334
      %v2343 = vmul.f32 %v2328, %v2332
      %2350 = vrot.lane.b32.xlu0 %v2338, 74
      %v2351 = vpop.permute.xlu0 %2350
      %2352 = vrot.lane.b32.xlu0 %v2339, 74
      %v2353 = vpop.permute.xlu0 %2352
      %2354 = vrot.lane.b32.xlu0 %v2340, 74
      %v2355 = vpop.permute.xlu0 %2354
      %2356 = vrot.lane.b32.xlu0 %v2341, 74
      %v2357 = vpop.permute.xlu0 %2356
      %2358 = vrot.lane.b32.xlu0 %v2342, 74
      %v2359 = vpop.permute.xlu0 %2358
      %2360 = vrot.lane.b32.xlu0 %v2343, 74
      %v2361 = vpop.permute.xlu0 %2360
      %vm2362 = vcmask 605184
      %v2363 = vsel %vm2362, %v2351, %v2353
      %v2364 = vsel %vm2362, %v2353, %v2355
      %v2365 = vsel %vm2362, %v2357, %v2359
      %v2366 = vsel %vm2362, %v2359, %v2361
      %v2373 = vadd.f32 %v2309, %v2351
      %v2374 = vadd.f32 %v2310, %v2363
      %v2375 = vadd.f32 %v2311, %v2364
      %v2376 = vadd.f32 %v2312, %v2357
      %v2377 = vadd.f32 %v2313, %v2365
      %v2378 = vadd.f32 %v2314, %v2366
      %2379 = vset.pattern.permute.xlu0 28
      %2380 = vperm.xlu0 %2379, %v622
      %v2381 = vpop.permute.xlu0 %2380
      %2383 = vset.pattern.permute.xlu0 28
      %2384 = vperm.xlu0 %2383, %v623
      %v2385 = vpop.permute.xlu0 %2384
      %v2387 = vmul.f32 %v2181, %v2381
      %v2388 = vmul.f32 %v2182, %v2381
      %v2389 = vmul.f32 %v2183, %v2381
      %v2390 = vmul.f32 %v2184, %v2385
      %v2391 = vmul.f32 %v2185, %v2385
      %v2392 = vmul.f32 %v2186, %v2385
      %2393 = vrot.lane.b32.xlu0 %v649, 13
      %v2394 = vpop.permute.xlu0 %2393
      %2395 = vrot.lane.b32.xlu0 %v653, 13
      %v2396 = vpop.permute.xlu0 %2395
      %vm2397 = vcmask 105472
      %v2398 = vsel %vm2397, %v2394, %v2396
      %v2402 = vmul.f32 %v2387, %v2394
      %v2403 = vmul.f32 %v2388, %v2398
      %v2404 = vmul.f32 %v2389, %v2396
      %v2405 = vmul.f32 %v2390, %v2394
      %v2406 = vmul.f32 %v2391, %v2398
      %v2407 = vmul.f32 %v2392, %v2396
      %2414 = vrot.lane.b32.xlu0 %v2402, 64
      %v2415 = vpop.permute.xlu0 %2414
      %2416 = vrot.lane.b32.xlu0 %v2403, 64
      %v2417 = vpop.permute.xlu0 %2416
      %2418 = vrot.lane.b32.xlu0 %v2404, 64
      %v2419 = vpop.permute.xlu0 %2418
      %2420 = vrot.lane.b32.xlu0 %v2405, 64
      %v2421 = vpop.permute.xlu0 %2420
      %2422 = vrot.lane.b32.xlu0 %v2406, 64
      %v2423 = vpop.permute.xlu0 %2422
      %2424 = vrot.lane.b32.xlu0 %v2407, 64
      %v2425 = vpop.permute.xlu0 %2424
      %vm2426 = vcmask 523264
      %v2427 = vsel %vm2426, %v2415, %v2417
      %v2428 = vsel %vm2426, %v2417, %v2419
      %v2429 = vsel %vm2426, %v2421, %v2423
      %v2430 = vsel %vm2426, %v2423, %v2425
      %v2437 = vadd.f32 %v2373, %v2415
      %v2438 = vadd.f32 %v2374, %v2427
      %v2439 = vadd.f32 %v2375, %v2428
      %v2440 = vadd.f32 %v2376, %v2421
      %v2441 = vadd.f32 %v2377, %v2429
      %v2442 = vadd.f32 %v2378, %v2430
      %2443 = vset.pattern.permute.xlu0 29
      %2444 = vperm.xlu0 %2443, %v622
      %v2445 = vpop.permute.xlu0 %2444
      %2447 = vset.pattern.permute.xlu0 29
      %2448 = vperm.xlu0 %2447, %v623
      %v2449 = vpop.permute.xlu0 %2448
      %v2451 = vmul.f32 %v2181, %v2445
      %v2452 = vmul.f32 %v2182, %v2445
      %v2453 = vmul.f32 %v2183, %v2445
      %v2454 = vmul.f32 %v2184, %v2449
      %v2455 = vmul.f32 %v2185, %v2449
      %v2456 = vmul.f32 %v2186, %v2449
      %2457 = vrot.lane.b32.xlu0 %v694, 14
      %v2458 = vpop.permute.xlu0 %2457
      %2459 = vrot.lane.b32.xlu0 %v698, 14
      %v2460 = vpop.permute.xlu0 %2459
      %vm2461 = vcmask 113664
      %v2462 = vsel %vm2461, %v2458, %v2460
      %v2466 = vmul.f32 %v2451, %v2458
      %v2467 = vmul.f32 %v2452, %v2462
      %v2468 = vmul.f32 %v2453, %v2460
      %v2469 = vmul.f32 %v2454, %v2458
      %v2470 = vmul.f32 %v2455, %v2462
      %v2471 = vmul.f32 %v2456, %v2460
      %2478 = vrot.lane.b32.xlu0 %v2466, 63
      %v2479 = vpop.permute.xlu0 %2478
      %2480 = vrot.lane.b32.xlu0 %v2467, 63
      %v2481 = vpop.permute.xlu0 %2480
      %2482 = vrot.lane.b32.xlu0 %v2468, 63
      %v2483 = vpop.permute.xlu0 %2482
      %2484 = vrot.lane.b32.xlu0 %v2469, 63
      %v2485 = vpop.permute.xlu0 %2484
      %2486 = vrot.lane.b32.xlu0 %v2470, 63
      %v2487 = vpop.permute.xlu0 %2486
      %2488 = vrot.lane.b32.xlu0 %v2471, 63
      %v2489 = vpop.permute.xlu0 %2488
      %vm2490 = vcmask 515072
      %v2491 = vsel %vm2490, %v2479, %v2481
      %v2492 = vsel %vm2490, %v2481, %v2483
      %v2493 = vsel %vm2490, %v2485, %v2487
      %v2494 = vsel %vm2490, %v2487, %v2489
      %v2501 = vadd.f32 %v2437, %v2479
      %v2502 = vadd.f32 %v2438, %v2491
      %v2503 = vadd.f32 %v2439, %v2492
      %v2504 = vadd.f32 %v2440, %v2485
      %v2505 = vadd.f32 %v2441, %v2493
      %v2506 = vadd.f32 %v2442, %v2494
      %2507 = vset.pattern.permute.xlu0 30
      %2508 = vperm.xlu0 %2507, %v622
      %v2509 = vpop.permute.xlu0 %2508
      %2511 = vset.pattern.permute.xlu0 30
      %2512 = vperm.xlu0 %2511, %v623
      %v2513 = vpop.permute.xlu0 %2512
      %v2515 = vmul.f32 %v2181, %v2509
      %v2516 = vmul.f32 %v2182, %v2509
      %v2517 = vmul.f32 %v2183, %v2509
      %v2518 = vmul.f32 %v2184, %v2513
      %v2519 = vmul.f32 %v2185, %v2513
      %v2520 = vmul.f32 %v2186, %v2513
      %2521 = vrot.lane.b32.xlu0 %v768, 15
      %v2522 = vpop.permute.xlu0 %2521
      %2523 = vrot.lane.b32.xlu0 %v772, 15
      %v2524 = vpop.permute.xlu0 %2523
      %vm2525 = vcmask 121856
      %v2526 = vsel %vm2525, %v2522, %v2524
      %v2530 = vmul.f32 %v2515, %v2522
      %v2531 = vmul.f32 %v2516, %v2526
      %v2532 = vmul.f32 %v2517, %v2524
      %v2533 = vmul.f32 %v2518, %v2522
      %v2534 = vmul.f32 %v2519, %v2526
      %v2535 = vmul.f32 %v2520, %v2524
      %2542 = vrot.lane.b32.xlu0 %v2530, 62
      %v2543 = vpop.permute.xlu0 %2542
      %2544 = vrot.lane.b32.xlu0 %v2531, 62
      %v2545 = vpop.permute.xlu0 %2544
      %2546 = vrot.lane.b32.xlu0 %v2532, 62
      %v2547 = vpop.permute.xlu0 %2546
      %2548 = vrot.lane.b32.xlu0 %v2533, 62
      %v2549 = vpop.permute.xlu0 %2548
      %2550 = vrot.lane.b32.xlu0 %v2534, 62
      %v2551 = vpop.permute.xlu0 %2550
      %2552 = vrot.lane.b32.xlu0 %v2535, 62
      %v2553 = vpop.permute.xlu0 %2552
      %vm2554 = vcmask 506880
      %v2555 = vsel %vm2554, %v2543, %v2545
      %v2556 = vsel %vm2554, %v2545, %v2547
      %v2557 = vsel %vm2554, %v2549, %v2551
      %v2558 = vsel %vm2554, %v2551, %v2553
      %v2565 = vadd.f32 %v2501, %v2543
      %v2566 = vadd.f32 %v2502, %v2555
      %v2567 = vadd.f32 %v2503, %v2556
      %v2568 = vadd.f32 %v2504, %v2549
      %v2569 = vadd.f32 %v2505, %v2557
      %v2570 = vadd.f32 %v2506, %v2558
      %2571 = vset.pattern.permute.xlu0 31
      %2572 = vperm.xlu0 %2571, %v622
      %v2573 = vpop.permute.xlu0 %2572
      %2575 = vset.pattern.permute.xlu0 31
      %2576 = vperm.xlu0 %2575, %v623
      %v2577 = vpop.permute.xlu0 %2576
      %v2579 = vmul.f32 %v2181, %v2573
      %v2580 = vmul.f32 %v2182, %v2573
      %v2581 = vmul.f32 %v2183, %v2573
      %v2582 = vmul.f32 %v2184, %v2577
      %v2583 = vmul.f32 %v2185, %v2577
      %v2584 = vmul.f32 %v2186, %v2577
      %2591 = vrot.lane.b32.xlu0 %v2579, 61
      %v2592 = vpop.permute.xlu0 %2591
      %2593 = vrot.lane.b32.xlu0 %v2580, 61
      %v2594 = vpop.permute.xlu0 %2593
      %2595 = vrot.lane.b32.xlu0 %v2581, 61
      %v2596 = vpop.permute.xlu0 %2595
      %2597 = vrot.lane.b32.xlu0 %v2582, 61
      %v2598 = vpop.permute.xlu0 %2597
      %2599 = vrot.lane.b32.xlu0 %v2583, 61
      %v2600 = vpop.permute.xlu0 %2599
      %2601 = vrot.lane.b32.xlu0 %v2584, 61
      %v2602 = vpop.permute.xlu0 %2601
      %vm2603 = vcmask 498688
      %v2604 = vsel %vm2603, %v2592, %v2594
      %v2605 = vsel %vm2603, %v2594, %v2596
      %v2606 = vsel %vm2603, %v2598, %v2600
      %v2607 = vsel %vm2603, %v2600, %v2602
      %v2614 = vadd.f32 %v2565, %v2592
      %v2615 = vadd.f32 %v2566, %v2604
      %v2616 = vadd.f32 %v2567, %v2605
      %v2617 = vadd.f32 %v2568, %v2598
      %v2618 = vadd.f32 %v2569, %v2606
      %v2619 = vadd.f32 %v2570, %v2607
      %2620 = vset.pattern.permute.xlu0 32
      %2621 = vperm.xlu0 %2620, %v622
      %v2622 = vpop.permute.xlu0 %2621
      %2624 = vset.pattern.permute.xlu0 32
      %2625 = vperm.xlu0 %2624, %v623
      %v2626 = vpop.permute.xlu0 %2625
      %v2628 = vmul.f32 %v2181, %v2622
      %v2629 = vmul.f32 %v2182, %v2622
      %v2630 = vmul.f32 %v2183, %v2622
      %v2631 = vmul.f32 %v2184, %v2626
      %v2632 = vmul.f32 %v2185, %v2626
      %v2633 = vmul.f32 %v2186, %v2626
      %2634 = vrot.lane.b32.xlu0 %v891, 17
      %v2635 = vpop.permute.xlu0 %2634
      %2636 = vrot.lane.b32.xlu0 %v895, 17
      %v2637 = vpop.permute.xlu0 %2636
      %vm2638 = vcmask 138240
      %v2639 = vsel %vm2638, %v2635, %v2637
      %v2643 = vmul.f32 %v2628, %v2635
      %v2644 = vmul.f32 %v2629, %v2639
      %v2645 = vmul.f32 %v2630, %v2637
      %v2646 = vmul.f32 %v2631, %v2635
      %v2647 = vmul.f32 %v2632, %v2639
      %v2648 = vmul.f32 %v2633, %v2637
      %2655 = vrot.lane.b32.xlu0 %v2643, 60
      %v2656 = vpop.permute.xlu0 %2655
      %2657 = vrot.lane.b32.xlu0 %v2644, 60
      %v2658 = vpop.permute.xlu0 %2657
      %2659 = vrot.lane.b32.xlu0 %v2645, 60
      %v2660 = vpop.permute.xlu0 %2659
      %2661 = vrot.lane.b32.xlu0 %v2646, 60
      %v2662 = vpop.permute.xlu0 %2661
      %2663 = vrot.lane.b32.xlu0 %v2647, 60
      %v2664 = vpop.permute.xlu0 %2663
      %2665 = vrot.lane.b32.xlu0 %v2648, 60
      %v2666 = vpop.permute.xlu0 %2665
      %vm2667 = vcmask 490496
      %v2668 = vsel %vm2667, %v2656, %v2658
      %v2669 = vsel %vm2667, %v2658, %v2660
      %v2670 = vsel %vm2667, %v2662, %v2664
      %v2671 = vsel %vm2667, %v2664, %v2666
      %v2678 = vadd.f32 %v2614, %v2656
      %v2679 = vadd.f32 %v2615, %v2668
      %v2680 = vadd.f32 %v2616, %v2669
      %v2681 = vadd.f32 %v2617, %v2662
      %v2682 = vadd.f32 %v2618, %v2670
      %v2683 = vadd.f32 %v2619, %v2671
      %2684 = vset.pattern.permute.xlu0 33
      %2685 = vperm.xlu0 %2684, %v622
      %v2686 = vpop.permute.xlu0 %2685
      %2688 = vset.pattern.permute.xlu0 33
      %2689 = vperm.xlu0 %2688, %v623
      %v2690 = vpop.permute.xlu0 %2689
      %v2692 = vmul.f32 %v2181, %v2686
      %v2693 = vmul.f32 %v2182, %v2686
      %v2694 = vmul.f32 %v2183, %v2686
      %v2695 = vmul.f32 %v2184, %v2690
      %v2696 = vmul.f32 %v2185, %v2690
      %v2697 = vmul.f32 %v2186, %v2690
      %2698 = vrot.lane.b32.xlu0 %v965, 18
      %v2699 = vpop.permute.xlu0 %2698
      %2700 = vrot.lane.b32.xlu0 %v969, 18
      %v2701 = vpop.permute.xlu0 %2700
      %vm2702 = vcmask 146432
      %v2703 = vsel %vm2702, %v2699, %v2701
      %v2707 = vmul.f32 %v2692, %v2699
      %v2708 = vmul.f32 %v2693, %v2703
      %v2709 = vmul.f32 %v2694, %v2701
      %v2710 = vmul.f32 %v2695, %v2699
      %v2711 = vmul.f32 %v2696, %v2703
      %v2712 = vmul.f32 %v2697, %v2701
      %2719 = vrot.lane.b32.xlu0 %v2707, 59
      %v2720 = vpop.permute.xlu0 %2719
      %2721 = vrot.lane.b32.xlu0 %v2708, 59
      %v2722 = vpop.permute.xlu0 %2721
      %2723 = vrot.lane.b32.xlu0 %v2709, 59
      %v2724 = vpop.permute.xlu0 %2723
      %2725 = vrot.lane.b32.xlu0 %v2710, 59
      %v2726 = vpop.permute.xlu0 %2725
      %2727 = vrot.lane.b32.xlu0 %v2711, 59
      %v2728 = vpop.permute.xlu0 %2727
      %2729 = vrot.lane.b32.xlu0 %v2712, 59
      %v2730 = vpop.permute.xlu0 %2729
      %vm2731 = vcmask 482304
      %v2732 = vsel %vm2731, %v2720, %v2722
      %v2733 = vsel %vm2731, %v2722, %v2724
      %v2734 = vsel %vm2731, %v2726, %v2728
      %v2735 = vsel %vm2731, %v2728, %v2730
      %v2742 = vadd.f32 %v2678, %v2720
      %v2743 = vadd.f32 %v2679, %v2732
      %v2744 = vadd.f32 %v2680, %v2733
      %v2745 = vadd.f32 %v2681, %v2726
      %v2746 = vadd.f32 %v2682, %v2734
      %v2747 = vadd.f32 %v2683, %v2735
      %2748 = vset.pattern.permute.xlu0 34
      %2749 = vperm.xlu0 %2748, %v622
      %v2750 = vpop.permute.xlu0 %2749
      %2752 = vset.pattern.permute.xlu0 34
      %2753 = vperm.xlu0 %2752, %v623
      %v2754 = vpop.permute.xlu0 %2753
      %v2756 = vmul.f32 %v2181, %v2750
      %v2757 = vmul.f32 %v2182, %v2750
      %v2758 = vmul.f32 %v2183, %v2750
      %v2759 = vmul.f32 %v2184, %v2754
      %v2760 = vmul.f32 %v2185, %v2754
      %v2761 = vmul.f32 %v2186, %v2754
      %2762 = vrot.lane.b32.xlu0 %v1039, 19
      %v2763 = vpop.permute.xlu0 %2762
      %2764 = vrot.lane.b32.xlu0 %v1043, 19
      %v2765 = vpop.permute.xlu0 %2764
      %vm2766 = vcmask 154624
      %v2767 = vsel %vm2766, %v2763, %v2765
      %v2771 = vmul.f32 %v2756, %v2763
      %v2772 = vmul.f32 %v2757, %v2767
      %v2773 = vmul.f32 %v2758, %v2765
      %v2774 = vmul.f32 %v2759, %v2763
      %v2775 = vmul.f32 %v2760, %v2767
      %v2776 = vmul.f32 %v2761, %v2765
      %2783 = vrot.lane.b32.xlu0 %v2771, 58
      %v2784 = vpop.permute.xlu0 %2783
      %2785 = vrot.lane.b32.xlu0 %v2772, 58
      %v2786 = vpop.permute.xlu0 %2785
      %2787 = vrot.lane.b32.xlu0 %v2773, 58
      %v2788 = vpop.permute.xlu0 %2787
      %2789 = vrot.lane.b32.xlu0 %v2774, 58
      %v2790 = vpop.permute.xlu0 %2789
      %2791 = vrot.lane.b32.xlu0 %v2775, 58
      %v2792 = vpop.permute.xlu0 %2791
      %2793 = vrot.lane.b32.xlu0 %v2776, 58
      %v2794 = vpop.permute.xlu0 %2793
      %vm2795 = vcmask 474112
      %v2796 = vsel %vm2795, %v2784, %v2786
      %v2797 = vsel %vm2795, %v2786, %v2788
      %v2798 = vsel %vm2795, %v2790, %v2792
      %v2799 = vsel %vm2795, %v2792, %v2794
      %v2806 = vadd.f32 %v2742, %v2784
      %v2807 = vadd.f32 %v2743, %v2796
      %v2808 = vadd.f32 %v2744, %v2797
      %v2809 = vadd.f32 %v2745, %v2790
      %v2810 = vadd.f32 %v2746, %v2798
      %v2811 = vadd.f32 %v2747, %v2799
      %2812 = vset.pattern.permute.xlu0 35
      %2813 = vperm.xlu0 %2812, %v622
      %v2814 = vpop.permute.xlu0 %2813
      %2816 = vset.pattern.permute.xlu0 35
      %2817 = vperm.xlu0 %2816, %v623
      %v2818 = vpop.permute.xlu0 %2817
      %v2820 = vmul.f32 %v2181, %v2814
      %v2821 = vmul.f32 %v2182, %v2814
      %v2822 = vmul.f32 %v2183, %v2814
      %v2823 = vmul.f32 %v2184, %v2818
      %v2824 = vmul.f32 %v2185, %v2818
      %v2825 = vmul.f32 %v2186, %v2818
      %2826 = vrot.lane.b32.xlu0 %v649, 29
      %v2827 = vpop.permute.xlu0 %2826
      %2828 = vrot.lane.b32.xlu0 %v653, 29
      %v2829 = vpop.permute.xlu0 %2828
      %vm2830 = vcmask 236544
      %v2831 = vsel %vm2830, %v2827, %v2829
      %v2835 = vmul.f32 %v2820, %v2827
      %v2836 = vmul.f32 %v2821, %v2831
      %v2837 = vmul.f32 %v2822, %v2829
      %v2838 = vmul.f32 %v2823, %v2827
      %v2839 = vmul.f32 %v2824, %v2831
      %v2840 = vmul.f32 %v2825, %v2829
      %2847 = vrot.lane.b32.xlu0 %v2835, 48
      %v2848 = vpop.permute.xlu0 %2847
      %2849 = vrot.lane.b32.xlu0 %v2836, 48
      %v2850 = vpop.permute.xlu0 %2849
      %2851 = vrot.lane.b32.xlu0 %v2837, 48
      %v2852 = vpop.permute.xlu0 %2851
      %2853 = vrot.lane.b32.xlu0 %v2838, 48
      %v2854 = vpop.permute.xlu0 %2853
      %2855 = vrot.lane.b32.xlu0 %v2839, 48
      %v2856 = vpop.permute.xlu0 %2855
      %2857 = vrot.lane.b32.xlu0 %v2840, 48
      %v2858 = vpop.permute.xlu0 %2857
      %vm2859 = vcmask 392192
      %v2860 = vsel %vm2859, %v2848, %v2850
      %v2861 = vsel %vm2859, %v2850, %v2852
      %v2862 = vsel %vm2859, %v2854, %v2856
      %v2863 = vsel %vm2859, %v2856, %v2858
      %v2870 = vadd.f32 %v2806, %v2848
      %v2871 = vadd.f32 %v2807, %v2860
      %v2872 = vadd.f32 %v2808, %v2861
      %v2873 = vadd.f32 %v2809, %v2854
      %v2874 = vadd.f32 %v2810, %v2862
      %v2875 = vadd.f32 %v2811, %v2863
      %2876 = vset.pattern.permute.xlu0 36
      %2877 = vperm.xlu0 %2876, %v622
      %v2878 = vpop.permute.xlu0 %2877
      %2880 = vset.pattern.permute.xlu0 36
      %2881 = vperm.xlu0 %2880, %v623
      %v2882 = vpop.permute.xlu0 %2881
      %v2884 = vmul.f32 %v2181, %v2878
      %v2885 = vmul.f32 %v2182, %v2878
      %v2886 = vmul.f32 %v2183, %v2878
      %v2887 = vmul.f32 %v2184, %v2882
      %v2888 = vmul.f32 %v2185, %v2882
      %v2889 = vmul.f32 %v2186, %v2882
      %2890 = vrot.lane.b32.xlu0 %v694, 30
      %v2891 = vpop.permute.xlu0 %2890
      %2892 = vrot.lane.b32.xlu0 %v698, 30
      %v2893 = vpop.permute.xlu0 %2892
      %vm2894 = vcmask 244736
      %v2895 = vsel %vm2894, %v2891, %v2893
      %v2899 = vmul.f32 %v2884, %v2891
      %v2900 = vmul.f32 %v2885, %v2895
      %v2901 = vmul.f32 %v2886, %v2893
      %v2902 = vmul.f32 %v2887, %v2891
      %v2903 = vmul.f32 %v2888, %v2895
      %v2904 = vmul.f32 %v2889, %v2893
      %2911 = vrot.lane.b32.xlu0 %v2899, 47
      %v2912 = vpop.permute.xlu0 %2911
      %2913 = vrot.lane.b32.xlu0 %v2900, 47
      %v2914 = vpop.permute.xlu0 %2913
      %2915 = vrot.lane.b32.xlu0 %v2901, 47
      %v2916 = vpop.permute.xlu0 %2915
      %2917 = vrot.lane.b32.xlu0 %v2902, 47
      %v2918 = vpop.permute.xlu0 %2917
      %2919 = vrot.lane.b32.xlu0 %v2903, 47
      %v2920 = vpop.permute.xlu0 %2919
      %2921 = vrot.lane.b32.xlu0 %v2904, 47
      %v2922 = vpop.permute.xlu0 %2921
      %vm2923 = vcmask 384000
      %v2924 = vsel %vm2923, %v2912, %v2914
      %v2925 = vsel %vm2923, %v2914, %v2916
      %v2926 = vsel %vm2923, %v2918, %v2920
      %v2927 = vsel %vm2923, %v2920, %v2922
      %v2934 = vadd.f32 %v2870, %v2912
      %v2935 = vadd.f32 %v2871, %v2924
      %v2936 = vadd.f32 %v2872, %v2925
      %v2937 = vadd.f32 %v2873, %v2918
      %v2938 = vadd.f32 %v2874, %v2926
      %v2939 = vadd.f32 %v2875, %v2927
      %2940 = vset.pattern.permute.xlu0 37
      %2941 = vperm.xlu0 %2940, %v622
      %v2942 = vpop.permute.xlu0 %2941
      %2944 = vset.pattern.permute.xlu0 37
      %2945 = vperm.xlu0 %2944, %v623
      %v2946 = vpop.permute.xlu0 %2945
      %v2948 = vmul.f32 %v2181, %v2942
      %v2949 = vmul.f32 %v2182, %v2942
      %v2950 = vmul.f32 %v2183, %v2942
      %v2951 = vmul.f32 %v2184, %v2946
      %v2952 = vmul.f32 %v2185, %v2946
      %v2953 = vmul.f32 %v2186, %v2946
      %2954 = vrot.lane.b32.xlu0 %v768, 31
      %v2955 = vpop.permute.xlu0 %2954
      %2956 = vrot.lane.b32.xlu0 %v772, 31
      %v2957 = vpop.permute.xlu0 %2956
      %vm2958 = vcmask 252928
      %v2959 = vsel %vm2958, %v2955, %v2957
      %v2963 = vmul.f32 %v2948, %v2955
      %v2964 = vmul.f32 %v2949, %v2959
      %v2965 = vmul.f32 %v2950, %v2957
      %v2966 = vmul.f32 %v2951, %v2955
      %v2967 = vmul.f32 %v2952, %v2959
      %v2968 = vmul.f32 %v2953, %v2957
      %2975 = vrot.lane.b32.xlu0 %v2963, 46
      %v2976 = vpop.permute.xlu0 %2975
      %2977 = vrot.lane.b32.xlu0 %v2964, 46
      %v2978 = vpop.permute.xlu0 %2977
      %2979 = vrot.lane.b32.xlu0 %v2965, 46
      %v2980 = vpop.permute.xlu0 %2979
      %2981 = vrot.lane.b32.xlu0 %v2966, 46
      %v2982 = vpop.permute.xlu0 %2981
      %2983 = vrot.lane.b32.xlu0 %v2967, 46
      %v2984 = vpop.permute.xlu0 %2983
      %2985 = vrot.lane.b32.xlu0 %v2968, 46
      %v2986 = vpop.permute.xlu0 %2985
      %vm2987 = vcmask 375808
      %v2988 = vsel %vm2987, %v2976, %v2978
      %v2989 = vsel %vm2987, %v2978, %v2980
      %v2990 = vsel %vm2987, %v2982, %v2984
      %v2991 = vsel %vm2987, %v2984, %v2986
      %v2998 = vadd.f32 %v2934, %v2976
      %v2999 = vadd.f32 %v2935, %v2988
      %v3000 = vadd.f32 %v2936, %v2989
      %v3001 = vadd.f32 %v2937, %v2982
      %v3002 = vadd.f32 %v2938, %v2990
      %v3003 = vadd.f32 %v2939, %v2991
      %3004 = vset.pattern.permute.xlu0 38
      %3005 = vperm.xlu0 %3004, %v622
      %v3006 = vpop.permute.xlu0 %3005
      %3008 = vset.pattern.permute.xlu0 38
      %3009 = vperm.xlu0 %3008, %v623
      %v3010 = vpop.permute.xlu0 %3009
      %v3012 = vmul.f32 %v2181, %v3006
      %v3013 = vmul.f32 %v2182, %v3006
      %v3014 = vmul.f32 %v2183, %v3006
      %v3015 = vmul.f32 %v2184, %v3010
      %v3016 = vmul.f32 %v2185, %v3010
      %v3017 = vmul.f32 %v2186, %v3010
      %3024 = vrot.lane.b32.xlu0 %v3012, 45
      %v3025 = vpop.permute.xlu0 %3024
      %3026 = vrot.lane.b32.xlu0 %v3013, 45
      %v3027 = vpop.permute.xlu0 %3026
      %3028 = vrot.lane.b32.xlu0 %v3014, 45
      %v3029 = vpop.permute.xlu0 %3028
      %3030 = vrot.lane.b32.xlu0 %v3015, 45
      %v3031 = vpop.permute.xlu0 %3030
      %3032 = vrot.lane.b32.xlu0 %v3016, 45
      %v3033 = vpop.permute.xlu0 %3032
      %3034 = vrot.lane.b32.xlu0 %v3017, 45
      %v3035 = vpop.permute.xlu0 %3034
      %vm3036 = vcmask 367616
      %v3037 = vsel %vm3036, %v3025, %v3027
      %v3038 = vsel %vm3036, %v3027, %v3029
      %v3039 = vsel %vm3036, %v3031, %v3033
      %v3040 = vsel %vm3036, %v3033, %v3035
      %v3047 = vadd.f32 %v2998, %v3025
      %v3048 = vadd.f32 %v2999, %v3037
      %v3049 = vadd.f32 %v3000, %v3038
      %v3050 = vadd.f32 %v3001, %v3031
      %v3051 = vadd.f32 %v3002, %v3039
      %v3052 = vadd.f32 %v3003, %v3040
      %3053 = vset.pattern.permute.xlu0 39
      %3054 = vperm.xlu0 %3053, %v622
      %v3055 = vpop.permute.xlu0 %3054
      %3057 = vset.pattern.permute.xlu0 39
      %3058 = vperm.xlu0 %3057, %v623
      %v3059 = vpop.permute.xlu0 %3058
      %v3061 = vmul.f32 %v2181, %v3055
      %v3062 = vmul.f32 %v2182, %v3055
      %v3063 = vmul.f32 %v2183, %v3055
      %v3064 = vmul.f32 %v2184, %v3059
      %v3065 = vmul.f32 %v2185, %v3059
      %v3066 = vmul.f32 %v2186, %v3059
      %3067 = vrot.lane.b32.xlu0 %v891, 33
      %v3068 = vpop.permute.xlu0 %3067
      %3069 = vrot.lane.b32.xlu0 %v895, 33
      %v3070 = vpop.permute.xlu0 %3069
      %vm3071 = vcmask 269312
      %v3072 = vsel %vm3071, %v3068, %v3070
      %v3076 = vmul.f32 %v3061, %v3068
      %v3077 = vmul.f32 %v3062, %v3072
      %v3078 = vmul.f32 %v3063, %v3070
      %v3079 = vmul.f32 %v3064, %v3068
      %v3080 = vmul.f32 %v3065, %v3072
      %v3081 = vmul.f32 %v3066, %v3070
      %3088 = vrot.lane.b32.xlu0 %v3076, 44
      %v3089 = vpop.permute.xlu0 %3088
      %3090 = vrot.lane.b32.xlu0 %v3077, 44
      %v3091 = vpop.permute.xlu0 %3090
      %3092 = vrot.lane.b32.xlu0 %v3078, 44
      %v3093 = vpop.permute.xlu0 %3092
      %3094 = vrot.lane.b32.xlu0 %v3079, 44
      %v3095 = vpop.permute.xlu0 %3094
      %3096 = vrot.lane.b32.xlu0 %v3080, 44
      %v3097 = vpop.permute.xlu0 %3096
      %3098 = vrot.lane.b32.xlu0 %v3081, 44
      %v3099 = vpop.permute.xlu0 %3098
      %vm3100 = vcmask 359424
      %v3101 = vsel %vm3100, %v3089, %v3091
      %v3102 = vsel %vm3100, %v3091, %v3093
      %v3103 = vsel %vm3100, %v3095, %v3097
      %v3104 = vsel %vm3100, %v3097, %v3099
      %v3111 = vadd.f32 %v3047, %v3089
      %v3112 = vadd.f32 %v3048, %v3101
      %v3113 = vadd.f32 %v3049, %v3102
      %v3114 = vadd.f32 %v3050, %v3095
      %v3115 = vadd.f32 %v3051, %v3103
      %v3116 = vadd.f32 %v3052, %v3104
      %3117 = vset.pattern.permute.xlu0 40
      %3118 = vperm.xlu0 %3117, %v622
      %v3119 = vpop.permute.xlu0 %3118
      %3121 = vset.pattern.permute.xlu0 40
      %3122 = vperm.xlu0 %3121, %v623
      %v3123 = vpop.permute.xlu0 %3122
      %v3125 = vmul.f32 %v2181, %v3119
      %v3126 = vmul.f32 %v2182, %v3119
      %v3127 = vmul.f32 %v2183, %v3119
      %v3128 = vmul.f32 %v2184, %v3123
      %v3129 = vmul.f32 %v2185, %v3123
      %v3130 = vmul.f32 %v2186, %v3123
      %3131 = vrot.lane.b32.xlu0 %v965, 34
      %v3132 = vpop.permute.xlu0 %3131
      %3133 = vrot.lane.b32.xlu0 %v969, 34
      %v3134 = vpop.permute.xlu0 %3133
      %vm3135 = vcmask 277504
      %v3136 = vsel %vm3135, %v3132, %v3134
      %v3140 = vmul.f32 %v3125, %v3132
      %v3141 = vmul.f32 %v3126, %v3136
      %v3142 = vmul.f32 %v3127, %v3134
      %v3143 = vmul.f32 %v3128, %v3132
      %v3144 = vmul.f32 %v3129, %v3136
      %v3145 = vmul.f32 %v3130, %v3134
      %3152 = vrot.lane.b32.xlu0 %v3140, 43
      %v3153 = vpop.permute.xlu0 %3152
      %3154 = vrot.lane.b32.xlu0 %v3141, 43
      %v3155 = vpop.permute.xlu0 %3154
      %3156 = vrot.lane.b32.xlu0 %v3142, 43
      %v3157 = vpop.permute.xlu0 %3156
      %3158 = vrot.lane.b32.xlu0 %v3143, 43
      %v3159 = vpop.permute.xlu0 %3158
      %3160 = vrot.lane.b32.xlu0 %v3144, 43
      %v3161 = vpop.permute.xlu0 %3160
      %3162 = vrot.lane.b32.xlu0 %v3145, 43
      %v3163 = vpop.permute.xlu0 %3162
      %vm3164 = vcmask 351232
      %v3165 = vsel %vm3164, %v3153, %v3155
      %v3166 = vsel %vm3164, %v3155, %v3157
      %v3167 = vsel %vm3164, %v3159, %v3161
      %v3168 = vsel %vm3164, %v3161, %v3163
      %v3175 = vadd.f32 %v3111, %v3153
      %v3176 = vadd.f32 %v3112, %v3165
      %v3177 = vadd.f32 %v3113, %v3166
      %v3178 = vadd.f32 %v3114, %v3159
      %v3179 = vadd.f32 %v3115, %v3167
      %v3180 = vadd.f32 %v3116, %v3168
      %3181 = vset.pattern.permute.xlu0 41
      %3182 = vperm.xlu0 %3181, %v622
      %v3183 = vpop.permute.xlu0 %3182
      %3185 = vset.pattern.permute.xlu0 41
      %3186 = vperm.xlu0 %3185, %v623
      %v3187 = vpop.permute.xlu0 %3186
      %v3189 = vmul.f32 %v2181, %v3183
      %v3190 = vmul.f32 %v2182, %v3183
      %v3191 = vmul.f32 %v2183, %v3183
      %v3192 = vmul.f32 %v2184, %v3187
      %v3193 = vmul.f32 %v2185, %v3187
      %v3194 = vmul.f32 %v2186, %v3187
      %3195 = vrot.lane.b32.xlu0 %v1039, 35
      %v3196 = vpop.permute.xlu0 %3195
      %3197 = vrot.lane.b32.xlu0 %v1043, 35
      %v3198 = vpop.permute.xlu0 %3197
      %vm3199 = vcmask 285696
      %v3200 = vsel %vm3199, %v3196, %v3198
      %v3204 = vmul.f32 %v3189, %v3196
      %v3205 = vmul.f32 %v3190, %v3200
      %v3206 = vmul.f32 %v3191, %v3198
      %v3207 = vmul.f32 %v3192, %v3196
      %v3208 = vmul.f32 %v3193, %v3200
      %v3209 = vmul.f32 %v3194, %v3198
      %3216 = vrot.lane.b32.xlu0 %v3204, 42
      %v3217 = vpop.permute.xlu0 %3216
      %3218 = vrot.lane.b32.xlu0 %v3205, 42
      %v3219 = vpop.permute.xlu0 %3218
      %3220 = vrot.lane.b32.xlu0 %v3206, 42
      %v3221 = vpop.permute.xlu0 %3220
      %3222 = vrot.lane.b32.xlu0 %v3207, 42
      %v3223 = vpop.permute.xlu0 %3222
      %3224 = vrot.lane.b32.xlu0 %v3208, 42
      %v3225 = vpop.permute.xlu0 %3224
      %3226 = vrot.lane.b32.xlu0 %v3209, 42
      %v3227 = vpop.permute.xlu0 %3226
      %vm3228 = vcmask 343040
      %v3229 = vsel %vm3228, %v3217, %v3219
      %v3230 = vsel %vm3228, %v3219, %v3221
      %v3231 = vsel %vm3228, %v3223, %v3225
      %v3232 = vsel %vm3228, %v3225, %v3227
      %v3239 = vadd.f32 %v3175, %v3217
      %v3240 = vadd.f32 %v3176, %v3229
      %v3241 = vadd.f32 %v3177, %v3230
      %v3242 = vadd.f32 %v3178, %v3223
      %v3243 = vadd.f32 %v3179, %v3231
      %v3244 = vadd.f32 %v3180, %v3232
      %3245 = vset.pattern.permute.xlu0 42
      %3246 = vperm.xlu0 %3245, %v622
      %v3247 = vpop.permute.xlu0 %3246
      %3249 = vset.pattern.permute.xlu0 42
      %3250 = vperm.xlu0 %3249, %v623
      %v3251 = vpop.permute.xlu0 %3250
      %v3253 = vmul.f32 %v2181, %v3247
      %v3254 = vmul.f32 %v2182, %v3247
      %v3255 = vmul.f32 %v2183, %v3247
      %v3256 = vmul.f32 %v2184, %v3251
      %v3257 = vmul.f32 %v2185, %v3251
      %v3258 = vmul.f32 %v2186, %v3251
      %3259 = vrot.lane.b32.xlu0 %v649, 45
      %v3260 = vpop.permute.xlu0 %3259
      %3261 = vrot.lane.b32.xlu0 %v653, 45
      %v3262 = vpop.permute.xlu0 %3261
      %v3263 = vsel %vm3036, %v3260, %v3262
      %v3267 = vmul.f32 %v3253, %v3260
      %v3268 = vmul.f32 %v3254, %v3263
      %v3269 = vmul.f32 %v3255, %v3262
      %v3270 = vmul.f32 %v3256, %v3260
      %v3271 = vmul.f32 %v3257, %v3263
      %v3272 = vmul.f32 %v3258, %v3262
      %3279 = vrot.lane.b32.xlu0 %v3267, 32
      %v3280 = vpop.permute.xlu0 %3279
      %3281 = vrot.lane.b32.xlu0 %v3268, 32
      %v3282 = vpop.permute.xlu0 %3281
      %3283 = vrot.lane.b32.xlu0 %v3269, 32
      %v3284 = vpop.permute.xlu0 %3283
      %3285 = vrot.lane.b32.xlu0 %v3270, 32
      %v3286 = vpop.permute.xlu0 %3285
      %3287 = vrot.lane.b32.xlu0 %v3271, 32
      %v3288 = vpop.permute.xlu0 %3287
      %3289 = vrot.lane.b32.xlu0 %v3272, 32
      %v3290 = vpop.permute.xlu0 %3289
      %vm3291 = vcmask 261120
      %v3292 = vsel %vm3291, %v3280, %v3282
      %v3293 = vsel %vm3291, %v3282, %v3284
      %v3294 = vsel %vm3291, %v3286, %v3288
      %v3295 = vsel %vm3291, %v3288, %v3290
      %v3302 = vadd.f32 %v3239, %v3280
      %v3303 = vadd.f32 %v3240, %v3292
      %v3304 = vadd.f32 %v3241, %v3293
      %v3305 = vadd.f32 %v3242, %v3286
      %v3306 = vadd.f32 %v3243, %v3294
      %v3307 = vadd.f32 %v3244, %v3295
      %3308 = vset.pattern.permute.xlu0 43
      %3309 = vperm.xlu0 %3308, %v622
      %v3310 = vpop.permute.xlu0 %3309
      %3312 = vset.pattern.permute.xlu0 43
      %3313 = vperm.xlu0 %3312, %v623
      %v3314 = vpop.permute.xlu0 %3313
      %v3316 = vmul.f32 %v2181, %v3310
      %v3317 = vmul.f32 %v2182, %v3310
      %v3318 = vmul.f32 %v2183, %v3310
      %v3319 = vmul.f32 %v2184, %v3314
      %v3320 = vmul.f32 %v2185, %v3314
      %v3321 = vmul.f32 %v2186, %v3314
      %3322 = vrot.lane.b32.xlu0 %v694, 46
      %v3323 = vpop.permute.xlu0 %3322
      %3324 = vrot.lane.b32.xlu0 %v698, 46
      %v3325 = vpop.permute.xlu0 %3324
      %v3326 = vsel %vm2987, %v3323, %v3325
      %v3330 = vmul.f32 %v3316, %v3323
      %v3331 = vmul.f32 %v3317, %v3326
      %v3332 = vmul.f32 %v3318, %v3325
      %v3333 = vmul.f32 %v3319, %v3323
      %v3334 = vmul.f32 %v3320, %v3326
      %v3335 = vmul.f32 %v3321, %v3325
      %3342 = vrot.lane.b32.xlu0 %v3330, 31
      %v3343 = vpop.permute.xlu0 %3342
      %3344 = vrot.lane.b32.xlu0 %v3331, 31
      %v3345 = vpop.permute.xlu0 %3344
      %3346 = vrot.lane.b32.xlu0 %v3332, 31
      %v3347 = vpop.permute.xlu0 %3346
      %3348 = vrot.lane.b32.xlu0 %v3333, 31
      %v3349 = vpop.permute.xlu0 %3348
      %3350 = vrot.lane.b32.xlu0 %v3334, 31
      %v3351 = vpop.permute.xlu0 %3350
      %3352 = vrot.lane.b32.xlu0 %v3335, 31
      %v3353 = vpop.permute.xlu0 %3352
      %v3354 = vsel %vm2958, %v3343, %v3345
      %v3355 = vsel %vm2958, %v3345, %v3347
      %v3356 = vsel %vm2958, %v3349, %v3351
      %v3357 = vsel %vm2958, %v3351, %v3353
      %v3364 = vadd.f32 %v3302, %v3343
      %v3365 = vadd.f32 %v3303, %v3354
      %v3366 = vadd.f32 %v3304, %v3355
      %v3367 = vadd.f32 %v3305, %v3349
      %v3368 = vadd.f32 %v3306, %v3356
      %v3369 = vadd.f32 %v3307, %v3357
      %3370 = vset.pattern.permute.xlu0 44
      %3371 = vperm.xlu0 %3370, %v622
      %v3372 = vpop.permute.xlu0 %3371
      %3374 = vset.pattern.permute.xlu0 44
      %3375 = vperm.xlu0 %3374, %v623
      %v3376 = vpop.permute.xlu0 %3375
      %v3378 = vmul.f32 %v2181, %v3372
      %v3379 = vmul.f32 %v2182, %v3372
      %v3380 = vmul.f32 %v2183, %v3372
      %v3381 = vmul.f32 %v2184, %v3376
      %v3382 = vmul.f32 %v2185, %v3376
      %v3383 = vmul.f32 %v2186, %v3376
      %3384 = vrot.lane.b32.xlu0 %v768, 47
      %v3385 = vpop.permute.xlu0 %3384
      %3386 = vrot.lane.b32.xlu0 %v772, 47
      %v3387 = vpop.permute.xlu0 %3386
      %v3388 = vsel %vm2923, %v3385, %v3387
      %v3392 = vmul.f32 %v3378, %v3385
      %v3393 = vmul.f32 %v3379, %v3388
      %v3394 = vmul.f32 %v3380, %v3387
      %v3395 = vmul.f32 %v3381, %v3385
      %v3396 = vmul.f32 %v3382, %v3388
      %v3397 = vmul.f32 %v3383, %v3387
      %3404 = vrot.lane.b32.xlu0 %v3392, 30
      %v3405 = vpop.permute.xlu0 %3404
      %3406 = vrot.lane.b32.xlu0 %v3393, 30
      %v3407 = vpop.permute.xlu0 %3406
      %3408 = vrot.lane.b32.xlu0 %v3394, 30
      %v3409 = vpop.permute.xlu0 %3408
      %3410 = vrot.lane.b32.xlu0 %v3395, 30
      %v3411 = vpop.permute.xlu0 %3410
      %3412 = vrot.lane.b32.xlu0 %v3396, 30
      %v3413 = vpop.permute.xlu0 %3412
      %3414 = vrot.lane.b32.xlu0 %v3397, 30
      %v3415 = vpop.permute.xlu0 %3414
      %v3416 = vsel %vm2894, %v3405, %v3407
      %v3417 = vsel %vm2894, %v3407, %v3409
      %v3418 = vsel %vm2894, %v3411, %v3413
      %v3419 = vsel %vm2894, %v3413, %v3415
      %v3426 = vadd.f32 %v3364, %v3405
      %v3427 = vadd.f32 %v3365, %v3416
      %v3428 = vadd.f32 %v3366, %v3417
      %v3429 = vadd.f32 %v3367, %v3411
      %v3430 = vadd.f32 %v3368, %v3418
      %v3431 = vadd.f32 %v3369, %v3419
      %3432 = vset.pattern.permute.xlu0 45
      %3433 = vperm.xlu0 %3432, %v622
      %v3434 = vpop.permute.xlu0 %3433
      %3436 = vset.pattern.permute.xlu0 45
      %3437 = vperm.xlu0 %3436, %v623
      %v3438 = vpop.permute.xlu0 %3437
      %v3440 = vmul.f32 %v2181, %v3434
      %v3441 = vmul.f32 %v2182, %v3434
      %v3442 = vmul.f32 %v2183, %v3434
      %v3443 = vmul.f32 %v2184, %v3438
      %v3444 = vmul.f32 %v2185, %v3438
      %v3445 = vmul.f32 %v2186, %v3438
      %3452 = vrot.lane.b32.xlu0 %v3440, 29
      %v3453 = vpop.permute.xlu0 %3452
      %3454 = vrot.lane.b32.xlu0 %v3441, 29
      %v3455 = vpop.permute.xlu0 %3454
      %3456 = vrot.lane.b32.xlu0 %v3442, 29
      %v3457 = vpop.permute.xlu0 %3456
      %3458 = vrot.lane.b32.xlu0 %v3443, 29
      %v3459 = vpop.permute.xlu0 %3458
      %3460 = vrot.lane.b32.xlu0 %v3444, 29
      %v3461 = vpop.permute.xlu0 %3460
      %3462 = vrot.lane.b32.xlu0 %v3445, 29
      %v3463 = vpop.permute.xlu0 %3462
      %v3464 = vsel %vm2830, %v3453, %v3455
      %v3465 = vsel %vm2830, %v3455, %v3457
      %v3466 = vsel %vm2830, %v3459, %v3461
      %v3467 = vsel %vm2830, %v3461, %v3463
      %v3474 = vadd.f32 %v3426, %v3453
      %v3475 = vadd.f32 %v3427, %v3464
      %v3476 = vadd.f32 %v3428, %v3465
      %v3477 = vadd.f32 %v3429, %v3459
      %v3478 = vadd.f32 %v3430, %v3466
      %v3479 = vadd.f32 %v3431, %v3467
      %3480 = vset.pattern.permute.xlu0 46
      %3481 = vperm.xlu0 %3480, %v622
      %v3482 = vpop.permute.xlu0 %3481
      %3484 = vset.pattern.permute.xlu0 46
      %3485 = vperm.xlu0 %3484, %v623
      %v3486 = vpop.permute.xlu0 %3485
      %v3488 = vmul.f32 %v2181, %v3482
      %v3489 = vmul.f32 %v2182, %v3482
      %v3490 = vmul.f32 %v2183, %v3482
      %v3491 = vmul.f32 %v2184, %v3486
      %v3492 = vmul.f32 %v2185, %v3486
      %v3493 = vmul.f32 %v2186, %v3486
      %3494 = vrot.lane.b32.xlu0 %v891, 49
      %v3495 = vpop.permute.xlu0 %3494
      %3496 = vrot.lane.b32.xlu0 %v895, 49
      %v3497 = vpop.permute.xlu0 %3496
      %vm3498 = vcmask 400384
      %v3499 = vsel %vm3498, %v3495, %v3497
      %v3503 = vmul.f32 %v3488, %v3495
      %v3504 = vmul.f32 %v3489, %v3499
      %v3505 = vmul.f32 %v3490, %v3497
      %v3506 = vmul.f32 %v3491, %v3495
      %v3507 = vmul.f32 %v3492, %v3499
      %v3508 = vmul.f32 %v3493, %v3497
      %3515 = vrot.lane.b32.xlu0 %v3503, 28
      %v3516 = vpop.permute.xlu0 %3515
      %3517 = vrot.lane.b32.xlu0 %v3504, 28
      %v3518 = vpop.permute.xlu0 %3517
      %3519 = vrot.lane.b32.xlu0 %v3505, 28
      %v3520 = vpop.permute.xlu0 %3519
      %3521 = vrot.lane.b32.xlu0 %v3506, 28
      %v3522 = vpop.permute.xlu0 %3521
      %3523 = vrot.lane.b32.xlu0 %v3507, 28
      %v3524 = vpop.permute.xlu0 %3523
      %3525 = vrot.lane.b32.xlu0 %v3508, 28
      %v3526 = vpop.permute.xlu0 %3525
      %vm3527 = vcmask 228352
      %v3528 = vsel %vm3527, %v3516, %v3518
      %v3529 = vsel %vm3527, %v3518, %v3520
      %v3530 = vsel %vm3527, %v3522, %v3524
      %v3531 = vsel %vm3527, %v3524, %v3526
      %v3538 = vadd.f32 %v3474, %v3516
      %v3539 = vadd.f32 %v3475, %v3528
      %v3540 = vadd.f32 %v3476, %v3529
      %v3541 = vadd.f32 %v3477, %v3522
      %v3542 = vadd.f32 %v3478, %v3530
      %v3543 = vadd.f32 %v3479, %v3531
      %3544 = vset.pattern.permute.xlu0 47
      %3545 = vperm.xlu0 %3544, %v622
      %v3546 = vpop.permute.xlu0 %3545
      %3548 = vset.pattern.permute.xlu0 47
      %3549 = vperm.xlu0 %3548, %v623
      %v3550 = vpop.permute.xlu0 %3549
      %v3552 = vmul.f32 %v2181, %v3546
      %v3553 = vmul.f32 %v2182, %v3546
      %v3554 = vmul.f32 %v2183, %v3546
      %v3555 = vmul.f32 %v2184, %v3550
      %v3556 = vmul.f32 %v2185, %v3550
      %v3557 = vmul.f32 %v2186, %v3550
      %3558 = vrot.lane.b32.xlu0 %v965, 50
      %v3559 = vpop.permute.xlu0 %3558
      %3560 = vrot.lane.b32.xlu0 %v969, 50
      %v3561 = vpop.permute.xlu0 %3560
      %vm3562 = vcmask 408576
      %v3563 = vsel %vm3562, %v3559, %v3561
      %v3567 = vmul.f32 %v3552, %v3559
      %v3568 = vmul.f32 %v3553, %v3563
      %v3569 = vmul.f32 %v3554, %v3561
      %v3570 = vmul.f32 %v3555, %v3559
      %v3571 = vmul.f32 %v3556, %v3563
      %v3572 = vmul.f32 %v3557, %v3561
      %3579 = vrot.lane.b32.xlu0 %v3567, 27
      %v3580 = vpop.permute.xlu0 %3579
      %3581 = vrot.lane.b32.xlu0 %v3568, 27
      %v3582 = vpop.permute.xlu0 %3581
      %3583 = vrot.lane.b32.xlu0 %v3569, 27
      %v3584 = vpop.permute.xlu0 %3583
      %3585 = vrot.lane.b32.xlu0 %v3570, 27
      %v3586 = vpop.permute.xlu0 %3585
      %3587 = vrot.lane.b32.xlu0 %v3571, 27
      %v3588 = vpop.permute.xlu0 %3587
      %3589 = vrot.lane.b32.xlu0 %v3572, 27
      %v3590 = vpop.permute.xlu0 %3589
      %vm3591 = vcmask 220160
      %v3592 = vsel %vm3591, %v3580, %v3582
      %v3593 = vsel %vm3591, %v3582, %v3584
      %v3594 = vsel %vm3591, %v3586, %v3588
      %v3595 = vsel %vm3591, %v3588, %v3590
      %v3602 = vadd.f32 %v3538, %v3580
      %v3603 = vadd.f32 %v3539, %v3592
      %v3604 = vadd.f32 %v3540, %v3593
      %v3605 = vadd.f32 %v3541, %v3586
      %v3606 = vadd.f32 %v3542, %v3594
      %v3607 = vadd.f32 %v3543, %v3595
      %3608 = vset.pattern.permute.xlu0 48
      %3609 = vperm.xlu0 %3608, %v622
      %v3610 = vpop.permute.xlu0 %3609
      %3612 = vset.pattern.permute.xlu0 48
      %3613 = vperm.xlu0 %3612, %v623
      %v3614 = vpop.permute.xlu0 %3613
      %v3616 = vmul.f32 %v2181, %v3610
      %v3617 = vmul.f32 %v2182, %v3610
      %v3618 = vmul.f32 %v2183, %v3610
      %v3619 = vmul.f32 %v2184, %v3614
      %v3620 = vmul.f32 %v2185, %v3614
      %v3621 = vmul.f32 %v2186, %v3614
      %3622 = vrot.lane.b32.xlu0 %v1039, 51
      %v3623 = vpop.permute.xlu0 %3622
      %3624 = vrot.lane.b32.xlu0 %v1043, 51
      %v3625 = vpop.permute.xlu0 %3624
      %vm3626 = vcmask 416768
      %v3627 = vsel %vm3626, %v3623, %v3625
      %v3631 = vmul.f32 %v3616, %v3623
      %v3632 = vmul.f32 %v3617, %v3627
      %v3633 = vmul.f32 %v3618, %v3625
      %v3634 = vmul.f32 %v3619, %v3623
      %v3635 = vmul.f32 %v3620, %v3627
      %v3636 = vmul.f32 %v3621, %v3625
      %3643 = vrot.lane.b32.xlu0 %v3631, 26
      %v3644 = vpop.permute.xlu0 %3643
      %3645 = vrot.lane.b32.xlu0 %v3632, 26
      %v3646 = vpop.permute.xlu0 %3645
      %3647 = vrot.lane.b32.xlu0 %v3633, 26
      %v3648 = vpop.permute.xlu0 %3647
      %3649 = vrot.lane.b32.xlu0 %v3634, 26
      %v3650 = vpop.permute.xlu0 %3649
      %3651 = vrot.lane.b32.xlu0 %v3635, 26
      %v3652 = vpop.permute.xlu0 %3651
      %3653 = vrot.lane.b32.xlu0 %v3636, 26
      %v3654 = vpop.permute.xlu0 %3653
      %vm3655 = vcmask 211968
      %v3656 = vsel %vm3655, %v3644, %v3646
      %v3657 = vsel %vm3655, %v3646, %v3648
      %v3658 = vsel %vm3655, %v3650, %v3652
      %v3659 = vsel %vm3655, %v3652, %v3654
      %v3666 = vadd.f32 %v3602, %v3644
      %v3667 = vadd.f32 %v3603, %v3656
      %v3668 = vadd.f32 %v3604, %v3657
      %v3669 = vadd.f32 %v3605, %v3650
      %v3670 = vadd.f32 %v3606, %v3658
      %v3671 = vadd.f32 %v3607, %v3659
      %v3672 = vld [vmem:[%s4] sm:$0xff]
      %v3673 = vld [vmem:[%s4 + $0x8] sm:$0xff]
      %v3674 = vld [vmem:[%s4 + $0x10] sm:$0xff]
      %v3675 = vld [vmem:[%s4 + $0x18] sm:$0xff]
      %v3676 = vld [vmem:[%s4 + $0x20] sm:$0xff]
      %v3677 = vld [vmem:[%s4 + $0x28] sm:$0xff]
      %v3678 = vld [vmem:[%s4 + $0x30] sm:$0xff]
      %v3679 = vld [vmem:[%s4 + $0x38] sm:$0xff]
      %v3680 = vld [vmem:[%s5] sm:$0xff]
      %v3681 = vld [vmem:[%s5 + $0x8] sm:$0xff]
      %v3682 = vld [vmem:[%s5 + $0x10] sm:$0xff]
      %v3683 = vld [vmem:[%s5 + $0x18] sm:$0xff]
      %v3684 = vld [vmem:[%s5 + $0x20] sm:$0xff]
      %v3685 = vld [vmem:[%s5 + $0x28] sm:$0xff]
      %v3686 = vld [vmem:[%s5 + $0x30] sm:$0xff]
      %v3687 = vld [vmem:[%s5 + $0x38] sm:$0xff]
      %3689 = vset.pattern.permute.xlu0 0
      %3690 = vperm.xlu0 %3689, %v3680
      %v3691 = vpop.permute.xlu0 %3690
      %3694 = vset.pattern.permute.xlu0 0
      %3695 = vperm.xlu0 %3694, %v3681
      %v3696 = vpop.permute.xlu0 %3695
      %3699 = vset.pattern.permute.xlu0 0
      %3700 = vperm.xlu0 %3699, %v3682
      %v3701 = vpop.permute.xlu0 %3700
      %3704 = vset.pattern.permute.xlu0 0
      %3705 = vperm.xlu0 %3704, %v3683
      %v3706 = vpop.permute.xlu0 %3705
      %3709 = vset.pattern.permute.xlu0 0
      %3710 = vperm.xlu0 %3709, %v3684
      %v3711 = vpop.permute.xlu0 %3710
      %3714 = vset.pattern.permute.xlu0 0
      %3715 = vperm.xlu0 %3714, %v3685
      %v3716 = vpop.permute.xlu0 %3715
      %3719 = vset.pattern.permute.xlu0 0
      %3720 = vperm.xlu0 %3719, %v3686
      %v3721 = vpop.permute.xlu0 %3720
      %3724 = vset.pattern.permute.xlu0 0
      %3725 = vperm.xlu0 %3724, %v3687
      %v3726 = vpop.permute.xlu0 %3725
      %3734 = vrot.lane.b32.xlu0 %v3666, 51
      %v3735 = vpop.permute.xlu0 %3734
      %3736 = vrot.lane.b32.xlu0 %v3667, 51
      %v3737 = vpop.permute.xlu0 %3736
      %3738 = vrot.lane.b32.xlu0 %v3668, 51
      %v3739 = vpop.permute.xlu0 %3738
      %3740 = vrot.lane.b32.xlu0 %v3669, 51
      %v3741 = vpop.permute.xlu0 %3740
      %3742 = vrot.lane.b32.xlu0 %v3670, 51
      %v3743 = vpop.permute.xlu0 %3742
      %3744 = vrot.lane.b32.xlu0 %v3671, 51
      %v3745 = vpop.permute.xlu0 %3744
      %v3746 = vsel %vm3626, %v3735, %v3737
      %v3747 = vsel %vm3626, %v3737, %v3739
      %v3748 = vsel %vm3626, %v3741, %v3743
      %v3749 = vsel %vm3626, %v3743, %v3745
      %vm3754 = vcmask 130048
      %v3756 = vsel %vm3754, %v3672, 0
      %v3759 = vsel %vm3754, %v3673, 0
      %v3762 = vsel %vm3754, %v3674, 0
      %v3765 = vsel %vm3754, %v3675, 0
      %v3768 = vsel %vm3754, %v3676, 0
      %v3771 = vsel %vm3754, %v3677, 0
      %v3774 = vsel %vm3754, %v3678, 0
      %v3777 = vsel %vm3754, %v3679, 0
      %3779 = vmatprep.subr.mxu0 %v3747
      %3780 = vmatpush1.msra.mxu0 %v3746
      %3781 = vmatprep.subr.mxu0 %v3749
      %3782 = vmatpush1.msra.mxu0 %v3748
      %3783 = vmatprep.subr.mxu0 0.0
      %3784 = vmatpush1.msra.mxu0 0.0
      %3785 = vmatprep.subr.mxu0 0.0
      %3786 = vmatpush1.msra.mxu0 0.0
      %3787 = vmatprep.subr.mxu0 0.0
      %3788 = vmatpush1.msra.mxu0 0.0
      %3789 = vmatprep.subr.mxu0 0.0
      %3790 = vmatpush1.msra.mxu0 0.0
      %3791 = vmatprep.subr.mxu0 0.0
      %3792 = vmatpush1.msra.mxu0 0.0
      %3793 = vmatprep.subr.mxu0 0.0
      %3794 = vmatpush1.msra.mxu0 0.0
      %3795 = vmatprep.subr.mxu0 0.0
      %3796 = vmatpush1.msra.mxu0 0.0
      %3797 = vmatprep.subr.mxu0 0.0
      %3798 = vmatpush1.msra.mxu0 0.0
      %3799 = vmatprep.subr.mxu0 0.0
      %3800 = vmatpush1.msra.mxu0 0.0
      %3801 = vmatprep.subr.mxu0 0.0
      %3802 = vmatpush1.msra.mxu0 0.0
      %3803 = vmatprep.subr.mxu0 0.0
      %3804 = vmatpush1.msra.mxu0 0.0
      %3805 = vmatprep.subr.mxu0 0.0
      %3806 = vmatpush1.msra.mxu0 0.0
      %3807 = vmatprep.subr.mxu0 0.0
      %3808 = vmatpush1.msra.mxu0 0.0
      %3809 = vmatprep.subr.mxu0 0.0
      %3810 = vmatpush1.msra.mxu0 0.0
      %3811 = vmatprep.subr.mxu0 0.0
      %3812 = vmatpush1.msra.mxu0 0.0
      %3813 = vmatprep.subr.mxu0 0.0
      %3814 = vmatpush1.msra.mxu0 0.0
      %3815 = vmatprep.subr.mxu0 0.0
      %3816 = vmatpush1.msra.mxu0 0.0
      %3817 = vmatprep.subr.mxu0 0.0
      %3818 = vmatpush1.msra.mxu0 0.0
      %3819 = vmatprep.subr.mxu0 0.0
      %3820 = vmatpush1.msra.mxu0 0.0
      %3821 = vmatprep.subr.mxu0 0.0
      %3822 = vmatpush1.msra.mxu0 0.0
      %3823 = vmatprep.subr.mxu0 0.0
      %3824 = vmatpush1.msra.mxu0 0.0
      %3825 = vmatprep.subr.mxu0 0.0
      %3826 = vmatpush1.msra.mxu0 0.0
      %3827 = vmatprep.subr.mxu0 0.0
      %3828 = vmatpush1.msra.mxu0 0.0
      %3829 = vmatprep.subr.mxu0 0.0
      %3830 = vmatpush1.msra.mxu0 0.0
      %3831 = vmatprep.subr.mxu0 0.0
      %3832 = vmatpush1.msra.mxu0 0.0
      %3833 = vmatprep.subr.mxu0 0.0
      %3834 = vmatpush1.msra.mxu0 0.0
      %3835 = vmatprep.subr.mxu0 0.0
      %3836 = vmatpush1.msra.mxu0 0.0
      %3837 = vmatprep.subr.mxu0 0.0
      %3838 = vmatpush1.msra.mxu0 0.0
      %3839 = vmatprep.subr.mxu0 0.0
      %3840 = vmatpush1.msra.mxu0 0.0
      %3841 = vmatprep.subr.mxu0 0.0
      %3842 = vmatpush1.msra.mxu0 0.0
      %3843 = vmatprep.mubr.f32.mxu0 0.0
      %3844 = vmatmul.mubr.f32.gmra.mrb[0].mxu0 %v3756
      %v3845 = vpop.f32.mrb[0].mxu0
      %v3846 = vadd.f32 %v3691, %v3845
      %v3847 = vpop.f32.mrb[0].mxu0
      %v3848 = vadd.f32 %v3691, %v3847
      %3849 = vmatprep.mubr.f32.mxu0 0.0
      %3850 = vmatmul.mubr.f32.gmra.mrb[0].mxu0 %v3759
      %v3851 = vpop.f32.mrb[0].mxu0
      %v3852 = vadd.f32 %v3696, %v3851
      %v3853 = vpop.f32.mrb[0].mxu0
      %v3854 = vadd.f32 %v3696, %v3853
      %3855 = vmatprep.mubr.f32.mxu0 0.0
      %3856 = vmatmul.mubr.f32.gmra.mrb[0].mxu0 %v3762
      %v3857 = vpop.f32.mrb[0].mxu0
      %v3858 = vadd.f32 %v3701, %v3857
      %v3859 = vpop.f32.mrb[0].mxu0
      %v3860 = vadd.f32 %v3701, %v3859
      %3861 = vmatprep.mubr.f32.mxu0 0.0
      %3862 = vmatmul.mubr.f32.gmra.mrb[0].mxu0 %v3765
      %v3863 = vpop.f32.mrb[0].mxu0
      %v3864 = vadd.f32 %v3706, %v3863
      %v3865 = vpop.f32.mrb[0].mxu0
      %v3866 = vadd.f32 %v3706, %v3865
      %3867 = vmatprep.mubr.f32.mxu0 0.0
      %3868 = vmatmul.mubr.f32.gmra.mrb[0].mxu0 %v3768
      %v3869 = vpop.f32.mrb[0].mxu0
      %v3870 = vadd.f32 %v3711, %v3869
      %v3871 = vpop.f32.mrb[0].mxu0
      %v3872 = vadd.f32 %v3711, %v3871
      %3873 = vmatprep.mubr.f32.mxu0 0.0
      %3874 = vmatmul.mubr.f32.gmra.mrb[0].mxu0 %v3771
      %v3875 = vpop.f32.mrb[0].mxu0
      %v3876 = vadd.f32 %v3716, %v3875
      %v3877 = vpop.f32.mrb[0].mxu0
      %v3878 = vadd.f32 %v3716, %v3877
      %3879 = vmatprep.mubr.f32.mxu0 0.0
      %3880 = vmatmul.mubr.f32.gmra.mrb[0].mxu0 %v3774
      %v3881 = vpop.f32.mrb[0].mxu0
      %v3882 = vadd.f32 %v3721, %v3881
      %v3883 = vpop.f32.mrb[0].mxu0
      %v3884 = vadd.f32 %v3721, %v3883
      %3885 = vmatprep.mubr.f32.mxu0 0.0
      %3886 = vmatmul.mubr.f32.gmra.mrb[0].mxu0 %v3777
      %v3887 = vpop.f32.mrb[0].mxu0
      %v3888 = vadd.f32 %v3726, %v3887
      %v3889 = vpop.f32.mrb[0].mxu0
      %v3890 = vadd.f32 %v3726, %v3889
      %3891 = vdwg.mxu0
      %v3892 = vmax.f32 %v3846, 0.0
      %v3893 = vmax.f32 %v3848, 0.0
      %v3894 = vmax.f32 %v3852, 0.0
      %v3895 = vmax.f32 %v3854, 0.0
      %v3896 = vmax.f32 %v3858, 0.0
      %v3897 = vmax.f32 %v3860, 0.0
      %v3898 = vmax.f32 %v3864, 0.0
      %v3899 = vmax.f32 %v3866, 0.0
      %v3900 = vmin.f32 %v3892, 6.0
      %v3901 = vmin.f32 %v3893, 6.0
      %v3902 = vmin.f32 %v3894, 6.0
      %v3903 = vmin.f32 %v3895, 6.0
      %v3904 = vmin.f32 %v3896, 6.0
      %v3905 = vmin.f32 %v3897, 6.0
      %v3906 = vmin.f32 %v3898, 6.0
      %v3907 = vmin.f32 %v3899, 6.0
      %v3908 = vmul.f32 %v3900, %v3870
      %v3909 = vmul.f32 %v3901, %v3872
      %v3910 = vmul.f32 %v3902, %v3876
      %v3911 = vmul.f32 %v3903, %v3878
      %v3912 = vmul.f32 %v3904, %v3882
      %v3913 = vmul.f32 %v3905, %v3884
      %v3914 = vmul.f32 %v3906, %v3888
      %v3915 = vmul.f32 %v3907, %v3890
      %v3916 = vld [vmem:[%s6] sm:$0xff]
      %v3917 = vld [vmem:[%s6 + $0x8] sm:$0xff]
      %v3918 = vld [vmem:[%s7] sm:$0xff]
      %v3919 = vld [vmem:[%s7 + $0x8] sm:$0xff]
      %3921 = vset.pattern.permute.xlu0 0
      %3922 = vperm.xlu0 %3921, %v3918
      %v3923 = vpop.permute.xlu0 %3922
      %3926 = vset.pattern.permute.xlu0 0
      %3927 = vperm.xlu0 %3926, %v3919
      %v3928 = vpop.permute.xlu0 %3927
      %v3931 = vsel %vm3291, %v3916, 0
      %v3934 = vsel %vm3291, %v3917, 0
      %3936 = vmatprep.subr.mxu0 %v3909
      %3937 = vmatpush1.msra.mxu0 %v3908
      %3938 = vmatprep.subr.mxu0 %v3911
      %3939 = vmatpush1.msra.mxu0 %v3910
      %3940 = vmatprep.subr.mxu0 %v3913
      %3941 = vmatpush1.msra.mxu0 %v3912
      %3942 = vmatprep.subr.mxu0 %v3915
      %3943 = vmatpush1.msra.mxu0 %v3914
      %3944 = vmatprep.subr.mxu0 0.0
      %3945 = vmatpush1.msra.mxu0 0.0
      %3946 = vmatprep.subr.mxu0 0.0
      %3947 = vmatpush1.msra.mxu0 0.0
      %3948 = vmatprep.subr.mxu0 0.0
      %3949 = vmatpush1.msra.mxu0 0.0
      %3950 = vmatprep.subr.mxu0 0.0
      %3951 = vmatpush1.msra.mxu0 0.0
      %3952 = vmatprep.subr.mxu0 0.0
      %3953 = vmatpush1.msra.mxu0 0.0
      %3954 = vmatprep.subr.mxu0 0.0
      %3955 = vmatpush1.msra.mxu0 0.0
      %3956 = vmatprep.subr.mxu0 0.0
      %3957 = vmatpush1.msra.mxu0 0.0
      %3958 = vmatprep.subr.mxu0 0.0
      %3959 = vmatpush1.msra.mxu0 0.0
      %3960 = vmatprep.subr.mxu0 0.0
      %3961 = vmatpush1.msra.mxu0 0.0
      %3962 = vmatprep.subr.mxu0 0.0
      %3963 = vmatpush1.msra.mxu0 0.0
      %3964 = vmatprep.subr.mxu0 0.0
      %3965 = vmatpush1.msra.mxu0 0.0
      %3966 = vmatprep.subr.mxu0 0.0
      %3967 = vmatpush1.msra.mxu0 0.0
      %3968 = vmatprep.subr.mxu0 0.0
      %3969 = vmatpush1.msra.mxu0 0.0
      %3970 = vmatprep.subr.mxu0 0.0
      %3971 = vmatpush1.msra.mxu0 0.0
      %3972 = vmatprep.subr.mxu0 0.0
      %3973 = vmatpush1.msra.mxu0 0.0
      %3974 = vmatprep.subr.mxu0 0.0
      %3975 = vmatpush1.msra.mxu0 0.0
      %3976 = vmatprep.subr.mxu0 0.0
      %3977 = vmatpush1.msra.mxu0 0.0
      %3978 = vmatprep.subr.mxu0 0.0
      %3979 = vmatpush1.msra.mxu0 0.0
      %3980 = vmatprep.subr.mxu0 0.0
      %3981 = vmatpush1.msra.mxu0 0.0
      %3982 = vmatprep.subr.mxu0 0.0
      %3983 = vmatpush1.msra.mxu0 0.0
      %3984 = vmatprep.subr.mxu0 0.0
      %3985 = vmatpush1.msra.mxu0 0.0
      %3986 = vmatprep.subr.mxu0 0.0
      %3987 = vmatpush1.msra.mxu0 0.0
      %3988 = vmatprep.subr.mxu0 0.0
      %3989 = vmatpush1.msra.mxu0 0.0
      %3990 = vmatprep.subr.mxu0 0.0
      %3991 = vmatpush1.msra.mxu0 0.0
      %3992 = vmatprep.subr.mxu0 0.0
      %3993 = vmatpush1.msra.mxu0 0.0
      %3994 = vmatprep.subr.mxu0 0.0
      %3995 = vmatpush1.msra.mxu0 0.0
      %3996 = vmatprep.subr.mxu0 0.0
      %3997 = vmatpush1.msra.mxu0 0.0
      %3998 = vmatprep.subr.mxu0 0.0
      %3999 = vmatpush1.msra.mxu0 0.0
      %4000 = vmatprep.mubr.f32.mxu0 0.0
      %4001 = vmatmul.mubr.f32.gmra.mrb[0].mxu0 %v3931
      %v4002 = vpop.f32.mrb[0].mxu0
      %v4003 = vadd.f32 %v3923, %v4002
      %v4004 = vpop.f32.mrb[0].mxu0
      %v4005 = vadd.f32 %v3923, %v4004
      %4006 = vmatprep.mubr.f32.mxu0 0.0
      %4007 = vmatmul.mubr.f32.gmra.mrb[0].mxu0 %v3934
      %v4008 = vpop.f32.mrb[0].mxu0
      %v4009 = vadd.f32 %v3928, %v4008
      %v4010 = vpop.f32.mrb[0].mxu0
      %v4011 = vadd.f32 %v3928, %v4010
      %4012 = vdwg.mxu0
      %v4013 = vld [vmem:[%s9] sm:$0xff]
      %v4014 = vld [vmem:[%s9 + $0x8] sm:$0xff]
      %4015 = vst [vmem:[#allocation2 + $0x8] sm:$0xff] %v4003
      %4016 = vst [vmem:[#allocation2 + $0x10] sm:$0xff] %v4005
      %4017 = vst [vmem:[#allocation2 + $0x28] sm:$0xff] %v4009
      %4018 = vst [vmem:[#allocation2 + $0x30] sm:$0xff] %v4011
      %v4019 = vld [vmem:[%s8] sm:$0xff]
      %v4020 = vld [vmem:[%s8 + $0x8] sm:$0xff]
      %4022 = vset.pattern.permute.xlu0 0
      %4023 = vperm.xlu0 %4022, %v4013
      %v4024 = vpop.permute.xlu0 %4023
      %4027 = vset.pattern.permute.xlu0 0
      %4028 = vperm.xlu0 %4027, %v4014
      %v4029 = vpop.permute.xlu0 %4028
      %v4031 = vld [vmem:[#allocation2] sm:$0xff]
      %v4032 = vld [vmem:[#allocation2 + $0x8] sm:$0xff]
      %v4033 = vld [vmem:[#allocation2 + $0x10] sm:$0xff]
      %v4034 = vld [vmem:[#allocation2 + $0x20] sm:$0xff]
      %v4035 = vld [vmem:[#allocation2 + $0x28] sm:$0xff]
      %v4036 = vld [vmem:[#allocation2 + $0x30] sm:$0xff]
      %4038 = vset.pattern.permute.xlu0 0
      %4039 = vperm.xlu0 %4038, %v4019
      %v4040 = vpop.permute.xlu0 %4039
      %4043 = vset.pattern.permute.xlu0 0
      %4044 = vperm.xlu0 %4043, %v4020
      %v4045 = vpop.permute.xlu0 %4044
      %v4047 = vmul.f32 %v4031, %v4040
      %v4048 = vmul.f32 %v4032, %v4040
      %v4049 = vmul.f32 %v4033, %v4040
      %v4050 = vmul.f32 %v4034, %v4045
      %v4051 = vmul.f32 %v4035, %v4045
      %v4052 = vmul.f32 %v4036, %v4045
      %v4053 = vmul.f32 %v4047, %v657
      %v4054 = vmul.f32 %v4048, %v661
      %v4055 = vmul.f32 %v4049, %v659
      %v4056 = vmul.f32 %v4050, %v657
      %v4057 = vmul.f32 %v4051, %v661
      %v4058 = vmul.f32 %v4052, %v659
      %v4059 = vadd.f32 %v4024, %v4053
      %v4060 = vadd.f32 %v4024, %v4054
      %v4061 = vadd.f32 %v4024, %v4055
      %v4062 = vadd.f32 %v4029, %v4056
      %v4063 = vadd.f32 %v4029, %v4057
      %v4064 = vadd.f32 %v4029, %v4058
      %4065 = vset.pattern.permute.xlu0 1
      %4066 = vperm.xlu0 %4065, %v4019
      %v4067 = vpop.permute.xlu0 %4066
      %4069 = vset.pattern.permute.xlu0 1
      %4070 = vperm.xlu0 %4069, %v4020
      %v4071 = vpop.permute.xlu0 %4070
      %v4073 = vmul.f32 %v4031, %v4067
      %v4074 = vmul.f32 %v4032, %v4067
      %v4075 = vmul.f32 %v4033, %v4067
      %v4076 = vmul.f32 %v4034, %v4071
      %v4077 = vmul.f32 %v4035, %v4071
      %v4078 = vmul.f32 %v4036, %v4071
      %v4079 = vmul.f32 %v4073, %v702
      %v4080 = vmul.f32 %v4074, %v706
      %v4081 = vmul.f32 %v4075, %v704
      %v4082 = vmul.f32 %v4076, %v702
      %v4083 = vmul.f32 %v4077, %v706
      %v4084 = vmul.f32 %v4078, %v704
      %4091 = vrot.lane.b32.xlu0 %v4079, 127
      %v4092 = vpop.permute.xlu0 %4091
      %4093 = vrot.lane.b32.xlu0 %v4080, 127
      %v4094 = vpop.permute.xlu0 %4093
      %4095 = vrot.lane.b32.xlu0 %v4081, 127
      %v4096 = vpop.permute.xlu0 %4095
      %4097 = vrot.lane.b32.xlu0 %v4082, 127
      %v4098 = vpop.permute.xlu0 %4097
      %4099 = vrot.lane.b32.xlu0 %v4083, 127
      %v4100 = vpop.permute.xlu0 %4099
      %4101 = vrot.lane.b32.xlu0 %v4084, 127
      %v4102 = vpop.permute.xlu0 %4101
      %v4103 = vsel %vm734, %v4092, %v4094
      %v4104 = vsel %vm734, %v4094, %v4096
      %v4105 = vsel %vm734, %v4098, %v4100
      %v4106 = vsel %vm734, %v4100, %v4102
      %v4113 = vadd.f32 %v4059, %v4103
      %v4114 = vadd.f32 %v4060, %v4104
      %v4115 = vadd.f32 %v4061, %v4096
      %v4116 = vadd.f32 %v4062, %v4105
      %v4117 = vadd.f32 %v4063, %v4106
      %v4118 = vadd.f32 %v4064, %v4102
      %4119 = vset.pattern.permute.xlu0 2
      %4120 = vperm.xlu0 %4119, %v4019
      %v4121 = vpop.permute.xlu0 %4120
      %4123 = vset.pattern.permute.xlu0 2
      %4124 = vperm.xlu0 %4123, %v4020
      %v4125 = vpop.permute.xlu0 %4124
      %v4127 = vmul.f32 %v4031, %v4121
      %v4128 = vmul.f32 %v4032, %v4121
      %v4129 = vmul.f32 %v4033, %v4121
      %v4130 = vmul.f32 %v4034, %v4125
      %v4131 = vmul.f32 %v4035, %v4125
      %v4132 = vmul.f32 %v4036, %v4125
      %v4133 = vmul.f32 %v4127, %v776
      %v4134 = vmul.f32 %v4128, %v780
      %v4135 = vmul.f32 %v4129, %v778
      %v4136 = vmul.f32 %v4130, %v776
      %v4137 = vmul.f32 %v4131, %v780
      %v4138 = vmul.f32 %v4132, %v778
      %4145 = vrot.lane.b32.xlu0 %v4133, 126
      %v4146 = vpop.permute.xlu0 %4145
      %4147 = vrot.lane.b32.xlu0 %v4134, 126
      %v4148 = vpop.permute.xlu0 %4147
      %4149 = vrot.lane.b32.xlu0 %v4135, 126
      %v4150 = vpop.permute.xlu0 %4149
      %4151 = vrot.lane.b32.xlu0 %v4136, 126
      %v4152 = vpop.permute.xlu0 %4151
      %4153 = vrot.lane.b32.xlu0 %v4137, 126
      %v4154 = vpop.permute.xlu0 %4153
      %4155 = vrot.lane.b32.xlu0 %v4138, 126
      %v4156 = vpop.permute.xlu0 %4155
      %v4157 = vsel %vm808, %v4146, %v4148
      %v4158 = vsel %vm808, %v4148, %v4150
      %v4159 = vsel %vm808, %v4152, %v4154
      %v4160 = vsel %vm808, %v4154, %v4156
      %v4167 = vadd.f32 %v4113, %v4157
      %v4168 = vadd.f32 %v4114, %v4158
      %v4169 = vadd.f32 %v4115, %v4150
      %v4170 = vadd.f32 %v4116, %v4159
      %v4171 = vadd.f32 %v4117, %v4160
      %v4172 = vadd.f32 %v4118, %v4156
      %4173 = vset.pattern.permute.xlu0 3
      %4174 = vperm.xlu0 %4173, %v4019
      %v4175 = vpop.permute.xlu0 %4174
      %4177 = vset.pattern.permute.xlu0 3
      %4178 = vperm.xlu0 %4177, %v4020
      %v4179 = vpop.permute.xlu0 %4178
      %v4181 = vmul.f32 %v4031, %v4175
      %v4182 = vmul.f32 %v4032, %v4175
      %v4183 = vmul.f32 %v4033, %v4175
      %v4184 = vmul.f32 %v4034, %v4179
      %v4185 = vmul.f32 %v4035, %v4179
      %v4186 = vmul.f32 %v4036, %v4179
      %4193 = vrot.lane.b32.xlu0 %v4181, 125
      %v4194 = vpop.permute.xlu0 %4193
      %4195 = vrot.lane.b32.xlu0 %v4182, 125
      %v4196 = vpop.permute.xlu0 %4195
      %4197 = vrot.lane.b32.xlu0 %v4183, 125
      %v4198 = vpop.permute.xlu0 %4197
      %4199 = vrot.lane.b32.xlu0 %v4184, 125
      %v4200 = vpop.permute.xlu0 %4199
      %4201 = vrot.lane.b32.xlu0 %v4185, 125
      %v4202 = vpop.permute.xlu0 %4201
      %4203 = vrot.lane.b32.xlu0 %v4186, 125
      %v4204 = vpop.permute.xlu0 %4203
      %v4205 = vsel %vm857, %v4194, %v4196
      %v4206 = vsel %vm857, %v4196, %v4198
      %v4207 = vsel %vm857, %v4200, %v4202
      %v4208 = vsel %vm857, %v4202, %v4204
      %v4215 = vadd.f32 %v4167, %v4205
      %v4216 = vadd.f32 %v4168, %v4206
      %v4217 = vadd.f32 %v4169, %v4198
      %v4218 = vadd.f32 %v4170, %v4207
      %v4219 = vadd.f32 %v4171, %v4208
      %v4220 = vadd.f32 %v4172, %v4204
      %4221 = vset.pattern.permute.xlu0 4
      %4222 = vperm.xlu0 %4221, %v4019
      %v4223 = vpop.permute.xlu0 %4222
      %4225 = vset.pattern.permute.xlu0 4
      %4226 = vperm.xlu0 %4225, %v4020
      %v4227 = vpop.permute.xlu0 %4226
      %v4229 = vmul.f32 %v4031, %v4223
      %v4230 = vmul.f32 %v4032, %v4223
      %v4231 = vmul.f32 %v4033, %v4223
      %v4232 = vmul.f32 %v4034, %v4227
      %v4233 = vmul.f32 %v4035, %v4227
      %v4234 = vmul.f32 %v4036, %v4227
      %v4235 = vmul.f32 %v4229, %v899
      %v4236 = vmul.f32 %v4230, %v903
      %v4237 = vmul.f32 %v4231, %v901
      %v4238 = vmul.f32 %v4232, %v899
      %v4239 = vmul.f32 %v4233, %v903
      %v4240 = vmul.f32 %v4234, %v901
      %4247 = vrot.lane.b32.xlu0 %v4235, 124
      %v4248 = vpop.permute.xlu0 %4247
      %4249 = vrot.lane.b32.xlu0 %v4236, 124
      %v4250 = vpop.permute.xlu0 %4249
      %4251 = vrot.lane.b32.xlu0 %v4237, 124
      %v4252 = vpop.permute.xlu0 %4251
      %4253 = vrot.lane.b32.xlu0 %v4238, 124
      %v4254 = vpop.permute.xlu0 %4253
      %4255 = vrot.lane.b32.xlu0 %v4239, 124
      %v4256 = vpop.permute.xlu0 %4255
      %4257 = vrot.lane.b32.xlu0 %v4240, 124
      %v4258 = vpop.permute.xlu0 %4257
      %v4259 = vsel %vm931, %v4248, %v4250
      %v4260 = vsel %vm931, %v4250, %v4252
      %v4261 = vsel %vm931, %v4254, %v4256
      %v4262 = vsel %vm931, %v4256, %v4258
      %v4269 = vadd.f32 %v4215, %v4259
      %v4270 = vadd.f32 %v4216, %v4260
      %v4271 = vadd.f32 %v4217, %v4252
      %v4272 = vadd.f32 %v4218, %v4261
      %v4273 = vadd.f32 %v4219, %v4262
      %v4274 = vadd.f32 %v4220, %v4258
      %4275 = vset.pattern.permute.xlu0 5
      %4276 = vperm.xlu0 %4275, %v4019
      %v4277 = vpop.permute.xlu0 %4276
      %4279 = vset.pattern.permute.xlu0 5
      %4280 = vperm.xlu0 %4279, %v4020
      %v4281 = vpop.permute.xlu0 %4280
      %v4283 = vmul.f32 %v4031, %v4277
      %v4284 = vmul.f32 %v4032, %v4277
      %v4285 = vmul.f32 %v4033, %v4277
      %v4286 = vmul.f32 %v4034, %v4281
      %v4287 = vmul.f32 %v4035, %v4281
      %v4288 = vmul.f32 %v4036, %v4281
      %v4289 = vmul.f32 %v4283, %v973
      %v4290 = vmul.f32 %v4284, %v977
      %v4291 = vmul.f32 %v4285, %v975
      %v4292 = vmul.f32 %v4286, %v973
      %v4293 = vmul.f32 %v4287, %v977
      %v4294 = vmul.f32 %v4288, %v975
      %4301 = vrot.lane.b32.xlu0 %v4289, 123
      %v4302 = vpop.permute.xlu0 %4301
      %4303 = vrot.lane.b32.xlu0 %v4290, 123
      %v4304 = vpop.permute.xlu0 %4303
      %4305 = vrot.lane.b32.xlu0 %v4291, 123
      %v4306 = vpop.permute.xlu0 %4305
      %4307 = vrot.lane.b32.xlu0 %v4292, 123
      %v4308 = vpop.permute.xlu0 %4307
      %4309 = vrot.lane.b32.xlu0 %v4293, 123
      %v4310 = vpop.permute.xlu0 %4309
      %4311 = vrot.lane.b32.xlu0 %v4294, 123
      %v4312 = vpop.permute.xlu0 %4311
      %v4313 = vsel %vm1005, %v4302, %v4304
      %v4314 = vsel %vm1005, %v4304, %v4306
      %v4315 = vsel %vm1005, %v4308, %v4310
      %v4316 = vsel %vm1005, %v4310, %v4312
      %v4323 = vadd.f32 %v4269, %v4313
      %v4324 = vadd.f32 %v4270, %v4314
      %v4325 = vadd.f32 %v4271, %v4306
      %v4326 = vadd.f32 %v4272, %v4315
      %v4327 = vadd.f32 %v4273, %v4316
      %v4328 = vadd.f32 %v4274, %v4312
      %4329 = vset.pattern.permute.xlu0 6
      %4330 = vperm.xlu0 %4329, %v4019
      %v4331 = vpop.permute.xlu0 %4330
      %4333 = vset.pattern.permute.xlu0 6
      %4334 = vperm.xlu0 %4333, %v4020
      %v4335 = vpop.permute.xlu0 %4334
      %v4337 = vmul.f32 %v4031, %v4331
      %v4338 = vmul.f32 %v4032, %v4331
      %v4339 = vmul.f32 %v4033, %v4331
      %v4340 = vmul.f32 %v4034, %v4335
      %v4341 = vmul.f32 %v4035, %v4335
      %v4342 = vmul.f32 %v4036, %v4335
      %v4343 = vmul.f32 %v4337, %v1047
      %v4344 = vmul.f32 %v4338, %v1051
      %v4345 = vmul.f32 %v4339, %v1049
      %v4346 = vmul.f32 %v4340, %v1047
      %v4347 = vmul.f32 %v4341, %v1051
      %v4348 = vmul.f32 %v4342, %v1049
      %4355 = vrot.lane.b32.xlu0 %v4343, 122
      %v4356 = vpop.permute.xlu0 %4355
      %4357 = vrot.lane.b32.xlu0 %v4344, 122
      %v4358 = vpop.permute.xlu0 %4357
      %4359 = vrot.lane.b32.xlu0 %v4345, 122
      %v4360 = vpop.permute.xlu0 %4359
      %4361 = vrot.lane.b32.xlu0 %v4346, 122
      %v4362 = vpop.permute.xlu0 %4361
      %4363 = vrot.lane.b32.xlu0 %v4347, 122
      %v4364 = vpop.permute.xlu0 %4363
      %4365 = vrot.lane.b32.xlu0 %v4348, 122
      %v4366 = vpop.permute.xlu0 %4365
      %v4367 = vsel %vm1079, %v4356, %v4358
      %v4368 = vsel %vm1079, %v4358, %v4360
      %v4369 = vsel %vm1079, %v4362, %v4364
      %v4370 = vsel %vm1079, %v4364, %v4366
      %v4377 = vadd.f32 %v4323, %v4367
      %v4378 = vadd.f32 %v4324, %v4368
      %v4379 = vadd.f32 %v4325, %v4360
      %v4380 = vadd.f32 %v4326, %v4369
      %v4381 = vadd.f32 %v4327, %v4370
      %v4382 = vadd.f32 %v4328, %v4366
      %4383 = vset.pattern.permute.xlu0 7
      %4384 = vperm.xlu0 %4383, %v4019
      %v4385 = vpop.permute.xlu0 %4384
      %4387 = vset.pattern.permute.xlu0 7
      %4388 = vperm.xlu0 %4387, %v4020
      %v4389 = vpop.permute.xlu0 %4388
      %v4391 = vmul.f32 %v4031, %v4385
      %v4392 = vmul.f32 %v4032, %v4385
      %v4393 = vmul.f32 %v4033, %v4385
      %v4394 = vmul.f32 %v4034, %v4389
      %v4395 = vmul.f32 %v4035, %v4389
      %v4396 = vmul.f32 %v4036, %v4389
      %v4397 = vmul.f32 %v4391, %v1111
      %v4398 = vmul.f32 %v4392, %v1115
      %v4399 = vmul.f32 %v4393, %v1113
      %v4400 = vmul.f32 %v4394, %v1111
      %v4401 = vmul.f32 %v4395, %v1115
      %v4402 = vmul.f32 %v4396, %v1113
      %4409 = vrot.lane.b32.xlu0 %v4397, 112
      %v4410 = vpop.permute.xlu0 %4409
      %4411 = vrot.lane.b32.xlu0 %v4398, 112
      %v4412 = vpop.permute.xlu0 %4411
      %4413 = vrot.lane.b32.xlu0 %v4399, 112
      %v4414 = vpop.permute.xlu0 %4413
      %4415 = vrot.lane.b32.xlu0 %v4400, 112
      %v4416 = vpop.permute.xlu0 %4415
      %4417 = vrot.lane.b32.xlu0 %v4401, 112
      %v4418 = vpop.permute.xlu0 %4417
      %4419 = vrot.lane.b32.xlu0 %v4402, 112
      %v4420 = vpop.permute.xlu0 %4419
      %v4421 = vsel %vm1143, %v4410, %v4412
      %v4422 = vsel %vm1143, %v4412, %v4414
      %v4423 = vsel %vm1143, %v4416, %v4418
      %v4424 = vsel %vm1143, %v4418, %v4420
      %v4431 = vadd.f32 %v4377, %v4421
      %v4432 = vadd.f32 %v4378, %v4422
      %v4433 = vadd.f32 %v4379, %v4414
      %v4434 = vadd.f32 %v4380, %v4423
      %v4435 = vadd.f32 %v4381, %v4424
      %v4436 = vadd.f32 %v4382, %v4420
      %4437 = vset.pattern.permute.xlu0 8
      %4438 = vperm.xlu0 %4437, %v4019
      %v4439 = vpop.permute.xlu0 %4438
      %4441 = vset.pattern.permute.xlu0 8
      %4442 = vperm.xlu0 %4441, %v4020
      %v4443 = vpop.permute.xlu0 %4442
      %v4445 = vmul.f32 %v4031, %v4439
      %v4446 = vmul.f32 %v4032, %v4439
      %v4447 = vmul.f32 %v4033, %v4439
      %v4448 = vmul.f32 %v4034, %v4443
      %v4449 = vmul.f32 %v4035, %v4443
      %v4450 = vmul.f32 %v4036, %v4443
      %v4451 = vmul.f32 %v4445, %v1175
      %v4452 = vmul.f32 %v4446, %v1179
      %v4453 = vmul.f32 %v4447, %v1177
      %v4454 = vmul.f32 %v4448, %v1175
      %v4455 = vmul.f32 %v4449, %v1179
      %v4456 = vmul.f32 %v4450, %v1177
      %4463 = vrot.lane.b32.xlu0 %v4451, 111
      %v4464 = vpop.permute.xlu0 %4463
      %4465 = vrot.lane.b32.xlu0 %v4452, 111
      %v4466 = vpop.permute.xlu0 %4465
      %4467 = vrot.lane.b32.xlu0 %v4453, 111
      %v4468 = vpop.permute.xlu0 %4467
      %4469 = vrot.lane.b32.xlu0 %v4454, 111
      %v4470 = vpop.permute.xlu0 %4469
      %4471 = vrot.lane.b32.xlu0 %v4455, 111
      %v4472 = vpop.permute.xlu0 %4471
      %4473 = vrot.lane.b32.xlu0 %v4456, 111
      %v4474 = vpop.permute.xlu0 %4473
      %v4475 = vsel %vm1207, %v4464, %v4466
      %v4476 = vsel %vm1207, %v4466, %v4468
      %v4477 = vsel %vm1207, %v4470, %v4472
      %v4478 = vsel %vm1207, %v4472, %v4474
      %v4485 = vadd.f32 %v4431, %v4475
      %v4486 = vadd.f32 %v4432, %v4476
      %v4487 = vadd.f32 %v4433, %v4468
      %v4488 = vadd.f32 %v4434, %v4477
      %v4489 = vadd.f32 %v4435, %v4478
      %v4490 = vadd.f32 %v4436, %v4474
      %4491 = vset.pattern.permute.xlu0 9
      %4492 = vperm.xlu0 %4491, %v4019
      %v4493 = vpop.permute.xlu0 %4492
      %4495 = vset.pattern.permute.xlu0 9
      %4496 = vperm.xlu0 %4495, %v4020
      %v4497 = vpop.permute.xlu0 %4496
      %v4499 = vmul.f32 %v4031, %v4493
      %v4500 = vmul.f32 %v4032, %v4493
      %v4501 = vmul.f32 %v4033, %v4493
      %v4502 = vmul.f32 %v4034, %v4497
      %v4503 = vmul.f32 %v4035, %v4497
      %v4504 = vmul.f32 %v4036, %v4497
      %v4505 = vmul.f32 %v4499, %v1239
      %v4506 = vmul.f32 %v4500, %v1243
      %v4507 = vmul.f32 %v4501, %v1241
      %v4508 = vmul.f32 %v4502, %v1239
      %v4509 = vmul.f32 %v4503, %v1243
      %v4510 = vmul.f32 %v4504, %v1241
      %4517 = vrot.lane.b32.xlu0 %v4505, 110
      %v4518 = vpop.permute.xlu0 %4517
      %4519 = vrot.lane.b32.xlu0 %v4506, 110
      %v4520 = vpop.permute.xlu0 %4519
      %4521 = vrot.lane.b32.xlu0 %v4507, 110
      %v4522 = vpop.permute.xlu0 %4521
      %4523 = vrot.lane.b32.xlu0 %v4508, 110
      %v4524 = vpop.permute.xlu0 %4523
      %4525 = vrot.lane.b32.xlu0 %v4509, 110
      %v4526 = vpop.permute.xlu0 %4525
      %4527 = vrot.lane.b32.xlu0 %v4510, 110
      %v4528 = vpop.permute.xlu0 %4527
      %v4529 = vsel %vm1271, %v4518, %v4520
      %v4530 = vsel %vm1271, %v4520, %v4522
      %v4531 = vsel %vm1271, %v4524, %v4526
      %v4532 = vsel %vm1271, %v4526, %v4528
      %v4539 = vadd.f32 %v4485, %v4529
      %v4540 = vadd.f32 %v4486, %v4530
      %v4541 = vadd.f32 %v4487, %v4522
      %v4542 = vadd.f32 %v4488, %v4531
      %v4543 = vadd.f32 %v4489, %v4532
      %v4544 = vadd.f32 %v4490, %v4528
      %4545 = vset.pattern.permute.xlu0 10
      %4546 = vperm.xlu0 %4545, %v4019
      %v4547 = vpop.permute.xlu0 %4546
      %4549 = vset.pattern.permute.xlu0 10
      %4550 = vperm.xlu0 %4549, %v4020
      %v4551 = vpop.permute.xlu0 %4550
      %v4553 = vmul.f32 %v4031, %v4547
      %v4554 = vmul.f32 %v4032, %v4547
      %v4555 = vmul.f32 %v4033, %v4547
      %v4556 = vmul.f32 %v4034, %v4551
      %v4557 = vmul.f32 %v4035, %v4551
      %v4558 = vmul.f32 %v4036, %v4551
      %4565 = vrot.lane.b32.xlu0 %v4553, 109
      %v4566 = vpop.permute.xlu0 %4565
      %4567 = vrot.lane.b32.xlu0 %v4554, 109
      %v4568 = vpop.permute.xlu0 %4567
      %4569 = vrot.lane.b32.xlu0 %v4555, 109
      %v4570 = vpop.permute.xlu0 %4569
      %4571 = vrot.lane.b32.xlu0 %v4556, 109
      %v4572 = vpop.permute.xlu0 %4571
      %4573 = vrot.lane.b32.xlu0 %v4557, 109
      %v4574 = vpop.permute.xlu0 %4573
      %4575 = vrot.lane.b32.xlu0 %v4558, 109
      %v4576 = vpop.permute.xlu0 %4575
      %v4577 = vsel %vm1320, %v4566, %v4568
      %v4578 = vsel %vm1320, %v4568, %v4570
      %v4579 = vsel %vm1320, %v4572, %v4574
      %v4580 = vsel %vm1320, %v4574, %v4576
      %v4587 = vadd.f32 %v4539, %v4577
      %v4588 = vadd.f32 %v4540, %v4578
      %v4589 = vadd.f32 %v4541, %v4570
      %v4590 = vadd.f32 %v4542, %v4579
      %v4591 = vadd.f32 %v4543, %v4580
      %v4592 = vadd.f32 %v4544, %v4576
      %4593 = vset.pattern.permute.xlu0 11
      %4594 = vperm.xlu0 %4593, %v4019
      %v4595 = vpop.permute.xlu0 %4594
      %4597 = vset.pattern.permute.xlu0 11
      %4598 = vperm.xlu0 %4597, %v4020
      %v4599 = vpop.permute.xlu0 %4598
      %v4601 = vmul.f32 %v4031, %v4595
      %v4602 = vmul.f32 %v4032, %v4595
      %v4603 = vmul.f32 %v4033, %v4595
      %v4604 = vmul.f32 %v4034, %v4599
      %v4605 = vmul.f32 %v4035, %v4599
      %v4606 = vmul.f32 %v4036, %v4599
      %v4607 = vmul.f32 %v4601, %v1352
      %v4608 = vmul.f32 %v4602, %v1356
      %v4609 = vmul.f32 %v4603, %v1354
      %v4610 = vmul.f32 %v4604, %v1352
      %v4611 = vmul.f32 %v4605, %v1356
      %v4612 = vmul.f32 %v4606, %v1354
      %4619 = vrot.lane.b32.xlu0 %v4607, 108
      %v4620 = vpop.permute.xlu0 %4619
      %4621 = vrot.lane.b32.xlu0 %v4608, 108
      %v4622 = vpop.permute.xlu0 %4621
      %4623 = vrot.lane.b32.xlu0 %v4609, 108
      %v4624 = vpop.permute.xlu0 %4623
      %4625 = vrot.lane.b32.xlu0 %v4610, 108
      %v4626 = vpop.permute.xlu0 %4625
      %4627 = vrot.lane.b32.xlu0 %v4611, 108
      %v4628 = vpop.permute.xlu0 %4627
      %4629 = vrot.lane.b32.xlu0 %v4612, 108
      %v4630 = vpop.permute.xlu0 %4629
      %v4631 = vsel %vm1384, %v4620, %v4622
      %v4632 = vsel %vm1384, %v4622, %v4624
      %v4633 = vsel %vm1384, %v4626, %v4628
      %v4634 = vsel %vm1384, %v4628, %v4630
      %v4641 = vadd.f32 %v4587, %v4631
      %v4642 = vadd.f32 %v4588, %v4632
      %v4643 = vadd.f32 %v4589, %v4624
      %v4644 = vadd.f32 %v4590, %v4633
      %v4645 = vadd.f32 %v4591, %v4634
      %v4646 = vadd.f32 %v4592, %v4630
      %4647 = vset.pattern.permute.xlu0 12
      %4648 = vperm.xlu0 %4647, %v4019
      %v4649 = vpop.permute.xlu0 %4648
      %4651 = vset.pattern.permute.xlu0 12
      %4652 = vperm.xlu0 %4651, %v4020
      %v4653 = vpop.permute.xlu0 %4652
      %v4655 = vmul.f32 %v4031, %v4649
      %v4656 = vmul.f32 %v4032, %v4649
      %v4657 = vmul.f32 %v4033, %v4649
      %v4658 = vmul.f32 %v4034, %v4653
      %v4659 = vmul.f32 %v4035, %v4653
      %v4660 = vmul.f32 %v4036, %v4653
      %v4661 = vmul.f32 %v4655, %v1416
      %v4662 = vmul.f32 %v4656, %v1420
      %v4663 = vmul.f32 %v4657, %v1418
      %v4664 = vmul.f32 %v4658, %v1416
      %v4665 = vmul.f32 %v4659, %v1420
      %v4666 = vmul.f32 %v4660, %v1418
      %4673 = vrot.lane.b32.xlu0 %v4661, 107
      %v4674 = vpop.permute.xlu0 %4673
      %4675 = vrot.lane.b32.xlu0 %v4662, 107
      %v4676 = vpop.permute.xlu0 %4675
      %4677 = vrot.lane.b32.xlu0 %v4663, 107
      %v4678 = vpop.permute.xlu0 %4677
      %4679 = vrot.lane.b32.xlu0 %v4664, 107
      %v4680 = vpop.permute.xlu0 %4679
      %4681 = vrot.lane.b32.xlu0 %v4665, 107
      %v4682 = vpop.permute.xlu0 %4681
      %4683 = vrot.lane.b32.xlu0 %v4666, 107
      %v4684 = vpop.permute.xlu0 %4683
      %v4685 = vsel %vm1448, %v4674, %v4676
      %v4686 = vsel %vm1448, %v4676, %v4678
      %v4687 = vsel %vm1448, %v4680, %v4682
      %v4688 = vsel %vm1448, %v4682, %v4684
      %v4695 = vadd.f32 %v4641, %v4685
      %v4696 = vadd.f32 %v4642, %v4686
      %v4697 = vadd.f32 %v4643, %v4678
      %v4698 = vadd.f32 %v4644, %v4687
      %v4699 = vadd.f32 %v4645, %v4688
      %v4700 = vadd.f32 %v4646, %v4684
      %4701 = vset.pattern.permute.xlu0 13
      %4702 = vperm.xlu0 %4701, %v4019
      %v4703 = vpop.permute.xlu0 %4702
      %4705 = vset.pattern.permute.xlu0 13
      %4706 = vperm.xlu0 %4705, %v4020
      %v4707 = vpop.permute.xlu0 %4706
      %v4709 = vmul.f32 %v4031, %v4703
      %v4710 = vmul.f32 %v4032, %v4703
      %v4711 = vmul.f32 %v4033, %v4703
      %v4712 = vmul.f32 %v4034, %v4707
      %v4713 = vmul.f32 %v4035, %v4707
      %v4714 = vmul.f32 %v4036, %v4707
      %v4715 = vmul.f32 %v4709, %v1480
      %v4716 = vmul.f32 %v4710, %v1484
      %v4717 = vmul.f32 %v4711, %v1482
      %v4718 = vmul.f32 %v4712, %v1480
      %v4719 = vmul.f32 %v4713, %v1484
      %v4720 = vmul.f32 %v4714, %v1482
      %4727 = vrot.lane.b32.xlu0 %v4715, 106
      %v4728 = vpop.permute.xlu0 %4727
      %4729 = vrot.lane.b32.xlu0 %v4716, 106
      %v4730 = vpop.permute.xlu0 %4729
      %4731 = vrot.lane.b32.xlu0 %v4717, 106
      %v4732 = vpop.permute.xlu0 %4731
      %4733 = vrot.lane.b32.xlu0 %v4718, 106
      %v4734 = vpop.permute.xlu0 %4733
      %4735 = vrot.lane.b32.xlu0 %v4719, 106
      %v4736 = vpop.permute.xlu0 %4735
      %4737 = vrot.lane.b32.xlu0 %v4720, 106
      %v4738 = vpop.permute.xlu0 %4737
      %v4739 = vsel %vm1512, %v4728, %v4730
      %v4740 = vsel %vm1512, %v4730, %v4732
      %v4741 = vsel %vm1512, %v4734, %v4736
      %v4742 = vsel %vm1512, %v4736, %v4738
      %v4749 = vadd.f32 %v4695, %v4739
      %v4750 = vadd.f32 %v4696, %v4740
      %v4751 = vadd.f32 %v4697, %v4732
      %v4752 = vadd.f32 %v4698, %v4741
      %v4753 = vadd.f32 %v4699, %v4742
      %v4754 = vadd.f32 %v4700, %v4738
      %4755 = vset.pattern.permute.xlu0 14
      %4756 = vperm.xlu0 %4755, %v4019
      %v4757 = vpop.permute.xlu0 %4756
      %4759 = vset.pattern.permute.xlu0 14
      %4760 = vperm.xlu0 %4759, %v4020
      %v4761 = vpop.permute.xlu0 %4760
      %v4763 = vmul.f32 %v4031, %v4757
      %v4764 = vmul.f32 %v4032, %v4757
      %v4765 = vmul.f32 %v4033, %v4757
      %v4766 = vmul.f32 %v4034, %v4761
      %v4767 = vmul.f32 %v4035, %v4761
      %v4768 = vmul.f32 %v4036, %v4761
      %v4769 = vmul.f32 %v4763, %v1544
      %v4770 = vmul.f32 %v4764, %v1547
      %v4771 = vmul.f32 %v4765, %v1546
      %v4772 = vmul.f32 %v4766, %v1544
      %v4773 = vmul.f32 %v4767, %v1547
      %v4774 = vmul.f32 %v4768, %v1546
      %4781 = vrot.lane.b32.xlu0 %v4769, 96
      %v4782 = vpop.permute.xlu0 %4781
      %4783 = vrot.lane.b32.xlu0 %v4770, 96
      %v4784 = vpop.permute.xlu0 %4783
      %4785 = vrot.lane.b32.xlu0 %v4771, 96
      %v4786 = vpop.permute.xlu0 %4785
      %4787 = vrot.lane.b32.xlu0 %v4772, 96
      %v4788 = vpop.permute.xlu0 %4787
      %4789 = vrot.lane.b32.xlu0 %v4773, 96
      %v4790 = vpop.permute.xlu0 %4789
      %4791 = vrot.lane.b32.xlu0 %v4774, 96
      %v4792 = vpop.permute.xlu0 %4791
      %v4793 = vsel %vm1575, %v4782, %v4784
      %v4794 = vsel %vm1575, %v4784, %v4786
      %v4795 = vsel %vm1575, %v4788, %v4790
      %v4796 = vsel %vm1575, %v4790, %v4792
      %v4803 = vadd.f32 %v4749, %v4793
      %v4804 = vadd.f32 %v4750, %v4794
      %v4805 = vadd.f32 %v4751, %v4786
      %v4806 = vadd.f32 %v4752, %v4795
      %v4807 = vadd.f32 %v4753, %v4796
      %v4808 = vadd.f32 %v4754, %v4792
      %4809 = vset.pattern.permute.xlu0 15
      %4810 = vperm.xlu0 %4809, %v4019
      %v4811 = vpop.permute.xlu0 %4810
      %4813 = vset.pattern.permute.xlu0 15
      %4814 = vperm.xlu0 %4813, %v4020
      %v4815 = vpop.permute.xlu0 %4814
      %v4817 = vmul.f32 %v4031, %v4811
      %v4818 = vmul.f32 %v4032, %v4811
      %v4819 = vmul.f32 %v4033, %v4811
      %v4820 = vmul.f32 %v4034, %v4815
      %v4821 = vmul.f32 %v4035, %v4815
      %v4822 = vmul.f32 %v4036, %v4815
      %v4823 = vmul.f32 %v4817, %v1607
      %v4824 = vmul.f32 %v4818, %v1610
      %v4825 = vmul.f32 %v4819, %v1609
      %v4826 = vmul.f32 %v4820, %v1607
      %v4827 = vmul.f32 %v4821, %v1610
      %v4828 = vmul.f32 %v4822, %v1609
      %4835 = vrot.lane.b32.xlu0 %v4823, 95
      %v4836 = vpop.permute.xlu0 %4835
      %4837 = vrot.lane.b32.xlu0 %v4824, 95
      %v4838 = vpop.permute.xlu0 %4837
      %4839 = vrot.lane.b32.xlu0 %v4825, 95
      %v4840 = vpop.permute.xlu0 %4839
      %4841 = vrot.lane.b32.xlu0 %v4826, 95
      %v4842 = vpop.permute.xlu0 %4841
      %4843 = vrot.lane.b32.xlu0 %v4827, 95
      %v4844 = vpop.permute.xlu0 %4843
      %4845 = vrot.lane.b32.xlu0 %v4828, 95
      %v4846 = vpop.permute.xlu0 %4845
      %v4847 = vsel %vm1242, %v4836, %v4838
      %v4848 = vsel %vm1242, %v4838, %v4840
      %v4849 = vsel %vm1242, %v4842, %v4844
      %v4850 = vsel %vm1242, %v4844, %v4846
      %v4857 = vadd.f32 %v4803, %v4847
      %v4858 = vadd.f32 %v4804, %v4848
      %v4859 = vadd.f32 %v4805, %v4840
      %v4860 = vadd.f32 %v4806, %v4849
      %v4861 = vadd.f32 %v4807, %v4850
      %v4862 = vadd.f32 %v4808, %v4846
      %4863 = vset.pattern.permute.xlu0 16
      %4864 = vperm.xlu0 %4863, %v4019
      %v4865 = vpop.permute.xlu0 %4864
      %4867 = vset.pattern.permute.xlu0 16
      %4868 = vperm.xlu0 %4867, %v4020
      %v4869 = vpop.permute.xlu0 %4868
      %v4871 = vmul.f32 %v4031, %v4865
      %v4872 = vmul.f32 %v4032, %v4865
      %v4873 = vmul.f32 %v4033, %v4865
      %v4874 = vmul.f32 %v4034, %v4869
      %v4875 = vmul.f32 %v4035, %v4869
      %v4876 = vmul.f32 %v4036, %v4869
      %v4877 = vmul.f32 %v4871, %v1669
      %v4878 = vmul.f32 %v4872, %v1672
      %v4879 = vmul.f32 %v4873, %v1671
      %v4880 = vmul.f32 %v4874, %v1669
      %v4881 = vmul.f32 %v4875, %v1672
      %v4882 = vmul.f32 %v4876, %v1671
      %4889 = vrot.lane.b32.xlu0 %v4877, 94
      %v4890 = vpop.permute.xlu0 %4889
      %4891 = vrot.lane.b32.xlu0 %v4878, 94
      %v4892 = vpop.permute.xlu0 %4891
      %4893 = vrot.lane.b32.xlu0 %v4879, 94
      %v4894 = vpop.permute.xlu0 %4893
      %4895 = vrot.lane.b32.xlu0 %v4880, 94
      %v4896 = vpop.permute.xlu0 %4895
      %4897 = vrot.lane.b32.xlu0 %v4881, 94
      %v4898 = vpop.permute.xlu0 %4897
      %4899 = vrot.lane.b32.xlu0 %v4882, 94
      %v4900 = vpop.permute.xlu0 %4899
      %v4901 = vsel %vm1178, %v4890, %v4892
      %v4902 = vsel %vm1178, %v4892, %v4894
      %v4903 = vsel %vm1178, %v4896, %v4898
      %v4904 = vsel %vm1178, %v4898, %v4900
      %v4911 = vadd.f32 %v4857, %v4901
      %v4912 = vadd.f32 %v4858, %v4902
      %v4913 = vadd.f32 %v4859, %v4894
      %v4914 = vadd.f32 %v4860, %v4903
      %v4915 = vadd.f32 %v4861, %v4904
      %v4916 = vadd.f32 %v4862, %v4900
      %4917 = vset.pattern.permute.xlu0 17
      %4918 = vperm.xlu0 %4917, %v4019
      %v4919 = vpop.permute.xlu0 %4918
      %4921 = vset.pattern.permute.xlu0 17
      %4922 = vperm.xlu0 %4921, %v4020
      %v4923 = vpop.permute.xlu0 %4922
      %v4925 = vmul.f32 %v4031, %v4919
      %v4926 = vmul.f32 %v4032, %v4919
      %v4927 = vmul.f32 %v4033, %v4919
      %v4928 = vmul.f32 %v4034, %v4923
      %v4929 = vmul.f32 %v4035, %v4923
      %v4930 = vmul.f32 %v4036, %v4923
      %4937 = vrot.lane.b32.xlu0 %v4925, 93
      %v4938 = vpop.permute.xlu0 %4937
      %4939 = vrot.lane.b32.xlu0 %v4926, 93
      %v4940 = vpop.permute.xlu0 %4939
      %4941 = vrot.lane.b32.xlu0 %v4927, 93
      %v4942 = vpop.permute.xlu0 %4941
      %4943 = vrot.lane.b32.xlu0 %v4928, 93
      %v4944 = vpop.permute.xlu0 %4943
      %4945 = vrot.lane.b32.xlu0 %v4929, 93
      %v4946 = vpop.permute.xlu0 %4945
      %4947 = vrot.lane.b32.xlu0 %v4930, 93
      %v4948 = vpop.permute.xlu0 %4947
      %v4949 = vsel %vm1114, %v4938, %v4940
      %v4950 = vsel %vm1114, %v4940, %v4942
      %v4951 = vsel %vm1114, %v4944, %v4946
      %v4952 = vsel %vm1114, %v4946, %v4948
      %v4959 = vadd.f32 %v4911, %v4949
      %v4960 = vadd.f32 %v4912, %v4950
      %v4961 = vadd.f32 %v4913, %v4942
      %v4962 = vadd.f32 %v4914, %v4951
      %v4963 = vadd.f32 %v4915, %v4952
      %v4964 = vadd.f32 %v4916, %v4948
      %4965 = vset.pattern.permute.xlu0 18
      %4966 = vperm.xlu0 %4965, %v4019
      %v4967 = vpop.permute.xlu0 %4966
      %4969 = vset.pattern.permute.xlu0 18
      %4970 = vperm.xlu0 %4969, %v4020
      %v4971 = vpop.permute.xlu0 %4970
      %v4973 = vmul.f32 %v4031, %v4967
      %v4974 = vmul.f32 %v4032, %v4967
      %v4975 = vmul.f32 %v4033, %v4967
      %v4976 = vmul.f32 %v4034, %v4971
      %v4977 = vmul.f32 %v4035, %v4971
      %v4978 = vmul.f32 %v4036, %v4971
      %v4979 = vmul.f32 %v4973, %v1779
      %v4980 = vmul.f32 %v4974, %v1783
      %v4981 = vmul.f32 %v4975, %v1781
      %v4982 = vmul.f32 %v4976, %v1779
      %v4983 = vmul.f32 %v4977, %v1783
      %v4984 = vmul.f32 %v4978, %v1781
      %4991 = vrot.lane.b32.xlu0 %v4979, 92
      %v4992 = vpop.permute.xlu0 %4991
      %4993 = vrot.lane.b32.xlu0 %v4980, 92
      %v4994 = vpop.permute.xlu0 %4993
      %4995 = vrot.lane.b32.xlu0 %v4981, 92
      %v4996 = vpop.permute.xlu0 %4995
      %4997 = vrot.lane.b32.xlu0 %v4982, 92
      %v4998 = vpop.permute.xlu0 %4997
      %4999 = vrot.lane.b32.xlu0 %v4983, 92
      %v5000 = vpop.permute.xlu0 %4999
      %5001 = vrot.lane.b32.xlu0 %v4984, 92
      %v5002 = vpop.permute.xlu0 %5001
      %v5003 = vsel %vm1811, %v4992, %v4994
      %v5004 = vsel %vm1811, %v4994, %v4996
      %v5005 = vsel %vm1811, %v4998, %v5000
      %v5006 = vsel %vm1811, %v5000, %v5002
      %v5013 = vadd.f32 %v4959, %v5003
      %v5014 = vadd.f32 %v4960, %v5004
      %v5015 = vadd.f32 %v4961, %v4996
      %v5016 = vadd.f32 %v4962, %v5005
      %v5017 = vadd.f32 %v4963, %v5006
      %v5018 = vadd.f32 %v4964, %v5002
      %5019 = vset.pattern.permute.xlu0 19
      %5020 = vperm.xlu0 %5019, %v4019
      %v5021 = vpop.permute.xlu0 %5020
      %5023 = vset.pattern.permute.xlu0 19
      %5024 = vperm.xlu0 %5023, %v4020
      %v5025 = vpop.permute.xlu0 %5024
      %v5027 = vmul.f32 %v4031, %v5021
      %v5028 = vmul.f32 %v4032, %v5021
      %v5029 = vmul.f32 %v4033, %v5021
      %v5030 = vmul.f32 %v4034, %v5025
      %v5031 = vmul.f32 %v4035, %v5025
      %v5032 = vmul.f32 %v4036, %v5025
      %v5033 = vmul.f32 %v5027, %v1843
      %v5034 = vmul.f32 %v5028, %v1847
      %v5035 = vmul.f32 %v5029, %v1845
      %v5036 = vmul.f32 %v5030, %v1843
      %v5037 = vmul.f32 %v5031, %v1847
      %v5038 = vmul.f32 %v5032, %v1845
      %5045 = vrot.lane.b32.xlu0 %v5033, 91
      %v5046 = vpop.permute.xlu0 %5045
      %5047 = vrot.lane.b32.xlu0 %v5034, 91
      %v5048 = vpop.permute.xlu0 %5047
      %5049 = vrot.lane.b32.xlu0 %v5035, 91
      %v5050 = vpop.permute.xlu0 %5049
      %5051 = vrot.lane.b32.xlu0 %v5036, 91
      %v5052 = vpop.permute.xlu0 %5051
      %5053 = vrot.lane.b32.xlu0 %v5037, 91
      %v5054 = vpop.permute.xlu0 %5053
      %5055 = vrot.lane.b32.xlu0 %v5038, 91
      %v5056 = vpop.permute.xlu0 %5055
      %v5057 = vsel %vm1875, %v5046, %v5048
      %v5058 = vsel %vm1875, %v5048, %v5050
      %v5059 = vsel %vm1875, %v5052, %v5054
      %v5060 = vsel %vm1875, %v5054, %v5056
      %v5067 = vadd.f32 %v5013, %v5057
      %v5068 = vadd.f32 %v5014, %v5058
      %v5069 = vadd.f32 %v5015, %v5050
      %v5070 = vadd.f32 %v5016, %v5059
      %v5071 = vadd.f32 %v5017, %v5060
      %v5072 = vadd.f32 %v5018, %v5056
      %5073 = vset.pattern.permute.xlu0 20
      %5074 = vperm.xlu0 %5073, %v4019
      %v5075 = vpop.permute.xlu0 %5074
      %5077 = vset.pattern.permute.xlu0 20
      %5078 = vperm.xlu0 %5077, %v4020
      %v5079 = vpop.permute.xlu0 %5078
      %v5081 = vmul.f32 %v4031, %v5075
      %v5082 = vmul.f32 %v4032, %v5075
      %v5083 = vmul.f32 %v4033, %v5075
      %v5084 = vmul.f32 %v4034, %v5079
      %v5085 = vmul.f32 %v4035, %v5079
      %v5086 = vmul.f32 %v4036, %v5079
      %v5087 = vmul.f32 %v5081, %v1907
      %v5088 = vmul.f32 %v5082, %v1911
      %v5089 = vmul.f32 %v5083, %v1909
      %v5090 = vmul.f32 %v5084, %v1907
      %v5091 = vmul.f32 %v5085, %v1911
      %v5092 = vmul.f32 %v5086, %v1909
      %5099 = vrot.lane.b32.xlu0 %v5087, 90
      %v5100 = vpop.permute.xlu0 %5099
      %5101 = vrot.lane.b32.xlu0 %v5088, 90
      %v5102 = vpop.permute.xlu0 %5101
      %5103 = vrot.lane.b32.xlu0 %v5089, 90
      %v5104 = vpop.permute.xlu0 %5103
      %5105 = vrot.lane.b32.xlu0 %v5090, 90
      %v5106 = vpop.permute.xlu0 %5105
      %5107 = vrot.lane.b32.xlu0 %v5091, 90
      %v5108 = vpop.permute.xlu0 %5107
      %5109 = vrot.lane.b32.xlu0 %v5092, 90
      %v5110 = vpop.permute.xlu0 %5109
      %v5111 = vsel %vm1939, %v5100, %v5102
      %v5112 = vsel %vm1939, %v5102, %v5104
      %v5113 = vsel %vm1939, %v5106, %v5108
      %v5114 = vsel %vm1939, %v5108, %v5110
      %v5121 = vadd.f32 %v5067, %v5111
      %v5122 = vadd.f32 %v5068, %v5112
      %v5123 = vadd.f32 %v5069, %v5104
      %v5124 = vadd.f32 %v5070, %v5113
      %v5125 = vadd.f32 %v5071, %v5114
      %v5126 = vadd.f32 %v5072, %v5110
      %5127 = vset.pattern.permute.xlu0 21
      %5128 = vperm.xlu0 %5127, %v4019
      %v5129 = vpop.permute.xlu0 %5128
      %5131 = vset.pattern.permute.xlu0 21
      %5132 = vperm.xlu0 %5131, %v4020
      %v5133 = vpop.permute.xlu0 %5132
      %v5135 = vmul.f32 %v4031, %v5129
      %v5136 = vmul.f32 %v4032, %v5129
      %v5137 = vmul.f32 %v4033, %v5129
      %v5138 = vmul.f32 %v4034, %v5133
      %v5139 = vmul.f32 %v4035, %v5133
      %v5140 = vmul.f32 %v4036, %v5133
      %v5141 = vmul.f32 %v5135, %v1971
      %v5142 = vmul.f32 %v5136, %v1974
      %v5143 = vmul.f32 %v5137, %v1973
      %v5144 = vmul.f32 %v5138, %v1971
      %v5145 = vmul.f32 %v5139, %v1974
      %v5146 = vmul.f32 %v5140, %v1973
      %5153 = vrot.lane.b32.xlu0 %v5141, 80
      %v5154 = vpop.permute.xlu0 %5153
      %5155 = vrot.lane.b32.xlu0 %v5142, 80
      %v5156 = vpop.permute.xlu0 %5155
      %5157 = vrot.lane.b32.xlu0 %v5143, 80
      %v5158 = vpop.permute.xlu0 %5157
      %5159 = vrot.lane.b32.xlu0 %v5144, 80
      %v5160 = vpop.permute.xlu0 %5159
      %5161 = vrot.lane.b32.xlu0 %v5145, 80
      %v5162 = vpop.permute.xlu0 %5161
      %5163 = vrot.lane.b32.xlu0 %v5146, 80
      %v5164 = vpop.permute.xlu0 %5163
      %v5165 = vsel %vm2002, %v5154, %v5156
      %v5166 = vsel %vm2002, %v5156, %v5158
      %v5167 = vsel %vm2002, %v5160, %v5162
      %v5168 = vsel %vm2002, %v5162, %v5164
      %v5175 = vadd.f32 %v5121, %v5165
      %v5176 = vadd.f32 %v5122, %v5166
      %v5177 = vadd.f32 %v5123, %v5158
      %v5178 = vadd.f32 %v5124, %v5167
      %v5179 = vadd.f32 %v5125, %v5168
      %v5180 = vadd.f32 %v5126, %v5164
      %5181 = vset.pattern.permute.xlu0 22
      %5182 = vperm.xlu0 %5181, %v4019
      %v5183 = vpop.permute.xlu0 %5182
      %5185 = vset.pattern.permute.xlu0 22
      %5186 = vperm.xlu0 %5185, %v4020
      %v5187 = vpop.permute.xlu0 %5186
      %v5189 = vmul.f32 %v4031, %v5183
      %v5190 = vmul.f32 %v4032, %v5183
      %v5191 = vmul.f32 %v4033, %v5183
      %v5192 = vmul.f32 %v4034, %v5187
      %v5193 = vmul.f32 %v4035, %v5187
      %v5194 = vmul.f32 %v4036, %v5187
      %v5195 = vmul.f32 %v5189, %v2034
      %v5196 = vmul.f32 %v5190, %v2037
      %v5197 = vmul.f32 %v5191, %v2036
      %v5198 = vmul.f32 %v5192, %v2034
      %v5199 = vmul.f32 %v5193, %v2037
      %v5200 = vmul.f32 %v5194, %v2036
      %5207 = vrot.lane.b32.xlu0 %v5195, 79
      %v5208 = vpop.permute.xlu0 %5207
      %5209 = vrot.lane.b32.xlu0 %v5196, 79
      %v5210 = vpop.permute.xlu0 %5209
      %5211 = vrot.lane.b32.xlu0 %v5197, 79
      %v5212 = vpop.permute.xlu0 %5211
      %5213 = vrot.lane.b32.xlu0 %v5198, 79
      %v5214 = vpop.permute.xlu0 %5213
      %5215 = vrot.lane.b32.xlu0 %v5199, 79
      %v5216 = vpop.permute.xlu0 %5215
      %5217 = vrot.lane.b32.xlu0 %v5200, 79
      %v5218 = vpop.permute.xlu0 %5217
      %v5219 = vsel %vm779, %v5208, %v5210
      %v5220 = vsel %vm779, %v5210, %v5212
      %v5221 = vsel %vm779, %v5214, %v5216
      %v5222 = vsel %vm779, %v5216, %v5218
      %v5229 = vadd.f32 %v5175, %v5219
      %v5230 = vadd.f32 %v5176, %v5220
      %v5231 = vadd.f32 %v5177, %v5212
      %v5232 = vadd.f32 %v5178, %v5221
      %v5233 = vadd.f32 %v5179, %v5222
      %v5234 = vadd.f32 %v5180, %v5218
      %5235 = vset.pattern.permute.xlu0 23
      %5236 = vperm.xlu0 %5235, %v4019
      %v5237 = vpop.permute.xlu0 %5236
      %5239 = vset.pattern.permute.xlu0 23
      %5240 = vperm.xlu0 %5239, %v4020
      %v5241 = vpop.permute.xlu0 %5240
      %v5243 = vmul.f32 %v4031, %v5237
      %v5244 = vmul.f32 %v4032, %v5237
      %v5245 = vmul.f32 %v4033, %v5237
      %v5246 = vmul.f32 %v4034, %v5241
      %v5247 = vmul.f32 %v4035, %v5241
      %v5248 = vmul.f32 %v4036, %v5241
      %v5249 = vmul.f32 %v5243, %v2096
      %v5250 = vmul.f32 %v5244, %v2099
      %v5251 = vmul.f32 %v5245, %v2098
      %v5252 = vmul.f32 %v5246, %v2096
      %v5253 = vmul.f32 %v5247, %v2099
      %v5254 = vmul.f32 %v5248, %v2098
      %5261 = vrot.lane.b32.xlu0 %v5249, 78
      %v5262 = vpop.permute.xlu0 %5261
      %5263 = vrot.lane.b32.xlu0 %v5250, 78
      %v5264 = vpop.permute.xlu0 %5263
      %5265 = vrot.lane.b32.xlu0 %v5251, 78
      %v5266 = vpop.permute.xlu0 %5265
      %5267 = vrot.lane.b32.xlu0 %v5252, 78
      %v5268 = vpop.permute.xlu0 %5267
      %5269 = vrot.lane.b32.xlu0 %v5253, 78
      %v5270 = vpop.permute.xlu0 %5269
      %5271 = vrot.lane.b32.xlu0 %v5254, 78
      %v5272 = vpop.permute.xlu0 %5271
      %v5273 = vsel %vm705, %v5262, %v5264
      %v5274 = vsel %vm705, %v5264, %v5266
      %v5275 = vsel %vm705, %v5268, %v5270
      %v5276 = vsel %vm705, %v5270, %v5272
      %v5283 = vadd.f32 %v5229, %v5273
      %v5284 = vadd.f32 %v5230, %v5274
      %v5285 = vadd.f32 %v5231, %v5266
      %v5286 = vadd.f32 %v5232, %v5275
      %v5287 = vadd.f32 %v5233, %v5276
      %v5288 = vadd.f32 %v5234, %v5272
      %5289 = vset.pattern.permute.xlu0 24
      %5290 = vperm.xlu0 %5289, %v4019
      %v5291 = vpop.permute.xlu0 %5290
      %5293 = vset.pattern.permute.xlu0 24
      %5294 = vperm.xlu0 %5293, %v4020
      %v5295 = vpop.permute.xlu0 %5294
      %v5297 = vmul.f32 %v4032, %v5291
      %v5298 = vmul.f32 %v4033, %v5291
      %v5299 = vmul.f32 %v4035, %v5295
      %v5300 = vmul.f32 %v4036, %v5295
      %5305 = vrot.lane.b32.xlu0 %v5297, 77
      %v5306 = vpop.permute.xlu0 %5305
      %5307 = vrot.lane.b32.xlu0 %v5298, 77
      %v5308 = vpop.permute.xlu0 %5307
      %5309 = vrot.lane.b32.xlu0 %v5299, 77
      %v5310 = vpop.permute.xlu0 %5309
      %5311 = vrot.lane.b32.xlu0 %v5300, 77
      %v5312 = vpop.permute.xlu0 %5311
      %v5313 = vsel %vm660, %v5306, %v5308
      %v5314 = vsel %vm660, %v5310, %v5312
      %v5321 = vadd.f32 %v5283, %v5306
      %v5322 = vadd.f32 %v5284, %v5313
      %v5323 = vadd.f32 %v5285, %v5308
      %v5324 = vadd.f32 %v5286, %v5310
      %v5325 = vadd.f32 %v5287, %v5314
      %v5326 = vadd.f32 %v5288, %v5312
      %v5327 = vld [vmem:[#allocation2 + $0x8] sm:$0xff]
      %v5328 = vld [vmem:[#allocation2 + $0x10] sm:$0xff]
      %v5329 = vld [vmem:[#allocation2 + $0x18] sm:$0xff]
      %v5330 = vld [vmem:[#allocation2 + $0x28] sm:$0xff]
      %v5331 = vld [vmem:[#allocation2 + $0x30] sm:$0xff]
      %v5332 = vld [vmem:[#allocation2 + $0x38] sm:$0xff]
      %5333 = vset.pattern.permute.xlu0 25
      %5334 = vperm.xlu0 %5333, %v4019
      %v5335 = vpop.permute.xlu0 %5334
      %5337 = vset.pattern.permute.xlu0 25
      %5338 = vperm.xlu0 %5337, %v4020
      %v5339 = vpop.permute.xlu0 %5338
      %v5341 = vmul.f32 %v5327, %v5335
      %v5342 = vmul.f32 %v5328, %v5335
      %v5343 = vmul.f32 %v5329, %v5335
      %v5344 = vmul.f32 %v5330, %v5339
      %v5345 = vmul.f32 %v5331, %v5339
      %v5346 = vmul.f32 %v5332, %v5339
      %v5347 = vmul.f32 %v5341, %v2202
      %v5348 = vmul.f32 %v5342, %v2206
      %v5349 = vmul.f32 %v5343, %v2204
      %v5350 = vmul.f32 %v5344, %v2202
      %v5351 = vmul.f32 %v5345, %v2206
      %v5352 = vmul.f32 %v5346, %v2204
      %5359 = vrot.lane.b32.xlu0 %v5347, 76
      %v5360 = vpop.permute.xlu0 %5359
      %5361 = vrot.lane.b32.xlu0 %v5348, 76
      %v5362 = vpop.permute.xlu0 %5361
      %5363 = vrot.lane.b32.xlu0 %v5349, 76
      %v5364 = vpop.permute.xlu0 %5363
      %5365 = vrot.lane.b32.xlu0 %v5350, 76
      %v5366 = vpop.permute.xlu0 %5365
      %5367 = vrot.lane.b32.xlu0 %v5351, 76
      %v5368 = vpop.permute.xlu0 %5367
      %5369 = vrot.lane.b32.xlu0 %v5352, 76
      %v5370 = vpop.permute.xlu0 %5369
      %v5371 = vsel %vm2234, %v5360, %v5362
      %v5372 = vsel %vm2234, %v5362, %v5364
      %v5373 = vsel %vm2234, %v5366, %v5368
      %v5374 = vsel %vm2234, %v5368, %v5370
      %v5381 = vadd.f32 %v5321, %v5360
      %v5382 = vadd.f32 %v5322, %v5371
      %v5383 = vadd.f32 %v5323, %v5372
      %v5384 = vadd.f32 %v5324, %v5366
      %v5385 = vadd.f32 %v5325, %v5373
      %v5386 = vadd.f32 %v5326, %v5374
      %5387 = vset.pattern.permute.xlu0 26
      %5388 = vperm.xlu0 %5387, %v4019
      %v5389 = vpop.permute.xlu0 %5388
      %5391 = vset.pattern.permute.xlu0 26
      %5392 = vperm.xlu0 %5391, %v4020
      %v5393 = vpop.permute.xlu0 %5392
      %v5395 = vmul.f32 %v5327, %v5389
      %v5396 = vmul.f32 %v5328, %v5389
      %v5397 = vmul.f32 %v5329, %v5389
      %v5398 = vmul.f32 %v5330, %v5393
      %v5399 = vmul.f32 %v5331, %v5393
      %v5400 = vmul.f32 %v5332, %v5393
      %v5401 = vmul.f32 %v5395, %v2266
      %v5402 = vmul.f32 %v5396, %v2270
      %v5403 = vmul.f32 %v5397, %v2268
      %v5404 = vmul.f32 %v5398, %v2266
      %v5405 = vmul.f32 %v5399, %v2270
      %v5406 = vmul.f32 %v5400, %v2268
      %5413 = vrot.lane.b32.xlu0 %v5401, 75
      %v5414 = vpop.permute.xlu0 %5413
      %5415 = vrot.lane.b32.xlu0 %v5402, 75
      %v5416 = vpop.permute.xlu0 %5415
      %5417 = vrot.lane.b32.xlu0 %v5403, 75
      %v5418 = vpop.permute.xlu0 %5417
      %5419 = vrot.lane.b32.xlu0 %v5404, 75
      %v5420 = vpop.permute.xlu0 %5419
      %5421 = vrot.lane.b32.xlu0 %v5405, 75
      %v5422 = vpop.permute.xlu0 %5421
      %5423 = vrot.lane.b32.xlu0 %v5406, 75
      %v5424 = vpop.permute.xlu0 %5423
      %v5425 = vsel %vm2298, %v5414, %v5416
      %v5426 = vsel %vm2298, %v5416, %v5418
      %v5427 = vsel %vm2298, %v5420, %v5422
      %v5428 = vsel %vm2298, %v5422, %v5424
      %v5435 = vadd.f32 %v5381, %v5414
      %v5436 = vadd.f32 %v5382, %v5425
      %v5437 = vadd.f32 %v5383, %v5426
      %v5438 = vadd.f32 %v5384, %v5420
      %v5439 = vadd.f32 %v5385, %v5427
      %v5440 = vadd.f32 %v5386, %v5428
      %5441 = vset.pattern.permute.xlu0 27
      %5442 = vperm.xlu0 %5441, %v4019
      %v5443 = vpop.permute.xlu0 %5442
      %5445 = vset.pattern.permute.xlu0 27
      %5446 = vperm.xlu0 %5445, %v4020
      %v5447 = vpop.permute.xlu0 %5446
      %v5449 = vmul.f32 %v5327, %v5443
      %v5450 = vmul.f32 %v5328, %v5443
      %v5451 = vmul.f32 %v5329, %v5443
      %v5452 = vmul.f32 %v5330, %v5447
      %v5453 = vmul.f32 %v5331, %v5447
      %v5454 = vmul.f32 %v5332, %v5447
      %v5455 = vmul.f32 %v5449, %v2330
      %v5456 = vmul.f32 %v5450, %v2334
      %v5457 = vmul.f32 %v5451, %v2332
      %v5458 = vmul.f32 %v5452, %v2330
      %v5459 = vmul.f32 %v5453, %v2334
      %v5460 = vmul.f32 %v5454, %v2332
      %5467 = vrot.lane.b32.xlu0 %v5455, 74
      %v5468 = vpop.permute.xlu0 %5467
      %5469 = vrot.lane.b32.xlu0 %v5456, 74
      %v5470 = vpop.permute.xlu0 %5469
      %5471 = vrot.lane.b32.xlu0 %v5457, 74
      %v5472 = vpop.permute.xlu0 %5471
      %5473 = vrot.lane.b32.xlu0 %v5458, 74
      %v5474 = vpop.permute.xlu0 %5473
      %5475 = vrot.lane.b32.xlu0 %v5459, 74
      %v5476 = vpop.permute.xlu0 %5475
      %5477 = vrot.lane.b32.xlu0 %v5460, 74
      %v5478 = vpop.permute.xlu0 %5477
      %v5479 = vsel %vm2362, %v5468, %v5470
      %v5480 = vsel %vm2362, %v5470, %v5472
      %v5481 = vsel %vm2362, %v5474, %v5476
      %v5482 = vsel %vm2362, %v5476, %v5478
      %v5489 = vadd.f32 %v5435, %v5468
      %v5490 = vadd.f32 %v5436, %v5479
      %v5491 = vadd.f32 %v5437, %v5480
      %v5492 = vadd.f32 %v5438, %v5474
      %v5493 = vadd.f32 %v5439, %v5481
      %v5494 = vadd.f32 %v5440, %v5482
      %5495 = vset.pattern.permute.xlu0 28
      %5496 = vperm.xlu0 %5495, %v4019
      %v5497 = vpop.permute.xlu0 %5496
      %5499 = vset.pattern.permute.xlu0 28
      %5500 = vperm.xlu0 %5499, %v4020
      %v5501 = vpop.permute.xlu0 %5500
      %v5503 = vmul.f32 %v5327, %v5497
      %v5504 = vmul.f32 %v5328, %v5497
      %v5505 = vmul.f32 %v5329, %v5497
      %v5506 = vmul.f32 %v5330, %v5501
      %v5507 = vmul.f32 %v5331, %v5501
      %v5508 = vmul.f32 %v5332, %v5501
      %v5509 = vmul.f32 %v5503, %v2394
      %v5510 = vmul.f32 %v5504, %v2398
      %v5511 = vmul.f32 %v5505, %v2396
      %v5512 = vmul.f32 %v5506, %v2394
      %v5513 = vmul.f32 %v5507, %v2398
      %v5514 = vmul.f32 %v5508, %v2396
      %5521 = vrot.lane.b32.xlu0 %v5509, 64
      %v5522 = vpop.permute.xlu0 %5521
      %5523 = vrot.lane.b32.xlu0 %v5510, 64
      %v5524 = vpop.permute.xlu0 %5523
      %5525 = vrot.lane.b32.xlu0 %v5511, 64
      %v5526 = vpop.permute.xlu0 %5525
      %5527 = vrot.lane.b32.xlu0 %v5512, 64
      %v5528 = vpop.permute.xlu0 %5527
      %5529 = vrot.lane.b32.xlu0 %v5513, 64
      %v5530 = vpop.permute.xlu0 %5529
      %5531 = vrot.lane.b32.xlu0 %v5514, 64
      %v5532 = vpop.permute.xlu0 %5531
      %v5533 = vsel %vm2426, %v5522, %v5524
      %v5534 = vsel %vm2426, %v5524, %v5526
      %v5535 = vsel %vm2426, %v5528, %v5530
      %v5536 = vsel %vm2426, %v5530, %v5532
      %v5543 = vadd.f32 %v5489, %v5522
      %v5544 = vadd.f32 %v5490, %v5533
      %v5545 = vadd.f32 %v5491, %v5534
      %v5546 = vadd.f32 %v5492, %v5528
      %v5547 = vadd.f32 %v5493, %v5535
      %v5548 = vadd.f32 %v5494, %v5536
      %5549 = vset.pattern.permute.xlu0 29
      %5550 = vperm.xlu0 %5549, %v4019
      %v5551 = vpop.permute.xlu0 %5550
      %5553 = vset.pattern.permute.xlu0 29
      %5554 = vperm.xlu0 %5553, %v4020
      %v5555 = vpop.permute.xlu0 %5554
      %v5557 = vmul.f32 %v5327, %v5551
      %v5558 = vmul.f32 %v5328, %v5551
      %v5559 = vmul.f32 %v5329, %v5551
      %v5560 = vmul.f32 %v5330, %v5555
      %v5561 = vmul.f32 %v5331, %v5555
      %v5562 = vmul.f32 %v5332, %v5555
      %v5563 = vmul.f32 %v5557, %v2458
      %v5564 = vmul.f32 %v5558, %v2462
      %v5565 = vmul.f32 %v5559, %v2460
      %v5566 = vmul.f32 %v5560, %v2458
      %v5567 = vmul.f32 %v5561, %v2462
      %v5568 = vmul.f32 %v5562, %v2460
      %5575 = vrot.lane.b32.xlu0 %v5563, 63
      %v5576 = vpop.permute.xlu0 %5575
      %5577 = vrot.lane.b32.xlu0 %v5564, 63
      %v5578 = vpop.permute.xlu0 %5577
      %5579 = vrot.lane.b32.xlu0 %v5565, 63
      %v5580 = vpop.permute.xlu0 %5579
      %5581 = vrot.lane.b32.xlu0 %v5566, 63
      %v5582 = vpop.permute.xlu0 %5581
      %5583 = vrot.lane.b32.xlu0 %v5567, 63
      %v5584 = vpop.permute.xlu0 %5583
      %5585 = vrot.lane.b32.xlu0 %v5568, 63
      %v5586 = vpop.permute.xlu0 %5585
      %v5587 = vsel %vm2490, %v5576, %v5578
      %v5588 = vsel %vm2490, %v5578, %v5580
      %v5589 = vsel %vm2490, %v5582, %v5584
      %v5590 = vsel %vm2490, %v5584, %v5586
      %v5597 = vadd.f32 %v5543, %v5576
      %v5598 = vadd.f32 %v5544, %v5587
      %v5599 = vadd.f32 %v5545, %v5588
      %v5600 = vadd.f32 %v5546, %v5582
      %v5601 = vadd.f32 %v5547, %v5589
      %v5602 = vadd.f32 %v5548, %v5590
      %5603 = vset.pattern.permute.xlu0 30
      %5604 = vperm.xlu0 %5603, %v4019
      %v5605 = vpop.permute.xlu0 %5604
      %5607 = vset.pattern.permute.xlu0 30
      %5608 = vperm.xlu0 %5607, %v4020
      %v5609 = vpop.permute.xlu0 %5608
      %v5611 = vmul.f32 %v5327, %v5605
      %v5612 = vmul.f32 %v5328, %v5605
      %v5613 = vmul.f32 %v5329, %v5605
      %v5614 = vmul.f32 %v5330, %v5609
      %v5615 = vmul.f32 %v5331, %v5609
      %v5616 = vmul.f32 %v5332, %v5609
      %v5617 = vmul.f32 %v5611, %v2522
      %v5618 = vmul.f32 %v5612, %v2526
      %v5619 = vmul.f32 %v5613, %v2524
      %v5620 = vmul.f32 %v5614, %v2522
      %v5621 = vmul.f32 %v5615, %v2526
      %v5622 = vmul.f32 %v5616, %v2524
      %5629 = vrot.lane.b32.xlu0 %v5617, 62
      %v5630 = vpop.permute.xlu0 %5629
      %5631 = vrot.lane.b32.xlu0 %v5618, 62
      %v5632 = vpop.permute.xlu0 %5631
      %5633 = vrot.lane.b32.xlu0 %v5619, 62
      %v5634 = vpop.permute.xlu0 %5633
      %5635 = vrot.lane.b32.xlu0 %v5620, 62
      %v5636 = vpop.permute.xlu0 %5635
      %5637 = vrot.lane.b32.xlu0 %v5621, 62
      %v5638 = vpop.permute.xlu0 %5637
      %5639 = vrot.lane.b32.xlu0 %v5622, 62
      %v5640 = vpop.permute.xlu0 %5639
      %v5641 = vsel %vm2554, %v5630, %v5632
      %v5642 = vsel %vm2554, %v5632, %v5634
      %v5643 = vsel %vm2554, %v5636, %v5638
      %v5644 = vsel %vm2554, %v5638, %v5640
      %v5651 = vadd.f32 %v5597, %v5630
      %v5652 = vadd.f32 %v5598, %v5641
      %v5653 = vadd.f32 %v5599, %v5642
      %v5654 = vadd.f32 %v5600, %v5636
      %v5655 = vadd.f32 %v5601, %v5643
      %v5656 = vadd.f32 %v5602, %v5644
      %5657 = vset.pattern.permute.xlu0 31
      %5658 = vperm.xlu0 %5657, %v4019
      %v5659 = vpop.permute.xlu0 %5658
      %5661 = vset.pattern.permute.xlu0 31
      %5662 = vperm.xlu0 %5661, %v4020
      %v5663 = vpop.permute.xlu0 %5662
      %v5665 = vmul.f32 %v5327, %v5659
      %v5666 = vmul.f32 %v5328, %v5659
      %v5667 = vmul.f32 %v5329, %v5659
      %v5668 = vmul.f32 %v5330, %v5663
      %v5669 = vmul.f32 %v5331, %v5663
      %v5670 = vmul.f32 %v5332, %v5663
      %5677 = vrot.lane.b32.xlu0 %v5665, 61
      %v5678 = vpop.permute.xlu0 %5677
      %5679 = vrot.lane.b32.xlu0 %v5666, 61
      %v5680 = vpop.permute.xlu0 %5679
      %5681 = vrot.lane.b32.xlu0 %v5667, 61
      %v5682 = vpop.permute.xlu0 %5681
      %5683 = vrot.lane.b32.xlu0 %v5668, 61
      %v5684 = vpop.permute.xlu0 %5683
      %5685 = vrot.lane.b32.xlu0 %v5669, 61
      %v5686 = vpop.permute.xlu0 %5685
      %5687 = vrot.lane.b32.xlu0 %v5670, 61
      %v5688 = vpop.permute.xlu0 %5687
      %v5689 = vsel %vm2603, %v5678, %v5680
      %v5690 = vsel %vm2603, %v5680, %v5682
      %v5691 = vsel %vm2603, %v5684, %v5686
      %v5692 = vsel %vm2603, %v5686, %v5688
      %v5699 = vadd.f32 %v5651, %v5678
      %v5700 = vadd.f32 %v5652, %v5689
      %v5701 = vadd.f32 %v5653, %v5690
      %v5702 = vadd.f32 %v5654, %v5684
      %v5703 = vadd.f32 %v5655, %v5691
      %v5704 = vadd.f32 %v5656, %v5692
      %5705 = vset.pattern.permute.xlu0 32
      %5706 = vperm.xlu0 %5705, %v4019
      %v5707 = vpop.permute.xlu0 %5706
      %5709 = vset.pattern.permute.xlu0 32
      %5710 = vperm.xlu0 %5709, %v4020
      %v5711 = vpop.permute.xlu0 %5710
      %v5713 = vmul.f32 %v5327, %v5707
      %v5714 = vmul.f32 %v5328, %v5707
      %v5715 = vmul.f32 %v5329, %v5707
      %v5716 = vmul.f32 %v5330, %v5711
      %v5717 = vmul.f32 %v5331, %v5711
      %v5718 = vmul.f32 %v5332, %v5711
      %v5719 = vmul.f32 %v5713, %v2635
      %v5720 = vmul.f32 %v5714, %v2639
      %v5721 = vmul.f32 %v5715, %v2637
      %v5722 = vmul.f32 %v5716, %v2635
      %v5723 = vmul.f32 %v5717, %v2639
      %v5724 = vmul.f32 %v5718, %v2637
      %5731 = vrot.lane.b32.xlu0 %v5719, 60
      %v5732 = vpop.permute.xlu0 %5731
      %5733 = vrot.lane.b32.xlu0 %v5720, 60
      %v5734 = vpop.permute.xlu0 %5733
      %5735 = vrot.lane.b32.xlu0 %v5721, 60
      %v5736 = vpop.permute.xlu0 %5735
      %5737 = vrot.lane.b32.xlu0 %v5722, 60
      %v5738 = vpop.permute.xlu0 %5737
      %5739 = vrot.lane.b32.xlu0 %v5723, 60
      %v5740 = vpop.permute.xlu0 %5739
      %5741 = vrot.lane.b32.xlu0 %v5724, 60
      %v5742 = vpop.permute.xlu0 %5741
      %v5743 = vsel %vm2667, %v5732, %v5734
      %v5744 = vsel %vm2667, %v5734, %v5736
      %v5745 = vsel %vm2667, %v5738, %v5740
      %v5746 = vsel %vm2667, %v5740, %v5742
      %v5753 = vadd.f32 %v5699, %v5732
      %v5754 = vadd.f32 %v5700, %v5743
      %v5755 = vadd.f32 %v5701, %v5744
      %v5756 = vadd.f32 %v5702, %v5738
      %v5757 = vadd.f32 %v5703, %v5745
      %v5758 = vadd.f32 %v5704, %v5746
      %5759 = vset.pattern.permute.xlu0 33
      %5760 = vperm.xlu0 %5759, %v4019
      %v5761 = vpop.permute.xlu0 %5760
      %5763 = vset.pattern.permute.xlu0 33
      %5764 = vperm.xlu0 %5763, %v4020
      %v5765 = vpop.permute.xlu0 %5764
      %v5767 = vmul.f32 %v5327, %v5761
      %v5768 = vmul.f32 %v5328, %v5761
      %v5769 = vmul.f32 %v5329, %v5761
      %v5770 = vmul.f32 %v5330, %v5765
      %v5771 = vmul.f32 %v5331, %v5765
      %v5772 = vmul.f32 %v5332, %v5765
      %v5773 = vmul.f32 %v5767, %v2699
      %v5774 = vmul.f32 %v5768, %v2703
      %v5775 = vmul.f32 %v5769, %v2701
      %v5776 = vmul.f32 %v5770, %v2699
      %v5777 = vmul.f32 %v5771, %v2703
      %v5778 = vmul.f32 %v5772, %v2701
      %5785 = vrot.lane.b32.xlu0 %v5773, 59
      %v5786 = vpop.permute.xlu0 %5785
      %5787 = vrot.lane.b32.xlu0 %v5774, 59
      %v5788 = vpop.permute.xlu0 %5787
      %5789 = vrot.lane.b32.xlu0 %v5775, 59
      %v5790 = vpop.permute.xlu0 %5789
      %5791 = vrot.lane.b32.xlu0 %v5776, 59
      %v5792 = vpop.permute.xlu0 %5791
      %5793 = vrot.lane.b32.xlu0 %v5777, 59
      %v5794 = vpop.permute.xlu0 %5793
      %5795 = vrot.lane.b32.xlu0 %v5778, 59
      %v5796 = vpop.permute.xlu0 %5795
      %v5797 = vsel %vm2731, %v5786, %v5788
      %v5798 = vsel %vm2731, %v5788, %v5790
      %v5799 = vsel %vm2731, %v5792, %v5794
      %v5800 = vsel %vm2731, %v5794, %v5796
      %v5807 = vadd.f32 %v5753, %v5786
      %v5808 = vadd.f32 %v5754, %v5797
      %v5809 = vadd.f32 %v5755, %v5798
      %v5810 = vadd.f32 %v5756, %v5792
      %v5811 = vadd.f32 %v5757, %v5799
      %v5812 = vadd.f32 %v5758, %v5800
      %5813 = vset.pattern.permute.xlu0 34
      %5814 = vperm.xlu0 %5813, %v4019
      %v5815 = vpop.permute.xlu0 %5814
      %5817 = vset.pattern.permute.xlu0 34
      %5818 = vperm.xlu0 %5817, %v4020
      %v5819 = vpop.permute.xlu0 %5818
      %v5821 = vmul.f32 %v5327, %v5815
      %v5822 = vmul.f32 %v5328, %v5815
      %v5823 = vmul.f32 %v5329, %v5815
      %v5824 = vmul.f32 %v5330, %v5819
      %v5825 = vmul.f32 %v5331, %v5819
      %v5826 = vmul.f32 %v5332, %v5819
      %v5827 = vmul.f32 %v5821, %v2763
      %v5828 = vmul.f32 %v5822, %v2767
      %v5829 = vmul.f32 %v5823, %v2765
      %v5830 = vmul.f32 %v5824, %v2763
      %v5831 = vmul.f32 %v5825, %v2767
      %v5832 = vmul.f32 %v5826, %v2765
      %5839 = vrot.lane.b32.xlu0 %v5827, 58
      %v5840 = vpop.permute.xlu0 %5839
      %5841 = vrot.lane.b32.xlu0 %v5828, 58
      %v5842 = vpop.permute.xlu0 %5841
      %5843 = vrot.lane.b32.xlu0 %v5829, 58
      %v5844 = vpop.permute.xlu0 %5843
      %5845 = vrot.lane.b32.xlu0 %v5830, 58
      %v5846 = vpop.permute.xlu0 %5845
      %5847 = vrot.lane.b32.xlu0 %v5831, 58
      %v5848 = vpop.permute.xlu0 %5847
      %5849 = vrot.lane.b32.xlu0 %v5832, 58
      %v5850 = vpop.permute.xlu0 %5849
      %v5851 = vsel %vm2795, %v5840, %v5842
      %v5852 = vsel %vm2795, %v5842, %v5844
      %v5853 = vsel %vm2795, %v5846, %v5848
      %v5854 = vsel %vm2795, %v5848, %v5850
      %v5861 = vadd.f32 %v5807, %v5840
      %v5862 = vadd.f32 %v5808, %v5851
      %v5863 = vadd.f32 %v5809, %v5852
      %v5864 = vadd.f32 %v5810, %v5846
      %v5865 = vadd.f32 %v5811, %v5853
      %v5866 = vadd.f32 %v5812, %v5854
      %5867 = vset.pattern.permute.xlu0 35
      %5868 = vperm.xlu0 %5867, %v4019
      %v5869 = vpop.permute.xlu0 %5868
      %5871 = vset.pattern.permute.xlu0 35
      %5872 = vperm.xlu0 %5871, %v4020
      %v5873 = vpop.permute.xlu0 %5872
      %v5875 = vmul.f32 %v5327, %v5869
      %v5876 = vmul.f32 %v5328, %v5869
      %v5877 = vmul.f32 %v5329, %v5869
      %v5878 = vmul.f32 %v5330, %v5873
      %v5879 = vmul.f32 %v5331, %v5873
      %v5880 = vmul.f32 %v5332, %v5873
      %v5881 = vmul.f32 %v5875, %v2827
      %v5882 = vmul.f32 %v5876, %v2831
      %v5883 = vmul.f32 %v5877, %v2829
      %v5884 = vmul.f32 %v5878, %v2827
      %v5885 = vmul.f32 %v5879, %v2831
      %v5886 = vmul.f32 %v5880, %v2829
      %5893 = vrot.lane.b32.xlu0 %v5881, 48
      %v5894 = vpop.permute.xlu0 %5893
      %5895 = vrot.lane.b32.xlu0 %v5882, 48
      %v5896 = vpop.permute.xlu0 %5895
      %5897 = vrot.lane.b32.xlu0 %v5883, 48
      %v5898 = vpop.permute.xlu0 %5897
      %5899 = vrot.lane.b32.xlu0 %v5884, 48
      %v5900 = vpop.permute.xlu0 %5899
      %5901 = vrot.lane.b32.xlu0 %v5885, 48
      %v5902 = vpop.permute.xlu0 %5901
      %5903 = vrot.lane.b32.xlu0 %v5886, 48
      %v5904 = vpop.permute.xlu0 %5903
      %v5905 = vsel %vm2859, %v5894, %v5896
      %v5906 = vsel %vm2859, %v5896, %v5898
      %v5907 = vsel %vm2859, %v5900, %v5902
      %v5908 = vsel %vm2859, %v5902, %v5904
      %v5915 = vadd.f32 %v5861, %v5894
      %v5916 = vadd.f32 %v5862, %v5905
      %v5917 = vadd.f32 %v5863, %v5906
      %v5918 = vadd.f32 %v5864, %v5900
      %v5919 = vadd.f32 %v5865, %v5907
      %v5920 = vadd.f32 %v5866, %v5908
      %5921 = vset.pattern.permute.xlu0 36
      %5922 = vperm.xlu0 %5921, %v4019
      %v5923 = vpop.permute.xlu0 %5922
      %5925 = vset.pattern.permute.xlu0 36
      %5926 = vperm.xlu0 %5925, %v4020
      %v5927 = vpop.permute.xlu0 %5926
      %v5929 = vmul.f32 %v5327, %v5923
      %v5930 = vmul.f32 %v5328, %v5923
      %v5931 = vmul.f32 %v5329, %v5923
      %v5932 = vmul.f32 %v5330, %v5927
      %v5933 = vmul.f32 %v5331, %v5927
      %v5934 = vmul.f32 %v5332, %v5927
      %v5935 = vmul.f32 %v5929, %v2891
      %v5936 = vmul.f32 %v5930, %v2895
      %v5937 = vmul.f32 %v5931, %v2893
      %v5938 = vmul.f32 %v5932, %v2891
      %v5939 = vmul.f32 %v5933, %v2895
      %v5940 = vmul.f32 %v5934, %v2893
      %5947 = vrot.lane.b32.xlu0 %v5935, 47
      %v5948 = vpop.permute.xlu0 %5947
      %5949 = vrot.lane.b32.xlu0 %v5936, 47
      %v5950 = vpop.permute.xlu0 %5949
      %5951 = vrot.lane.b32.xlu0 %v5937, 47
      %v5952 = vpop.permute.xlu0 %5951
      %5953 = vrot.lane.b32.xlu0 %v5938, 47
      %v5954 = vpop.permute.xlu0 %5953
      %5955 = vrot.lane.b32.xlu0 %v5939, 47
      %v5956 = vpop.permute.xlu0 %5955
      %5957 = vrot.lane.b32.xlu0 %v5940, 47
      %v5958 = vpop.permute.xlu0 %5957
      %v5959 = vsel %vm2923, %v5948, %v5950
      %v5960 = vsel %vm2923, %v5950, %v5952
      %v5961 = vsel %vm2923, %v5954, %v5956
      %v5962 = vsel %vm2923, %v5956, %v5958
      %v5969 = vadd.f32 %v5915, %v5948
      %v5970 = vadd.f32 %v5916, %v5959
      %v5971 = vadd.f32 %v5917, %v5960
      %v5972 = vadd.f32 %v5918, %v5954
      %v5973 = vadd.f32 %v5919, %v5961
      %v5974 = vadd.f32 %v5920, %v5962
      %5975 = vset.pattern.permute.xlu0 37
      %5976 = vperm.xlu0 %5975, %v4019
      %v5977 = vpop.permute.xlu0 %5976
      %5979 = vset.pattern.permute.xlu0 37
      %5980 = vperm.xlu0 %5979, %v4020
      %v5981 = vpop.permute.xlu0 %5980
      %v5983 = vmul.f32 %v5327, %v5977
      %v5984 = vmul.f32 %v5328, %v5977
      %v5985 = vmul.f32 %v5329, %v5977
      %v5986 = vmul.f32 %v5330, %v5981
      %v5987 = vmul.f32 %v5331, %v5981
      %v5988 = vmul.f32 %v5332, %v5981
      %v5989 = vmul.f32 %v5983, %v2955
      %v5990 = vmul.f32 %v5984, %v2959
      %v5991 = vmul.f32 %v5985, %v2957
      %v5992 = vmul.f32 %v5986, %v2955
      %v5993 = vmul.f32 %v5987, %v2959
      %v5994 = vmul.f32 %v5988, %v2957
      %6001 = vrot.lane.b32.xlu0 %v5989, 46
      %v6002 = vpop.permute.xlu0 %6001
      %6003 = vrot.lane.b32.xlu0 %v5990, 46
      %v6004 = vpop.permute.xlu0 %6003
      %6005 = vrot.lane.b32.xlu0 %v5991, 46
      %v6006 = vpop.permute.xlu0 %6005
      %6007 = vrot.lane.b32.xlu0 %v5992, 46
      %v6008 = vpop.permute.xlu0 %6007
      %6009 = vrot.lane.b32.xlu0 %v5993, 46
      %v6010 = vpop.permute.xlu0 %6009
      %6011 = vrot.lane.b32.xlu0 %v5994, 46
      %v6012 = vpop.permute.xlu0 %6011
      %v6013 = vsel %vm2987, %v6002, %v6004
      %v6014 = vsel %vm2987, %v6004, %v6006
      %v6015 = vsel %vm2987, %v6008, %v6010
      %v6016 = vsel %vm2987, %v6010, %v6012
      %v6023 = vadd.f32 %v5969, %v6002
      %v6024 = vadd.f32 %v5970, %v6013
      %v6025 = vadd.f32 %v5971, %v6014
      %v6026 = vadd.f32 %v5972, %v6008
      %v6027 = vadd.f32 %v5973, %v6015
      %v6028 = vadd.f32 %v5974, %v6016
      %6029 = vset.pattern.permute.xlu0 38
      %6030 = vperm.xlu0 %6029, %v4019
      %v6031 = vpop.permute.xlu0 %6030
      %6033 = vset.pattern.permute.xlu0 38
      %6034 = vperm.xlu0 %6033, %v4020
      %v6035 = vpop.permute.xlu0 %6034
      %v6037 = vmul.f32 %v5327, %v6031
      %v6038 = vmul.f32 %v5328, %v6031
      %v6039 = vmul.f32 %v5329, %v6031
      %v6040 = vmul.f32 %v5330, %v6035
      %v6041 = vmul.f32 %v5331, %v6035
      %v6042 = vmul.f32 %v5332, %v6035
      %6049 = vrot.lane.b32.xlu0 %v6037, 45
      %v6050 = vpop.permute.xlu0 %6049
      %6051 = vrot.lane.b32.xlu0 %v6038, 45
      %v6052 = vpop.permute.xlu0 %6051
      %6053 = vrot.lane.b32.xlu0 %v6039, 45
      %v6054 = vpop.permute.xlu0 %6053
      %6055 = vrot.lane.b32.xlu0 %v6040, 45
      %v6056 = vpop.permute.xlu0 %6055
      %6057 = vrot.lane.b32.xlu0 %v6041, 45
      %v6058 = vpop.permute.xlu0 %6057
      %6059 = vrot.lane.b32.xlu0 %v6042, 45
      %v6060 = vpop.permute.xlu0 %6059
      %v6061 = vsel %vm3036, %v6050, %v6052
      %v6062 = vsel %vm3036, %v6052, %v6054
      %v6063 = vsel %vm3036, %v6056, %v6058
      %v6064 = vsel %vm3036, %v6058, %v6060
      %v6071 = vadd.f32 %v6023, %v6050
      %v6072 = vadd.f32 %v6024, %v6061
      %v6073 = vadd.f32 %v6025, %v6062
      %v6074 = vadd.f32 %v6026, %v6056
      %v6075 = vadd.f32 %v6027, %v6063
      %v6076 = vadd.f32 %v6028, %v6064
      %6077 = vset.pattern.permute.xlu0 39
      %6078 = vperm.xlu0 %6077, %v4019
      %v6079 = vpop.permute.xlu0 %6078
      %6081 = vset.pattern.permute.xlu0 39
      %6082 = vperm.xlu0 %6081, %v4020
      %v6083 = vpop.permute.xlu0 %6082
      %v6085 = vmul.f32 %v5327, %v6079
      %v6086 = vmul.f32 %v5328, %v6079
      %v6087 = vmul.f32 %v5329, %v6079
      %v6088 = vmul.f32 %v5330, %v6083
      %v6089 = vmul.f32 %v5331, %v6083
      %v6090 = vmul.f32 %v5332, %v6083
      %v6091 = vmul.f32 %v6085, %v3068
      %v6092 = vmul.f32 %v6086, %v3072
      %v6093 = vmul.f32 %v6087, %v3070
      %v6094 = vmul.f32 %v6088, %v3068
      %v6095 = vmul.f32 %v6089, %v3072
      %v6096 = vmul.f32 %v6090, %v3070
      %6103 = vrot.lane.b32.xlu0 %v6091, 44
      %v6104 = vpop.permute.xlu0 %6103
      %6105 = vrot.lane.b32.xlu0 %v6092, 44
      %v6106 = vpop.permute.xlu0 %6105
      %6107 = vrot.lane.b32.xlu0 %v6093, 44
      %v6108 = vpop.permute.xlu0 %6107
      %6109 = vrot.lane.b32.xlu0 %v6094, 44
      %v6110 = vpop.permute.xlu0 %6109
      %6111 = vrot.lane.b32.xlu0 %v6095, 44
      %v6112 = vpop.permute.xlu0 %6111
      %6113 = vrot.lane.b32.xlu0 %v6096, 44
      %v6114 = vpop.permute.xlu0 %6113
      %v6115 = vsel %vm3100, %v6104, %v6106
      %v6116 = vsel %vm3100, %v6106, %v6108
      %v6117 = vsel %vm3100, %v6110, %v6112
      %v6118 = vsel %vm3100, %v6112, %v6114
      %v6125 = vadd.f32 %v6071, %v6104
      %v6126 = vadd.f32 %v6072, %v6115
      %v6127 = vadd.f32 %v6073, %v6116
      %v6128 = vadd.f32 %v6074, %v6110
      %v6129 = vadd.f32 %v6075, %v6117
      %v6130 = vadd.f32 %v6076, %v6118
      %6131 = vset.pattern.permute.xlu0 40
      %6132 = vperm.xlu0 %6131, %v4019
      %v6133 = vpop.permute.xlu0 %6132
      %6135 = vset.pattern.permute.xlu0 40
      %6136 = vperm.xlu0 %6135, %v4020
      %v6137 = vpop.permute.xlu0 %6136
      %v6139 = vmul.f32 %v5327, %v6133
      %v6140 = vmul.f32 %v5328, %v6133
      %v6141 = vmul.f32 %v5329, %v6133
      %v6142 = vmul.f32 %v5330, %v6137
      %v6143 = vmul.f32 %v5331, %v6137
      %v6144 = vmul.f32 %v5332, %v6137
      %v6145 = vmul.f32 %v6139, %v3132
      %v6146 = vmul.f32 %v6140, %v3136
      %v6147 = vmul.f32 %v6141, %v3134
      %v6148 = vmul.f32 %v6142, %v3132
      %v6149 = vmul.f32 %v6143, %v3136
      %v6150 = vmul.f32 %v6144, %v3134
      %6157 = vrot.lane.b32.xlu0 %v6145, 43
      %v6158 = vpop.permute.xlu0 %6157
      %6159 = vrot.lane.b32.xlu0 %v6146, 43
      %v6160 = vpop.permute.xlu0 %6159
      %6161 = vrot.lane.b32.xlu0 %v6147, 43
      %v6162 = vpop.permute.xlu0 %6161
      %6163 = vrot.lane.b32.xlu0 %v6148, 43
      %v6164 = vpop.permute.xlu0 %6163
      %6165 = vrot.lane.b32.xlu0 %v6149, 43
      %v6166 = vpop.permute.xlu0 %6165
      %6167 = vrot.lane.b32.xlu0 %v6150, 43
      %v6168 = vpop.permute.xlu0 %6167
      %v6169 = vsel %vm3164, %v6158, %v6160
      %v6170 = vsel %vm3164, %v6160, %v6162
      %v6171 = vsel %vm3164, %v6164, %v6166
      %v6172 = vsel %vm3164, %v6166, %v6168
      %v6179 = vadd.f32 %v6125, %v6158
      %v6180 = vadd.f32 %v6126, %v6169
      %v6181 = vadd.f32 %v6127, %v6170
      %v6182 = vadd.f32 %v6128, %v6164
      %v6183 = vadd.f32 %v6129, %v6171
      %v6184 = vadd.f32 %v6130, %v6172
      %6185 = vset.pattern.permute.xlu0 41
      %6186 = vperm.xlu0 %6185, %v4019
      %v6187 = vpop.permute.xlu0 %6186
      %6189 = vset.pattern.permute.xlu0 41
      %6190 = vperm.xlu0 %6189, %v4020
      %v6191 = vpop.permute.xlu0 %6190
      %v6193 = vmul.f32 %v5327, %v6187
      %v6194 = vmul.f32 %v5328, %v6187
      %v6195 = vmul.f32 %v5329, %v6187
      %v6196 = vmul.f32 %v5330, %v6191
      %v6197 = vmul.f32 %v5331, %v6191
      %v6198 = vmul.f32 %v5332, %v6191
      %v6199 = vmul.f32 %v6193, %v3196
      %v6200 = vmul.f32 %v6194, %v3200
      %v6201 = vmul.f32 %v6195, %v3198
      %v6202 = vmul.f32 %v6196, %v3196
      %v6203 = vmul.f32 %v6197, %v3200
      %v6204 = vmul.f32 %v6198, %v3198
      %6211 = vrot.lane.b32.xlu0 %v6199, 42
      %v6212 = vpop.permute.xlu0 %6211
      %6213 = vrot.lane.b32.xlu0 %v6200, 42
      %v6214 = vpop.permute.xlu0 %6213
      %6215 = vrot.lane.b32.xlu0 %v6201, 42
      %v6216 = vpop.permute.xlu0 %6215
      %6217 = vrot.lane.b32.xlu0 %v6202, 42
      %v6218 = vpop.permute.xlu0 %6217
      %6219 = vrot.lane.b32.xlu0 %v6203, 42
      %v6220 = vpop.permute.xlu0 %6219
      %6221 = vrot.lane.b32.xlu0 %v6204, 42
      %v6222 = vpop.permute.xlu0 %6221
      %v6223 = vsel %vm3228, %v6212, %v6214
      %v6224 = vsel %vm3228, %v6214, %v6216
      %v6225 = vsel %vm3228, %v6218, %v6220
      %v6226 = vsel %vm3228, %v6220, %v6222
      %v6233 = vadd.f32 %v6179, %v6212
      %v6234 = vadd.f32 %v6180, %v6223
      %v6235 = vadd.f32 %v6181, %v6224
      %v6236 = vadd.f32 %v6182, %v6218
      %v6237 = vadd.f32 %v6183, %v6225
      %v6238 = vadd.f32 %v6184, %v6226
      %6239 = vset.pattern.permute.xlu0 42
      %6240 = vperm.xlu0 %6239, %v4019
      %v6241 = vpop.permute.xlu0 %6240
      %6243 = vset.pattern.permute.xlu0 42
      %6244 = vperm.xlu0 %6243, %v4020
      %v6245 = vpop.permute.xlu0 %6244
      %v6247 = vmul.f32 %v5327, %v6241
      %v6248 = vmul.f32 %v5328, %v6241
      %v6249 = vmul.f32 %v5329, %v6241
      %v6250 = vmul.f32 %v5330, %v6245
      %v6251 = vmul.f32 %v5331, %v6245
      %v6252 = vmul.f32 %v5332, %v6245
      %v6253 = vmul.f32 %v6247, %v3260
      %v6254 = vmul.f32 %v6248, %v3263
      %v6255 = vmul.f32 %v6249, %v3262
      %v6256 = vmul.f32 %v6250, %v3260
      %v6257 = vmul.f32 %v6251, %v3263
      %v6258 = vmul.f32 %v6252, %v3262
      %6265 = vrot.lane.b32.xlu0 %v6253, 32
      %v6266 = vpop.permute.xlu0 %6265
      %6267 = vrot.lane.b32.xlu0 %v6254, 32
      %v6268 = vpop.permute.xlu0 %6267
      %6269 = vrot.lane.b32.xlu0 %v6255, 32
      %v6270 = vpop.permute.xlu0 %6269
      %6271 = vrot.lane.b32.xlu0 %v6256, 32
      %v6272 = vpop.permute.xlu0 %6271
      %6273 = vrot.lane.b32.xlu0 %v6257, 32
      %v6274 = vpop.permute.xlu0 %6273
      %6275 = vrot.lane.b32.xlu0 %v6258, 32
      %v6276 = vpop.permute.xlu0 %6275
      %v6277 = vsel %vm3291, %v6266, %v6268
      %v6278 = vsel %vm3291, %v6268, %v6270
      %v6279 = vsel %vm3291, %v6272, %v6274
      %v6280 = vsel %vm3291, %v6274, %v6276
      %v6287 = vadd.f32 %v6233, %v6266
      %v6288 = vadd.f32 %v6234, %v6277
      %v6289 = vadd.f32 %v6235, %v6278
      %v6290 = vadd.f32 %v6236, %v6272
      %v6291 = vadd.f32 %v6237, %v6279
      %v6292 = vadd.f32 %v6238, %v6280
      %6293 = vset.pattern.permute.xlu0 43
      %6294 = vperm.xlu0 %6293, %v4019
      %v6295 = vpop.permute.xlu0 %6294
      %6297 = vset.pattern.permute.xlu0 43
      %6298 = vperm.xlu0 %6297, %v4020
      %v6299 = vpop.permute.xlu0 %6298
      %v6301 = vmul.f32 %v5327, %v6295
      %v6302 = vmul.f32 %v5328, %v6295
      %v6303 = vmul.f32 %v5329, %v6295
      %v6304 = vmul.f32 %v5330, %v6299
      %v6305 = vmul.f32 %v5331, %v6299
      %v6306 = vmul.f32 %v5332, %v6299
      %v6307 = vmul.f32 %v6301, %v3323
      %v6308 = vmul.f32 %v6302, %v3326
      %v6309 = vmul.f32 %v6303, %v3325
      %v6310 = vmul.f32 %v6304, %v3323
      %v6311 = vmul.f32 %v6305, %v3326
      %v6312 = vmul.f32 %v6306, %v3325
      %6319 = vrot.lane.b32.xlu0 %v6307, 31
      %v6320 = vpop.permute.xlu0 %6319
      %6321 = vrot.lane.b32.xlu0 %v6308, 31
      %v6322 = vpop.permute.xlu0 %6321
      %6323 = vrot.lane.b32.xlu0 %v6309, 31
      %v6324 = vpop.permute.xlu0 %6323
      %6325 = vrot.lane.b32.xlu0 %v6310, 31
      %v6326 = vpop.permute.xlu0 %6325
      %6327 = vrot.lane.b32.xlu0 %v6311, 31
      %v6328 = vpop.permute.xlu0 %6327
      %6329 = vrot.lane.b32.xlu0 %v6312, 31
      %v6330 = vpop.permute.xlu0 %6329
      %v6331 = vsel %vm2958, %v6320, %v6322
      %v6332 = vsel %vm2958, %v6322, %v6324
      %v6333 = vsel %vm2958, %v6326, %v6328
      %v6334 = vsel %vm2958, %v6328, %v6330
      %v6341 = vadd.f32 %v6287, %v6320
      %v6342 = vadd.f32 %v6288, %v6331
      %v6343 = vadd.f32 %v6289, %v6332
      %v6344 = vadd.f32 %v6290, %v6326
      %v6345 = vadd.f32 %v6291, %v6333
      %v6346 = vadd.f32 %v6292, %v6334
      %6347 = vset.pattern.permute.xlu0 44
      %6348 = vperm.xlu0 %6347, %v4019
      %v6349 = vpop.permute.xlu0 %6348
      %6351 = vset.pattern.permute.xlu0 44
      %6352 = vperm.xlu0 %6351, %v4020
      %v6353 = vpop.permute.xlu0 %6352
      %v6355 = vmul.f32 %v5327, %v6349
      %v6356 = vmul.f32 %v5328, %v6349
      %v6357 = vmul.f32 %v5329, %v6349
      %v6358 = vmul.f32 %v5330, %v6353
      %v6359 = vmul.f32 %v5331, %v6353
      %v6360 = vmul.f32 %v5332, %v6353
      %v6361 = vmul.f32 %v6355, %v3385
      %v6362 = vmul.f32 %v6356, %v3388
      %v6363 = vmul.f32 %v6357, %v3387
      %v6364 = vmul.f32 %v6358, %v3385
      %v6365 = vmul.f32 %v6359, %v3388
      %v6366 = vmul.f32 %v6360, %v3387
      %6373 = vrot.lane.b32.xlu0 %v6361, 30
      %v6374 = vpop.permute.xlu0 %6373
      %6375 = vrot.lane.b32.xlu0 %v6362, 30
      %v6376 = vpop.permute.xlu0 %6375
      %6377 = vrot.lane.b32.xlu0 %v6363, 30
      %v6378 = vpop.permute.xlu0 %6377
      %6379 = vrot.lane.b32.xlu0 %v6364, 30
      %v6380 = vpop.permute.xlu0 %6379
      %6381 = vrot.lane.b32.xlu0 %v6365, 30
      %v6382 = vpop.permute.xlu0 %6381
      %6383 = vrot.lane.b32.xlu0 %v6366, 30
      %v6384 = vpop.permute.xlu0 %6383
      %v6385 = vsel %vm2894, %v6374, %v6376
      %v6386 = vsel %vm2894, %v6376, %v6378
      %v6387 = vsel %vm2894, %v6380, %v6382
      %v6388 = vsel %vm2894, %v6382, %v6384
      %v6395 = vadd.f32 %v6341, %v6374
      %v6396 = vadd.f32 %v6342, %v6385
      %v6397 = vadd.f32 %v6343, %v6386
      %v6398 = vadd.f32 %v6344, %v6380
      %v6399 = vadd.f32 %v6345, %v6387
      %v6400 = vadd.f32 %v6346, %v6388
      %6401 = vset.pattern.permute.xlu0 45
      %6402 = vperm.xlu0 %6401, %v4019
      %v6403 = vpop.permute.xlu0 %6402
      %6405 = vset.pattern.permute.xlu0 45
      %6406 = vperm.xlu0 %6405, %v4020
      %v6407 = vpop.permute.xlu0 %6406
      %v6409 = vmul.f32 %v5327, %v6403
      %v6410 = vmul.f32 %v5328, %v6403
      %v6411 = vmul.f32 %v5329, %v6403
      %v6412 = vmul.f32 %v5330, %v6407
      %v6413 = vmul.f32 %v5331, %v6407
      %v6414 = vmul.f32 %v5332, %v6407
      %6421 = vrot.lane.b32.xlu0 %v6409, 29
      %v6422 = vpop.permute.xlu0 %6421
      %6423 = vrot.lane.b32.xlu0 %v6410, 29
      %v6424 = vpop.permute.xlu0 %6423
      %6425 = vrot.lane.b32.xlu0 %v6411, 29
      %v6426 = vpop.permute.xlu0 %6425
      %6427 = vrot.lane.b32.xlu0 %v6412, 29
      %v6428 = vpop.permute.xlu0 %6427
      %6429 = vrot.lane.b32.xlu0 %v6413, 29
      %v6430 = vpop.permute.xlu0 %6429
      %6431 = vrot.lane.b32.xlu0 %v6414, 29
      %v6432 = vpop.permute.xlu0 %6431
      %v6433 = vsel %vm2830, %v6422, %v6424
      %v6434 = vsel %vm2830, %v6424, %v6426
      %v6435 = vsel %vm2830, %v6428, %v6430
      %v6436 = vsel %vm2830, %v6430, %v6432
      %v6443 = vadd.f32 %v6395, %v6422
      %v6444 = vadd.f32 %v6396, %v6433
      %v6445 = vadd.f32 %v6397, %v6434
      %v6446 = vadd.f32 %v6398, %v6428
      %v6447 = vadd.f32 %v6399, %v6435
      %v6448 = vadd.f32 %v6400, %v6436
      %6449 = vset.pattern.permute.xlu0 46
      %6450 = vperm.xlu0 %6449, %v4019
      %v6451 = vpop.permute.xlu0 %6450
      %6453 = vset.pattern.permute.xlu0 46
      %6454 = vperm.xlu0 %6453, %v4020
      %v6455 = vpop.permute.xlu0 %6454
      %v6457 = vmul.f32 %v5327, %v6451
      %v6458 = vmul.f32 %v5328, %v6451
      %v6459 = vmul.f32 %v5329, %v6451
      %v6460 = vmul.f32 %v5330, %v6455
      %v6461 = vmul.f32 %v5331, %v6455
      %v6462 = vmul.f32 %v5332, %v6455
      %v6463 = vmul.f32 %v6457, %v3495
      %v6464 = vmul.f32 %v6458, %v3499
      %v6465 = vmul.f32 %v6459, %v3497
      %v6466 = vmul.f32 %v6460, %v3495
      %v6467 = vmul.f32 %v6461, %v3499
      %v6468 = vmul.f32 %v6462, %v3497
      %6475 = vrot.lane.b32.xlu0 %v6463, 28
      %v6476 = vpop.permute.xlu0 %6475
      %6477 = vrot.lane.b32.xlu0 %v6464, 28
      %v6478 = vpop.permute.xlu0 %6477
      %6479 = vrot.lane.b32.xlu0 %v6465, 28
      %v6480 = vpop.permute.xlu0 %6479
      %6481 = vrot.lane.b32.xlu0 %v6466, 28
      %v6482 = vpop.permute.xlu0 %6481
      %6483 = vrot.lane.b32.xlu0 %v6467, 28
      %v6484 = vpop.permute.xlu0 %6483
      %6485 = vrot.lane.b32.xlu0 %v6468, 28
      %v6486 = vpop.permute.xlu0 %6485
      %v6487 = vsel %vm3527, %v6476, %v6478
      %v6488 = vsel %vm3527, %v6478, %v6480
      %v6489 = vsel %vm3527, %v6482, %v6484
      %v6490 = vsel %vm3527, %v6484, %v6486
      %v6497 = vadd.f32 %v6443, %v6476
      %v6498 = vadd.f32 %v6444, %v6487
      %v6499 = vadd.f32 %v6445, %v6488
      %v6500 = vadd.f32 %v6446, %v6482
      %v6501 = vadd.f32 %v6447, %v6489
      %v6502 = vadd.f32 %v6448, %v6490
      %6503 = vset.pattern.permute.xlu0 47
      %6504 = vperm.xlu0 %6503, %v4019
      %v6505 = vpop.permute.xlu0 %6504
      %6507 = vset.pattern.permute.xlu0 47
      %6508 = vperm.xlu0 %6507, %v4020
      %v6509 = vpop.permute.xlu0 %6508
      %v6511 = vmul.f32 %v5327, %v6505
      %v6512 = vmul.f32 %v5328, %v6505
      %v6513 = vmul.f32 %v5329, %v6505
      %v6514 = vmul.f32 %v5330, %v6509
      %v6515 = vmul.f32 %v5331, %v6509
      %v6516 = vmul.f32 %v5332, %v6509
      %v6517 = vmul.f32 %v6511, %v3559
      %v6518 = vmul.f32 %v6512, %v3563
      %v6519 = vmul.f32 %v6513, %v3561
      %v6520 = vmul.f32 %v6514, %v3559
      %v6521 = vmul.f32 %v6515, %v3563
      %v6522 = vmul.f32 %v6516, %v3561
      %6529 = vrot.lane.b32.xlu0 %v6517, 27
      %v6530 = vpop.permute.xlu0 %6529
      %6531 = vrot.lane.b32.xlu0 %v6518, 27
      %v6532 = vpop.permute.xlu0 %6531
      %6533 = vrot.lane.b32.xlu0 %v6519, 27
      %v6534 = vpop.permute.xlu0 %6533
      %6535 = vrot.lane.b32.xlu0 %v6520, 27
      %v6536 = vpop.permute.xlu0 %6535
      %6537 = vrot.lane.b32.xlu0 %v6521, 27
      %v6538 = vpop.permute.xlu0 %6537
      %6539 = vrot.lane.b32.xlu0 %v6522, 27
      %v6540 = vpop.permute.xlu0 %6539
      %v6541 = vsel %vm3591, %v6530, %v6532
      %v6542 = vsel %vm3591, %v6532, %v6534
      %v6543 = vsel %vm3591, %v6536, %v6538
      %v6544 = vsel %vm3591, %v6538, %v6540
      %v6551 = vadd.f32 %v6497, %v6530
      %v6552 = vadd.f32 %v6498, %v6541
      %v6553 = vadd.f32 %v6499, %v6542
      %v6554 = vadd.f32 %v6500, %v6536
      %v6555 = vadd.f32 %v6501, %v6543
      %v6556 = vadd.f32 %v6502, %v6544
      %6557 = vset.pattern.permute.xlu0 48
      %6558 = vperm.xlu0 %6557, %v4019
      %v6559 = vpop.permute.xlu0 %6558
      %6561 = vset.pattern.permute.xlu0 48
      %6562 = vperm.xlu0 %6561, %v4020
      %v6563 = vpop.permute.xlu0 %6562
      %v6565 = vmul.f32 %v5327, %v6559
      %v6566 = vmul.f32 %v5328, %v6559
      %v6567 = vmul.f32 %v5329, %v6559
      %v6568 = vmul.f32 %v5330, %v6563
      %v6569 = vmul.f32 %v5331, %v6563
      %v6570 = vmul.f32 %v5332, %v6563
      %v6571 = vmul.f32 %v6565, %v3623
      %v6572 = vmul.f32 %v6566, %v3627
      %v6573 = vmul.f32 %v6567, %v3625
      %v6574 = vmul.f32 %v6568, %v3623
      %v6575 = vmul.f32 %v6569, %v3627
      %v6576 = vmul.f32 %v6570, %v3625
      %6583 = vrot.lane.b32.xlu0 %v6571, 26
      %v6584 = vpop.permute.xlu0 %6583
      %6585 = vrot.lane.b32.xlu0 %v6572, 26
      %v6586 = vpop.permute.xlu0 %6585
      %6587 = vrot.lane.b32.xlu0 %v6573, 26
      %v6588 = vpop.permute.xlu0 %6587
      %6589 = vrot.lane.b32.xlu0 %v6574, 26
      %v6590 = vpop.permute.xlu0 %6589
      %6591 = vrot.lane.b32.xlu0 %v6575, 26
      %v6592 = vpop.permute.xlu0 %6591
      %6593 = vrot.lane.b32.xlu0 %v6576, 26
      %v6594 = vpop.permute.xlu0 %6593
      %v6595 = vsel %vm3655, %v6584, %v6586
      %v6596 = vsel %vm3655, %v6586, %v6588
      %v6597 = vsel %vm3655, %v6590, %v6592
      %v6598 = vsel %vm3655, %v6592, %v6594
      %v6605 = vadd.f32 %v6551, %v6584
      %v6606 = vadd.f32 %v6552, %v6595
      %v6607 = vadd.f32 %v6553, %v6596
      %v6608 = vadd.f32 %v6554, %v6590
      %v6609 = vadd.f32 %v6555, %v6597
      %v6610 = vadd.f32 %v6556, %v6598
      %6617 = vrot.lane.b32.xlu0 %v6605, 51
      %v6618 = vpop.permute.xlu0 %6617
      %6619 = vrot.lane.b32.xlu0 %v6606, 51
      %v6620 = vpop.permute.xlu0 %6619
      %6621 = vrot.lane.b32.xlu0 %v6607, 51
      %v6622 = vpop.permute.xlu0 %6621
      %6623 = vrot.lane.b32.xlu0 %v6608, 51
      %v6624 = vpop.permute.xlu0 %6623
      %6625 = vrot.lane.b32.xlu0 %v6609, 51
      %v6626 = vpop.permute.xlu0 %6625
      %6627 = vrot.lane.b32.xlu0 %v6610, 51
      %v6628 = vpop.permute.xlu0 %6627
      %v6629 = vsel %vm3626, %v6618, %v6620
      %v6630 = vsel %vm3626, %v6620, %v6622
      %v6631 = vsel %vm3626, %v6624, %v6626
      %v6632 = vsel %vm3626, %v6626, %v6628
      %v6637 = vadd.f32 %v612, %v6629
      %v6638 = vadd.f32 %v613, %v6630
      %v6639 = vadd.f32 %v614, %v6631
      %v6640 = vadd.f32 %v615, %v6632
      %v6641 = vld [vmem:[%s10] sm:$0x3]
      %v6643 = vsel %vm3754, %v6641, 0
      %6645 = vmatprep.subr.mxu0 %v6638
      %6646 = vmatpush1.msra.mxu0 %v6637
      %6647 = vmatprep.subr.mxu0 %v6640
      %6648 = vmatpush1.msra.mxu0 %v6639
      %6649 = vmatprep.subr.mxu0 0.0
      %6650 = vmatpush1.msra.mxu0 0.0
      %6651 = vmatprep.subr.mxu0 0.0
      %6652 = vmatpush1.msra.mxu0 0.0
      %6653 = vmatprep.subr.mxu0 0.0
      %6654 = vmatpush1.msra.mxu0 0.0
      %6655 = vmatprep.subr.mxu0 0.0
      %6656 = vmatpush1.msra.mxu0 0.0
      %6657 = vmatprep.subr.mxu0 0.0
      %6658 = vmatpush1.msra.mxu0 0.0
      %6659 = vmatprep.subr.mxu0 0.0
      %6660 = vmatpush1.msra.mxu0 0.0
      %6661 = vmatprep.subr.mxu0 0.0
      %6662 = vmatpush1.msra.mxu0 0.0
      %6663 = vmatprep.subr.mxu0 0.0
      %6664 = vmatpush1.msra.mxu0 0.0
      %6665 = vmatprep.subr.mxu0 0.0
      %6666 = vmatpush1.msra.mxu0 0.0
      %6667 = vmatprep.subr.mxu0 0.0
      %6668 = vmatpush1.msra.mxu0 0.0
      %6669 = vmatprep.subr.mxu0 0.0
      %6670 = vmatpush1.msra.mxu0 0.0
      %6671 = vmatprep.subr.mxu0 0.0
      %6672 = vmatpush1.msra.mxu0 0.0
      %6673 = vmatprep.subr.mxu0 0.0
      %6674 = vmatpush1.msra.mxu0 0.0
      %6675 = vmatprep.subr.mxu0 0.0
      %6676 = vmatpush1.msra.mxu0 0.0
      %6677 = vmatprep.subr.mxu0 0.0
      %6678 = vmatpush1.msra.mxu0 0.0
      %6679 = vmatprep.subr.mxu0 0.0
      %6680 = vmatpush1.msra.mxu0 0.0
      %6681 = vmatprep.subr.mxu0 0.0
      %6682 = vmatpush1.msra.mxu0 0.0
      %6683 = vmatprep.subr.mxu0 0.0
      %6684 = vmatpush1.msra.mxu0 0.0
      %6685 = vmatprep.subr.mxu0 0.0
      %6686 = vmatpush1.msra.mxu0 0.0
      %6687 = vmatprep.subr.mxu0 0.0
      %6688 = vmatpush1.msra.mxu0 0.0
      %6689 = vmatprep.subr.mxu0 0.0
      %6690 = vmatpush1.msra.mxu0 0.0
      %6691 = vmatprep.subr.mxu0 0.0
      %6692 = vmatpush1.msra.mxu0 0.0
      %6693 = vmatprep.subr.mxu0 0.0
      %6694 = vmatpush1.msra.mxu0 0.0
      %6695 = vmatprep.subr.mxu0 0.0
      %6696 = vmatpush1.msra.mxu0 0.0
      %6697 = vmatprep.subr.mxu0 0.0
      %6698 = vmatpush1.msra.mxu0 0.0
      %6699 = vmatprep.subr.mxu0 0.0
      %6700 = vmatpush1.msra.mxu0 0.0
      %6701 = vmatprep.subr.mxu0 0.0
      %6702 = vmatpush1.msra.mxu0 0.0
      %6703 = vmatprep.subr.mxu0 0.0
      %6704 = vmatpush1.msra.mxu0 0.0
      %6705 = vmatprep.subr.mxu0 0.0
      %6706 = vmatpush1.msra.mxu0 0.0
      %6707 = vmatprep.subr.mxu0 0.0
      %6708 = vmatpush1.msra.mxu0 0.0
      %6709 = vmatprep.mubr.f32.mxu0 0.0
      %6710 = vmatmul.mubr.f32.gmra.mrb[0].mxu0 %v6643
      %v6711 = vpop.f32.mrb[0].mxu0
      %v6712 = vadd.f32 0.0, %v6711
      %v6713 = vpop.f32.mrb[0].mxu0
      %v6714 = vadd.f32 0.0, %v6713
      %6715 = vdwg.mxu0
      %vm6716 = vcmask 1041408
      %v6717 = vsel %vm6716, %v6712, 0.0
      %v6718 = vsel %vm6716, %v6714, 0.0
      %v6719 = vadd.f32 %v6717, %v6718
      %6720 = vadd.xlane.f32.xlu0 %v6719
      %v6721 = vpop.xlane.xlu0 %6720
      %v6722 = vrcp.pop 256.0
      %v6723 = vmul.f32 %v6721, %v6722
      %v6724 = vld [vmem:[%s11] sm:$0x3]
      %v6725 = vadd.f32 %v6723, %v6724
      %vm6726 = vcmp.ge.f32.partialorder %v6725, 0.0
      %v6727 = vmul.f32 %v6725, 0.01
      %v6728 = vsel %vm6726, %v6725, %v6727
      %v6729 = vld [vmem:[%s13] sm:$0xff]
      %v6730 = vld [vmem:[%s13 + $0x8] sm:$0xff]
      %v6731 = vld [vmem:[%s12] sm:$0xff]
      %v6732 = vld [vmem:[%s12 + $0x8] sm:$0xff]
      %v6733 = vlaneseq
      %v6734 = vshrl.u32 %v6733, 7
      %v6735 = vsub.s32 0, %v6734
      %v6736 = vrot.slane %v6728, %v6735
      %v6737 = vmul.f32 %v6731, %v6736
      %v6738 = vmul.f32 %v6732, %v6736
      %v6739 = vadd.f32 %v6729, %v6737
      %v6740 = vadd.f32 %v6730, %v6738
      %v6741 = vlaneseq
      %v6742 = vshrl.u32 %v6741, 7
      %v6743 = vsub.s32 1, %v6742
      %v6744 = vrot.slane %v6728, %v6743
      %6746 = vrot.lane.b32.xlu0 %v6744, 1
      %v6747 = vpop.permute.xlu0 %6746
      %v6749 = vmul.f32 %v6731, %v6747
      %v6750 = vmul.f32 %v6732, %v6747
      %6753 = vrot.lane.b32.xlu0 %v6749, 127
      %v6754 = vpop.permute.xlu0 %6753
      %6755 = vrot.lane.b32.xlu0 %v6750, 127
      %v6756 = vpop.permute.xlu0 %6755
      %v6759 = vadd.f32 %v6739, %v6754
      %v6760 = vadd.f32 %v6740, %v6756
      %v6761 = vsub.f32 0.0, %v6759
      %v6762 = vsub.f32 0.0, %v6760
      %v6763 = vmul.f32 %v6761, 1.442695
      %v6764 = vpow.pop %v6763
      %v6765 = vmul.f32 %v6762, 1.442695
      %v6766 = vpow.pop %v6765
      %v6767 = vadd.f32 %v6764, 1.0
      %v6768 = vadd.f32 %v6766, 1.0
      %v6769 = vrcp.pop %v6767
      %v6770 = vmul.f32 1.0, %v6769
      %v6771 = vrcp.pop %v6768
      %v6772 = vmul.f32 1.0, %v6771
      %v6773 = vld [vmem:[%s14] sm:$0xff]
      %v6774 = vld [vmem:[%s14 + $0x8] sm:$0xff]
      %v6775 = vmul.f32 %v6770, %v6773
      %v6776 = vmul.f32 %v6772, %v6774
      %6778 = vset.pattern.permute.xlu0 0
      %6779 = vperm.xlu0 %6778, %v6775
      %v6780 = vpop.permute.xlu0 %6779
      %6783 = vset.pattern.permute.xlu0 0
      %6784 = vperm.xlu0 %6783, %v6776
      %v6785 = vpop.permute.xlu0 %6784
      %v6787 = vmul.f32 %v6637, %v6780
      %v6788 = vmul.f32 %v6638, %v6780
      %v6789 = vmul.f32 %v6639, %v6785
      %v6790 = vmul.f32 %v6640, %v6785
      %v6791 = vld [vmem:[%s15] sm:$0xff]
      %v6792 = vld [vmem:[%s15 + $0x8] sm:$0xff]
      %6794 = vset.pattern.permute.xlu0 0
      %6795 = vperm.xlu0 %6794, %v6791
      %v6796 = vpop.permute.xlu0 %6795
      %6799 = vset.pattern.permute.xlu0 0
      %6800 = vperm.xlu0 %6799, %v6792
      %v6801 = vpop.permute.xlu0 %6800
      %v6803 = vadd.f32 %v6787, %v6796
      %v6804 = vadd.f32 %v6788, %v6796
      %v6805 = vadd.f32 %v6789, %v6801
      %v6806 = vadd.f32 %v6790, %v6801
      %vm6807 = vcmp.ge.f32.partialorder %v6803, 0.0
      %vm6808 = vcmp.ge.f32.partialorder %v6804, 0.0
      %vm6809 = vcmp.ge.f32.partialorder %v6805, 0.0
      %vm6810 = vcmp.ge.f32.partialorder %v6806, 0.0
      %v6811 = vmul.f32 %v6803, 0.01
      %v6812 = vmul.f32 %v6804, 0.01
      %v6813 = vmul.f32 %v6805, 0.01
      %v6814 = vmul.f32 %v6806, 0.01
      %v6815 = vsel %vm6807, %v6803, %v6811
      %v6816 = vsel %vm6808, %v6804, %v6812
      %v6817 = vsel %vm6809, %v6805, %v6813
      %v6818 = vsel %vm6810, %v6806, %v6814
      %v6819 = vld [vmem:[%s16] sm:$0xff]
      %v6820 = vld [vmem:[%s16 + $0x8] sm:$0xff]
      %6822 = vset.pattern.permute.xlu0 0
      %6823 = vperm.xlu0 %6822, %v6819
      %v6824 = vpop.permute.xlu0 %6823
      %6827 = vset.pattern.permute.xlu0 0
      %6828 = vperm.xlu0 %6827, %v6820
      %v6829 = vpop.permute.xlu0 %6828
      %v6831 = vmul.f32 %v6815, %v6824
      %v6832 = vmul.f32 %v6816, %v6824
      %v6833 = vmul.f32 %v6817, %v6829
      %v6834 = vmul.f32 %v6818, %v6829
      %v6835 = vadd.f32 %v6831, %v580
      %v6836 = vadd.f32 %v6832, %v581
      %v6837 = vadd.f32 %v6833, %v582
      %v6838 = vadd.f32 %v6834, %v583
      %6839 = vst [vmem:[%s575] sm:$0xff] %v6835
      %6840 = vst [vmem:[%s575 + $0x8] sm:$0xff] %v6836
      %6841 = vst [vmem:[%s575 + $0x10] sm:$0xff] %v6837
      %6842 = vst [vmem:[%s575 + $0x18] sm:$0xff] %v6838
      %p6843 = scmp.lt.s32.totalorder %s29, 1
      %s6844 = scalar_select %p6843, %s29, 1
      %s6845 = smul.addr %s6844, 4
      %s6846 = smul.addr %s6845, 8
      %s6847 = scalar_lea.vmem %s18, %s6846
      // Predicated region
      $region93: #{metanext_upstage_blockwithse.2} parent=91 // pred_check
        %p6848 = pneg %p430
      $region94: #{metanext_upstage_blockwithse.2} parent=91 // pred_check_branch
        %6850 = sbr.rel (%p6848) target = $region96
      $region95: #{metanext_upstage_blockwithse.2} parent=91 // pred_region
        _
      $region96: #{metanext_upstage_blockwithse.2} parent=91 // pred_fallthru
        _
    $region92: #{metanext_upstage_blockwithse.2} parent=5 // pred_fallthru
      _
    %p6851 = scmp.le.s32.totalorder 2, %s24
    // Predicated region
    $region97: #{metanext_upstage_blockwithse.2} parent=5 // pred_check
      %p6852 = pneg %p6851
    $region98: #{metanext_upstage_blockwithse.2} parent=5 // pred_check_branch
      %6854 = sbr.rel (%p6852) target = $region100
    $region99: #{metanext_upstage_blockwithse.2} parent=5 // pred_region
      %s6855 = ssub.s32 %s24, 2
      // Predicated region
      $region101: #{metanext_upstage_blockwithse.2} parent=99 // pred_check
        %p6856 = pneg %p436
      $region102: #{metanext_upstage_blockwithse.2} parent=99 // pred_check_branch
        %6858 = sbr.rel (%p6856) target = $region104
      $region103: #{metanext_upstage_blockwithse.2} parent=99 // pred_region
        %p6859 = scmp.lt.s32.totalorder %s30, 1
        %s6860 = scalar_select %p6859, %s30, 1
        %s6861 = smul.addr %s6860, 4
        %s6862 = smul.addr %s6861, 8
        %s6863 = scalar_lea.vmem %s18, %s6862
      $region104: #{metanext_upstage_blockwithse.2} parent=99 // pred_fallthru
        _
    $region100: #{metanext_upstage_blockwithse.2} parent=5 // pred_fallthru
      _
  $region6: #{metanext_upstage_blockwithse.2} parent=0 // loop_footer
    %s28 = sadd.s32 1, %s24
  $region7: #{metanext_upstage_blockwithse.2} parent=0 // loop_footer_branch
    %23 = sbr.rel target = $region3
  $region8: #{metanext_upstage_blockwithse.2} parent=0 // loop_exit
    _

</llo_original>
